<compile_context>
chip_gen: v6e
topology: v6e:2x2x1
jax: 0.10.0
libtpu: 0.0.40
codegen_flags: <defaults>
</compile_context>

<pallas_src>
import functools
import math

import jax
import jax.numpy as jnp
from jax.experimental import pallas as pl
from jax.experimental.pallas import tpu as pltpu

BN_EPS = 1e-5                           # PyTorch BatchNorm2d default
VMEM_LIMIT_BYTES = 32 * 1024 * 1024     # conservative; fits v5e/v6e/v7x scoped VMEM


# ---------------------------------------------------------------------------
# Pallas kernels
# ---------------------------------------------------------------------------
def _matmul_stats_kernel(a_ref, w_ref, y_ref, mean_ref, var_ref,
                         sum_ref, ssq_ref, *, inv_m):
    """Tiled im2col matmul (bf16 MXU, f32 acc) + exact per-channel batch stats."""
    i = pl.program_id(0)
    y = jnp.dot(a_ref[...], w_ref[...], preferred_element_type=jnp.float32)
    y_ref[...] = y

    @pl.when(i == 0)
    def _init():
        sum_ref[...] = jnp.zeros_like(sum_ref)
        ssq_ref[...] = jnp.zeros_like(ssq_ref)

    # Padded rows of A are zero, so they contribute nothing; inv_m uses true M.
    sum_ref[...] += jnp.sum(y, axis=0, keepdims=True)
    ssq_ref[...] += jnp.sum(y * y, axis=0, keepdims=True)

    @pl.when(i == pl.num_programs(0) - 1)
    def _finalize():
        mean = sum_ref[...] * inv_m
        mean_ref[...] = mean
        var_ref[...] = jnp.maximum(ssq_ref[...] * inv_m - mean * mean, 0.0)


def _bn_act_kernel(*refs, relu, has_skip, eps):
    """BatchNorm apply + optional ReLU + optional fused residual add."""
    if has_skip:
        y_ref, mean_ref, var_ref, gamma_ref, beta_ref, skip_ref, o_ref = refs
    else:
        y_ref, mean_ref, var_ref, gamma_ref, beta_ref, o_ref = refs
        skip_ref = None
    y = y_ref[...]
    scale = jax.lax.rsqrt(var_ref[...] + eps) * gamma_ref[...]
    out = (y - mean_ref[...]) * scale + beta_ref[...]
    if has_skip:
        out = out + skip_ref[...].astype(jnp.float32)
    if relu:
        out = jnp.maximum(out, 0.0)
    o_ref[...] = out.astype(o_ref.dtype)


def _matmul_act_kernel(a_ref, w_ref, o_ref, *, tanh):
    """Plain tiled matmul (no norm); optionally fuses the final tanh."""
    y = jnp.dot(a_ref[...], w_ref[...], preferred_element_type=jnp.float32)
    if tanh:
        y = jnp.tanh(y)
    o_ref[...] = y.astype(o_ref.dtype)


# ---------------------------------------------------------------------------
# JAX glue: padding / im2col / zero-dilation (data movement only)
# ---------------------------------------------------------------------------
def _round_up(x, m):
    return (x + m - 1) // m * m


def _im2col(x_nhwc, kh, kw, stride, pad, pad_mode):
    mode = "reflect" if pad_mode == "reflect" else "constant"
    x = jnp.pad(x_nhwc, ((0, 0), (pad, pad), (pad, pad), (0, 0)), mode=mode)
    n, hp, wp, c = x.shape
    ho = (hp - kh) // stride + 1
    wo = (wp - kw) // stride + 1
    cols = []
    for i in range(kh):
        for j in range(kw):
            cols.append(x[:, i:i + stride * ho:stride, j:j + stride * wo:stride, :])
    patches = jnp.stack(cols, axis=3)                  # (n, ho, wo, kh*kw, c)
    a = patches.reshape(n * ho * wo, kh * kw * c)      # (M, K)
    return a, n, ho, wo


def _dilate2x(x_nhwc):
    """Insert zeros between spatial elements: (N, H, W, C) -> (N, 2H-1, 2W-1, C)."""
    n, h, w, c = x_nhwc.shape
    y = jnp.zeros((n, 2 * h - 1, 2 * w - 1, c), x_nhwc.dtype)
    return y.at[:, ::2, ::2, :].set(x_nhwc)


def _pick_tm(m, k_pad, c_pad):
    """M-tile: largest 256-multiple that fits a conservative VMEM budget."""
    m8 = _round_up(m, 8)
    if m8 <= 256:                       # tiny layer -> single (latency-bound) tile
        return m8
    budget = 16 * 1024 * 1024           # leaves headroom inside the 32 MiB limit
    per_row = 4 * k_pad + 20 * c_pad    # dbl-buffered bf16 A + f32 y/out (+skip)
    tm = (budget // per_row) // 256 * 256
    return max(256, min(1024, tm, _round_up(m8, 256)))


# ---------------------------------------------------------------------------
# One conv layer = im2col matmul (+ BN + act [+ skip]) via Pallas
# ---------------------------------------------------------------------------
def _conv_layer_pallas(a, w2d, gamma, beta, *, m_true, do_bn, relu, tanh,
                       skip2d, out_dtype):
    m, k = a.shape
    cout = w2d.shape[1]
    c_pad = _round_up(cout, 128)        # lane-dense output stores
    k_pad = _round_up(k, 128)
    tm = _pick_tm(m, k_pad, c_pad)
    m_pad = _round_up(m, tm)
    grid = (m_pad // tm,)

    a_p = jnp.pad(a.astype(jnp.bfloat16), ((0, m_pad - m), (0, k_pad - k)))
    w_p = jnp.pad(w2d.astype(jnp.bfloat16), ((0, k_pad - k), (0, c_pad - cout)))

    mm_cost = pl.CostEstimate(
        flops=2 * m_pad * k_pad * c_pad,
        transcendentals=0,
        bytes_accessed=a_p.size * 2 + w_p.size * 2 + m_pad * c_pad * 4)

    a_spec = pl.BlockSpec((tm, k_pad), lambda i: (i, 0))
    w_spec = pl.BlockSpec((k_pad, c_pad), lambda i: (0, 0))
    row_spec = pl.BlockSpec((tm, c_pad), lambda i: (i, 0))
    vec_spec = pl.BlockSpec((1, c_pad), lambda i: (0, 0))

    if not do_bn:
        out = pl.pallas_call(
            functools.partial(_matmul_act_kernel, tanh=tanh),
            out_shape=jax.ShapeDtypeStruct((m_pad, c_pad), out_dtype),
            grid_spec=pltpu.PrefetchScalarGridSpec(
                num_scalar_prefetch=0, grid=grid,
                in_specs=[a_spec, w_spec], out_specs=row_spec),
            compiler_params=pltpu.CompilerParams(
                dimension_semantics=("parallel",),
                vmem_limit_bytes=VMEM_LIMIT_BYTES),
            cost_estimate=mm_cost,
        )(a_p, w_p)
        return out[:m, :cout]

    # Pass 1: tiled matmul + exact per-channel batch statistics.
    y, mean, var = pl.pallas_call(
        functools.partial(_matmul_stats_kernel, inv_m=1.0 / float(m_true)),
        out_shape=(jax.ShapeDtypeStruct((m_pad, c_pad), jnp.float32),
                   jax.ShapeDtypeStruct((1, c_pad), jnp.float32),
                   jax.ShapeDtypeStruct((1, c_pad), jnp.float32)),
        grid_spec=pltpu.PrefetchScalarGridSpec(
            num_scalar_prefetch=0, grid=grid,
            in_specs=[a_spec, w_spec],
            out_specs=[row_spec, vec_spec, vec_spec],
            scratch_shapes=[pltpu.VMEM((1, c_pad), jnp.float32),
                            pltpu.VMEM((1, c_pad), jnp.float32)]),
        compiler_params=pltpu.CompilerParams(
            dimension_semantics=("arbitrary",),   # stats accumulate across M tiles
            vmem_limit_bytes=VMEM_LIMIT_BYTES),
        cost_estimate=mm_cost,
    )(a_p, w_p)

    gamma_p = jnp.pad(gamma.reshape(1, -1).astype(jnp.float32),
                      ((0, 0), (0, c_pad - cout)))
    beta_p = jnp.pad(beta.reshape(1, -1).astype(jnp.float32),
                     ((0, 0), (0, c_pad - cout)))

    inputs = [y, mean, var, gamma_p, beta_p]
    in_specs = [row_spec, vec_spec, vec_spec, vec_spec, vec_spec]
    has_skip = skip2d is not None
    if has_skip:
        skip_p = jnp.pad(skip2d.astype(jnp.bfloat16),
                         ((0, m_pad - skip2d.shape[0]), (0, c_pad - cout)))
        inputs.append(skip_p)
        in_specs.append(row_spec)

    # Pass 2: normalize + affine (+ residual) + ReLU.
    out = pl.pallas_call(
        functools.partial(_bn_act_kernel, relu=relu, has_skip=has_skip, eps=BN_EPS),
        out_shape=jax.ShapeDtypeStruct((m_pad, c_pad), out_dtype),
        grid_spec=pltpu.PrefetchScalarGridSpec(
            num_scalar_prefetch=0, grid=grid,
            in_specs=in_specs, out_specs=row_spec),
        compiler_params=pltpu.CompilerParams(
            dimension_semantics=("parallel",),
            vmem_limit_bytes=VMEM_LIMIT_BYTES),
    )(*inputs)
    return out[:m, :cout]


def cnr2d(x_nhwc, w_hwio, gamma=None, beta=None, *, stride=1, pad=0,
          pad_mode="zeros", do_bn=True, relu=True, tanh=False, skip=None,
          out_dtype=jnp.bfloat16):
    kh, kw, cin, cout = w_hwio.shape
    a, n, ho, wo = _im2col(x_nhwc, kh, kw, stride, pad, pad_mode)
    w2d = w_hwio.reshape(kh * kw * cin, cout)
    skip2d = None if skip is None else skip.reshape(n * ho * wo, cout)
    y2d = _conv_layer_pallas(a, w2d, gamma, beta, m_true=n * ho * wo,
                             do_bn=do_bn, relu=relu, tanh=tanh,
                             skip2d=skip2d, out_dtype=out_dtype)
    return y2d.reshape(n, ho, wo, cout)


def decnr2d(x_nhwc, w_hwio, gamma, beta):
    # ConvTranspose2d(k=4, s=2, p=1) == zero-dilate input 2x, pad by k-1-p = 2,
    # then stride-1 conv (weights kept in HWIO of the equivalent dilated conv).
    return cnr2d(_dilate2x(x_nhwc), w_hwio, gamma, beta,
                 stride=1, pad=2, do_bn=True, relu=True)


# ---------------------------------------------------------------------------
# ResNet: parameter init + forward (norm='bnorm' -> conv bias=False)
# ---------------------------------------------------------------------------
def init_resnet_params(key, nch_in, nch_out, nch_ker, nblk):
    def conv(k_, ksz, cin, cout):
        bound = 1.0 / math.sqrt(cin * ksz * ksz)
        return jax.random.uniform(k_, (ksz, ksz, cin, cout), jnp.float32, -bound, bound)

    def bn(cout):
        return jnp.ones((cout,), jnp.float32), jnp.zeros((cout,), jnp.float32)

    keys = iter(jax.random.split(key, 6 + 2 * nblk))
    p = {}
    p["enc1"] = (conv(next(keys), 7, nch_in, nch_ker), *bn(nch_ker))
    p["enc2"] = (conv(next(keys), 4, nch_ker, 2 * nch_ker), *bn(2 * nch_ker))
    p["enc3"] = (conv(next(keys), 4, 2 * nch_ker, 4 * nch_ker), *bn(4 * nch_ker))
    p["res"] = []
    for _ in range(nblk):
        w1 = conv(next(keys), 3, 4 * nch_ker, 4 * nch_ker)
        w2 = conv(next(keys), 3, 4 * nch_ker, 4 * nch_ker)
        g1, b1 = bn(4 * nch_ker)
        g2, b2 = bn(4 * nch_ker)
        p["res"].append((w1, g1, b1, w2, g2, b2))
    p["dec3"] = (conv(next(keys), 4, 4 * nch_ker, 2 * nch_ker), *bn(2 * nch_ker))
    p["dec2"] = (conv(next(keys), 4, 2 * nch_ker, nch_ker), *bn(nch_ker))
    p["dec1"] = conv(next(keys), 7, nch_ker, nch_out)
    return p


def resnet_forward(params, x_nchw):
    # PyTorch NCHW -> NHWC; inter-layer activations in bf16.
    x = jnp.transpose(x_nchw, (0, 2, 3, 1)).astype(jnp.bfloat16)

    w, g, b = params["enc1"]
    x = cnr2d(x, w, g, b, stride=1, pad=3)                 # k=7 s=1 p=3 + BN + ReLU
    w, g, b = params["enc2"]
    x = cnr2d(x, w, g, b, stride=2, pad=1)                 # k=4 s=2 p=1 + BN + ReLU
    w, g, b = params["enc3"]
    x = cnr2d(x, w, g, b, stride=2, pad=1)

    for w1, g1, b1, w2, g2, b2 in params["res"]:
        h = cnr2d(x, w1, g1, b1, stride=1, pad=1, pad_mode="reflect")
        x = cnr2d(h, w2, g2, b2, stride=1, pad=1, pad_mode="reflect",
                  relu=False, skip=x)                      # residual add fused in-kernel

    w, g, b = params["dec3"]
    x = decnr2d(x, w, g, b)                                # ConvTranspose k=4 s=2 p=1
    w, g, b = params["dec2"]
    x = decnr2d(x, w, g, b)

    x = cnr2d(x, params["dec1"], stride=1, pad=3, do_bn=False, relu=False,
              tanh=True, out_dtype=jnp.float32)            # final conv + fused tanh
    return jnp.transpose(x, (0, 3, 1, 2))                  # back to NCHW


if __name__ == "__main__":
    nch_in, nch_out, nch_ker, nblk = 3, 3, 8, 2
    key = jax.random.PRNGKey(0)
    key_p, key_x = jax.random.split(key)

    params = init_resnet_params(key_p, nch_in, nch_out, nch_ker, nblk)
    # Input: N=2, C=3, H=W=32  (32 -> 32 -> 16 -> 8 -> [res 8] -> 16 -> 32 -> 32)
    x = jax.random.normal(key_x, (2, nch_in, 32, 32), jnp.float32)

    out = jax.jit(resnet_forward)(params, x)
    out = jax.block_until_ready(out)
    assert out.shape == (2, nch_out, 32, 32), out.shape
    assert bool(jnp.all(jnp.isfinite(out)))
    assert bool(jnp.all(jnp.abs(out) <= 1.0 + 1e-6))       # tanh range
    print("KERNEL_OK")
</pallas_src>

<mosaic_0001>
module attributes {stable_mosaic.version = 11 : i64} {
  func.func @_matmul_stats_kernel(%arg0: i32, %arg1: memref<1024x256xbf16, #tpu.memory_space<vmem>>, %arg2: memref<256x128xbf16, #tpu.memory_space<vmem>>, %arg3: memref<1024x128xf32, #tpu.memory_space<vmem>>, %arg4: memref<1x128xf32, #tpu.memory_space<vmem>>, %arg5: memref<1x128xf32, #tpu.memory_space<vmem>>, %arg6: memref<1x128xf32, #tpu.memory_space<vmem>>, %arg7: memref<1x128xf32, #tpu.memory_space<vmem>>) attributes {dimension_semantics = [#tpu.dimension_semantics<arbitrary>], iteration_bounds = array<i64: 2>, scalar_prefetch = 0 : i64, scratch_operands = 2 : i64, tpu.core_type = #tpu.core_type<tc>, window_params = [{transform_indices = @transform_0, window_bounds = array<i64: 1024, 256>}, {pipeline_mode = #tpu.pipeline_mode<synchronous>, transform_indices = @transform_1, window_bounds = array<i64: 256, 128>}, {transform_indices = @transform_2, window_bounds = array<i64: 1024, 128>}, {pipeline_mode = #tpu.pipeline_mode<synchronous>, transform_indices = @transform_3, window_bounds = array<i64: 1, 128>}, {pipeline_mode = #tpu.pipeline_mode<synchronous>, transform_indices = @transform_4, window_bounds = array<i64: 1, 128>}]} {
    %c0 = arith.constant 0 : index
    %c0_0 = arith.constant 0 : index
    %0 = vector.load %arg1[%c0, %c0_0] : memref<1024x256xbf16, #tpu.memory_space<vmem>>, vector<1024x256xbf16>
    %c0_1 = arith.constant 0 : index
    %c0_2 = arith.constant 0 : index
    %1 = vector.load %arg2[%c0_1, %c0_2] : memref<256x128xbf16, #tpu.memory_space<vmem>>, vector<256x128xbf16>
    %cst = arith.constant dense<0.000000e+00> : vector<1024x128xf32>
    %2 = tpu.matmul %0, %1, %cst {dimension_numbers = #tpu.dot_dimension_numbers<[1], [0], [0], [1], [0, 0, 1, 1], [], []>} : vector<1024x256xbf16>, vector<256x128xbf16>, vector<1024x128xf32> -> vector<1024x128xf32>
    %c0_3 = arith.constant 0 : index
    %c0_4 = arith.constant 0 : index
    %3 = vector.load %arg3[%c0_3, %c0_4] : memref<1024x128xf32, #tpu.memory_space<vmem>>, vector<1024x128xf32>
    tpu.vector_store %arg3[%c0_3, %c0_4], %2 {strides = array<i32>} : memref<1024x128xf32, #tpu.memory_space<vmem>>, vector<1024x128xf32>,
    %c0_i32 = arith.constant 0 : i32
    %4 = arith.cmpi eq, %arg0, %c0_i32 : i32
    %5 = arith.extui %4 : i1 to i32
    %c0_i32_5 = arith.constant 0 : i32
    %6 = arith.cmpi ne, %5, %c0_i32_5 : i32
    scf.if %6 {
      %cst_17 = arith.constant 0.000000e+00 : f32
      %21 = vector.broadcast %cst_17 : f32 to vector<1x128xf32>
      %c0_18 = arith.constant 0 : index
      %c0_19 = arith.constant 0 : index
      %22 = vector.load %arg6[%c0_18, %c0_19] : memref<1x128xf32, #tpu.memory_space<vmem>>, vector<1x128xf32>
      tpu.vector_store %arg6[%c0_18, %c0_19], %21 {strides = array<i32>} : memref<1x128xf32, #tpu.memory_space<vmem>>, vector<1x128xf32>,
      %cst_20 = arith.constant 0.000000e+00 : f32
      %23 = vector.broadcast %cst_20 : f32 to vector<1x128xf32>
      %c0_21 = arith.constant 0 : index
      %c0_22 = arith.constant 0 : index
      %24 = vector.load %arg7[%c0_21, %c0_22] : memref<1x128xf32, #tpu.memory_space<vmem>>, vector<1x128xf32>
      tpu.vector_store %arg7[%c0_21, %c0_22], %23 {strides = array<i32>} : memref<1x128xf32, #tpu.memory_space<vmem>>, vector<1x128xf32>,
    } else {
    }
    %c0_6 = arith.constant 0 : index
    %c0_7 = arith.constant 0 : index
    %7 = vector.load %arg6[%c0_6, %c0_7] : memref<1x128xf32, #tpu.memory_space<vmem>>, vector<1x128xf32>
    %cst_8 = arith.constant dense<0.000000e+00> : vector<128xf32>
    %8 = vector.multi_reduction <add>, %2, %cst_8 [0] : vector<1024x128xf32> to vector<128xf32>
    %9 = vector.shape_cast %8 : vector<128xf32> to vector<1x128xf32>
    %10 = arith.addf %7, %9 : vector<1x128xf32>
    %c0_9 = arith.constant 0 : index
    %c0_10 = arith.constant 0 : index
    %11 = vector.load %arg6[%c0_9, %c0_10] : memref<1x128xf32, #tpu.memory_space<vmem>>, vector<1x128xf32>
    tpu.vector_store %arg6[%c0_9, %c0_10], %10 {strides = array<i32>} : memref<1x128xf32, #tpu.memory_space<vmem>>, vector<1x128xf32>,
    %c0_11 = arith.constant 0 : index
    %c0_12 = arith.constant 0 : index
    %12 = vector.load %arg7[%c0_11, %c0_12] : memref<1x128xf32, #tpu.memory_space<vmem>>, vector<1x128xf32>
    %13 = arith.mulf %2, %2 : vector<1024x128xf32>
    %cst_13 = arith.constant dense<0.000000e+00> : vector<128xf32>
    %14 = vector.multi_reduction <add>, %13, %cst_13 [0] : vector<1024x128xf32> to vector<128xf32>
    %15 = vector.shape_cast %14 : vector<128xf32> to vector<1x128xf32>
    %16 = arith.addf %12, %15 : vector<1x128xf32>
    %c0_14 = arith.constant 0 : index
    %c0_15 = arith.constant 0 : index
    %17 = vector.load %arg7[%c0_14, %c0_15] : memref<1x128xf32, #tpu.memory_space<vmem>>, vector<1x128xf32>
    tpu.vector_store %arg7[%c0_14, %c0_15], %16 {strides = array<i32>} : memref<1x128xf32, #tpu.memory_space<vmem>>, vector<1x128xf32>,
    %c1_i32 = arith.constant 1 : i32
    %18 = arith.cmpi eq, %arg0, %c1_i32 : i32
    %19 = arith.extui %18 : i1 to i32
    %c0_i32_16 = arith.constant 0 : i32
    %20 = arith.cmpi ne, %19, %c0_i32_16 : i32
    scf.if %20 {
      %c0_17 = arith.constant 0 : index
      %c0_18 = arith.constant 0 : index
      %21 = vector.load %arg6[%c0_17, %c0_18] : memref<1x128xf32, #tpu.memory_space<vmem>>, vector<1x128xf32>
      %cst_19 = arith.constant 4.8828125E-4 : f32
      %22 = vector.broadcast %cst_19 : f32 to vector<1x128xf32>
      %23 = arith.mulf %21, %22 : vector<1x128xf32>
      %c0_20 = arith.constant 0 : index
      %c0_21 = arith.constant 0 : index
      %24 = vector.load %arg4[%c0_20, %c0_21] : memref<1x128xf32, #tpu.memory_space<vmem>>, vector<1x128xf32>
      tpu.vector_store %arg4[%c0_20, %c0_21], %23 {strides = array<i32>} : memref<1x128xf32, #tpu.memory_space<vmem>>, vector<1x128xf32>,
      %c0_22 = arith.constant 0 : index
      %c0_23 = arith.constant 0 : index
      %25 = vector.load %arg7[%c0_22, %c0_23] : memref<1x128xf32, #tpu.memory_space<vmem>>, vector<1x128xf32>
      %cst_24 = arith.constant 4.8828125E-4 : f32
      %26 = vector.broadcast %cst_24 : f32 to vector<1x128xf32>
      %27 = arith.mulf %25, %26 : vector<1x128xf32>
      %28 = arith.mulf %23, %23 : vector<1x128xf32>
      %29 = arith.subf %27, %28 : vector<1x128xf32>
      %cst_25 = arith.constant 0.000000e+00 : f32
      %30 = vector.broadcast %cst_25 : f32 to vector<1x128xf32>
      %31 = arith.maximumf %29, %30 : vector<1x128xf32>
      %c0_26 = arith.constant 0 : index
      %c0_27 = arith.constant 0 : index
      %32 = vector.load %arg5[%c0_26, %c0_27] : memref<1x128xf32, #tpu.memory_space<vmem>>, vector<1x128xf32>
      tpu.vector_store %arg5[%c0_26, %c0_27], %31 {strides = array<i32>} : memref<1x128xf32, #tpu.memory_space<vmem>>, vector<1x128xf32>,
    } else {
    }
    return
  }
  func.func @transform_0(%arg0: i32) -> (i32, i32) {
    %c0_i32 = arith.constant 0 : i32
    %c0_i32_0 = arith.constant 0 : i32
    return %arg0, %c0_i32 : i32, i32
  }
  func.func @transform_1(%arg0: i32) -> (i32, i32) {
    %c0_i32 = arith.constant 0 : i32
    %c0_i32_0 = arith.constant 0 : i32
    %c0_i32_1 = arith.constant 0 : i32
    return %c0_i32, %c0_i32_0 : i32, i32
  }
  func.func @transform_2(%arg0: i32) -> (i32, i32) {
    %c0_i32 = arith.constant 0 : i32
    %c0_i32_0 = arith.constant 0 : i32
    return %arg0, %c0_i32 : i32, i32
  }
  func.func @transform_3(%arg0: i32) -> (i32, i32) {
    %c0_i32 = arith.constant 0 : i32
    %c0_i32_0 = arith.constant 0 : i32
    %c0_i32_1 = arith.constant 0 : i32
    return %c0_i32, %c0_i32_0 : i32, i32
  }
  func.func @transform_4(%arg0: i32) -> (i32, i32) {
    %c0_i32 = arith.constant 0 : i32
    %c0_i32_0 = arith.constant 0 : i32
    %c0_i32_1 = arith.constant 0 : i32
    return %c0_i32, %c0_i32_0 : i32, i32
  }
}

module attributes {stable_mosaic.version = 11 : i64} {
  func.func @_bn_act_kernel(%arg0: i32, %arg1: memref<1024x128xf32, #tpu.memory_space<vmem>>, %arg2: memref<1x128xf32, #tpu.memory_space<vmem>>, %arg3: memref<1x128xf32, #tpu.memory_space<vmem>>, %arg4: memref<1x128xf32, #tpu.memory_space<vmem>>, %arg5: memref<1x128xf32, #tpu.memory_space<vmem>>, %arg6: memref<1024x128xbf16, #tpu.memory_space<vmem>>) attributes {dimension_semantics = [#tpu.dimension_semantics<parallel>], iteration_bounds = array<i64: 2>, scalar_prefetch = 0 : i64, scratch_operands = 0 : i64, tpu.core_type = #tpu.core_type<tc>, window_params = [{transform_indices = @transform_0, window_bounds = array<i64: 1024, 128>}, {pipeline_mode = #tpu.pipeline_mode<synchronous>, transform_indices = @transform_1, window_bounds = array<i64: 1, 128>}, {pipeline_mode = #tpu.pipeline_mode<synchronous>, transform_indices = @transform_2, window_bounds = array<i64: 1, 128>}, {pipeline_mode = #tpu.pipeline_mode<synchronous>, transform_indices = @transform_3, window_bounds = array<i64: 1, 128>}, {pipeline_mode = #tpu.pipeline_mode<synchronous>, transform_indices = @transform_4, window_bounds = array<i64: 1, 128>}, {transform_indices = @transform_5, window_bounds = array<i64: 1024, 128>}]} {
    %c0 = arith.constant 0 : index
    %c0_0 = arith.constant 0 : index
    %0 = vector.load %arg1[%c0, %c0_0] : memref<1024x128xf32, #tpu.memory_space<vmem>>, vector<1024x128xf32>
    %c0_1 = arith.constant 0 : index
    %c0_2 = arith.constant 0 : index
    %1 = vector.load %arg3[%c0_1, %c0_2] : memref<1x128xf32, #tpu.memory_space<vmem>>, vector<1x128xf32>
    %cst = arith.constant 9.99999974E-6 : f32
    %2 = vector.broadcast %cst : f32 to vector<1x128xf32>
    %3 = arith.addf %1, %2 : vector<1x128xf32>
    %4 = math.rsqrt %3 : vector<1x128xf32>
    %c0_3 = arith.constant 0 : index
    %c0_4 = arith.constant 0 : index
    %5 = vector.load %arg4[%c0_3, %c0_4] : memref<1x128xf32, #tpu.memory_space<vmem>>, vector<1x128xf32>
    %6 = arith.mulf %4, %5 : vector<1x128xf32>
    %c0_5 = arith.constant 0 : index
    %c0_6 = arith.constant 0 : index
    %7 = vector.load %arg2[%c0_5, %c0_6] : memref<1x128xf32, #tpu.memory_space<vmem>>, vector<1x128xf32>
    %8 = vector.broadcast %7 : vector<1x128xf32> to vector<1024x128xf32>
    %9 = arith.subf %0, %8 : vector<1024x128xf32>
    %10 = vector.broadcast %6 : vector<1x128xf32> to vector<1024x128xf32>
    %11 = arith.mulf %9, %10 : vector<1024x128xf32>
    %c0_7 = arith.constant 0 : index
    %c0_8 = arith.constant 0 : index
    %12 = vector.load %arg5[%c0_7, %c0_8] : memref<1x128xf32, #tpu.memory_space<vmem>>, vector<1x128xf32>
    %13 = vector.broadcast %12 : vector<1x128xf32> to vector<1024x128xf32>
    %14 = arith.addf %11, %13 : vector<1024x128xf32>
    %cst_9 = arith.constant 0.000000e+00 : f32
    %15 = vector.broadcast %cst_9 : f32 to vector<1024x128xf32>
    %16 = arith.maximumf %14, %15 : vector<1024x128xf32>
    %17 = arith.truncf %16 : vector<1024x128xf32> to vector<1024x128xbf16>
    %c0_10 = arith.constant 0 : index
    %c0_11 = arith.constant 0 : index
    %18 = vector.load %arg6[%c0_10, %c0_11] : memref<1024x128xbf16, #tpu.memory_space<vmem>>, vector<1024x128xbf16>
    tpu.vector_store %arg6[%c0_10, %c0_11], %17 {strides = array<i32>} : memref<1024x128xbf16, #tpu.memory_space<vmem>>, vector<1024x128xbf16>,
    return
  }
  func.func @transform_0(%arg0: i32) -> (i32, i32) {
    %c0_i32 = arith.constant 0 : i32
    %c0_i32_0 = arith.constant 0 : i32
    return %arg0, %c0_i32 : i32, i32
  }
  func.func @transform_1(%arg0: i32) -> (i32, i32) {
    %c0_i32 = arith.constant 0 : i32
    %c0_i32_0 = arith.constant 0 : i32
    %c0_i32_1 = arith.constant 0 : i32
    return %c0_i32, %c0_i32_0 : i32, i32
  }
  func.func @transform_2(%arg0: i32) -> (i32, i32) {
    %c0_i32 = arith.constant 0 : i32
    %c0_i32_0 = arith.constant 0 : i32
    %c0_i32_1 = arith.constant 0 : i32
    return %c0_i32, %c0_i32_0 : i32, i32
  }
  func.func @transform_3(%arg0: i32) -> (i32, i32) {
    %c0_i32 = arith.constant 0 : i32
    %c0_i32_0 = arith.constant 0 : i32
    %c0_i32_1 = arith.constant 0 : i32
    return %c0_i32, %c0_i32_0 : i32, i32
  }
  func.func @transform_4(%arg0: i32) -> (i32, i32) {
    %c0_i32 = arith.constant 0 : i32
    %c0_i32_0 = arith.constant 0 : i32
    %c0_i32_1 = arith.constant 0 : i32
    return %c0_i32, %c0_i32_0 : i32, i32
  }
  func.func @transform_5(%arg0: i32) -> (i32, i32) {
    %c0_i32 = arith.constant 0 : i32
    %c0_i32_0 = arith.constant 0 : i32
    return %arg0, %c0_i32 : i32, i32
  }
}

module attributes {stable_mosaic.version = 11 : i64} {
  func.func @_matmul_stats_kernel(%arg0: i32, %arg1: memref<512x128xbf16, #tpu.memory_space<vmem>>, %arg2: memref<128x128xbf16, #tpu.memory_space<vmem>>, %arg3: memref<512x128xf32, #tpu.memory_space<vmem>>, %arg4: memref<1x128xf32, #tpu.memory_space<vmem>>, %arg5: memref<1x128xf32, #tpu.memory_space<vmem>>, %arg6: memref<1x128xf32, #tpu.memory_space<vmem>>, %arg7: memref<1x128xf32, #tpu.memory_space<vmem>>) attributes {dimension_semantics = [#tpu.dimension_semantics<arbitrary>], iteration_bounds = array<i64: 1>, scalar_prefetch = 0 : i64, scratch_operands = 2 : i64, tpu.core_type = #tpu.core_type<tc>, window_params = [{transform_indices = @transform_0, window_bounds = array<i64: 512, 128>}, {pipeline_mode = #tpu.pipeline_mode<synchronous>, transform_indices = @transform_1, window_bounds = array<i64: 128, 128>}, {transform_indices = @transform_2, window_bounds = array<i64: 512, 128>}, {pipeline_mode = #tpu.pipeline_mode<synchronous>, transform_indices = @transform_3, window_bounds = array<i64: 1, 128>}, {pipeline_mode = #tpu.pipeline_mode<synchronous>, transform_indices = @transform_4, window_bounds = array<i64: 1, 128>}]} {
    %c0 = arith.constant 0 : index
    %c0_0 = arith.constant 0 : index
    %0 = vector.load %arg1[%c0, %c0_0] : memref<512x128xbf16, #tpu.memory_space<vmem>>, vector<512x128xbf16>
    %c0_1 = arith.constant 0 : index
    %c0_2 = arith.constant 0 : index
    %1 = vector.load %arg2[%c0_1, %c0_2] : memref<128x128xbf16, #tpu.memory_space<vmem>>, vector<128x128xbf16>
    %cst = arith.constant dense<0.000000e+00> : vector<512x128xf32>
    %2 = tpu.matmul %0, %1, %cst {dimension_numbers = #tpu.dot_dimension_numbers<[1], [0], [0], [1], [0, 0, 1, 1], [], []>} : vector<512x128xbf16>, vector<128x128xbf16>, vector<512x128xf32> -> vector<512x128xf32>
    %c0_3 = arith.constant 0 : index
    %c0_4 = arith.constant 0 : index
    %3 = vector.load %arg3[%c0_3, %c0_4] : memref<512x128xf32, #tpu.memory_space<vmem>>, vector<512x128xf32>
    tpu.vector_store %arg3[%c0_3, %c0_4], %2 {strides = array<i32>} : memref<512x128xf32, #tpu.memory_space<vmem>>, vector<512x128xf32>,
    %c0_i32 = arith.constant 0 : i32
    %4 = arith.cmpi eq, %arg0, %c0_i32 : i32
    %5 = arith.extui %4 : i1 to i32
    %c0_i32_5 = arith.constant 0 : i32
    %6 = arith.cmpi ne, %5, %c0_i32_5 : i32
    scf.if %6 {
      %cst_18 = arith.constant 0.000000e+00 : f32
      %21 = vector.broadcast %cst_18 : f32 to vector<1x128xf32>
      %c0_19 = arith.constant 0 : index
      %c0_20 = arith.constant 0 : index
      %22 = vector.load %arg6[%c0_19, %c0_20] : memref<1x128xf32, #tpu.memory_space<vmem>>, vector<1x128xf32>
      tpu.vector_store %arg6[%c0_19, %c0_20], %21 {strides = array<i32>} : memref<1x128xf32, #tpu.memory_space<vmem>>, vector<1x128xf32>,
      %cst_21 = arith.constant 0.000000e+00 : f32
      %23 = vector.broadcast %cst_21 : f32 to vector<1x128xf32>
      %c0_22 = arith.constant 0 : index
      %c0_23 = arith.constant 0 : index
      %24 = vector.load %arg7[%c0_22, %c0_23] : memref<1x128xf32, #tpu.memory_space<vmem>>, vector<1x128xf32>
      tpu.vector_store %arg7[%c0_22, %c0_23], %23 {strides = array<i32>} : memref<1x128xf32, #tpu.memory_space<vmem>>, vector<1x128xf32>,
    } else {
    }
    %c0_6 = arith.constant 0 : index
    %c0_7 = arith.constant 0 : index
    %7 = vector.load %arg6[%c0_6, %c0_7] : memref<1x128xf32, #tpu.memory_space<vmem>>, vector<1x128xf32>
    %cst_8 = arith.constant dense<0.000000e+00> : vector<128xf32>
    %8 = vector.multi_reduction <add>, %2, %cst_8 [0] : vector<512x128xf32> to vector<128xf32>
    %9 = vector.shape_cast %8 : vector<128xf32> to vector<1x128xf32>
    %10 = arith.addf %7, %9 : vector<1x128xf32>
    %c0_9 = arith.constant 0 : index
    %c0_10 = arith.constant 0 : index
    %11 = vector.load %arg6[%c0_9, %c0_10] : memref<1x128xf32, #tpu.memory_space<vmem>>, vector<1x128xf32>
    tpu.vector_store %arg6[%c0_9, %c0_10], %10 {strides = array<i32>} : memref<1x128xf32, #tpu.memory_space<vmem>>, vector<1x128xf32>,
    %c0_11 = arith.constant 0 : index
    %c0_12 = arith.constant 0 : index
    %12 = vector.load %arg7[%c0_11, %c0_12] : memref<1x128xf32, #tpu.memory_space<vmem>>, vector<1x128xf32>
    %13 = arith.mulf %2, %2 : vector<512x128xf32>
    %cst_13 = arith.constant dense<0.000000e+00> : vector<128xf32>
    %14 = vector.multi_reduction <add>, %13, %cst_13 [0] : vector<512x128xf32> to vector<128xf32>
    %15 = vector.shape_cast %14 : vector<128xf32> to vector<1x128xf32>
    %16 = arith.addf %12, %15 : vector<1x128xf32>
    %c0_14 = arith.constant 0 : index
    %c0_15 = arith.constant 0 : index
    %17 = vector.load %arg7[%c0_14, %c0_15] : memref<1x128xf32, #tpu.memory_space<vmem>>, vector<1x128xf32>
    tpu.vector_store %arg7[%c0_14, %c0_15], %16 {strides = array<i32>} : memref<1x128xf32, #tpu.memory_space<vmem>>, vector<1x128xf32>,
    %c0_i32_16 = arith.constant 0 : i32
    %18 = arith.cmpi eq, %arg0, %c0_i32_16 : i32
    %19 = arith.extui %18 : i1 to i32
    %c0_i32_17 = arith.constant 0 : i32
    %20 = arith.cmpi ne, %19, %c0_i32_17 : i32
    scf.if %20 {
      %c0_18 = arith.constant 0 : index
      %c0_19 = arith.constant 0 : index
      %21 = vector.load %arg6[%c0_18, %c0_19] : memref<1x128xf32, #tpu.memory_space<vmem>>, vector<1x128xf32>
      %cst_20 = arith.constant 0.001953125 : f32
      %22 = vector.broadcast %cst_20 : f32 to vector<1x128xf32>
      %23 = arith.mulf %21, %22 : vector<1x128xf32>
      %c0_21 = arith.constant 0 : index
      %c0_22 = arith.constant 0 : index
      %24 = vector.load %arg4[%c0_21, %c0_22] : memref<1x128xf32, #tpu.memory_space<vmem>>, vector<1x128xf32>
      tpu.vector_store %arg4[%c0_21, %c0_22], %23 {strides = array<i32>} : memref<1x128xf32, #tpu.memory_space<vmem>>, vector<1x128xf32>,
      %c0_23 = arith.constant 0 : index
      %c0_24 = arith.constant 0 : index
      %25 = vector.load %arg7[%c0_23, %c0_24] : memref<1x128xf32, #tpu.memory_space<vmem>>, vector<1x128xf32>
      %cst_25 = arith.constant 0.001953125 : f32
      %26 = vector.broadcast %cst_25 : f32 to vector<1x128xf32>
      %27 = arith.mulf %25, %26 : vector<1x128xf32>
      %28 = arith.mulf %23, %23 : vector<1x128xf32>
      %29 = arith.subf %27, %28 : vector<1x128xf32>
      %cst_26 = arith.constant 0.000000e+00 : f32
      %30 = vector.broadcast %cst_26 : f32 to vector<1x128xf32>
      %31 = arith.maximumf %29, %30 : vector<1x128xf32>
      %c0_27 = arith.constant 0 : index
      %c0_28 = arith.constant 0 : index
      %32 = vector.load %arg5[%c0_27, %c0_28] : memref<1x128xf32, #tpu.memory_space<vmem>>, vector<1x128xf32>
      tpu.vector_store %arg5[%c0_27, %c0_28], %31 {strides = array<i32>} : memref<1x128xf32, #tpu.memory_space<vmem>>, vector<1x128xf32>,
    } else {
    }
    return
  }
  func.func @transform_0(%arg0: i32) -> (i32, i32) {
    %c0_i32 = arith.constant 0 : i32
    %c0_i32_0 = arith.constant 0 : i32
    return %arg0, %c0_i32 : i32, i32
  }
  func.func @transform_1(%arg0: i32) -> (i32, i32) {
    %c0_i32 = arith.constant 0 : i32
    %c0_i32_0 = arith.constant 0 : i32
    %c0_i32_1 = arith.constant 0 : i32
    return %c0_i32, %c0_i32_0 : i32, i32
  }
  func.func @transform_2(%arg0: i32) -> (i32, i32) {
    %c0_i32 = arith.constant 0 : i32
    %c0_i32_0 = arith.constant 0 : i32
    return %arg0, %c0_i32 : i32, i32
  }
  func.func @transform_3(%arg0: i32) -> (i32, i32) {
    %c0_i32 = arith.constant 0 : i32
    %c0_i32_0 = arith.constant 0 : i32
    %c0_i32_1 = arith.constant 0 : i32
    return %c0_i32, %c0_i32_0 : i32, i32
  }
  func.func @transform_4(%arg0: i32) -> (i32, i32) {
    %c0_i32 = arith.constant 0 : i32
    %c0_i32_0 = arith.constant 0 : i32
    %c0_i32_1 = arith.constant 0 : i32
    return %c0_i32, %c0_i32_0 : i32, i32
  }
}

module attributes {stable_mosaic.version = 11 : i64} {
  func.func @_bn_act_kernel(%arg0: i32, %arg1: memref<512x128xf32, #tpu.memory_space<vmem>>, %arg2: memref<1x128xf32, #tpu.memory_space<vmem>>, %arg3: memref<1x128xf32, #tpu.memory_space<vmem>>, %arg4: memref<1x128xf32, #tpu.memory_space<vmem>>, %arg5: memref<1x128xf32, #tpu.memory_space<vmem>>, %arg6: memref<512x128xbf16, #tpu.memory_space<vmem>>) attributes {dimension_semantics = [#tpu.dimension_semantics<parallel>], iteration_bounds = array<i64: 1>, scalar_prefetch = 0 : i64, scratch_operands = 0 : i64, tpu.core_type = #tpu.core_type<tc>, window_params = [{transform_indices = @transform_0, window_bounds = array<i64: 512, 128>}, {pipeline_mode = #tpu.pipeline_mode<synchronous>, transform_indices = @transform_1, window_bounds = array<i64: 1, 128>}, {pipeline_mode = #tpu.pipeline_mode<synchronous>, transform_indices = @transform_2, window_bounds = array<i64: 1, 128>}, {pipeline_mode = #tpu.pipeline_mode<synchronous>, transform_indices = @transform_3, window_bounds = array<i64: 1, 128>}, {pipeline_mode = #tpu.pipeline_mode<synchronous>, transform_indices = @transform_4, window_bounds = array<i64: 1, 128>}, {transform_indices = @transform_5, window_bounds = array<i64: 512, 128>}]} {
    %c0 = arith.constant 0 : index
    %c0_0 = arith.constant 0 : index
    %0 = vector.load %arg1[%c0, %c0_0] : memref<512x128xf32, #tpu.memory_space<vmem>>, vector<512x128xf32>
    %c0_1 = arith.constant 0 : index
    %c0_2 = arith.constant 0 : index
    %1 = vector.load %arg3[%c0_1, %c0_2] : memref<1x128xf32, #tpu.memory_space<vmem>>, vector<1x128xf32>
    %cst = arith.constant 9.99999974E-6 : f32
    %2 = vector.broadcast %cst : f32 to vector<1x128xf32>
    %3 = arith.addf %1, %2 : vector<1x128xf32>
    %4 = math.rsqrt %3 : vector<1x128xf32>
    %c0_3 = arith.constant 0 : index
    %c0_4 = arith.constant 0 : index
    %5 = vector.load %arg4[%c0_3, %c0_4] : memref<1x128xf32, #tpu.memory_space<vmem>>, vector<1x128xf32>
    %6 = arith.mulf %4, %5 : vector<1x128xf32>
    %c0_5 = arith.constant 0 : index
    %c0_6 = arith.constant 0 : index
    %7 = vector.load %arg2[%c0_5, %c0_6] : memref<1x128xf32, #tpu.memory_space<vmem>>, vector<1x128xf32>
    %8 = vector.broadcast %7 : vector<1x128xf32> to vector<512x128xf32>
    %9 = arith.subf %0, %8 : vector<512x128xf32>
    %10 = vector.broadcast %6 : vector<1x128xf32> to vector<512x128xf32>
    %11 = arith.mulf %9, %10 : vector<512x128xf32>
    %c0_7 = arith.constant 0 : index
    %c0_8 = arith.constant 0 : index
    %12 = vector.load %arg5[%c0_7, %c0_8] : memref<1x128xf32, #tpu.memory_space<vmem>>, vector<1x128xf32>
    %13 = vector.broadcast %12 : vector<1x128xf32> to vector<512x128xf32>
    %14 = arith.addf %11, %13 : vector<512x128xf32>
    %cst_9 = arith.constant 0.000000e+00 : f32
    %15 = vector.broadcast %cst_9 : f32 to vector<512x128xf32>
    %16 = arith.maximumf %14, %15 : vector<512x128xf32>
    %17 = arith.truncf %16 : vector<512x128xf32> to vector<512x128xbf16>
    %c0_10 = arith.constant 0 : index
    %c0_11 = arith.constant 0 : index
    %18 = vector.load %arg6[%c0_10, %c0_11] : memref<512x128xbf16, #tpu.memory_space<vmem>>, vector<512x128xbf16>
    tpu.vector_store %arg6[%c0_10, %c0_11], %17 {strides = array<i32>} : memref<512x128xbf16, #tpu.memory_space<vmem>>, vector<512x128xbf16>,
    return
  }
  func.func @transform_0(%arg0: i32) -> (i32, i32) {
    %c0_i32 = arith.constant 0 : i32
    %c0_i32_0 = arith.constant 0 : i32
    return %arg0, %c0_i32 : i32, i32
  }
  func.func @transform_1(%arg0: i32) -> (i32, i32) {
    %c0_i32 = arith.constant 0 : i32
    %c0_i32_0 = arith.constant 0 : i32
    %c0_i32_1 = arith.constant 0 : i32
    return %c0_i32, %c0_i32_0 : i32, i32
  }
  func.func @transform_2(%arg0: i32) -> (i32, i32) {
    %c0_i32 = arith.constant 0 : i32
    %c0_i32_0 = arith.constant 0 : i32
    %c0_i32_1 = arith.constant 0 : i32
    return %c0_i32, %c0_i32_0 : i32, i32
  }
  func.func @transform_3(%arg0: i32) -> (i32, i32) {
    %c0_i32 = arith.constant 0 : i32
    %c0_i32_0 = arith.constant 0 : i32
    %c0_i32_1 = arith.constant 0 : i32
    return %c0_i32, %c0_i32_0 : i32, i32
  }
  func.func @transform_4(%arg0: i32) -> (i32, i32) {
    %c0_i32 = arith.constant 0 : i32
    %c0_i32_0 = arith.constant 0 : i32
    %c0_i32_1 = arith.constant 0 : i32
    return %c0_i32, %c0_i32_0 : i32, i32
  }
  func.func @transform_5(%arg0: i32) -> (i32, i32) {
    %c0_i32 = arith.constant 0 : i32
    %c0_i32_0 = arith.constant 0 : i32
    return %arg0, %c0_i32 : i32, i32
  }
}

module attributes {stable_mosaic.version = 11 : i64} {
  func.func @_matmul_stats_kernel(%arg0: i32, %arg1: memref<128x256xbf16, #tpu.memory_space<vmem>>, %arg2: memref<256x128xbf16, #tpu.memory_space<vmem>>, %arg3: memref<128x128xf32, #tpu.memory_space<vmem>>, %arg4: memref<1x128xf32, #tpu.memory_space<vmem>>, %arg5: memref<1x128xf32, #tpu.memory_space<vmem>>, %arg6: memref<1x128xf32, #tpu.memory_space<vmem>>, %arg7: memref<1x128xf32, #tpu.memory_space<vmem>>) attributes {dimension_semantics = [#tpu.dimension_semantics<arbitrary>], iteration_bounds = array<i64: 1>, scalar_prefetch = 0 : i64, scratch_operands = 2 : i64, tpu.core_type = #tpu.core_type<tc>, window_params = [{transform_indices = @transform_0, window_bounds = array<i64: 128, 256>}, {pipeline_mode = #tpu.pipeline_mode<synchronous>, transform_indices = @transform_1, window_bounds = array<i64: 256, 128>}, {transform_indices = @transform_2, window_bounds = array<i64: 128, 128>}, {pipeline_mode = #tpu.pipeline_mode<synchronous>, transform_indices = @transform_3, window_bounds = array<i64: 1, 128>}, {pipeline_mode = #tpu.pipeline_mode<synchronous>, transform_indices = @transform_4, window_bounds = array<i64: 1, 128>}]} {
    %c0 = arith.constant 0 : index
    %c0_0 = arith.constant 0 : index
    %0 = vector.load %arg1[%c0, %c0_0] : memref<128x256xbf16, #tpu.memory_space<vmem>>, vector<128x256xbf16>
    %c0_1 = arith.constant 0 : index
    %c0_2 = arith.constant 0 : index
    %1 = vector.load %arg2[%c0_1, %c0_2] : memref<256x128xbf16, #tpu.memory_space<vmem>>, vector<256x128xbf16>
    %cst = arith.constant dense<0.000000e+00> : vector<128x128xf32>
    %2 = tpu.matmul %0, %1, %cst {dimension_numbers = #tpu.dot_dimension_numbers<[1], [0], [0], [1], [0, 0, 1, 1], [], []>} : vector<128x256xbf16>, vector<256x128xbf16>, vector<128x128xf32> -> vector<128x128xf32>
    %c0_3 = arith.constant 0 : index
    %c0_4 = arith.constant 0 : index
    %3 = vector.load %arg3[%c0_3, %c0_4] : memref<128x128xf32, #tpu.memory_space<vmem>>, vector<128x128xf32>
    tpu.vector_store %arg3[%c0_3, %c0_4], %2 {strides = array<i32>} : memref<128x128xf32, #tpu.memory_space<vmem>>, vector<128x128xf32>,
    %c0_i32 = arith.constant 0 : i32
    %4 = arith.cmpi eq, %arg0, %c0_i32 : i32
    %5 = arith.extui %4 : i1 to i32
    %c0_i32_5 = arith.constant 0 : i32
    %6 = arith.cmpi ne, %5, %c0_i32_5 : i32
    scf.if %6 {
      %cst_18 = arith.constant 0.000000e+00 : f32
      %21 = vector.broadcast %cst_18 : f32 to vector<1x128xf32>
      %c0_19 = arith.constant 0 : index
      %c0_20 = arith.constant 0 : index
      %22 = vector.load %arg6[%c0_19, %c0_20] : memref<1x128xf32, #tpu.memory_space<vmem>>, vector<1x128xf32>
      tpu.vector_store %arg6[%c0_19, %c0_20], %21 {strides = array<i32>} : memref<1x128xf32, #tpu.memory_space<vmem>>, vector<1x128xf32>,
      %cst_21 = arith.constant 0.000000e+00 : f32
      %23 = vector.broadcast %cst_21 : f32 to vector<1x128xf32>
      %c0_22 = arith.constant 0 : index
      %c0_23 = arith.constant 0 : index
      %24 = vector.load %arg7[%c0_22, %c0_23] : memref<1x128xf32, #tpu.memory_space<vmem>>, vector<1x128xf32>
      tpu.vector_store %arg7[%c0_22, %c0_23], %23 {strides = array<i32>} : memref<1x128xf32, #tpu.memory_space<vmem>>, vector<1x128xf32>,
    } else {
    }
    %c0_6 = arith.constant 0 : index
    %c0_7 = arith.constant 0 : index
    %7 = vector.load %arg6[%c0_6, %c0_7] : memref<1x128xf32, #tpu.memory_space<vmem>>, vector<1x128xf32>
    %cst_8 = arith.constant dense<0.000000e+00> : vector<128xf32>
    %8 = vector.multi_reduction <add>, %2, %cst_8 [0] : vector<128x128xf32> to vector<128xf32>
    %9 = vector.shape_cast %8 : vector<128xf32> to vector<1x128xf32>
    %10 = arith.addf %7, %9 : vector<1x128xf32>
    %c0_9 = arith.constant 0 : index
    %c0_10 = arith.constant 0 : index
    %11 = vector.load %arg6[%c0_9, %c0_10] : memref<1x128xf32, #tpu.memory_space<vmem>>, vector<1x128xf32>
    tpu.vector_store %arg6[%c0_9, %c0_10], %10 {strides = array<i32>} : memref<1x128xf32, #tpu.memory_space<vmem>>, vector<1x128xf32>,
    %c0_11 = arith.constant 0 : index
    %c0_12 = arith.constant 0 : index
    %12 = vector.load %arg7[%c0_11, %c0_12] : memref<1x128xf32, #tpu.memory_space<vmem>>, vector<1x128xf32>
    %13 = arith.mulf %2, %2 : vector<128x128xf32>
    %cst_13 = arith.constant dense<0.000000e+00> : vector<128xf32>
    %14 = vector.multi_reduction <add>, %13, %cst_13 [0] : vector<128x128xf32> to vector<128xf32>
    %15 = vector.shape_cast %14 : vector<128xf32> to vector<1x128xf32>
    %16 = arith.addf %12, %15 : vector<1x128xf32>
    %c0_14 = arith.constant 0 : index
    %c0_15 = arith.constant 0 : index
    %17 = vector.load %arg7[%c0_14, %c0_15] : memref<1x128xf32, #tpu.memory_space<vmem>>, vector<1x128xf32>
    tpu.vector_store %arg7[%c0_14, %c0_15], %16 {strides = array<i32>} : memref<1x128xf32, #tpu.memory_space<vmem>>, vector<1x128xf32>,
    %c0_i32_16 = arith.constant 0 : i32
    %18 = arith.cmpi eq, %arg0, %c0_i32_16 : i32
    %19 = arith.extui %18 : i1 to i32
    %c0_i32_17 = arith.constant 0 : i32
    %20 = arith.cmpi ne, %19, %c0_i32_17 : i32
    scf.if %20 {
      %c0_18 = arith.constant 0 : index
      %c0_19 = arith.constant 0 : index
      %21 = vector.load %arg6[%c0_18, %c0_19] : memref<1x128xf32, #tpu.memory_space<vmem>>, vector<1x128xf32>
      %cst_20 = arith.constant 7.812500e-03 : f32
      %22 = vector.broadcast %cst_20 : f32 to vector<1x128xf32>
      %23 = arith.mulf %21, %22 : vector<1x128xf32>
      %c0_21 = arith.constant 0 : index
      %c0_22 = arith.constant 0 : index
      %24 = vector.load %arg4[%c0_21, %c0_22] : memref<1x128xf32, #tpu.memory_space<vmem>>, vector<1x128xf32>
      tpu.vector_store %arg4[%c0_21, %c0_22], %23 {strides = array<i32>} : memref<1x128xf32, #tpu.memory_space<vmem>>, vector<1x128xf32>,
      %c0_23 = arith.constant 0 : index
      %c0_24 = arith.constant 0 : index
      %25 = vector.load %arg7[%c0_23, %c0_24] : memref<1x128xf32, #tpu.memory_space<vmem>>, vector<1x128xf32>
      %cst_25 = arith.constant 7.812500e-03 : f32
      %26 = vector.broadcast %cst_25 : f32 to vector<1x128xf32>
      %27 = arith.mulf %25, %26 : vector<1x128xf32>
      %28 = arith.mulf %23, %23 : vector<1x128xf32>
      %29 = arith.subf %27, %28 : vector<1x128xf32>
      %cst_26 = arith.constant 0.000000e+00 : f32
      %30 = vector.broadcast %cst_26 : f32 to vector<1x128xf32>
      %31 = arith.maximumf %29, %30 : vector<1x128xf32>
      %c0_27 = arith.constant 0 : index
      %c0_28 = arith.constant 0 : index
      %32 = vector.load %arg5[%c0_27, %c0_28] : memref<1x128xf32, #tpu.memory_space<vmem>>, vector<1x128xf32>
      tpu.vector_store %arg5[%c0_27, %c0_28], %31 {strides = array<i32>} : memref<1x128xf32, #tpu.memory_space<vmem>>, vector<1x128xf32>,
    } else {
    }
    return
  }
  func.func @transform_0(%arg0: i32) -> (i32, i32) {
    %c0_i32 = arith.constant 0 : i32
    %c0_i32_0 = arith.constant 0 : i32
    return %arg0, %c0_i32 : i32, i32
  }
  func.func @transform_1(%arg0: i32) -> (i32, i32) {
    %c0_i32 = arith.constant 0 : i32
    %c0_i32_0 = arith.constant 0 : i32
    %c0_i32_1 = arith.constant 0 : i32
    return %c0_i32, %c0_i32_0 : i32, i32
  }
  func.func @transform_2(%arg0: i32) -> (i32, i32) {
    %c0_i32 = arith.constant 0 : i32
    %c0_i32_0 = arith.constant 0 : i32
    return %arg0, %c0_i32 : i32, i32
  }
  func.func @transform_3(%arg0: i32) -> (i32, i32) {
    %c0_i32 = arith.constant 0 : i32
    %c0_i32_0 = arith.constant 0 : i32
    %c0_i32_1 = arith.constant 0 : i32
    return %c0_i32, %c0_i32_0 : i32, i32
  }
  func.func @transform_4(%arg0: i32) -> (i32, i32) {
    %c0_i32 = arith.constant 0 : i32
    %c0_i32_0 = arith.constant 0 : i32
    %c0_i32_1 = arith.constant 0 : i32
    return %c0_i32, %c0_i32_0 : i32, i32
  }
}

module attributes {stable_mosaic.version = 11 : i64} {
  func.func @_bn_act_kernel(%arg0: i32, %arg1: memref<128x128xf32, #tpu.memory_space<vmem>>, %arg2: memref<1x128xf32, #tpu.memory_space<vmem>>, %arg3: memref<1x128xf32, #tpu.memory_space<vmem>>, %arg4: memref<1x128xf32, #tpu.memory_space<vmem>>, %arg5: memref<1x128xf32, #tpu.memory_space<vmem>>, %arg6: memref<128x128xbf16, #tpu.memory_space<vmem>>) attributes {dimension_semantics = [#tpu.dimension_semantics<parallel>], iteration_bounds = array<i64: 1>, scalar_prefetch = 0 : i64, scratch_operands = 0 : i64, tpu.core_type = #tpu.core_type<tc>, window_params = [{transform_indices = @transform_0, window_bounds = array<i64: 128, 128>}, {pipeline_mode = #tpu.pipeline_mode<synchronous>, transform_indices = @transform_1, window_bounds = array<i64: 1, 128>}, {pipeline_mode = #tpu.pipeline_mode<synchronous>, transform_indices = @transform_2, window_bounds = array<i64: 1, 128>}, {pipeline_mode = #tpu.pipeline_mode<synchronous>, transform_indices = @transform_3, window_bounds = array<i64: 1, 128>}, {pipeline_mode = #tpu.pipeline_mode<synchronous>, transform_indices = @transform_4, window_bounds = array<i64: 1, 128>}, {transform_indices = @transform_5, window_bounds = array<i64: 128, 128>}]} {
    %c0 = arith.constant 0 : index
    %c0_0 = arith.constant 0 : index
    %0 = vector.load %arg1[%c0, %c0_0] : memref<128x128xf32, #tpu.memory_space<vmem>>, vector<128x128xf32>
    %c0_1 = arith.constant 0 : index
    %c0_2 = arith.constant 0 : index
    %1 = vector.load %arg3[%c0_1, %c0_2] : memref<1x128xf32, #tpu.memory_space<vmem>>, vector<1x128xf32>
    %cst = arith.constant 9.99999974E-6 : f32
    %2 = vector.broadcast %cst : f32 to vector<1x128xf32>
    %3 = arith.addf %1, %2 : vector<1x128xf32>
    %4 = math.rsqrt %3 : vector<1x128xf32>
    %c0_3 = arith.constant 0 : index
    %c0_4 = arith.constant 0 : index
    %5 = vector.load %arg4[%c0_3, %c0_4] : memref<1x128xf32, #tpu.memory_space<vmem>>, vector<1x128xf32>
    %6 = arith.mulf %4, %5 : vector<1x128xf32>
    %c0_5 = arith.constant 0 : index
    %c0_6 = arith.constant 0 : index
    %7 = vector.load %arg2[%c0_5, %c0_6] : memref<1x128xf32, #tpu.memory_space<vmem>>, vector<1x128xf32>
    %8 = vector.broadcast %7 : vector<1x128xf32> to vector<128x128xf32>
    %9 = arith.subf %0, %8 : vector<128x128xf32>
    %10 = vector.broadcast %6 : vector<1x128xf32> to vector<128x128xf32>
    %11 = arith.mulf %9, %10 : vector<128x128xf32>
    %c0_7 = arith.constant 0 : index
    %c0_8 = arith.constant 0 : index
    %12 = vector.load %arg5[%c0_7, %c0_8] : memref<1x128xf32, #tpu.memory_space<vmem>>, vector<1x128xf32>
    %13 = vector.broadcast %12 : vector<1x128xf32> to vector<128x128xf32>
    %14 = arith.addf %11, %13 : vector<128x128xf32>
    %cst_9 = arith.constant 0.000000e+00 : f32
    %15 = vector.broadcast %cst_9 : f32 to vector<128x128xf32>
    %16 = arith.maximumf %14, %15 : vector<128x128xf32>
    %17 = arith.truncf %16 : vector<128x128xf32> to vector<128x128xbf16>
    %c0_10 = arith.constant 0 : index
    %c0_11 = arith.constant 0 : index
    %18 = vector.load %arg6[%c0_10, %c0_11] : memref<128x128xbf16, #tpu.memory_space<vmem>>, vector<128x128xbf16>
    tpu.vector_store %arg6[%c0_10, %c0_11], %17 {strides = array<i32>} : memref<128x128xbf16, #tpu.memory_space<vmem>>, vector<128x128xbf16>,
    return
  }
  func.func @transform_0(%arg0: i32) -> (i32, i32) {
    %c0_i32 = arith.constant 0 : i32
    %c0_i32_0 = arith.constant 0 : i32
    return %arg0, %c0_i32 : i32, i32
  }
  func.func @transform_1(%arg0: i32) -> (i32, i32) {
    %c0_i32 = arith.constant 0 : i32
    %c0_i32_0 = arith.constant 0 : i32
    %c0_i32_1 = arith.constant 0 : i32
    return %c0_i32, %c0_i32_0 : i32, i32
  }
  func.func @transform_2(%arg0: i32) -> (i32, i32) {
    %c0_i32 = arith.constant 0 : i32
    %c0_i32_0 = arith.constant 0 : i32
    %c0_i32_1 = arith.constant 0 : i32
    return %c0_i32, %c0_i32_0 : i32, i32
  }
  func.func @transform_3(%arg0: i32) -> (i32, i32) {
    %c0_i32 = arith.constant 0 : i32
    %c0_i32_0 = arith.constant 0 : i32
    %c0_i32_1 = arith.constant 0 : i32
    return %c0_i32, %c0_i32_0 : i32, i32
  }
  func.func @transform_4(%arg0: i32) -> (i32, i32) {
    %c0_i32 = arith.constant 0 : i32
    %c0_i32_0 = arith.constant 0 : i32
    %c0_i32_1 = arith.constant 0 : i32
    return %c0_i32, %c0_i32_0 : i32, i32
  }
  func.func @transform_5(%arg0: i32) -> (i32, i32) {
    %c0_i32 = arith.constant 0 : i32
    %c0_i32_0 = arith.constant 0 : i32
    return %arg0, %c0_i32 : i32, i32
  }
}

module attributes {stable_mosaic.version = 11 : i64} {
  func.func @_matmul_stats_kernel(%arg0: i32, %arg1: memref<128x384xbf16, #tpu.memory_space<vmem>>, %arg2: memref<384x128xbf16, #tpu.memory_space<vmem>>, %arg3: memref<128x128xf32, #tpu.memory_space<vmem>>, %arg4: memref<1x128xf32, #tpu.memory_space<vmem>>, %arg5: memref<1x128xf32, #tpu.memory_space<vmem>>, %arg6: memref<1x128xf32, #tpu.memory_space<vmem>>, %arg7: memref<1x128xf32, #tpu.memory_space<vmem>>) attributes {dimension_semantics = [#tpu.dimension_semantics<arbitrary>], iteration_bounds = array<i64: 1>, scalar_prefetch = 0 : i64, scratch_operands = 2 : i64, tpu.core_type = #tpu.core_type<tc>, window_params = [{transform_indices = @transform_0, window_bounds = array<i64: 128, 384>}, {pipeline_mode = #tpu.pipeline_mode<synchronous>, transform_indices = @transform_1, window_bounds = array<i64: 384, 128>}, {transform_indices = @transform_2, window_bounds = array<i64: 128, 128>}, {pipeline_mode = #tpu.pipeline_mode<synchronous>, transform_indices = @transform_3, window_bounds = array<i64: 1, 128>}, {pipeline_mode = #tpu.pipeline_mode<synchronous>, transform_indices = @transform_4, window_bounds = array<i64: 1, 128>}]} {
    %c0 = arith.constant 0 : index
    %c0_0 = arith.constant 0 : index
    %0 = vector.load %arg1[%c0, %c0_0] : memref<128x384xbf16, #tpu.memory_space<vmem>>, vector<128x384xbf16>
    %c0_1 = arith.constant 0 : index
    %c0_2 = arith.constant 0 : index
    %1 = vector.load %arg2[%c0_1, %c0_2] : memref<384x128xbf16, #tpu.memory_space<vmem>>, vector<384x128xbf16>
    %cst = arith.constant dense<0.000000e+00> : vector<128x128xf32>
    %2 = tpu.matmul %0, %1, %cst {dimension_numbers = #tpu.dot_dimension_numbers<[1], [0], [0], [1], [0, 0, 1, 1], [], []>} : vector<128x384xbf16>, vector<384x128xbf16>, vector<128x128xf32> -> vector<128x128xf32>
    %c0_3 = arith.constant 0 : index
    %c0_4 = arith.constant 0 : index
    %3 = vector.load %arg3[%c0_3, %c0_4] : memref<128x128xf32, #tpu.memory_space<vmem>>, vector<128x128xf32>
    tpu.vector_store %arg3[%c0_3, %c0_4], %2 {strides = array<i32>} : memref<128x128xf32, #tpu.memory_space<vmem>>, vector<128x128xf32>,
    %c0_i32 = arith.constant 0 : i32
    %4 = arith.cmpi eq, %arg0, %c0_i32 : i32
    %5 = arith.extui %4 : i1 to i32
    %c0_i32_5 = arith.constant 0 : i32
    %6 = arith.cmpi ne, %5, %c0_i32_5 : i32
    scf.if %6 {
      %cst_18 = arith.constant 0.000000e+00 : f32
      %21 = vector.broadcast %cst_18 : f32 to vector<1x128xf32>
      %c0_19 = arith.constant 0 : index
      %c0_20 = arith.constant 0 : index
      %22 = vector.load %arg6[%c0_19, %c0_20] : memref<1x128xf32, #tpu.memory_space<vmem>>, vector<1x128xf32>
      tpu.vector_store %arg6[%c0_19, %c0_20], %21 {strides = array<i32>} : memref<1x128xf32, #tpu.memory_space<vmem>>, vector<1x128xf32>,
      %cst_21 = arith.constant 0.000000e+00 : f32
      %23 = vector.broadcast %cst_21 : f32 to vector<1x128xf32>
      %c0_22 = arith.constant 0 : index
      %c0_23 = arith.constant 0 : index
      %24 = vector.load %arg7[%c0_22, %c0_23] : memref<1x128xf32, #tpu.memory_space<vmem>>, vector<1x128xf32>
      tpu.vector_store %arg7[%c0_22, %c0_23], %23 {strides = array<i32>} : memref<1x128xf32, #tpu.memory_space<vmem>>, vector<1x128xf32>,
    } else {
    }
    %c0_6 = arith.constant 0 : index
    %c0_7 = arith.constant 0 : index
    %7 = vector.load %arg6[%c0_6, %c0_7] : memref<1x128xf32, #tpu.memory_space<vmem>>, vector<1x128xf32>
    %cst_8 = arith.constant dense<0.000000e+00> : vector<128xf32>
    %8 = vector.multi_reduction <add>, %2, %cst_8 [0] : vector<128x128xf32> to vector<128xf32>
    %9 = vector.shape_cast %8 : vector<128xf32> to vector<1x128xf32>
    %10 = arith.addf %7, %9 : vector<1x128xf32>
    %c0_9 = arith.constant 0 : index
    %c0_10 = arith.constant 0 : index
    %11 = vector.load %arg6[%c0_9, %c0_10] : memref<1x128xf32, #tpu.memory_space<vmem>>, vector<1x128xf32>
    tpu.vector_store %arg6[%c0_9, %c0_10], %10 {strides = array<i32>} : memref<1x128xf32, #tpu.memory_space<vmem>>, vector<1x128xf32>,
    %c0_11 = arith.constant 0 : index
    %c0_12 = arith.constant 0 : index
    %12 = vector.load %arg7[%c0_11, %c0_12] : memref<1x128xf32, #tpu.memory_space<vmem>>, vector<1x128xf32>
    %13 = arith.mulf %2, %2 : vector<128x128xf32>
    %cst_13 = arith.constant dense<0.000000e+00> : vector<128xf32>
    %14 = vector.multi_reduction <add>, %13, %cst_13 [0] : vector<128x128xf32> to vector<128xf32>
    %15 = vector.shape_cast %14 : vector<128xf32> to vector<1x128xf32>
    %16 = arith.addf %12, %15 : vector<1x128xf32>
    %c0_14 = arith.constant 0 : index
    %c0_15 = arith.constant 0 : index
    %17 = vector.load %arg7[%c0_14, %c0_15] : memref<1x128xf32, #tpu.memory_space<vmem>>, vector<1x128xf32>
    tpu.vector_store %arg7[%c0_14, %c0_15], %16 {strides = array<i32>} : memref<1x128xf32, #tpu.memory_space<vmem>>, vector<1x128xf32>,
    %c0_i32_16 = arith.constant 0 : i32
    %18 = arith.cmpi eq, %arg0, %c0_i32_16 : i32
    %19 = arith.extui %18 : i1 to i32
    %c0_i32_17 = arith.constant 0 : i32
    %20 = arith.cmpi ne, %19, %c0_i32_17 : i32
    scf.if %20 {
      %c0_18 = arith.constant 0 : index
      %c0_19 = arith.constant 0 : index
      %21 = vector.load %arg6[%c0_18, %c0_19] : memref<1x128xf32, #tpu.memory_space<vmem>>, vector<1x128xf32>
      %cst_20 = arith.constant 7.812500e-03 : f32
      %22 = vector.broadcast %cst_20 : f32 to vector<1x128xf32>
      %23 = arith.mulf %21, %22 : vector<1x128xf32>
      %c0_21 = arith.constant 0 : index
      %c0_22 = arith.constant 0 : index
      %24 = vector.load %arg4[%c0_21, %c0_22] : memref<1x128xf32, #tpu.memory_space<vmem>>, vector<1x128xf32>
      tpu.vector_store %arg4[%c0_21, %c0_22], %23 {strides = array<i32>} : memref<1x128xf32, #tpu.memory_space<vmem>>, vector<1x128xf32>,
      %c0_23 = arith.constant 0 : index
      %c0_24 = arith.constant 0 : index
      %25 = vector.load %arg7[%c0_23, %c0_24] : memref<1x128xf32, #tpu.memory_space<vmem>>, vector<1x128xf32>
      %cst_25 = arith.constant 7.812500e-03 : f32
      %26 = vector.broadcast %cst_25 : f32 to vector<1x128xf32>
      %27 = arith.mulf %25, %26 : vector<1x128xf32>
      %28 = arith.mulf %23, %23 : vector<1x128xf32>
      %29 = arith.subf %27, %28 : vector<1x128xf32>
      %cst_26 = arith.constant 0.000000e+00 : f32
      %30 = vector.broadcast %cst_26 : f32 to vector<1x128xf32>
      %31 = arith.maximumf %29, %30 : vector<1x128xf32>
      %c0_27 = arith.constant 0 : index
      %c0_28 = arith.constant 0 : index
      %32 = vector.load %arg5[%c0_27, %c0_28] : memref<1x128xf32, #tpu.memory_space<vmem>>, vector<1x128xf32>
      tpu.vector_store %arg5[%c0_27, %c0_28], %31 {strides = array<i32>} : memref<1x128xf32, #tpu.memory_space<vmem>>, vector<1x128xf32>,
    } else {
    }
    return
  }
  func.func @transform_0(%arg0: i32) -> (i32, i32) {
    %c0_i32 = arith.constant 0 : i32
    %c0_i32_0 = arith.constant 0 : i32
    return %arg0, %c0_i32 : i32, i32
  }
  func.func @transform_1(%arg0: i32) -> (i32, i32) {
    %c0_i32 = arith.constant 0 : i32
    %c0_i32_0 = arith.constant 0 : i32
    %c0_i32_1 = arith.constant 0 : i32
    return %c0_i32, %c0_i32_0 : i32, i32
  }
  func.func @transform_2(%arg0: i32) -> (i32, i32) {
    %c0_i32 = arith.constant 0 : i32
    %c0_i32_0 = arith.constant 0 : i32
    return %arg0, %c0_i32 : i32, i32
  }
  func.func @transform_3(%arg0: i32) -> (i32, i32) {
    %c0_i32 = arith.constant 0 : i32
    %c0_i32_0 = arith.constant 0 : i32
    %c0_i32_1 = arith.constant 0 : i32
    return %c0_i32, %c0_i32_0 : i32, i32
  }
  func.func @transform_4(%arg0: i32) -> (i32, i32) {
    %c0_i32 = arith.constant 0 : i32
    %c0_i32_0 = arith.constant 0 : i32
    %c0_i32_1 = arith.constant 0 : i32
    return %c0_i32, %c0_i32_0 : i32, i32
  }
}

module attributes {stable_mosaic.version = 11 : i64} {
  func.func @_bn_act_kernel(%arg0: i32, %arg1: memref<128x128xf32, #tpu.memory_space<vmem>>, %arg2: memref<1x128xf32, #tpu.memory_space<vmem>>, %arg3: memref<1x128xf32, #tpu.memory_space<vmem>>, %arg4: memref<1x128xf32, #tpu.memory_space<vmem>>, %arg5: memref<1x128xf32, #tpu.memory_space<vmem>>, %arg6: memref<128x128xbf16, #tpu.memory_space<vmem>>, %arg7: memref<128x128xbf16, #tpu.memory_space<vmem>>) attributes {dimension_semantics = [#tpu.dimension_semantics<parallel>], iteration_bounds = array<i64: 1>, scalar_prefetch = 0 : i64, scratch_operands = 0 : i64, tpu.core_type = #tpu.core_type<tc>, window_params = [{transform_indices = @transform_0, window_bounds = array<i64: 128, 128>}, {pipeline_mode = #tpu.pipeline_mode<synchronous>, transform_indices = @transform_1, window_bounds = array<i64: 1, 128>}, {pipeline_mode = #tpu.pipeline_mode<synchronous>, transform_indices = @transform_2, window_bounds = array<i64: 1, 128>}, {pipeline_mode = #tpu.pipeline_mode<synchronous>, transform_indices = @transform_3, window_bounds = array<i64: 1, 128>}, {pipeline_mode = #tpu.pipeline_mode<synchronous>, transform_indices = @transform_4, window_bounds = array<i64: 1, 128>}, {transform_indices = @transform_5, window_bounds = array<i64: 128, 128>}, {transform_indices = @transform_6, window_bounds = array<i64: 128, 128>}]} {
    %c0 = arith.constant 0 : index
    %c0_0 = arith.constant 0 : index
    %0 = vector.load %arg1[%c0, %c0_0] : memref<128x128xf32, #tpu.memory_space<vmem>>, vector<128x128xf32>
    %c0_1 = arith.constant 0 : index
    %c0_2 = arith.constant 0 : index
    %1 = vector.load %arg3[%c0_1, %c0_2] : memref<1x128xf32, #tpu.memory_space<vmem>>, vector<1x128xf32>
    %cst = arith.constant 9.99999974E-6 : f32
    %2 = vector.broadcast %cst : f32 to vector<1x128xf32>
    %3 = arith.addf %1, %2 : vector<1x128xf32>
    %4 = math.rsqrt %3 : vector<1x128xf32>
    %c0_3 = arith.constant 0 : index
    %c0_4 = arith.constant 0 : index
    %5 = vector.load %arg4[%c0_3, %c0_4] : memref<1x128xf32, #tpu.memory_space<vmem>>, vector<1x128xf32>
    %6 = arith.mulf %4, %5 : vector<1x128xf32>
    %c0_5 = arith.constant 0 : index
    %c0_6 = arith.constant 0 : index
    %7 = vector.load %arg2[%c0_5, %c0_6] : memref<1x128xf32, #tpu.memory_space<vmem>>, vector<1x128xf32>
    %8 = vector.broadcast %7 : vector<1x128xf32> to vector<128x128xf32>
    %9 = arith.subf %0, %8 : vector<128x128xf32>
    %10 = vector.broadcast %6 : vector<1x128xf32> to vector<128x128xf32>
    %11 = arith.mulf %9, %10 : vector<128x128xf32>
    %c0_7 = arith.constant 0 : index
    %c0_8 = arith.constant 0 : index
    %12 = vector.load %arg5[%c0_7, %c0_8] : memref<1x128xf32, #tpu.memory_space<vmem>>, vector<1x128xf32>
    %13 = vector.broadcast %12 : vector<1x128xf32> to vector<128x128xf32>
    %14 = arith.addf %11, %13 : vector<128x128xf32>
    %c0_9 = arith.constant 0 : index
    %c0_10 = arith.constant 0 : index
    %15 = vector.load %arg6[%c0_9, %c0_10] : memref<128x128xbf16, #tpu.memory_space<vmem>>, vector<128x128xbf16>
    %16 = arith.extf %15 : vector<128x128xbf16> to vector<128x128xf32>
    %17 = arith.addf %14, %16 : vector<128x128xf32>
    %18 = arith.truncf %17 : vector<128x128xf32> to vector<128x128xbf16>
    %c0_11 = arith.constant 0 : index
    %c0_12 = arith.constant 0 : index
    %19 = vector.load %arg7[%c0_11, %c0_12] : memref<128x128xbf16, #tpu.memory_space<vmem>>, vector<128x128xbf16>
    tpu.vector_store %arg7[%c0_11, %c0_12], %18 {strides = array<i32>} : memref<128x128xbf16, #tpu.memory_space<vmem>>, vector<128x128xbf16>,
    return
  }
  func.func @transform_0(%arg0: i32) -> (i32, i32) {
    %c0_i32 = arith.constant 0 : i32
    %c0_i32_0 = arith.constant 0 : i32
    return %arg0, %c0_i32 : i32, i32
  }
  func.func @transform_1(%arg0: i32) -> (i32, i32) {
    %c0_i32 = arith.constant 0 : i32
    %c0_i32_0 = arith.constant 0 : i32
    %c0_i32_1 = arith.constant 0 : i32
    return %c0_i32, %c0_i32_0 : i32, i32
  }
  func.func @transform_2(%arg0: i32) -> (i32, i32) {
    %c0_i32 = arith.constant 0 : i32
    %c0_i32_0 = arith.constant 0 : i32
    %c0_i32_1 = arith.constant 0 : i32
    return %c0_i32, %c0_i32_0 : i32, i32
  }
  func.func @transform_3(%arg0: i32) -> (i32, i32) {
    %c0_i32 = arith.constant 0 : i32
    %c0_i32_0 = arith.constant 0 : i32
    %c0_i32_1 = arith.constant 0 : i32
    return %c0_i32, %c0_i32_0 : i32, i32
  }
  func.func @transform_4(%arg0: i32) -> (i32, i32) {
    %c0_i32 = arith.constant 0 : i32
    %c0_i32_0 = arith.constant 0 : i32
    %c0_i32_1 = arith.constant 0 : i32
    return %c0_i32, %c0_i32_0 : i32, i32
  }
  func.func @transform_5(%arg0: i32) -> (i32, i32) {
    %c0_i32 = arith.constant 0 : i32
    %c0_i32_0 = arith.constant 0 : i32
    return %arg0, %c0_i32 : i32, i32
  }
  func.func @transform_6(%arg0: i32) -> (i32, i32) {
    %c0_i32 = arith.constant 0 : i32
    %c0_i32_0 = arith.constant 0 : i32
    return %arg0, %c0_i32 : i32, i32
  }
}

module attributes {stable_mosaic.version = 11 : i64} {
  func.func @_matmul_stats_kernel(%arg0: i32, %arg1: memref<512x512xbf16, #tpu.memory_space<vmem>>, %arg2: memref<512x128xbf16, #tpu.memory_space<vmem>>, %arg3: memref<512x128xf32, #tpu.memory_space<vmem>>, %arg4: memref<1x128xf32, #tpu.memory_space<vmem>>, %arg5: memref<1x128xf32, #tpu.memory_space<vmem>>, %arg6: memref<1x128xf32, #tpu.memory_space<vmem>>, %arg7: memref<1x128xf32, #tpu.memory_space<vmem>>) attributes {dimension_semantics = [#tpu.dimension_semantics<arbitrary>], iteration_bounds = array<i64: 1>, scalar_prefetch = 0 : i64, scratch_operands = 2 : i64, tpu.core_type = #tpu.core_type<tc>, window_params = [{transform_indices = @transform_0, window_bounds = array<i64: 512, 512>}, {pipeline_mode = #tpu.pipeline_mode<synchronous>, transform_indices = @transform_1, window_bounds = array<i64: 512, 128>}, {transform_indices = @transform_2, window_bounds = array<i64: 512, 128>}, {pipeline_mode = #tpu.pipeline_mode<synchronous>, transform_indices = @transform_3, window_bounds = array<i64: 1, 128>}, {pipeline_mode = #tpu.pipeline_mode<synchronous>, transform_indices = @transform_4, window_bounds = array<i64: 1, 128>}]} {
    %c0 = arith.constant 0 : index
    %c0_0 = arith.constant 0 : index
    %0 = vector.load %arg1[%c0, %c0_0] : memref<512x512xbf16, #tpu.memory_space<vmem>>, vector<512x512xbf16>
    %c0_1 = arith.constant 0 : index
    %c0_2 = arith.constant 0 : index
    %1 = vector.load %arg2[%c0_1, %c0_2] : memref<512x128xbf16, #tpu.memory_space<vmem>>, vector<512x128xbf16>
    %cst = arith.constant dense<0.000000e+00> : vector<512x128xf32>
    %2 = tpu.matmul %0, %1, %cst {dimension_numbers = #tpu.dot_dimension_numbers<[1], [0], [0], [1], [0, 0, 1, 1], [], []>} : vector<512x512xbf16>, vector<512x128xbf16>, vector<512x128xf32> -> vector<512x128xf32>
    %c0_3 = arith.constant 0 : index
    %c0_4 = arith.constant 0 : index
    %3 = vector.load %arg3[%c0_3, %c0_4] : memref<512x128xf32, #tpu.memory_space<vmem>>, vector<512x128xf32>
    tpu.vector_store %arg3[%c0_3, %c0_4], %2 {strides = array<i32>} : memref<512x128xf32, #tpu.memory_space<vmem>>, vector<512x128xf32>,
    %c0_i32 = arith.constant 0 : i32
    %4 = arith.cmpi eq, %arg0, %c0_i32 : i32
    %5 = arith.extui %4 : i1 to i32
    %c0_i32_5 = arith.constant 0 : i32
    %6 = arith.cmpi ne, %5, %c0_i32_5 : i32
    scf.if %6 {
      %cst_18 = arith.constant 0.000000e+00 : f32
      %21 = vector.broadcast %cst_18 : f32 to vector<1x128xf32>
      %c0_19 = arith.constant 0 : index
      %c0_20 = arith.constant 0 : index
      %22 = vector.load %arg6[%c0_19, %c0_20] : memref<1x128xf32, #tpu.memory_space<vmem>>, vector<1x128xf32>
      tpu.vector_store %arg6[%c0_19, %c0_20], %21 {strides = array<i32>} : memref<1x128xf32, #tpu.memory_space<vmem>>, vector<1x128xf32>,
      %cst_21 = arith.constant 0.000000e+00 : f32
      %23 = vector.broadcast %cst_21 : f32 to vector<1x128xf32>
      %c0_22 = arith.constant 0 : index
      %c0_23 = arith.constant 0 : index
      %24 = vector.load %arg7[%c0_22, %c0_23] : memref<1x128xf32, #tpu.memory_space<vmem>>, vector<1x128xf32>
      tpu.vector_store %arg7[%c0_22, %c0_23], %23 {strides = array<i32>} : memref<1x128xf32, #tpu.memory_space<vmem>>, vector<1x128xf32>,
    } else {
    }
    %c0_6 = arith.constant 0 : index
    %c0_7 = arith.constant 0 : index
    %7 = vector.load %arg6[%c0_6, %c0_7] : memref<1x128xf32, #tpu.memory_space<vmem>>, vector<1x128xf32>
    %cst_8 = arith.constant dense<0.000000e+00> : vector<128xf32>
    %8 = vector.multi_reduction <add>, %2, %cst_8 [0] : vector<512x128xf32> to vector<128xf32>
    %9 = vector.shape_cast %8 : vector<128xf32> to vector<1x128xf32>
    %10 = arith.addf %7, %9 : vector<1x128xf32>
    %c0_9 = arith.constant 0 : index
    %c0_10 = arith.constant 0 : index
    %11 = vector.load %arg6[%c0_9, %c0_10] : memref<1x128xf32, #tpu.memory_space<vmem>>, vector<1x128xf32>
    tpu.vector_store %arg6[%c0_9, %c0_10], %10 {strides = array<i32>} : memref<1x128xf32, #tpu.memory_space<vmem>>, vector<1x128xf32>,
    %c0_11 = arith.constant 0 : index
    %c0_12 = arith.constant 0 : index
    %12 = vector.load %arg7[%c0_11, %c0_12] : memref<1x128xf32, #tpu.memory_space<vmem>>, vector<1x128xf32>
    %13 = arith.mulf %2, %2 : vector<512x128xf32>
    %cst_13 = arith.constant dense<0.000000e+00> : vector<128xf32>
    %14 = vector.multi_reduction <add>, %13, %cst_13 [0] : vector<512x128xf32> to vector<128xf32>
    %15 = vector.shape_cast %14 : vector<128xf32> to vector<1x128xf32>
    %16 = arith.addf %12, %15 : vector<1x128xf32>
    %c0_14 = arith.constant 0 : index
    %c0_15 = arith.constant 0 : index
    %17 = vector.load %arg7[%c0_14, %c0_15] : memref<1x128xf32, #tpu.memory_space<vmem>>, vector<1x128xf32>
    tpu.vector_store %arg7[%c0_14, %c0_15], %16 {strides = array<i32>} : memref<1x128xf32, #tpu.memory_space<vmem>>, vector<1x128xf32>,
    %c0_i32_16 = arith.constant 0 : i32
    %18 = arith.cmpi eq, %arg0, %c0_i32_16 : i32
    %19 = arith.extui %18 : i1 to i32
    %c0_i32_17 = arith.constant 0 : i32
    %20 = arith.cmpi ne, %19, %c0_i32_17 : i32
    scf.if %20 {
      %c0_18 = arith.constant 0 : index
      %c0_19 = arith.constant 0 : index
      %21 = vector.load %arg6[%c0_18, %c0_19] : memref<1x128xf32, #tpu.memory_space<vmem>>, vector<1x128xf32>
      %cst_20 = arith.constant 0.001953125 : f32
      %22 = vector.broadcast %cst_20 : f32 to vector<1x128xf32>
      %23 = arith.mulf %21, %22 : vector<1x128xf32>
      %c0_21 = arith.constant 0 : index
      %c0_22 = arith.constant 0 : index
      %24 = vector.load %arg4[%c0_21, %c0_22] : memref<1x128xf32, #tpu.memory_space<vmem>>, vector<1x128xf32>
      tpu.vector_store %arg4[%c0_21, %c0_22], %23 {strides = array<i32>} : memref<1x128xf32, #tpu.memory_space<vmem>>, vector<1x128xf32>,
      %c0_23 = arith.constant 0 : index
      %c0_24 = arith.constant 0 : index
      %25 = vector.load %arg7[%c0_23, %c0_24] : memref<1x128xf32, #tpu.memory_space<vmem>>, vector<1x128xf32>
      %cst_25 = arith.constant 0.001953125 : f32
      %26 = vector.broadcast %cst_25 : f32 to vector<1x128xf32>
      %27 = arith.mulf %25, %26 : vector<1x128xf32>
      %28 = arith.mulf %23, %23 : vector<1x128xf32>
      %29 = arith.subf %27, %28 : vector<1x128xf32>
      %cst_26 = arith.constant 0.000000e+00 : f32
      %30 = vector.broadcast %cst_26 : f32 to vector<1x128xf32>
      %31 = arith.maximumf %29, %30 : vector<1x128xf32>
      %c0_27 = arith.constant 0 : index
      %c0_28 = arith.constant 0 : index
      %32 = vector.load %arg5[%c0_27, %c0_28] : memref<1x128xf32, #tpu.memory_space<vmem>>, vector<1x128xf32>
      tpu.vector_store %arg5[%c0_27, %c0_28], %31 {strides = array<i32>} : memref<1x128xf32, #tpu.memory_space<vmem>>, vector<1x128xf32>,
    } else {
    }
    return
  }
  func.func @transform_0(%arg0: i32) -> (i32, i32) {
    %c0_i32 = arith.constant 0 : i32
    %c0_i32_0 = arith.constant 0 : i32
    return %arg0, %c0_i32 : i32, i32
  }
  func.func @transform_1(%arg0: i32) -> (i32, i32) {
    %c0_i32 = arith.constant 0 : i32
    %c0_i32_0 = arith.constant 0 : i32
    %c0_i32_1 = arith.constant 0 : i32
    return %c0_i32, %c0_i32_0 : i32, i32
  }
  func.func @transform_2(%arg0: i32) -> (i32, i32) {
    %c0_i32 = arith.constant 0 : i32
    %c0_i32_0 = arith.constant 0 : i32
    return %arg0, %c0_i32 : i32, i32
  }
  func.func @transform_3(%arg0: i32) -> (i32, i32) {
    %c0_i32 = arith.constant 0 : i32
    %c0_i32_0 = arith.constant 0 : i32
    %c0_i32_1 = arith.constant 0 : i32
    return %c0_i32, %c0_i32_0 : i32, i32
  }
  func.func @transform_4(%arg0: i32) -> (i32, i32) {
    %c0_i32 = arith.constant 0 : i32
    %c0_i32_0 = arith.constant 0 : i32
    %c0_i32_1 = arith.constant 0 : i32
    return %c0_i32, %c0_i32_0 : i32, i32
  }
}

module attributes {stable_mosaic.version = 11 : i64} {
  func.func @_matmul_act_kernel(%arg0: i32, %arg1: memref<1024x512xbf16, #tpu.memory_space<vmem>>, %arg2: memref<512x128xbf16, #tpu.memory_space<vmem>>, %arg3: memref<1024x128xf32, #tpu.memory_space<vmem>>) attributes {dimension_semantics = [#tpu.dimension_semantics<parallel>], iteration_bounds = array<i64: 2>, scalar_prefetch = 0 : i64, scratch_operands = 0 : i64, tpu.core_type = #tpu.core_type<tc>, window_params = [{transform_indices = @transform_0, window_bounds = array<i64: 1024, 512>}, {pipeline_mode = #tpu.pipeline_mode<synchronous>, transform_indices = @transform_1, window_bounds = array<i64: 512, 128>}, {transform_indices = @transform_2, window_bounds = array<i64: 1024, 128>}]} {
    %c0 = arith.constant 0 : index
    %c0_0 = arith.constant 0 : index
    %0 = vector.load %arg1[%c0, %c0_0] : memref<1024x512xbf16, #tpu.memory_space<vmem>>, vector<1024x512xbf16>
    %c0_1 = arith.constant 0 : index
    %c0_2 = arith.constant 0 : index
    %1 = vector.load %arg2[%c0_1, %c0_2] : memref<512x128xbf16, #tpu.memory_space<vmem>>, vector<512x128xbf16>
    %cst = arith.constant dense<0.000000e+00> : vector<1024x128xf32>
    %2 = tpu.matmul %0, %1, %cst {dimension_numbers = #tpu.dot_dimension_numbers<[1], [0], [0], [1], [0, 0, 1, 1], [], []>} : vector<1024x512xbf16>, vector<512x128xbf16>, vector<1024x128xf32> -> vector<1024x128xf32>
    %3 = math.tanh %2 : vector<1024x128xf32>
    %c0_3 = arith.constant 0 : index
    %c0_4 = arith.constant 0 : index
    %4 = vector.load %arg3[%c0_3, %c0_4] : memref<1024x128xf32, #tpu.memory_space<vmem>>, vector<1024x128xf32>
    tpu.vector_store %arg3[%c0_3, %c0_4], %3 {strides = array<i32>} : memref<1024x128xf32, #tpu.memory_space<vmem>>, vector<1024x128xf32>,
    return
  }
  func.func @transform_0(%arg0: i32) -> (i32, i32) {
    %c0_i32 = arith.constant 0 : i32
    %c0_i32_0 = arith.constant 0 : i32
    return %arg0, %c0_i32 : i32, i32
  }
  func.func @transform_1(%arg0: i32) -> (i32, i32) {
    %c0_i32 = arith.constant 0 : i32
    %c0_i32_0 = arith.constant 0 : i32
    %c0_i32_1 = arith.constant 0 : i32
    return %c0_i32, %c0_i32_0 : i32, i32
  }
  func.func @transform_2(%arg0: i32) -> (i32, i32) {
    %c0_i32 = arith.constant 0 : i32
    %c0_i32_0 = arith.constant 0 : i32
    return %arg0, %c0_i32 : i32, i32
  }
}

</mosaic_0001>

<llo_original>
// kernel: resnet_forward.20
$region0: #{resnet_forward.20}
  #allocation0 [shape = 'u32[]', space=smem, size = 0x4, offset = 0x4, fixed_abs, tag = 'smem constant byte address 0x4 - core index']
  #allocation1 [shape = 'u32[144,128]{1,0:T(1,128)}', space=vmem, size = 0x12000, scoped, tag = 'internal scratch']
  %s0 = inlined_call_operand.vmem [shape: f32[2048,128], index: 0, kind: input, shape index: {}]
  %s1 = inlined_call_operand.vmem [shape: f32[1,128], index: 1, kind: input, shape index: {}]
  %s2 = inlined_call_operand.vmem [shape: f32[1,128], index: 2, kind: input, shape index: {}]
  %s3 = inlined_call_operand.vmem [shape: f32[1,128], index: 3, kind: input, shape index: {}]
  %s4 = inlined_call_operand.vmem [shape: f32[1,128], index: 4, kind: input, shape index: {}]
  %s5 = inlined_call_operand.vmem [shape: bf16[2048,128], index: 5, kind: output, shape index: {}]
  %s6 = sld [smem:[#allocation0]]
  $region53: #{resnet_forward.20} parent=0
    _
  %s8 = ssub.s32 1, %s6
  %s9 = scalar_select 0, %s8, %s6
  loop: start=0, step=1, limit=4
  $region2: #{resnet_forward.20} parent=0 // loop_pre_header
    _
  $region3: #{resnet_forward.20} parent=0 // loop_header
    %s11 = sphi 0, %s15
    %p12 = scmp.ge.s32.totalorder %s11, 4
    %s21 = sphi 0, %s23
    %s24 = sphi 0, %s21
    %s25 = sphi 0, %s24
    %s41 = sphi 0, %s25
    %s45 = sphi 0, %s45
    %s47 = sphi 0, %s45
    %s48 = sphi 0, %s47
    %s62 = sphi 0, %s48
    %s66 = sphi 0, %s66
    %s68 = sphi 0, %s66
    %s69 = sphi 0, %s68
    %s83 = sphi 0, %s69
    %s87 = sphi 0, %s87
    %s89 = sphi 0, %s87
    %s90 = sphi 0, %s89
    %s104 = sphi 0, %s90
    %s108 = sphi 0, %s108
    %s110 = sphi 0, %s108
    %s111 = sphi 0, %s110
    %s125 = sphi 0, %s111
    %s131 = sphi 0, %s133
    %s134 = sphi 0, %s131
    %s135 = sphi 0, %s134
    %s151 = sphi 0, %s135
  $region4: #{resnet_forward.20} parent=0 // loop_header_branch
    %14 = sbr.rel (%p12) target = $region8
  $region5: #{resnet_forward.20} parent=0 // loop_body
    %s16 = ssub.s32 %s11, 1
    %s17 = ssub.s32 %s11, 2
    %s18 = sadd.s32 %s11, 1
    %s19 = ssub.s32 %s11, %s18
    %p20 = scmp.eq.s32.totalorder %s19, 0
    %s22 = sadd.s32 %s21, 1
    %s23 = scalar_select %p20, %s21, %s22
    %p26 = pneg %p20
    %p27 = scmp.eq.s32.totalorder %s11, 1
    %p28 = por %p26, %p27
    %p29 = scmp.ne.s32.totalorder %s21, %s24
    %p30 = scmp.eq.s32.totalorder %s11, 0
    %p31 = por %p29, %p30
    %p32 = scmp.ne.s32.totalorder %s21, %s24
    %p33 = scmp.eq.s32.totalorder %s16, 1
    %p34 = por %p32, %p33
    %p35 = scmp.ne.s32.totalorder %s24, %s25
    %p36 = scmp.eq.s32.totalorder %s16, 0
    %p37 = por %p35, %p36
    %p38 = scmp.ne.s32.totalorder %s24, %s25
    %p39 = scmp.eq.s32.totalorder %s17, 1
    %p40 = por %p38, %p39
    %p42 = scmp.ne.s32.totalorder %s25, %s41
    %p43 = scmp.eq.s32.totalorder %s17, 0
    %p44 = por %p42, %p43
    %s46 = sadd.s32 %s45, 1
    %p49 = scmp.eq.s32.totalorder %s11, 1
    %p50 = scmp.ne.s32.totalorder %s45, %s47
    %p51 = scmp.eq.s32.totalorder %s11, 0
    %p52 = por %p50, %p51
    %p53 = scmp.ne.s32.totalorder %s45, %s47
    %p54 = scmp.eq.s32.totalorder %s16, 1
    %p55 = por %p53, %p54
    %p56 = scmp.ne.s32.totalorder %s47, %s48
    %p57 = scmp.eq.s32.totalorder %s16, 0
    %p58 = por %p56, %p57
    %p59 = scmp.ne.s32.totalorder %s47, %s48
    %p60 = scmp.eq.s32.totalorder %s17, 1
    %p61 = por %p59, %p60
    %p63 = scmp.ne.s32.totalorder %s48, %s62
    %p64 = scmp.eq.s32.totalorder %s17, 0
    %p65 = por %p63, %p64
    %s67 = sadd.s32 %s66, 1
    %p70 = scmp.eq.s32.totalorder %s11, 1
    %p71 = scmp.ne.s32.totalorder %s66, %s68
    %p72 = scmp.eq.s32.totalorder %s11, 0
    %p73 = por %p71, %p72
    %p74 = scmp.ne.s32.totalorder %s66, %s68
    %p75 = scmp.eq.s32.totalorder %s16, 1
    %p76 = por %p74, %p75
    %p77 = scmp.ne.s32.totalorder %s68, %s69
    %p78 = scmp.eq.s32.totalorder %s16, 0
    %p79 = por %p77, %p78
    %p80 = scmp.ne.s32.totalorder %s68, %s69
    %p81 = scmp.eq.s32.totalorder %s17, 1
    %p82 = por %p80, %p81
    %p84 = scmp.ne.s32.totalorder %s69, %s83
    %p85 = scmp.eq.s32.totalorder %s17, 0
    %p86 = por %p84, %p85
    %s88 = sadd.s32 %s87, 1
    %p91 = scmp.eq.s32.totalorder %s11, 1
    %p92 = scmp.ne.s32.totalorder %s87, %s89
    %p93 = scmp.eq.s32.totalorder %s11, 0
    %p94 = por %p92, %p93
    %p95 = scmp.ne.s32.totalorder %s87, %s89
    %p96 = scmp.eq.s32.totalorder %s16, 1
    %p97 = por %p95, %p96
    %p98 = scmp.ne.s32.totalorder %s89, %s90
    %p99 = scmp.eq.s32.totalorder %s16, 0
    %p100 = por %p98, %p99
    %p101 = scmp.ne.s32.totalorder %s89, %s90
    %p102 = scmp.eq.s32.totalorder %s17, 1
    %p103 = por %p101, %p102
    %p105 = scmp.ne.s32.totalorder %s90, %s104
    %p106 = scmp.eq.s32.totalorder %s17, 0
    %p107 = por %p105, %p106
    %s109 = sadd.s32 %s108, 1
    %p112 = scmp.eq.s32.totalorder %s11, 1
    %p113 = scmp.ne.s32.totalorder %s108, %s110
    %p114 = scmp.eq.s32.totalorder %s11, 0
    %p115 = por %p113, %p114
    %p116 = scmp.ne.s32.totalorder %s108, %s110
    %p117 = scmp.eq.s32.totalorder %s16, 1
    %p118 = por %p116, %p117
    %p119 = scmp.ne.s32.totalorder %s110, %s111
    %p120 = scmp.eq.s32.totalorder %s16, 0
    %p121 = por %p119, %p120
    %p122 = scmp.ne.s32.totalorder %s110, %s111
    %p123 = scmp.eq.s32.totalorder %s17, 1
    %p124 = por %p122, %p123
    %p126 = scmp.ne.s32.totalorder %s111, %s125
    %p127 = scmp.eq.s32.totalorder %s17, 0
    %p128 = por %p126, %p127
    %s129 = ssub.s32 %s11, %s18
    %p130 = scmp.eq.s32.totalorder %s129, 0
    %s132 = sadd.s32 %s131, 1
    %s133 = scalar_select %p130, %s131, %s132
    %p136 = pneg %p130
    %p137 = scmp.eq.s32.totalorder %s11, 1
    %p138 = por %p136, %p137
    %p139 = scmp.ne.s32.totalorder %s131, %s134
    %p140 = scmp.eq.s32.totalorder %s11, 0
    %p141 = por %p139, %p140
    %p142 = scmp.ne.s32.totalorder %s131, %s134
    %p143 = scmp.eq.s32.totalorder %s16, 1
    %p144 = por %p142, %p143
    %p145 = scmp.ne.s32.totalorder %s134, %s135
    %p146 = scmp.eq.s32.totalorder %s16, 0
    %p147 = por %p145, %p146
    %p148 = scmp.ne.s32.totalorder %s134, %s135
    %p149 = scmp.eq.s32.totalorder %s17, 1
    %p150 = por %p148, %p149
    %p152 = scmp.ne.s32.totalorder %s135, %s151
    %p153 = scmp.eq.s32.totalorder %s17, 0
    %p154 = por %p152, %p153
    %p155 = scmp.le.s32.totalorder 1, %s11
    %p156 = scmp.lt.s32.totalorder %s11, 3
    %p157 = pnand %p155, %p156
    %p158 = pneg %p157
    // Predicated region
    $region9: #{resnet_forward.20} parent=5 // pred_check
      _
    $region10: #{resnet_forward.20} parent=5 // pred_check_branch
      %160 = sbr.rel (%p157) target = $region12
    $region11: #{resnet_forward.20} parent=5 // pred_region
      %s161 = ssub.s32 %s11, 1
      // Predicated region
      $region13: #{resnet_forward.20} parent=11 // pred_check
        %p162 = pneg %p58
      $region14: #{resnet_forward.20} parent=11 // pred_check_branch
        %164 = sbr.rel (%p162) target = $region16
      $region15: #{resnet_forward.20} parent=11 // pred_region
        _
      $region16: #{resnet_forward.20} parent=11 // pred_fallthru
        _
      // Predicated region
      $region17: #{resnet_forward.20} parent=11 // pred_check
        %p165 = pneg %p79
      $region18: #{resnet_forward.20} parent=11 // pred_check_branch
        %167 = sbr.rel (%p165) target = $region20
      $region19: #{resnet_forward.20} parent=11 // pred_region
        _
      $region20: #{resnet_forward.20} parent=11 // pred_fallthru
        _
      // Predicated region
      $region21: #{resnet_forward.20} parent=11 // pred_check
        %p168 = pneg %p100
      $region22: #{resnet_forward.20} parent=11 // pred_check_branch
        %170 = sbr.rel (%p168) target = $region24
      $region23: #{resnet_forward.20} parent=11 // pred_region
        _
      $region24: #{resnet_forward.20} parent=11 // pred_fallthru
        _
      // Predicated region
      $region25: #{resnet_forward.20} parent=11 // pred_check
        %p171 = pneg %p121
      $region26: #{resnet_forward.20} parent=11 // pred_check_branch
        %173 = sbr.rel (%p171) target = $region28
      $region27: #{resnet_forward.20} parent=11 // pred_region
        _
      $region28: #{resnet_forward.20} parent=11 // pred_fallthru
        _
    $region12: #{resnet_forward.20} parent=5 // pred_fallthru
      _
    %p174 = scmp.lt.s32.totalorder %s11, 2
    // Predicated region
    $region29: #{resnet_forward.20} parent=5 // pred_check
      %p175 = pneg %p174
    $region30: #{resnet_forward.20} parent=5 // pred_check_branch
      %177 = sbr.rel (%p175) target = $region32
    $region31: #{resnet_forward.20} parent=5 // pred_region
      // Predicated region
      $region33: #{resnet_forward.20} parent=31 // pred_check
        %p178 = pneg %p31
      $region34: #{resnet_forward.20} parent=31 // pred_check_branch
        %180 = sbr.rel (%p178) target = $region36
      $region35: #{resnet_forward.20} parent=31 // pred_region
        %s181 = smul.u32 128, %s11
        %p182 = scmp.lt.s32.totalorder %s181, 255
        %s183 = scalar_select %p182, %s181, 255
        %s184 = smul.addr %s183, 8
        %s185 = scalar_lea.vmem %s0, %s184
        %s186 = smul.u32 128, %s11
      $region36: #{resnet_forward.20} parent=31 // pred_fallthru
        _
    $region32: #{resnet_forward.20} parent=5 // pred_fallthru
      _
    %p187 = scmp.le.s32.totalorder 1, %s11
    %p188 = scmp.lt.s32.totalorder %s11, 3
    %p189 = pnand %p187, %p188
    %p190 = pneg %p189
    // Predicated region
    $region37: #{resnet_forward.20} parent=5 // pred_check
      _
    $region38: #{resnet_forward.20} parent=5 // pred_check_branch
      %192 = sbr.rel (%p189) target = $region40
    $region39: #{resnet_forward.20} parent=5 // pred_region
      %s193 = ssub.s32 %s11, 1
      %s194 = smul.u32 128, %s16
      %p195 = scmp.lt.s32.totalorder %s194, 255
      %s196 = scalar_select %p195, %s194, 255
      %s197 = smul.addr %s196, 8
      %s198 = scalar_lea.vmem %s0, %s197
      %p199 = pneg %p37
      %p200 = pneg %p34
      %p201 = pneg %p58
      %p202 = pneg %p55
      %p203 = pneg %p79
      %p204 = pneg %p76
      %p205 = pneg %p100
      %p206 = pneg %p97
      %p207 = pneg %p121
      %p208 = pneg %p118
      %p209 = pneg %p147
      %p210 = pneg %p144
      %s211 = smul.u32 128, %s16
      %p212 = scmp.lt.s32.totalorder %s211, 255
      %s213 = scalar_select %p212, %s211, 255
      %s214 = smul.addr %s213, 4
      %s215 = scalar_lea.vmem %s5, %s214
      %s216 = smul.u32 128, %s16
      %p217 = scmp.lt.s32.totalorder %s216, 255
      %s218 = scalar_select %p217, %s216, 255
      %s219 = smul.addr %s218, 8
      %s220 = scalar_lea.vmem %s0, %s219
      %s221 = smul.u32 128, %s16
      %s222 = smul.u32 128, %s16
      %p223 = scmp.lt.s32.totalorder %s222, 255
      %s224 = scalar_select %p223, %s222, 255
      %s225 = smul.addr %s224, 4
      %s226 = scalar_lea.vmem %s5, %s225
      %s227 = smul.u32 128, %s16
      %v228 = vld [vmem:[%s220] sm:$0xff]
      %v229 = vld [vmem:[%s220 + $0x8] sm:$0xff]
      %v230 = vld [vmem:[%s220 + $0x10] sm:$0xff]
      %v231 = vld [vmem:[%s220 + $0x18] sm:$0xff]
      %v232 = vld [vmem:[%s220 + $0x20] sm:$0xff]
      %v233 = vld [vmem:[%s220 + $0x28] sm:$0xff]
      %v234 = vld [vmem:[%s220 + $0x30] sm:$0xff]
      %v235 = vld [vmem:[%s220 + $0x38] sm:$0xff]
      %v236 = vld [vmem:[%s220 + $0x40] sm:$0xff]
      %v237 = vld [vmem:[%s220 + $0x48] sm:$0xff]
      %v238 = vld [vmem:[%s220 + $0x50] sm:$0xff]
      %v239 = vld [vmem:[%s220 + $0x58] sm:$0xff]
      %v240 = vld [vmem:[%s220 + $0x60] sm:$0xff]
      %v241 = vld [vmem:[%s220 + $0x68] sm:$0xff]
      %v242 = vld [vmem:[%s220 + $0x70] sm:$0xff]
      %v243 = vld [vmem:[%s220 + $0x78] sm:$0xff]
      %v244 = vld [vmem:[%s220 + $0x80] sm:$0xff]
      %v245 = vld [vmem:[%s220 + $0x88] sm:$0xff]
      %v246 = vld [vmem:[%s220 + $0x90] sm:$0xff]
      %v247 = vld [vmem:[%s220 + $0x98] sm:$0xff]
      %v248 = vld [vmem:[%s220 + $0xa0] sm:$0xff]
      %v249 = vld [vmem:[%s220 + $0xa8] sm:$0xff]
      %v250 = vld [vmem:[%s220 + $0xb0] sm:$0xff]
      %v251 = vld [vmem:[%s220 + $0xb8] sm:$0xff]
      %v252 = vld [vmem:[%s220 + $0xc0] sm:$0xff]
      %v253 = vld [vmem:[%s220 + $0xc8] sm:$0xff]
      %v254 = vld [vmem:[%s220 + $0xd0] sm:$0xff]
      %v255 = vld [vmem:[%s220 + $0xd8] sm:$0xff]
      %v256 = vld [vmem:[%s220 + $0xe0] sm:$0xff]
      %v257 = vld [vmem:[%s220 + $0xe8] sm:$0xff]
      %v258 = vld [vmem:[%s220 + $0xf0] sm:$0xff]
      %v259 = vld [vmem:[%s220 + $0xf8] sm:$0xff]
      %v260 = vld [vmem:[%s220 + $0x100] sm:$0xff]
      %v261 = vld [vmem:[%s220 + $0x108] sm:$0xff]
      %v262 = vld [vmem:[%s220 + $0x110] sm:$0xff]
      %v263 = vld [vmem:[%s220 + $0x118] sm:$0xff]
      %v264 = vld [vmem:[%s220 + $0x120] sm:$0xff]
      %v265 = vld [vmem:[%s220 + $0x128] sm:$0xff]
      %v266 = vld [vmem:[%s220 + $0x130] sm:$0xff]
      %v267 = vld [vmem:[%s220 + $0x138] sm:$0xff]
      %v268 = vld [vmem:[%s220 + $0x140] sm:$0xff]
      %v269 = vld [vmem:[%s220 + $0x148] sm:$0xff]
      %v270 = vld [vmem:[%s220 + $0x150] sm:$0xff]
      %v271 = vld [vmem:[%s220 + $0x158] sm:$0xff]
      %v272 = vld [vmem:[%s220 + $0x160] sm:$0xff]
      %v273 = vld [vmem:[%s220 + $0x168] sm:$0xff]
      %v274 = vld [vmem:[%s220 + $0x170] sm:$0xff]
      %v275 = vld [vmem:[%s220 + $0x178] sm:$0xff]
      %v276 = vld [vmem:[%s220 + $0x180] sm:$0xff]
      %v277 = vld [vmem:[%s220 + $0x188] sm:$0xff]
      %v278 = vld [vmem:[%s220 + $0x190] sm:$0xff]
      %v279 = vld [vmem:[%s220 + $0x198] sm:$0xff]
      %v280 = vld [vmem:[%s220 + $0x1a0] sm:$0xff]
      %v281 = vld [vmem:[%s220 + $0x1a8] sm:$0xff]
      %v282 = vld [vmem:[%s220 + $0x1b0] sm:$0xff]
      %v283 = vld [vmem:[%s220 + $0x1b8] sm:$0xff]
      %v284 = vld [vmem:[%s220 + $0x1c0] sm:$0xff]
      %v285 = vld [vmem:[%s220 + $0x1c8] sm:$0xff]
      %v286 = vld [vmem:[%s220 + $0x1d0] sm:$0xff]
      %v287 = vld [vmem:[%s220 + $0x1d8] sm:$0xff]
      %v288 = vld [vmem:[%s220 + $0x1e0] sm:$0xff]
      %v289 = vld [vmem:[%s220 + $0x1e8] sm:$0xff]
      %v290 = vld [vmem:[%s220 + $0x1f0] sm:$0xff]
      %v291 = vld [vmem:[%s220 + $0x1f8] sm:$0xff]
      %v292 = vld [vmem:[%s220 + $0x200] sm:$0xff]
      %v293 = vld [vmem:[%s220 + $0x208] sm:$0xff]
      %v294 = vld [vmem:[%s220 + $0x210] sm:$0xff]
      %v295 = vld [vmem:[%s220 + $0x218] sm:$0xff]
      %v296 = vld [vmem:[%s220 + $0x220] sm:$0xff]
      %v297 = vld [vmem:[%s220 + $0x228] sm:$0xff]
      %v298 = vld [vmem:[%s220 + $0x230] sm:$0xff]
      %v299 = vld [vmem:[%s220 + $0x238] sm:$0xff]
      %v300 = vld [vmem:[%s220 + $0x240] sm:$0xff]
      %v301 = vld [vmem:[%s220 + $0x248] sm:$0xff]
      %v302 = vld [vmem:[%s220 + $0x250] sm:$0xff]
      %v303 = vld [vmem:[%s220 + $0x258] sm:$0xff]
      %v304 = vld [vmem:[%s220 + $0x260] sm:$0xff]
      %v305 = vld [vmem:[%s220 + $0x268] sm:$0xff]
      %v306 = vld [vmem:[%s220 + $0x270] sm:$0xff]
      %v307 = vld [vmem:[%s220 + $0x278] sm:$0xff]
      %v308 = vld [vmem:[%s220 + $0x280] sm:$0xff]
      %v309 = vld [vmem:[%s220 + $0x288] sm:$0xff]
      %v310 = vld [vmem:[%s220 + $0x290] sm:$0xff]
      %v311 = vld [vmem:[%s220 + $0x298] sm:$0xff]
      %v312 = vld [vmem:[%s220 + $0x2a0] sm:$0xff]
      %v313 = vld [vmem:[%s220 + $0x2a8] sm:$0xff]
      %v314 = vld [vmem:[%s220 + $0x2b0] sm:$0xff]
      %v315 = vld [vmem:[%s220 + $0x2b8] sm:$0xff]
      %v316 = vld [vmem:[%s220 + $0x2c0] sm:$0xff]
      %v317 = vld [vmem:[%s220 + $0x2c8] sm:$0xff]
      %v318 = vld [vmem:[%s220 + $0x2d0] sm:$0xff]
      %v319 = vld [vmem:[%s220 + $0x2d8] sm:$0xff]
      %v320 = vld [vmem:[%s220 + $0x2e0] sm:$0xff]
      %v321 = vld [vmem:[%s220 + $0x2e8] sm:$0xff]
      %v322 = vld [vmem:[%s220 + $0x2f0] sm:$0xff]
      %v323 = vld [vmem:[%s220 + $0x2f8] sm:$0xff]
      %v324 = vld [vmem:[%s220 + $0x300] sm:$0xff]
      %v325 = vld [vmem:[%s220 + $0x308] sm:$0xff]
      %v326 = vld [vmem:[%s220 + $0x310] sm:$0xff]
      %v327 = vld [vmem:[%s220 + $0x318] sm:$0xff]
      %v328 = vld [vmem:[%s220 + $0x320] sm:$0xff]
      %v329 = vld [vmem:[%s220 + $0x328] sm:$0xff]
      %v330 = vld [vmem:[%s220 + $0x330] sm:$0xff]
      %v331 = vld [vmem:[%s220 + $0x338] sm:$0xff]
      %v332 = vld [vmem:[%s220 + $0x340] sm:$0xff]
      %v333 = vld [vmem:[%s220 + $0x348] sm:$0xff]
      %v334 = vld [vmem:[%s220 + $0x350] sm:$0xff]
      %v335 = vld [vmem:[%s220 + $0x358] sm:$0xff]
      %v336 = vld [vmem:[%s220 + $0x360] sm:$0xff]
      %v337 = vld [vmem:[%s220 + $0x368] sm:$0xff]
      %v338 = vld [vmem:[%s220 + $0x370] sm:$0xff]
      %v339 = vld [vmem:[%s220 + $0x378] sm:$0xff]
      %v340 = vld [vmem:[%s220 + $0x380] sm:$0xff]
      %v341 = vld [vmem:[%s220 + $0x388] sm:$0xff]
      %v342 = vld [vmem:[%s220 + $0x390] sm:$0xff]
      %v343 = vld [vmem:[%s220 + $0x398] sm:$0xff]
      %v344 = vld [vmem:[%s220 + $0x3a0] sm:$0xff]
      %v345 = vld [vmem:[%s220 + $0x3a8] sm:$0xff]
      %v346 = vld [vmem:[%s220 + $0x3b0] sm:$0xff]
      %v347 = vld [vmem:[%s220 + $0x3b8] sm:$0xff]
      %v348 = vld [vmem:[%s220 + $0x3c0] sm:$0xff]
      %v349 = vld [vmem:[%s220 + $0x3c8] sm:$0xff]
      %v350 = vld [vmem:[%s220 + $0x3d0] sm:$0xff]
      %v351 = vld [vmem:[%s220 + $0x3d8] sm:$0xff]
      %v352 = vld [vmem:[%s220 + $0x3e0] sm:$0xff]
      %v353 = vld [vmem:[%s220 + $0x3e8] sm:$0xff]
      %v354 = vld [vmem:[%s220 + $0x3f0] sm:$0xff]
      %v355 = vld [vmem:[%s220 + $0x3f8] sm:$0xff]
      %v356 = vld [vmem:[%s2] sm:$0x1]
      %v357 = vadd.f32 %v356, 1e-05
      %v358 = vrsqrt.pop %v357
      %v359 = vld [vmem:[%s3] sm:$0x1]
      %v360 = vmul.f32 %v358, %v359
      %v361 = vld [vmem:[%s1] sm:$0x1]
      %v363 = vlaneseq
      %v364 = vshrl.u32 %v363, 7
      %v365 = vsub.s32 0, %v364
      %v366 = vrot.slane %v361, %v365
      %v368 = vsub.f32 %v228, %v366
      %v369 = vsub.f32 %v229, %v366
      %v370 = vsub.f32 %v230, %v366
      %v371 = vsub.f32 %v231, %v366
      %v372 = vsub.f32 %v232, %v366
      %v373 = vsub.f32 %v233, %v366
      %v374 = vsub.f32 %v234, %v366
      %v375 = vsub.f32 %v235, %v366
      %v376 = vsub.f32 %v236, %v366
      %v377 = vsub.f32 %v237, %v366
      %v378 = vsub.f32 %v238, %v366
      %v379 = vsub.f32 %v239, %v366
      %v380 = vsub.f32 %v240, %v366
      %v381 = vsub.f32 %v241, %v366
      %v382 = vsub.f32 %v242, %v366
      %v383 = vsub.f32 %v243, %v366
      %v384 = vsub.f32 %v244, %v366
      %v385 = vsub.f32 %v245, %v366
      %v386 = vsub.f32 %v246, %v366
      %v387 = vsub.f32 %v247, %v366
      %v388 = vsub.f32 %v248, %v366
      %v389 = vsub.f32 %v249, %v366
      %v390 = vsub.f32 %v250, %v366
      %v391 = vsub.f32 %v251, %v366
      %v392 = vsub.f32 %v252, %v366
      %v393 = vsub.f32 %v253, %v366
      %v394 = vsub.f32 %v254, %v366
      %v395 = vsub.f32 %v255, %v366
      %v396 = vsub.f32 %v256, %v366
      %v397 = vsub.f32 %v257, %v366
      %v398 = vsub.f32 %v258, %v366
      %v399 = vsub.f32 %v259, %v366
      %v400 = vsub.f32 %v260, %v366
      %v401 = vsub.f32 %v261, %v366
      %v402 = vsub.f32 %v262, %v366
      %v403 = vsub.f32 %v263, %v366
      %v404 = vsub.f32 %v264, %v366
      %v405 = vsub.f32 %v265, %v366
      %v406 = vsub.f32 %v266, %v366
      %v407 = vsub.f32 %v267, %v366
      %v408 = vsub.f32 %v268, %v366
      %v409 = vsub.f32 %v269, %v366
      %v410 = vsub.f32 %v270, %v366
      %v411 = vsub.f32 %v271, %v366
      %v412 = vsub.f32 %v272, %v366
      %v413 = vsub.f32 %v273, %v366
      %v414 = vsub.f32 %v274, %v366
      %v415 = vsub.f32 %v275, %v366
      %v416 = vsub.f32 %v276, %v366
      %v417 = vsub.f32 %v277, %v366
      %v418 = vsub.f32 %v278, %v366
      %v419 = vsub.f32 %v279, %v366
      %v420 = vsub.f32 %v280, %v366
      %v421 = vsub.f32 %v281, %v366
      %v422 = vsub.f32 %v282, %v366
      %v423 = vsub.f32 %v283, %v366
      %v424 = vsub.f32 %v284, %v366
      %v425 = vsub.f32 %v285, %v366
      %v426 = vsub.f32 %v286, %v366
      %v427 = vsub.f32 %v287, %v366
      %v428 = vsub.f32 %v288, %v366
      %v429 = vsub.f32 %v289, %v366
      %v430 = vsub.f32 %v290, %v366
      %v431 = vsub.f32 %v291, %v366
      %v432 = vsub.f32 %v292, %v366
      %v433 = vsub.f32 %v293, %v366
      %v434 = vsub.f32 %v294, %v366
      %v435 = vsub.f32 %v295, %v366
      %v436 = vsub.f32 %v296, %v366
      %v437 = vsub.f32 %v297, %v366
      %v438 = vsub.f32 %v298, %v366
      %v439 = vsub.f32 %v299, %v366
      %v440 = vsub.f32 %v300, %v366
      %v441 = vsub.f32 %v301, %v366
      %v442 = vsub.f32 %v302, %v366
      %v443 = vsub.f32 %v303, %v366
      %v444 = vsub.f32 %v304, %v366
      %v445 = vsub.f32 %v305, %v366
      %v446 = vsub.f32 %v306, %v366
      %v447 = vsub.f32 %v307, %v366
      %v448 = vsub.f32 %v308, %v366
      %v449 = vsub.f32 %v309, %v366
      %v450 = vsub.f32 %v310, %v366
      %v451 = vsub.f32 %v311, %v366
      %v452 = vsub.f32 %v312, %v366
      %v453 = vsub.f32 %v313, %v366
      %v454 = vsub.f32 %v314, %v366
      %v455 = vsub.f32 %v315, %v366
      %v456 = vsub.f32 %v316, %v366
      %v457 = vsub.f32 %v317, %v366
      %v458 = vsub.f32 %v318, %v366
      %v459 = vsub.f32 %v319, %v366
      %v460 = vsub.f32 %v320, %v366
      %v461 = vsub.f32 %v321, %v366
      %v462 = vsub.f32 %v322, %v366
      %v463 = vsub.f32 %v323, %v366
      %v464 = vsub.f32 %v324, %v366
      %v465 = vsub.f32 %v325, %v366
      %v466 = vsub.f32 %v326, %v366
      %v467 = vsub.f32 %v327, %v366
      %v468 = vsub.f32 %v328, %v366
      %v469 = vsub.f32 %v329, %v366
      %v470 = vsub.f32 %v330, %v366
      %v471 = vsub.f32 %v331, %v366
      %v472 = vsub.f32 %v332, %v366
      %v473 = vsub.f32 %v333, %v366
      %v474 = vsub.f32 %v334, %v366
      %v475 = vsub.f32 %v335, %v366
      %v476 = vsub.f32 %v336, %v366
      %v477 = vsub.f32 %v337, %v366
      %v478 = vsub.f32 %v338, %v366
      %v479 = vsub.f32 %v339, %v366
      %v480 = vsub.f32 %v340, %v366
      %v481 = vsub.f32 %v341, %v366
      %v482 = vsub.f32 %v342, %v366
      %v483 = vsub.f32 %v343, %v366
      %v484 = vsub.f32 %v344, %v366
      %v485 = vsub.f32 %v345, %v366
      %v486 = vsub.f32 %v346, %v366
      %v487 = vsub.f32 %v347, %v366
      %v488 = vsub.f32 %v348, %v366
      %v489 = vsub.f32 %v349, %v366
      %v490 = vsub.f32 %v350, %v366
      %v491 = vsub.f32 %v351, %v366
      %v492 = vsub.f32 %v352, %v366
      %v493 = vsub.f32 %v353, %v366
      %v494 = vsub.f32 %v354, %v366
      %v495 = vsub.f32 %v355, %v366
      %v497 = vlaneseq
      %v498 = vshrl.u32 %v497, 7
      %v499 = vsub.s32 0, %v498
      %v500 = vrot.slane %v360, %v499
      %v502 = vmul.f32 %v368, %v500
      %v503 = vmul.f32 %v369, %v500
      %v504 = vmul.f32 %v370, %v500
      %v505 = vmul.f32 %v371, %v500
      %v506 = vmul.f32 %v372, %v500
      %v507 = vmul.f32 %v373, %v500
      %v508 = vmul.f32 %v374, %v500
      %v509 = vmul.f32 %v375, %v500
      %v510 = vmul.f32 %v376, %v500
      %v511 = vmul.f32 %v377, %v500
      %v512 = vmul.f32 %v378, %v500
      %v513 = vmul.f32 %v379, %v500
      %v514 = vmul.f32 %v380, %v500
      %v515 = vmul.f32 %v381, %v500
      %v516 = vmul.f32 %v382, %v500
      %v517 = vmul.f32 %v383, %v500
      %v518 = vmul.f32 %v384, %v500
      %v519 = vmul.f32 %v385, %v500
      %v520 = vmul.f32 %v386, %v500
      %v521 = vmul.f32 %v387, %v500
      %v522 = vmul.f32 %v388, %v500
      %v523 = vmul.f32 %v389, %v500
      %v524 = vmul.f32 %v390, %v500
      %v525 = vmul.f32 %v391, %v500
      %v526 = vmul.f32 %v392, %v500
      %v527 = vmul.f32 %v393, %v500
      %v528 = vmul.f32 %v394, %v500
      %v529 = vmul.f32 %v395, %v500
      %v530 = vmul.f32 %v396, %v500
      %v531 = vmul.f32 %v397, %v500
      %v532 = vmul.f32 %v398, %v500
      %v533 = vmul.f32 %v399, %v500
      %v534 = vmul.f32 %v400, %v500
      %v535 = vmul.f32 %v401, %v500
      %v536 = vmul.f32 %v402, %v500
      %v537 = vmul.f32 %v403, %v500
      %v538 = vmul.f32 %v404, %v500
      %v539 = vmul.f32 %v405, %v500
      %v540 = vmul.f32 %v406, %v500
      %v541 = vmul.f32 %v407, %v500
      %v542 = vmul.f32 %v408, %v500
      %v543 = vmul.f32 %v409, %v500
      %v544 = vmul.f32 %v410, %v500
      %v545 = vmul.f32 %v411, %v500
      %v546 = vmul.f32 %v412, %v500
      %v547 = vmul.f32 %v413, %v500
      %v548 = vmul.f32 %v414, %v500
      %v549 = vmul.f32 %v415, %v500
      %v550 = vmul.f32 %v416, %v500
      %v551 = vmul.f32 %v417, %v500
      %v552 = vmul.f32 %v418, %v500
      %v553 = vmul.f32 %v419, %v500
      %v554 = vmul.f32 %v420, %v500
      %v555 = vmul.f32 %v421, %v500
      %v556 = vmul.f32 %v422, %v500
      %v557 = vmul.f32 %v423, %v500
      %v558 = vmul.f32 %v424, %v500
      %v559 = vmul.f32 %v425, %v500
      %v560 = vmul.f32 %v426, %v500
      %v561 = vmul.f32 %v427, %v500
      %v562 = vmul.f32 %v428, %v500
      %v563 = vmul.f32 %v429, %v500
      %v564 = vmul.f32 %v430, %v500
      %v565 = vmul.f32 %v431, %v500
      %v566 = vmul.f32 %v432, %v500
      %v567 = vmul.f32 %v433, %v500
      %v568 = vmul.f32 %v434, %v500
      %v569 = vmul.f32 %v435, %v500
      %v570 = vmul.f32 %v436, %v500
      %v571 = vmul.f32 %v437, %v500
      %v572 = vmul.f32 %v438, %v500
      %v573 = vmul.f32 %v439, %v500
      %v574 = vmul.f32 %v440, %v500
      %v575 = vmul.f32 %v441, %v500
      %v576 = vmul.f32 %v442, %v500
      %v577 = vmul.f32 %v443, %v500
      %v578 = vmul.f32 %v444, %v500
      %v579 = vmul.f32 %v445, %v500
      %v580 = vmul.f32 %v446, %v500
      %v581 = vmul.f32 %v447, %v500
      %v582 = vmul.f32 %v448, %v500
      %v583 = vmul.f32 %v449, %v500
      %v584 = vmul.f32 %v450, %v500
      %v585 = vmul.f32 %v451, %v500
      %v586 = vmul.f32 %v452, %v500
      %v587 = vmul.f32 %v453, %v500
      %v588 = vmul.f32 %v454, %v500
      %v589 = vmul.f32 %v455, %v500
      %v590 = vmul.f32 %v456, %v500
      %v591 = vmul.f32 %v457, %v500
      %v592 = vmul.f32 %v458, %v500
      %v593 = vmul.f32 %v459, %v500
      %v594 = vmul.f32 %v460, %v500
      %v595 = vmul.f32 %v461, %v500
      %v596 = vmul.f32 %v462, %v500
      %v597 = vmul.f32 %v463, %v500
      %v598 = vmul.f32 %v464, %v500
      %v599 = vmul.f32 %v465, %v500
      %v600 = vmul.f32 %v466, %v500
      %v601 = vmul.f32 %v467, %v500
      %v602 = vmul.f32 %v468, %v500
      %v603 = vmul.f32 %v469, %v500
      %v604 = vmul.f32 %v470, %v500
      %v605 = vmul.f32 %v471, %v500
      %v606 = vmul.f32 %v472, %v500
      %v607 = vmul.f32 %v473, %v500
      %v608 = vmul.f32 %v474, %v500
      %v609 = vmul.f32 %v475, %v500
      %v610 = vmul.f32 %v476, %v500
      %v611 = vmul.f32 %v477, %v500
      %v612 = vmul.f32 %v478, %v500
      %v613 = vmul.f32 %v479, %v500
      %v614 = vmul.f32 %v480, %v500
      %v615 = vmul.f32 %v481, %v500
      %v616 = vmul.f32 %v482, %v500
      %v617 = vmul.f32 %v483, %v500
      %v618 = vmul.f32 %v484, %v500
      %v619 = vmul.f32 %v485, %v500
      %v620 = vmul.f32 %v486, %v500
      %v621 = vmul.f32 %v487, %v500
      %v622 = vmul.f32 %v488, %v500
      %v623 = vmul.f32 %v489, %v500
      %v624 = vmul.f32 %v490, %v500
      %v625 = vmul.f32 %v491, %v500
      %v626 = vmul.f32 %v492, %v500
      %v627 = vmul.f32 %v493, %v500
      %v628 = vmul.f32 %v494, %v500
      %v629 = vmul.f32 %v495, %v500
      %v630 = vld [vmem:[%s4] sm:$0x1]
      %v632 = vlaneseq
      %v633 = vshrl.u32 %v632, 7
      %v634 = vsub.s32 0, %v633
      %v635 = vrot.slane %v630, %v634
      %v637 = vadd.f32 %v502, %v635
      %v638 = vadd.f32 %v503, %v635
      %v639 = vadd.f32 %v504, %v635
      %v640 = vadd.f32 %v505, %v635
      %v641 = vadd.f32 %v506, %v635
      %v642 = vadd.f32 %v507, %v635
      %v643 = vadd.f32 %v508, %v635
      %v644 = vadd.f32 %v509, %v635
      %v645 = vadd.f32 %v510, %v635
      %v646 = vadd.f32 %v511, %v635
      %v647 = vadd.f32 %v512, %v635
      %v648 = vadd.f32 %v513, %v635
      %v649 = vadd.f32 %v514, %v635
      %v650 = vadd.f32 %v515, %v635
      %v651 = vadd.f32 %v516, %v635
      %v652 = vadd.f32 %v517, %v635
      %v653 = vadd.f32 %v518, %v635
      %v654 = vadd.f32 %v519, %v635
      %v655 = vadd.f32 %v520, %v635
      %v656 = vadd.f32 %v521, %v635
      %v657 = vadd.f32 %v522, %v635
      %v658 = vadd.f32 %v523, %v635
      %v659 = vadd.f32 %v524, %v635
      %v660 = vadd.f32 %v525, %v635
      %v661 = vadd.f32 %v526, %v635
      %v662 = vadd.f32 %v527, %v635
      %v663 = vadd.f32 %v528, %v635
      %v664 = vadd.f32 %v529, %v635
      %v665 = vadd.f32 %v530, %v635
      %v666 = vadd.f32 %v531, %v635
      %v667 = vadd.f32 %v532, %v635
      %v668 = vadd.f32 %v533, %v635
      %v669 = vadd.f32 %v534, %v635
      %v670 = vadd.f32 %v535, %v635
      %v671 = vadd.f32 %v536, %v635
      %v672 = vadd.f32 %v537, %v635
      %v673 = vadd.f32 %v538, %v635
      %v674 = vadd.f32 %v539, %v635
      %v675 = vadd.f32 %v540, %v635
      %v676 = vadd.f32 %v541, %v635
      %v677 = vadd.f32 %v542, %v635
      %v678 = vadd.f32 %v543, %v635
      %v679 = vadd.f32 %v544, %v635
      %v680 = vadd.f32 %v545, %v635
      %v681 = vadd.f32 %v546, %v635
      %v682 = vadd.f32 %v547, %v635
      %v683 = vadd.f32 %v548, %v635
      %v684 = vadd.f32 %v549, %v635
      %v685 = vadd.f32 %v550, %v635
      %v686 = vadd.f32 %v551, %v635
      %v687 = vadd.f32 %v552, %v635
      %v688 = vadd.f32 %v553, %v635
      %v689 = vadd.f32 %v554, %v635
      %v690 = vadd.f32 %v555, %v635
      %v691 = vadd.f32 %v556, %v635
      %v692 = vadd.f32 %v557, %v635
      %v693 = vadd.f32 %v558, %v635
      %v694 = vadd.f32 %v559, %v635
      %v695 = vadd.f32 %v560, %v635
      %v696 = vadd.f32 %v561, %v635
      %v697 = vadd.f32 %v562, %v635
      %v698 = vadd.f32 %v563, %v635
      %v699 = vadd.f32 %v564, %v635
      %v700 = vadd.f32 %v565, %v635
      %v701 = vadd.f32 %v566, %v635
      %v702 = vadd.f32 %v567, %v635
      %v703 = vadd.f32 %v568, %v635
      %v704 = vadd.f32 %v569, %v635
      %v705 = vadd.f32 %v570, %v635
      %v706 = vadd.f32 %v571, %v635
      %v707 = vadd.f32 %v572, %v635
      %v708 = vadd.f32 %v573, %v635
      %v709 = vadd.f32 %v574, %v635
      %v710 = vadd.f32 %v575, %v635
      %v711 = vadd.f32 %v576, %v635
      %v712 = vadd.f32 %v577, %v635
      %v713 = vadd.f32 %v578, %v635
      %v714 = vadd.f32 %v579, %v635
      %v715 = vadd.f32 %v580, %v635
      %v716 = vadd.f32 %v581, %v635
      %v717 = vadd.f32 %v582, %v635
      %v718 = vadd.f32 %v583, %v635
      %v719 = vadd.f32 %v584, %v635
      %v720 = vadd.f32 %v585, %v635
      %v721 = vadd.f32 %v586, %v635
      %v722 = vadd.f32 %v587, %v635
      %v723 = vadd.f32 %v588, %v635
      %v724 = vadd.f32 %v589, %v635
      %v725 = vadd.f32 %v590, %v635
      %v726 = vadd.f32 %v591, %v635
      %v727 = vadd.f32 %v592, %v635
      %v728 = vadd.f32 %v593, %v635
      %v729 = vadd.f32 %v594, %v635
      %v730 = vadd.f32 %v595, %v635
      %v731 = vadd.f32 %v596, %v635
      %v732 = vadd.f32 %v597, %v635
      %v733 = vadd.f32 %v598, %v635
      %v734 = vadd.f32 %v599, %v635
      %v735 = vadd.f32 %v600, %v635
      %v736 = vadd.f32 %v601, %v635
      %v737 = vadd.f32 %v602, %v635
      %v738 = vadd.f32 %v603, %v635
      %v739 = vadd.f32 %v604, %v635
      %v740 = vadd.f32 %v605, %v635
      %v741 = vadd.f32 %v606, %v635
      %v742 = vadd.f32 %v607, %v635
      %v743 = vadd.f32 %v608, %v635
      %v744 = vadd.f32 %v609, %v635
      %v745 = vadd.f32 %v610, %v635
      %v746 = vadd.f32 %v611, %v635
      %v747 = vadd.f32 %v612, %v635
      %v748 = vadd.f32 %v613, %v635
      %v749 = vadd.f32 %v614, %v635
      %v750 = vadd.f32 %v615, %v635
      %v751 = vadd.f32 %v616, %v635
      %v752 = vadd.f32 %v617, %v635
      %v753 = vadd.f32 %v618, %v635
      %v754 = vadd.f32 %v619, %v635
      %v755 = vadd.f32 %v620, %v635
      %v756 = vadd.f32 %v621, %v635
      %v757 = vadd.f32 %v622, %v635
      %v758 = vadd.f32 %v623, %v635
      %v759 = vadd.f32 %v624, %v635
      %v760 = vadd.f32 %v625, %v635
      %v761 = vadd.f32 %v626, %v635
      %v762 = vadd.f32 %v627, %v635
      %v763 = vadd.f32 %v628, %v635
      %v764 = vadd.f32 %v629, %v635
      %v765 = vmax.f32 %v637, 0.0
      %v766 = vmax.f32 %v638, 0.0
      %v767 = vmax.f32 %v639, 0.0
      %v768 = vmax.f32 %v640, 0.0
      %v769 = vmax.f32 %v641, 0.0
      %v770 = vmax.f32 %v642, 0.0
      %v771 = vmax.f32 %v643, 0.0
      %v772 = vmax.f32 %v644, 0.0
      %v773 = vmax.f32 %v645, 0.0
      %v774 = vmax.f32 %v646, 0.0
      %v775 = vmax.f32 %v647, 0.0
      %v776 = vmax.f32 %v648, 0.0
      %v777 = vmax.f32 %v649, 0.0
      %v778 = vmax.f32 %v650, 0.0
      %v779 = vmax.f32 %v651, 0.0
      %v780 = vmax.f32 %v652, 0.0
      %v781 = vmax.f32 %v653, 0.0
      %v782 = vmax.f32 %v654, 0.0
      %v783 = vmax.f32 %v655, 0.0
      %v784 = vmax.f32 %v656, 0.0
      %v785 = vmax.f32 %v657, 0.0
      %v786 = vmax.f32 %v658, 0.0
      %v787 = vmax.f32 %v659, 0.0
      %v788 = vmax.f32 %v660, 0.0
      %v789 = vmax.f32 %v661, 0.0
      %v790 = vmax.f32 %v662, 0.0
      %v791 = vmax.f32 %v663, 0.0
      %v792 = vmax.f32 %v664, 0.0
      %v793 = vmax.f32 %v665, 0.0
      %v794 = vmax.f32 %v666, 0.0
      %v795 = vmax.f32 %v667, 0.0
      %v796 = vmax.f32 %v668, 0.0
      %v797 = vmax.f32 %v669, 0.0
      %v798 = vmax.f32 %v670, 0.0
      %v799 = vmax.f32 %v671, 0.0
      %v800 = vmax.f32 %v672, 0.0
      %v801 = vmax.f32 %v673, 0.0
      %v802 = vmax.f32 %v674, 0.0
      %v803 = vmax.f32 %v675, 0.0
      %v804 = vmax.f32 %v676, 0.0
      %v805 = vmax.f32 %v677, 0.0
      %v806 = vmax.f32 %v678, 0.0
      %v807 = vmax.f32 %v679, 0.0
      %v808 = vmax.f32 %v680, 0.0
      %v809 = vmax.f32 %v681, 0.0
      %v810 = vmax.f32 %v682, 0.0
      %v811 = vmax.f32 %v683, 0.0
      %v812 = vmax.f32 %v684, 0.0
      %v813 = vmax.f32 %v685, 0.0
      %v814 = vmax.f32 %v686, 0.0
      %v815 = vmax.f32 %v687, 0.0
      %v816 = vmax.f32 %v688, 0.0
      %v817 = vmax.f32 %v689, 0.0
      %v818 = vmax.f32 %v690, 0.0
      %v819 = vmax.f32 %v691, 0.0
      %v820 = vmax.f32 %v692, 0.0
      %v821 = vmax.f32 %v693, 0.0
      %v822 = vmax.f32 %v694, 0.0
      %v823 = vmax.f32 %v695, 0.0
      %v824 = vmax.f32 %v696, 0.0
      %v825 = vmax.f32 %v697, 0.0
      %v826 = vmax.f32 %v698, 0.0
      %v827 = vmax.f32 %v699, 0.0
      %v828 = vmax.f32 %v700, 0.0
      %v829 = vmax.f32 %v701, 0.0
      %v830 = vmax.f32 %v702, 0.0
      %v831 = vmax.f32 %v703, 0.0
      %v832 = vmax.f32 %v704, 0.0
      %v833 = vmax.f32 %v705, 0.0
      %v834 = vmax.f32 %v706, 0.0
      %v835 = vmax.f32 %v707, 0.0
      %v836 = vmax.f32 %v708, 0.0
      %v837 = vmax.f32 %v709, 0.0
      %v838 = vmax.f32 %v710, 0.0
      %v839 = vmax.f32 %v711, 0.0
      %v840 = vmax.f32 %v712, 0.0
      %v841 = vmax.f32 %v713, 0.0
      %v842 = vmax.f32 %v714, 0.0
      %v843 = vmax.f32 %v715, 0.0
      %v844 = vmax.f32 %v716, 0.0
      %v845 = vmax.f32 %v717, 0.0
      %v846 = vmax.f32 %v718, 0.0
      %v847 = vmax.f32 %v719, 0.0
      %v848 = vmax.f32 %v720, 0.0
      %v849 = vmax.f32 %v721, 0.0
      %v850 = vmax.f32 %v722, 0.0
      %v851 = vmax.f32 %v723, 0.0
      %v852 = vmax.f32 %v724, 0.0
      %v853 = vmax.f32 %v725, 0.0
      %v854 = vmax.f32 %v726, 0.0
      %v855 = vmax.f32 %v727, 0.0
      %v856 = vmax.f32 %v728, 0.0
      %v857 = vmax.f32 %v729, 0.0
      %v858 = vmax.f32 %v730, 0.0
      %v859 = vmax.f32 %v731, 0.0
      %v860 = vmax.f32 %v732, 0.0
      %v861 = vmax.f32 %v733, 0.0
      %v862 = vmax.f32 %v734, 0.0
      %v863 = vmax.f32 %v735, 0.0
      %v864 = vmax.f32 %v736, 0.0
      %v865 = vmax.f32 %v737, 0.0
      %v866 = vmax.f32 %v738, 0.0
      %v867 = vmax.f32 %v739, 0.0
      %v868 = vmax.f32 %v740, 0.0
      %v869 = vmax.f32 %v741, 0.0
      %v870 = vmax.f32 %v742, 0.0
      %v871 = vmax.f32 %v743, 0.0
      %v872 = vmax.f32 %v744, 0.0
      %v873 = vmax.f32 %v745, 0.0
      %v874 = vmax.f32 %v746, 0.0
      %v875 = vmax.f32 %v747, 0.0
      %v876 = vmax.f32 %v748, 0.0
      %v877 = vmax.f32 %v749, 0.0
      %v878 = vmax.f32 %v750, 0.0
      %v879 = vmax.f32 %v751, 0.0
      %v880 = vmax.f32 %v752, 0.0
      %v881 = vmax.f32 %v753, 0.0
      %v882 = vmax.f32 %v754, 0.0
      %v883 = vmax.f32 %v755, 0.0
      %v884 = vmax.f32 %v756, 0.0
      %v885 = vmax.f32 %v757, 0.0
      %v886 = vmax.f32 %v758, 0.0
      %v887 = vmax.f32 %v759, 0.0
      %v888 = vmax.f32 %v760, 0.0
      %v889 = vmax.f32 %v761, 0.0
      %v890 = vmax.f32 %v762, 0.0
      %v891 = vmax.f32 %v763, 0.0
      %v892 = vmax.f32 %v764, 0.0
      %v893 = vpack.c.bf16 %v766, %v765
      %v894 = vpack.c.bf16 %v768, %v767
      %v895 = vpack.c.bf16 %v770, %v769
      %v896 = vpack.c.bf16 %v772, %v771
      %v897 = vpack.c.bf16 %v774, %v773
      %v898 = vpack.c.bf16 %v776, %v775
      %v899 = vpack.c.bf16 %v778, %v777
      %v900 = vpack.c.bf16 %v780, %v779
      %v901 = vpack.c.bf16 %v782, %v781
      %v902 = vpack.c.bf16 %v784, %v783
      %v903 = vpack.c.bf16 %v786, %v785
      %v904 = vpack.c.bf16 %v788, %v787
      %v905 = vpack.c.bf16 %v790, %v789
      %v906 = vpack.c.bf16 %v792, %v791
      %v907 = vpack.c.bf16 %v794, %v793
      %v908 = vpack.c.bf16 %v796, %v795
      %v909 = vpack.c.bf16 %v798, %v797
      %v910 = vpack.c.bf16 %v800, %v799
      %v911 = vpack.c.bf16 %v802, %v801
      %v912 = vpack.c.bf16 %v804, %v803
      %v913 = vpack.c.bf16 %v806, %v805
      %v914 = vpack.c.bf16 %v808, %v807
      %v915 = vpack.c.bf16 %v810, %v809
      %v916 = vpack.c.bf16 %v812, %v811
      %v917 = vpack.c.bf16 %v814, %v813
      %v918 = vpack.c.bf16 %v816, %v815
      %v919 = vpack.c.bf16 %v818, %v817
      %v920 = vpack.c.bf16 %v820, %v819
      %v921 = vpack.c.bf16 %v822, %v821
      %v922 = vpack.c.bf16 %v824, %v823
      %v923 = vpack.c.bf16 %v826, %v825
      %v924 = vpack.c.bf16 %v828, %v827
      %v925 = vpack.c.bf16 %v830, %v829
      %v926 = vpack.c.bf16 %v832, %v831
      %v927 = vpack.c.bf16 %v834, %v833
      %v928 = vpack.c.bf16 %v836, %v835
      %v929 = vpack.c.bf16 %v838, %v837
      %v930 = vpack.c.bf16 %v840, %v839
      %v931 = vpack.c.bf16 %v842, %v841
      %v932 = vpack.c.bf16 %v844, %v843
      %v933 = vpack.c.bf16 %v846, %v845
      %v934 = vpack.c.bf16 %v848, %v847
      %v935 = vpack.c.bf16 %v850, %v849
      %v936 = vpack.c.bf16 %v852, %v851
      %v937 = vpack.c.bf16 %v854, %v853
      %v938 = vpack.c.bf16 %v856, %v855
      %v939 = vpack.c.bf16 %v858, %v857
      %v940 = vpack.c.bf16 %v860, %v859
      %v941 = vpack.c.bf16 %v862, %v861
      %v942 = vpack.c.bf16 %v864, %v863
      %v943 = vpack.c.bf16 %v866, %v865
      %v944 = vpack.c.bf16 %v868, %v867
      %v945 = vpack.c.bf16 %v870, %v869
      %v946 = vpack.c.bf16 %v872, %v871
      %v947 = vpack.c.bf16 %v874, %v873
      %v948 = vpack.c.bf16 %v876, %v875
      %v949 = vpack.c.bf16 %v878, %v877
      %v950 = vpack.c.bf16 %v880, %v879
      %v951 = vpack.c.bf16 %v882, %v881
      %v952 = vpack.c.bf16 %v884, %v883
      %v953 = vpack.c.bf16 %v886, %v885
      %v954 = vpack.c.bf16 %v888, %v887
      %v955 = vpack.c.bf16 %v890, %v889
      %v956 = vpack.c.bf16 %v892, %v891
      %v1021 = vunpack.c.l.b16 %v893
      %v1022 = vunpack.c.h.b16 %v893
      %v1023 = vunpack.c.l.b16 %v894
      %v1024 = vunpack.c.h.b16 %v894
      %v1025 = vunpack.c.l.b16 %v895
      %v1026 = vunpack.c.h.b16 %v895
      %v1027 = vunpack.c.l.b16 %v896
      %v1028 = vunpack.c.h.b16 %v896
      %v1029 = vunpack.c.l.b16 %v897
      %v1030 = vunpack.c.h.b16 %v897
      %v1031 = vunpack.c.l.b16 %v898
      %v1032 = vunpack.c.h.b16 %v898
      %v1033 = vunpack.c.l.b16 %v899
      %v1034 = vunpack.c.h.b16 %v899
      %v1035 = vunpack.c.l.b16 %v900
      %v1036 = vunpack.c.h.b16 %v900
      %v1037 = vunpack.c.l.b16 %v901
      %v1038 = vunpack.c.h.b16 %v901
      %v1039 = vunpack.c.l.b16 %v902
      %v1040 = vunpack.c.h.b16 %v902
      %v1041 = vunpack.c.l.b16 %v903
      %v1042 = vunpack.c.h.b16 %v903
      %v1043 = vunpack.c.l.b16 %v904
      %v1044 = vunpack.c.h.b16 %v904
      %v1045 = vunpack.c.l.b16 %v905
      %v1046 = vunpack.c.h.b16 %v905
      %v1047 = vunpack.c.l.b16 %v906
      %v1048 = vunpack.c.h.b16 %v906
      %v1049 = vunpack.c.l.b16 %v907
      %v1050 = vunpack.c.h.b16 %v907
      %v1051 = vunpack.c.l.b16 %v908
      %v1052 = vunpack.c.h.b16 %v908
      %v1053 = vunpack.c.l.b16 %v909
      %v1054 = vunpack.c.h.b16 %v909
      %v1055 = vunpack.c.l.b16 %v910
      %v1056 = vunpack.c.h.b16 %v910
      %v1057 = vunpack.c.l.b16 %v911
      %v1058 = vunpack.c.h.b16 %v911
      %v1059 = vunpack.c.l.b16 %v912
      %v1060 = vunpack.c.h.b16 %v912
      %v1061 = vunpack.c.l.b16 %v913
      %v1062 = vunpack.c.h.b16 %v913
      %v1063 = vunpack.c.l.b16 %v914
      %v1064 = vunpack.c.h.b16 %v914
      %v1065 = vunpack.c.l.b16 %v915
      %v1066 = vunpack.c.h.b16 %v915
      %v1067 = vunpack.c.l.b16 %v916
      %v1068 = vunpack.c.h.b16 %v916
      %v1069 = vunpack.c.l.b16 %v917
      %v1070 = vunpack.c.h.b16 %v917
      %v1071 = vunpack.c.l.b16 %v918
      %v1072 = vunpack.c.h.b16 %v918
      %v1073 = vunpack.c.l.b16 %v919
      %v1074 = vunpack.c.h.b16 %v919
      %v1075 = vunpack.c.l.b16 %v920
      %v1076 = vunpack.c.h.b16 %v920
      %v1077 = vunpack.c.l.b16 %v921
      %v1078 = vunpack.c.h.b16 %v921
      %v1079 = vunpack.c.l.b16 %v922
      %v1080 = vunpack.c.h.b16 %v922
      %v1081 = vunpack.c.l.b16 %v923
      %v1082 = vunpack.c.h.b16 %v923
      %v1083 = vunpack.c.l.b16 %v924
      %v1084 = vunpack.c.h.b16 %v924
      %v1085 = vunpack.c.l.b16 %v925
      %v1086 = vunpack.c.h.b16 %v925
      %v1087 = vunpack.c.l.b16 %v926
      %v1088 = vunpack.c.h.b16 %v926
      %v1089 = vunpack.c.l.b16 %v927
      %v1090 = vunpack.c.h.b16 %v927
      %v1091 = vunpack.c.l.b16 %v928
      %v1092 = vunpack.c.h.b16 %v928
      %v1093 = vunpack.c.l.b16 %v929
      %v1094 = vunpack.c.h.b16 %v929
      %v1095 = vunpack.c.l.b16 %v930
      %v1096 = vunpack.c.h.b16 %v930
      %v1097 = vunpack.c.l.b16 %v931
      %v1098 = vunpack.c.h.b16 %v931
      %v1099 = vunpack.c.l.b16 %v932
      %v1100 = vunpack.c.h.b16 %v932
      %v1101 = vunpack.c.l.b16 %v933
      %v1102 = vunpack.c.h.b16 %v933
      %v1103 = vunpack.c.l.b16 %v934
      %v1104 = vunpack.c.h.b16 %v934
      %v1105 = vunpack.c.l.b16 %v935
      %v1106 = vunpack.c.h.b16 %v935
      %v1107 = vunpack.c.l.b16 %v936
      %v1108 = vunpack.c.h.b16 %v936
      %v1109 = vunpack.c.l.b16 %v937
      %v1110 = vunpack.c.h.b16 %v937
      %v1111 = vunpack.c.l.b16 %v938
      %v1112 = vunpack.c.h.b16 %v938
      %v1113 = vunpack.c.l.b16 %v939
      %v1114 = vunpack.c.h.b16 %v939
      %v1115 = vunpack.c.l.b16 %v940
      %v1116 = vunpack.c.h.b16 %v940
      %v1117 = vunpack.c.l.b16 %v941
      %v1118 = vunpack.c.h.b16 %v941
      %v1119 = vunpack.c.l.b16 %v942
      %v1120 = vunpack.c.h.b16 %v942
      %v1121 = vunpack.c.l.b16 %v943
      %v1122 = vunpack.c.h.b16 %v943
      %v1123 = vunpack.c.l.b16 %v944
      %v1124 = vunpack.c.h.b16 %v944
      %v1125 = vunpack.c.l.b16 %v945
      %v1126 = vunpack.c.h.b16 %v945
      %v1127 = vunpack.c.l.b16 %v946
      %v1128 = vunpack.c.h.b16 %v946
      %v1129 = vunpack.c.l.b16 %v947
      %v1130 = vunpack.c.h.b16 %v947
      %v1131 = vunpack.c.l.b16 %v948
      %v1132 = vunpack.c.h.b16 %v948
      %v1133 = vunpack.c.l.b16 %v949
      %v1134 = vunpack.c.h.b16 %v949
      %v1135 = vunpack.c.l.b16 %v950
      %v1136 = vunpack.c.h.b16 %v950
      %v1137 = vunpack.c.l.b16 %v951
      %v1138 = vunpack.c.h.b16 %v951
      %v1139 = vunpack.c.l.b16 %v952
      %v1140 = vunpack.c.h.b16 %v952
      %v1141 = vunpack.c.l.b16 %v953
      %v1142 = vunpack.c.h.b16 %v953
      %v1143 = vunpack.c.l.b16 %v954
      %v1144 = vunpack.c.h.b16 %v954
      %v1145 = vunpack.c.l.b16 %v955
      %v1146 = vunpack.c.h.b16 %v955
      %v1147 = vunpack.c.l.b16 %v956
      %v1148 = vunpack.c.h.b16 %v956
      %v1149 = vpack.c.b16 %v1021, %v1021
      %v1150 = vpack.c.b16 %v1022, %v1022
      %v1151 = vpack.c.b16 %v1023, %v1023
      %v1152 = vpack.c.b16 %v1024, %v1024
      %v1153 = vpack.c.b16 %v1025, %v1025
      %v1154 = vpack.c.b16 %v1026, %v1026
      %v1155 = vpack.c.b16 %v1027, %v1027
      %v1156 = vpack.c.b16 %v1028, %v1028
      %v1157 = vpack.c.b16 %v1029, %v1029
      %v1158 = vpack.c.b16 %v1030, %v1030
      %v1159 = vpack.c.b16 %v1031, %v1031
      %v1160 = vpack.c.b16 %v1032, %v1032
      %v1161 = vpack.c.b16 %v1033, %v1033
      %v1162 = vpack.c.b16 %v1034, %v1034
      %v1163 = vpack.c.b16 %v1035, %v1035
      %v1164 = vpack.c.b16 %v1036, %v1036
      %v1165 = vpack.c.b16 %v1037, %v1037
      %v1166 = vpack.c.b16 %v1038, %v1038
      %v1167 = vpack.c.b16 %v1039, %v1039
      %v1168 = vpack.c.b16 %v1040, %v1040
      %v1169 = vpack.c.b16 %v1041, %v1041
      %v1170 = vpack.c.b16 %v1042, %v1042
      %v1171 = vpack.c.b16 %v1043, %v1043
      %v1172 = vpack.c.b16 %v1044, %v1044
      %v1173 = vpack.c.b16 %v1045, %v1045
      %v1174 = vpack.c.b16 %v1046, %v1046
      %v1175 = vpack.c.b16 %v1047, %v1047
      %v1176 = vpack.c.b16 %v1048, %v1048
      %v1177 = vpack.c.b16 %v1049, %v1049
      %v1178 = vpack.c.b16 %v1050, %v1050
      %v1179 = vpack.c.b16 %v1051, %v1051
      %v1180 = vpack.c.b16 %v1052, %v1052
      %v1181 = vpack.c.b16 %v1053, %v1053
      %v1182 = vpack.c.b16 %v1054, %v1054
      %v1183 = vpack.c.b16 %v1055, %v1055
      %v1184 = vpack.c.b16 %v1056, %v1056
      %v1185 = vpack.c.b16 %v1057, %v1057
      %v1186 = vpack.c.b16 %v1058, %v1058
      %v1187 = vpack.c.b16 %v1059, %v1059
      %v1188 = vpack.c.b16 %v1060, %v1060
      %v1189 = vpack.c.b16 %v1061, %v1061
      %v1190 = vpack.c.b16 %v1062, %v1062
      %v1191 = vpack.c.b16 %v1063, %v1063
      %v1192 = vpack.c.b16 %v1064, %v1064
      %v1193 = vpack.c.b16 %v1065, %v1065
      %v1194 = vpack.c.b16 %v1066, %v1066
      %v1195 = vpack.c.b16 %v1067, %v1067
      %v1196 = vpack.c.b16 %v1068, %v1068
      %v1197 = vpack.c.b16 %v1069, %v1069
      %v1198 = vpack.c.b16 %v1070, %v1070
      %v1199 = vpack.c.b16 %v1071, %v1071
      %v1200 = vpack.c.b16 %v1072, %v1072
      %v1201 = vpack.c.b16 %v1073, %v1073
      %v1202 = vpack.c.b16 %v1074, %v1074
      %v1203 = vpack.c.b16 %v1075, %v1075
      %v1204 = vpack.c.b16 %v1076, %v1076
      %v1205 = vpack.c.b16 %v1077, %v1077
      %v1206 = vpack.c.b16 %v1078, %v1078
      %v1207 = vpack.c.b16 %v1079, %v1079
      %v1208 = vpack.c.b16 %v1080, %v1080
      %v1209 = vpack.c.b16 %v1081, %v1081
      %v1210 = vpack.c.b16 %v1082, %v1082
      %v1211 = vpack.c.b16 %v1083, %v1083
      %v1212 = vpack.c.b16 %v1084, %v1084
      %v1213 = vpack.c.b16 %v1085, %v1085
      %v1214 = vpack.c.b16 %v1086, %v1086
      %v1215 = vpack.c.b16 %v1087, %v1087
      %v1216 = vpack.c.b16 %v1088, %v1088
      %v1217 = vpack.c.b16 %v1089, %v1089
      %v1218 = vpack.c.b16 %v1090, %v1090
      %v1219 = vpack.c.b16 %v1091, %v1091
      %v1220 = vpack.c.b16 %v1092, %v1092
      %v1221 = vpack.c.b16 %v1093, %v1093
      %v1222 = vpack.c.b16 %v1094, %v1094
      %v1223 = vpack.c.b16 %v1095, %v1095
      %v1224 = vpack.c.b16 %v1096, %v1096
      %v1225 = vpack.c.b16 %v1097, %v1097
      %v1226 = vpack.c.b16 %v1098, %v1098
      %v1227 = vpack.c.b16 %v1099, %v1099
      %v1228 = vpack.c.b16 %v1100, %v1100
      %v1229 = vpack.c.b16 %v1101, %v1101
      %v1230 = vpack.c.b16 %v1102, %v1102
      %v1231 = vpack.c.b16 %v1103, %v1103
      %v1232 = vpack.c.b16 %v1104, %v1104
      %v1233 = vpack.c.b16 %v1105, %v1105
      %v1234 = vpack.c.b16 %v1106, %v1106
      %v1235 = vpack.c.b16 %v1107, %v1107
      %v1236 = vpack.c.b16 %v1108, %v1108
      %v1237 = vpack.c.b16 %v1109, %v1109
      %v1238 = vpack.c.b16 %v1110, %v1110
      %v1239 = vpack.c.b16 %v1111, %v1111
      %v1240 = vpack.c.b16 %v1112, %v1112
      %v1241 = vpack.c.b16 %v1113, %v1113
      %v1242 = vpack.c.b16 %v1114, %v1114
      %v1243 = vpack.c.b16 %v1115, %v1115
      %v1244 = vpack.c.b16 %v1116, %v1116
      %v1245 = vpack.c.b16 %v1117, %v1117
      %v1246 = vpack.c.b16 %v1118, %v1118
      %v1247 = vpack.c.b16 %v1119, %v1119
      %v1248 = vpack.c.b16 %v1120, %v1120
      %v1249 = vpack.c.b16 %v1121, %v1121
      %v1250 = vpack.c.b16 %v1122, %v1122
      %v1251 = vpack.c.b16 %v1123, %v1123
      %v1252 = vpack.c.b16 %v1124, %v1124
      %v1253 = vpack.c.b16 %v1125, %v1125
      %v1254 = vpack.c.b16 %v1126, %v1126
      %v1255 = vpack.c.b16 %v1127, %v1127
      %v1256 = vpack.c.b16 %v1128, %v1128
      %v1257 = vpack.c.b16 %v1129, %v1129
      %v1258 = vpack.c.b16 %v1130, %v1130
      %v1259 = vpack.c.b16 %v1131, %v1131
      %v1260 = vpack.c.b16 %v1132, %v1132
      %v1261 = vpack.c.b16 %v1133, %v1133
      %v1262 = vpack.c.b16 %v1134, %v1134
      %v1263 = vpack.c.b16 %v1135, %v1135
      %v1264 = vpack.c.b16 %v1136, %v1136
      %v1265 = vpack.c.b16 %v1137, %v1137
      %v1266 = vpack.c.b16 %v1138, %v1138
      %v1267 = vpack.c.b16 %v1139, %v1139
      %v1268 = vpack.c.b16 %v1140, %v1140
      %v1269 = vpack.c.b16 %v1141, %v1141
      %v1270 = vpack.c.b16 %v1142, %v1142
      %v1271 = vpack.c.b16 %v1143, %v1143
      %v1272 = vpack.c.b16 %v1144, %v1144
      %v1273 = vpack.c.b16 %v1145, %v1145
      %v1274 = vpack.c.b16 %v1146, %v1146
      %v1275 = vpack.c.b16 %v1147, %v1147
      %v1276 = vpack.c.b16 %v1148, %v1148
      %1405 = vst [vmem:[%s226] sm:$0xf] %v1149
      %1406 = vst [vmem:[%s226 + $0x4] sm:$0xf] %v1150
      %1407 = vst [vmem:[%s226 + $0x8] sm:$0xf] %v1151
      %1408 = vst [vmem:[%s226 + $0xc] sm:$0xf] %v1152
      %1409 = vst [vmem:[%s226 + $0x10] sm:$0xf] %v1153
      %1410 = vst [vmem:[%s226 + $0x14] sm:$0xf] %v1154
      %1411 = vst [vmem:[%s226 + $0x18] sm:$0xf] %v1155
      %1412 = vst [vmem:[%s226 + $0x1c] sm:$0xf] %v1156
      %1413 = vst [vmem:[%s226 + $0x20] sm:$0xf] %v1157
      %1414 = vst [vmem:[%s226 + $0x24] sm:$0xf] %v1158
      %1415 = vst [vmem:[%s226 + $0x28] sm:$0xf] %v1159
      %1416 = vst [vmem:[%s226 + $0x2c] sm:$0xf] %v1160
      %1417 = vst [vmem:[%s226 + $0x30] sm:$0xf] %v1161
      %1418 = vst [vmem:[%s226 + $0x34] sm:$0xf] %v1162
      %1419 = vst [vmem:[%s226 + $0x38] sm:$0xf] %v1163
      %1420 = vst [vmem:[%s226 + $0x3c] sm:$0xf] %v1164
      %1421 = vst [vmem:[%s226 + $0x40] sm:$0xf] %v1165
      %1422 = vst [vmem:[%s226 + $0x44] sm:$0xf] %v1166
      %1423 = vst [vmem:[%s226 + $0x48] sm:$0xf] %v1167
      %1424 = vst [vmem:[%s226 + $0x4c] sm:$0xf] %v1168
      %1425 = vst [vmem:[%s226 + $0x50] sm:$0xf] %v1169
      %1426 = vst [vmem:[%s226 + $0x54] sm:$0xf] %v1170
      %1427 = vst [vmem:[%s226 + $0x58] sm:$0xf] %v1171
      %1428 = vst [vmem:[%s226 + $0x5c] sm:$0xf] %v1172
      %1429 = vst [vmem:[%s226 + $0x60] sm:$0xf] %v1173
      %1430 = vst [vmem:[%s226 + $0x64] sm:$0xf] %v1174
      %1431 = vst [vmem:[%s226 + $0x68] sm:$0xf] %v1175
      %1432 = vst [vmem:[%s226 + $0x6c] sm:$0xf] %v1176
      %1433 = vst [vmem:[%s226 + $0x70] sm:$0xf] %v1177
      %1434 = vst [vmem:[%s226 + $0x74] sm:$0xf] %v1178
      %1435 = vst [vmem:[%s226 + $0x78] sm:$0xf] %v1179
      %1436 = vst [vmem:[%s226 + $0x7c] sm:$0xf] %v1180
      %1437 = vst [vmem:[%s226 + $0x80] sm:$0xf] %v1181
      %1438 = vst [vmem:[%s226 + $0x84] sm:$0xf] %v1182
      %1439 = vst [vmem:[%s226 + $0x88] sm:$0xf] %v1183
      %1440 = vst [vmem:[%s226 + $0x8c] sm:$0xf] %v1184
      %1441 = vst [vmem:[%s226 + $0x90] sm:$0xf] %v1185
      %1442 = vst [vmem:[%s226 + $0x94] sm:$0xf] %v1186
      %1443 = vst [vmem:[%s226 + $0x98] sm:$0xf] %v1187
      %1444 = vst [vmem:[%s226 + $0x9c] sm:$0xf] %v1188
      %1445 = vst [vmem:[%s226 + $0xa0] sm:$0xf] %v1189
      %1446 = vst [vmem:[%s226 + $0xa4] sm:$0xf] %v1190
      %1447 = vst [vmem:[%s226 + $0xa8] sm:$0xf] %v1191
      %1448 = vst [vmem:[%s226 + $0xac] sm:$0xf] %v1192
      %1449 = vst [vmem:[%s226 + $0xb0] sm:$0xf] %v1193
      %1450 = vst [vmem:[%s226 + $0xb4] sm:$0xf] %v1194
      %1451 = vst [vmem:[%s226 + $0xb8] sm:$0xf] %v1195
      %1452 = vst [vmem:[%s226 + $0xbc] sm:$0xf] %v1196
      %1453 = vst [vmem:[%s226 + $0xc0] sm:$0xf] %v1197
      %1454 = vst [vmem:[%s226 + $0xc4] sm:$0xf] %v1198
      %1455 = vst [vmem:[%s226 + $0xc8] sm:$0xf] %v1199
      %1456 = vst [vmem:[%s226 + $0xcc] sm:$0xf] %v1200
      %1457 = vst [vmem:[%s226 + $0xd0] sm:$0xf] %v1201
      %1458 = vst [vmem:[%s226 + $0xd4] sm:$0xf] %v1202
      %1459 = vst [vmem:[%s226 + $0xd8] sm:$0xf] %v1203
      %1460 = vst [vmem:[%s226 + $0xdc] sm:$0xf] %v1204
      %1461 = vst [vmem:[%s226 + $0xe0] sm:$0xf] %v1205
      %1462 = vst [vmem:[%s226 + $0xe4] sm:$0xf] %v1206
      %1463 = vst [vmem:[%s226 + $0xe8] sm:$0xf] %v1207
      %1464 = vst [vmem:[%s226 + $0xec] sm:$0xf] %v1208
      %1465 = vst [vmem:[%s226 + $0xf0] sm:$0xf] %v1209
      %1466 = vst [vmem:[%s226 + $0xf4] sm:$0xf] %v1210
      %1467 = vst [vmem:[%s226 + $0xf8] sm:$0xf] %v1211
      %1468 = vst [vmem:[%s226 + $0xfc] sm:$0xf] %v1212
      %1469 = vst [vmem:[%s226 + $0x100] sm:$0xf] %v1213
      %1470 = vst [vmem:[%s226 + $0x104] sm:$0xf] %v1214
      %1471 = vst [vmem:[%s226 + $0x108] sm:$0xf] %v1215
      %1472 = vst [vmem:[%s226 + $0x10c] sm:$0xf] %v1216
      %1473 = vst [vmem:[%s226 + $0x110] sm:$0xf] %v1217
      %1474 = vst [vmem:[%s226 + $0x114] sm:$0xf] %v1218
      %1475 = vst [vmem:[%s226 + $0x118] sm:$0xf] %v1219
      %1476 = vst [vmem:[%s226 + $0x11c] sm:$0xf] %v1220
      %1477 = vst [vmem:[%s226 + $0x120] sm:$0xf] %v1221
      %1478 = vst [vmem:[%s226 + $0x124] sm:$0xf] %v1222
      %1479 = vst [vmem:[%s226 + $0x128] sm:$0xf] %v1223
      %1480 = vst [vmem:[%s226 + $0x12c] sm:$0xf] %v1224
      %1481 = vst [vmem:[%s226 + $0x130] sm:$0xf] %v1225
      %1482 = vst [vmem:[%s226 + $0x134] sm:$0xf] %v1226
      %1483 = vst [vmem:[%s226 + $0x138] sm:$0xf] %v1227
      %1484 = vst [vmem:[%s226 + $0x13c] sm:$0xf] %v1228
      %1485 = vst [vmem:[%s226 + $0x140] sm:$0xf] %v1229
      %1486 = vst [vmem:[%s226 + $0x144] sm:$0xf] %v1230
      %1487 = vst [vmem:[%s226 + $0x148] sm:$0xf] %v1231
      %1488 = vst [vmem:[%s226 + $0x14c] sm:$0xf] %v1232
      %1489 = vst [vmem:[%s226 + $0x150] sm:$0xf] %v1233
      %1490 = vst [vmem:[%s226 + $0x154] sm:$0xf] %v1234
      %1491 = vst [vmem:[%s226 + $0x158] sm:$0xf] %v1235
      %1492 = vst [vmem:[%s226 + $0x15c] sm:$0xf] %v1236
      %1493 = vst [vmem:[%s226 + $0x160] sm:$0xf] %v1237
      %1494 = vst [vmem:[%s226 + $0x164] sm:$0xf] %v1238
      %1495 = vst [vmem:[%s226 + $0x168] sm:$0xf] %v1239
      %1496 = vst [vmem:[%s226 + $0x16c] sm:$0xf] %v1240
      %1497 = vst [vmem:[%s226 + $0x170] sm:$0xf] %v1241
      %1498 = vst [vmem:[%s226 + $0x174] sm:$0xf] %v1242
      %1499 = vst [vmem:[%s226 + $0x178] sm:$0xf] %v1243
      %1500 = vst [vmem:[%s226 + $0x17c] sm:$0xf] %v1244
      %1501 = vst [vmem:[%s226 + $0x180] sm:$0xf] %v1245
      %1502 = vst [vmem:[%s226 + $0x184] sm:$0xf] %v1246
      %1503 = vst [vmem:[%s226 + $0x188] sm:$0xf] %v1247
      %1504 = vst [vmem:[%s226 + $0x18c] sm:$0xf] %v1248
      %1505 = vst [vmem:[%s226 + $0x190] sm:$0xf] %v1249
      %1506 = vst [vmem:[%s226 + $0x194] sm:$0xf] %v1250
      %1507 = vst [vmem:[%s226 + $0x198] sm:$0xf] %v1251
      %1508 = vst [vmem:[%s226 + $0x19c] sm:$0xf] %v1252
      %1509 = vst [vmem:[%s226 + $0x1a0] sm:$0xf] %v1253
      %1510 = vst [vmem:[%s226 + $0x1a4] sm:$0xf] %v1254
      %1511 = vst [vmem:[%s226 + $0x1a8] sm:$0xf] %v1255
      %1512 = vst [vmem:[%s226 + $0x1ac] sm:$0xf] %v1256
      %1513 = vst [vmem:[%s226 + $0x1b0] sm:$0xf] %v1257
      %1514 = vst [vmem:[%s226 + $0x1b4] sm:$0xf] %v1258
      %1515 = vst [vmem:[%s226 + $0x1b8] sm:$0xf] %v1259
      %1516 = vst [vmem:[%s226 + $0x1bc] sm:$0xf] %v1260
      %1517 = vst [vmem:[%s226 + $0x1c0] sm:$0xf] %v1261
      %1518 = vst [vmem:[%s226 + $0x1c4] sm:$0xf] %v1262
      %1519 = vst [vmem:[%s226 + $0x1c8] sm:$0xf] %v1263
      %1520 = vst [vmem:[%s226 + $0x1cc] sm:$0xf] %v1264
      %1521 = vst [vmem:[%s226 + $0x1d0] sm:$0xf] %v1265
      %1522 = vst [vmem:[%s226 + $0x1d4] sm:$0xf] %v1266
      %1523 = vst [vmem:[%s226 + $0x1d8] sm:$0xf] %v1267
      %1524 = vst [vmem:[%s226 + $0x1dc] sm:$0xf] %v1268
      %1525 = vst [vmem:[%s226 + $0x1e0] sm:$0xf] %v1269
      %1526 = vst [vmem:[%s226 + $0x1e4] sm:$0xf] %v1270
      %1527 = vst [vmem:[%s226 + $0x1e8] sm:$0xf] %v1271
      %1528 = vst [vmem:[%s226 + $0x1ec] sm:$0xf] %v1272
      %1529 = vst [vmem:[%s226 + $0x1f0] sm:$0xf] %v1273
      %1530 = vst [vmem:[%s226 + $0x1f4] sm:$0xf] %v1274
      %1531 = vst [vmem:[%s226 + $0x1f8] sm:$0xf] %v1275
      %1532 = vst [vmem:[%s226 + $0x1fc] sm:$0xf] %v1276
      %s1533 = smul.u32 128, %s16
      %p1534 = scmp.lt.s32.totalorder %s1533, 255
      %s1535 = scalar_select %p1534, %s1533, 255
      %s1536 = smul.addr %s1535, 4
      %s1537 = scalar_lea.vmem %s5, %s1536
      // Predicated region
      $region41: #{resnet_forward.20} parent=39 // pred_check
        %p1538 = pneg %p144
      $region42: #{resnet_forward.20} parent=39 // pred_check_branch
        %1540 = sbr.rel (%p1538) target = $region44
      $region43: #{resnet_forward.20} parent=39 // pred_region
        %s1541 = smul.u32 128, %s16
      $region44: #{resnet_forward.20} parent=39 // pred_fallthru
        _
    $region40: #{resnet_forward.20} parent=5 // pred_fallthru
      _
    %p1542 = scmp.le.s32.totalorder 2, %s11
    // Predicated region
    $region45: #{resnet_forward.20} parent=5 // pred_check
      %p1543 = pneg %p1542
    $region46: #{resnet_forward.20} parent=5 // pred_check_branch
      %1545 = sbr.rel (%p1543) target = $region48
    $region47: #{resnet_forward.20} parent=5 // pred_region
      %s1546 = ssub.s32 %s11, 2
      // Predicated region
      $region49: #{resnet_forward.20} parent=47 // pred_check
        %p1547 = pneg %p150
      $region50: #{resnet_forward.20} parent=47 // pred_check_branch
        %1549 = sbr.rel (%p1547) target = $region52
      $region51: #{resnet_forward.20} parent=47 // pred_region
        %s1550 = smul.u32 128, %s17
        %p1551 = scmp.lt.s32.totalorder %s1550, 255
        %s1552 = scalar_select %p1551, %s1550, 255
        %s1553 = smul.addr %s1552, 4
        %s1554 = scalar_lea.vmem %s5, %s1553
      $region52: #{resnet_forward.20} parent=47 // pred_fallthru
        _
    $region48: #{resnet_forward.20} parent=5 // pred_fallthru
      _
  $region6: #{resnet_forward.20} parent=0 // loop_footer
    %s15 = sadd.s32 1, %s11
  $region7: #{resnet_forward.20} parent=0 // loop_footer_branch
    %10 = sbr.rel target = $region3
  $region8: #{resnet_forward.20} parent=0 // loop_exit
    _

// kernel: resnet_forward.19
$region0: #{resnet_forward.19}
  #allocation0 [shape = 'u32[]', space=smem, size = 0x4, offset = 0x4, fixed_abs, tag = 'smem constant byte address 0x4 - core index']
  #allocation1 [shape = 'u32[144,128]{1,0:T(1,128)}', space=vmem, size = 0x12000, scoped, tag = 'internal scratch']
  #allocation2 [shape = 'f32[1,128]{1,0:T(1,128)}', space=vmem, size = 0x200, scoped, tag = 'scratch operand']
  #allocation3 [shape = 'f32[1,128]{1,0:T(1,128)}', space=vmem, size = 0x200, scoped, tag = 'scratch operand']
  %s0 = inlined_call_operand.vmem [shape: bf16[2048,256], index: 0, kind: input, shape index: {}]
  %s1 = inlined_call_operand.vmem [shape: bf16[256,128], index: 1, kind: input, shape index: {}]
  %s2 = inlined_call_operand.vmem [shape: f32[2048,128], index: 2, kind: output, shape index: {0}]
  %s3 = inlined_call_operand.vmem [shape: f32[1,128], index: 3, kind: output, shape index: {1}]
  %s4 = inlined_call_operand.vmem [shape: f32[1,128], index: 4, kind: output, shape index: {2}]
  %5 = xla_tuple %s2, %s3, %s4
  %s6 = sld [smem:[#allocation0]]
  $region65: #{resnet_forward.19} parent=0
    _
  %s8 = ssub.s32 1, %s6
  %s9 = scalar_select 0, %s8, %s6
  loop: start=0, step=1, limit=4
  $region2: #{resnet_forward.19} parent=0 // loop_pre_header
    _
  $region3: #{resnet_forward.19} parent=0 // loop_header
    %s11 = sphi 0, %s15
    %p12 = scmp.ge.s32.totalorder %s11, 4
    %s21 = sphi 0, %s23
    %s24 = sphi 0, %s21
    %s25 = sphi 0, %s24
    %s41 = sphi 0, %s25
    %s45 = sphi 0, %s45
    %s47 = sphi 0, %s45
    %s48 = sphi 0, %s47
    %s62 = sphi 0, %s48
    %s68 = sphi 0, %s70
    %s71 = sphi 0, %s68
    %s72 = sphi 0, %s71
    %s88 = sphi 0, %s72
    %s92 = sphi 0, %s92
    %s94 = sphi 0, %s92
    %s95 = sphi 0, %s94
    %s109 = sphi 0, %s95
    %s113 = sphi 0, %s113
    %s115 = sphi 0, %s113
    %s116 = sphi 0, %s115
    %s130 = sphi 0, %s116
  $region4: #{resnet_forward.19} parent=0 // loop_header_branch
    %14 = sbr.rel (%p12) target = $region8
  $region5: #{resnet_forward.19} parent=0 // loop_body
    %s16 = ssub.s32 %s11, 1
    %s17 = ssub.s32 %s11, 2
    %s18 = sadd.s32 %s11, 1
    %s19 = ssub.s32 %s11, %s18
    %p20 = scmp.eq.s32.totalorder %s19, 0
    %s22 = sadd.s32 %s21, 1
    %s23 = scalar_select %p20, %s21, %s22
    %p26 = pneg %p20
    %p27 = scmp.eq.s32.totalorder %s11, 1
    %p28 = por %p26, %p27
    %p29 = scmp.ne.s32.totalorder %s21, %s24
    %p30 = scmp.eq.s32.totalorder %s11, 0
    %p31 = por %p29, %p30
    %p32 = scmp.ne.s32.totalorder %s21, %s24
    %p33 = scmp.eq.s32.totalorder %s16, 1
    %p34 = por %p32, %p33
    %p35 = scmp.ne.s32.totalorder %s24, %s25
    %p36 = scmp.eq.s32.totalorder %s16, 0
    %p37 = por %p35, %p36
    %p38 = scmp.ne.s32.totalorder %s24, %s25
    %p39 = scmp.eq.s32.totalorder %s17, 1
    %p40 = por %p38, %p39
    %p42 = scmp.ne.s32.totalorder %s25, %s41
    %p43 = scmp.eq.s32.totalorder %s17, 0
    %p44 = por %p42, %p43
    %s46 = sadd.s32 %s45, 1
    %p49 = scmp.eq.s32.totalorder %s11, 1
    %p50 = scmp.ne.s32.totalorder %s45, %s47
    %p51 = scmp.eq.s32.totalorder %s11, 0
    %p52 = por %p50, %p51
    %p53 = scmp.ne.s32.totalorder %s45, %s47
    %p54 = scmp.eq.s32.totalorder %s16, 1
    %p55 = por %p53, %p54
    %p56 = scmp.ne.s32.totalorder %s47, %s48
    %p57 = scmp.eq.s32.totalorder %s16, 0
    %p58 = por %p56, %p57
    %p59 = scmp.ne.s32.totalorder %s47, %s48
    %p60 = scmp.eq.s32.totalorder %s17, 1
    %p61 = por %p59, %p60
    %p63 = scmp.ne.s32.totalorder %s48, %s62
    %p64 = scmp.eq.s32.totalorder %s17, 0
    %p65 = por %p63, %p64
    %s66 = ssub.s32 %s11, %s18
    %p67 = scmp.eq.s32.totalorder %s66, 0
    %s69 = sadd.s32 %s68, 1
    %s70 = scalar_select %p67, %s68, %s69
    %p73 = pneg %p67
    %p74 = scmp.eq.s32.totalorder %s11, 1
    %p75 = por %p73, %p74
    %p76 = scmp.ne.s32.totalorder %s68, %s71
    %p77 = scmp.eq.s32.totalorder %s11, 0
    %p78 = por %p76, %p77
    %p79 = scmp.ne.s32.totalorder %s68, %s71
    %p80 = scmp.eq.s32.totalorder %s16, 1
    %p81 = por %p79, %p80
    %p82 = scmp.ne.s32.totalorder %s71, %s72
    %p83 = scmp.eq.s32.totalorder %s16, 0
    %p84 = por %p82, %p83
    %p85 = scmp.ne.s32.totalorder %s71, %s72
    %p86 = scmp.eq.s32.totalorder %s17, 1
    %p87 = por %p85, %p86
    %p89 = scmp.ne.s32.totalorder %s72, %s88
    %p90 = scmp.eq.s32.totalorder %s17, 0
    %p91 = por %p89, %p90
    %s93 = sadd.s32 %s92, 1
    %p96 = scmp.eq.s32.totalorder %s11, 1
    %p97 = scmp.ne.s32.totalorder %s92, %s94
    %p98 = scmp.eq.s32.totalorder %s11, 0
    %p99 = por %p97, %p98
    %p100 = scmp.ne.s32.totalorder %s92, %s94
    %p101 = scmp.eq.s32.totalorder %s16, 1
    %p102 = por %p100, %p101
    %p103 = scmp.ne.s32.totalorder %s94, %s95
    %p104 = scmp.eq.s32.totalorder %s16, 0
    %p105 = por %p103, %p104
    %p106 = scmp.ne.s32.totalorder %s94, %s95
    %p107 = scmp.eq.s32.totalorder %s17, 1
    %p108 = por %p106, %p107
    %p110 = scmp.ne.s32.totalorder %s95, %s109
    %p111 = scmp.eq.s32.totalorder %s17, 0
    %p112 = por %p110, %p111
    %s114 = sadd.s32 %s113, 1
    %p117 = scmp.eq.s32.totalorder %s11, 1
    %p118 = scmp.ne.s32.totalorder %s113, %s115
    %p119 = scmp.eq.s32.totalorder %s11, 0
    %p120 = por %p118, %p119
    %p121 = scmp.ne.s32.totalorder %s113, %s115
    %p122 = scmp.eq.s32.totalorder %s16, 1
    %p123 = por %p121, %p122
    %p124 = scmp.ne.s32.totalorder %s115, %s116
    %p125 = scmp.eq.s32.totalorder %s16, 0
    %p126 = por %p124, %p125
    %p127 = scmp.ne.s32.totalorder %s115, %s116
    %p128 = scmp.eq.s32.totalorder %s17, 1
    %p129 = por %p127, %p128
    %p131 = scmp.ne.s32.totalorder %s116, %s130
    %p132 = scmp.eq.s32.totalorder %s17, 0
    %p133 = por %p131, %p132
    %p134 = scmp.le.s32.totalorder 1, %s11
    %p135 = scmp.lt.s32.totalorder %s11, 3
    %p136 = pnand %p134, %p135
    %p137 = pneg %p136
    // Predicated region
    $region9: #{resnet_forward.19} parent=5 // pred_check
      _
    $region10: #{resnet_forward.19} parent=5 // pred_check_branch
      %139 = sbr.rel (%p136) target = $region12
    $region11: #{resnet_forward.19} parent=5 // pred_region
      %s140 = ssub.s32 %s11, 1
      // Predicated region
      $region13: #{resnet_forward.19} parent=11 // pred_check
        %p141 = pneg %p58
      $region14: #{resnet_forward.19} parent=11 // pred_check_branch
        %143 = sbr.rel (%p141) target = $region16
      $region15: #{resnet_forward.19} parent=11 // pred_region
        _
      $region16: #{resnet_forward.19} parent=11 // pred_fallthru
        _
    $region12: #{resnet_forward.19} parent=5 // pred_fallthru
      _
    %p144 = scmp.lt.s32.totalorder %s11, 2
    // Predicated region
    $region17: #{resnet_forward.19} parent=5 // pred_check
      %p145 = pneg %p144
    $region18: #{resnet_forward.19} parent=5 // pred_check_branch
      %147 = sbr.rel (%p145) target = $region20
    $region19: #{resnet_forward.19} parent=5 // pred_region
      // Predicated region
      $region21: #{resnet_forward.19} parent=19 // pred_check
        %p148 = pneg %p31
      $region22: #{resnet_forward.19} parent=19 // pred_check_branch
        %150 = sbr.rel (%p148) target = $region24
      $region23: #{resnet_forward.19} parent=19 // pred_region
        %s151 = smul.u32 128, %s11
        %p152 = scmp.lt.s32.totalorder %s151, 255
        %s153 = scalar_select %p152, %s151, 255
        %s154 = smul.addr %s153, 2
        %s155 = smul.addr %s154, 4
        %s156 = scalar_lea.vmem %s0, %s155
        %s157 = smul.u32 128, %s11
      $region24: #{resnet_forward.19} parent=19 // pred_fallthru
        _
    $region20: #{resnet_forward.19} parent=5 // pred_fallthru
      _
    %p158 = scmp.le.s32.totalorder 1, %s11
    %p159 = scmp.lt.s32.totalorder %s11, 3
    %p160 = pnand %p158, %p159
    %p161 = pneg %p160
    // Predicated region
    $region25: #{resnet_forward.19} parent=5 // pred_check
      _
    $region26: #{resnet_forward.19} parent=5 // pred_check_branch
      %163 = sbr.rel (%p160) target = $region28
    $region27: #{resnet_forward.19} parent=5 // pred_region
      %s164 = ssub.s32 %s11, 1
      %s165 = smul.u32 128, %s16
      %p166 = scmp.lt.s32.totalorder %s165, 255
      %s167 = scalar_select %p166, %s165, 255
      %s168 = smul.addr %s167, 2
      %s169 = smul.addr %s168, 4
      %s170 = scalar_lea.vmem %s0, %s169
      %p171 = pneg %p37
      %p172 = pneg %p34
      %p173 = pneg %p58
      %p174 = pneg %p55
      %p175 = pneg %p84
      %p176 = pneg %p81
      %s177 = smul.u32 128, %s16
      %p178 = scmp.lt.s32.totalorder %s177, 255
      %s179 = scalar_select %p178, %s177, 255
      %s180 = smul.addr %s179, 8
      %s181 = scalar_lea.vmem %s2, %s180
      %p182 = pneg %p105
      %p183 = pneg %p102
      %p184 = pneg %p126
      %p185 = pneg %p123
      %s186 = smul.u32 128, %s16
      %p187 = scmp.lt.s32.totalorder %s186, 255
      %s188 = scalar_select %p187, %s186, 255
      %s189 = smul.addr %s188, 2
      %s190 = smul.addr %s189, 4
      %s191 = scalar_lea.vmem %s0, %s190
      %s192 = smul.u32 128, %s16
      %s193 = smul.u32 128, %s16
      %p194 = scmp.lt.s32.totalorder %s193, 255
      %s195 = scalar_select %p194, %s193, 255
      %s196 = smul.addr %s195, 8
      %s197 = scalar_lea.vmem %s2, %s196
      %s198 = smul.u32 128, %s16
      %v200 = vld [vmem:[%s191] sm:$0xff]
      %v201 = vld [vmem:[%s191 + $0x8] sm:$0xff]
      %v202 = vld [vmem:[%s191 + $0x10] sm:$0xff]
      %v203 = vld [vmem:[%s191 + $0x18] sm:$0xff]
      %v204 = vld [vmem:[%s191 + $0x20] sm:$0xff]
      %v205 = vld [vmem:[%s191 + $0x28] sm:$0xff]
      %v206 = vld [vmem:[%s191 + $0x30] sm:$0xff]
      %v207 = vld [vmem:[%s191 + $0x38] sm:$0xff]
      %v208 = vld [vmem:[%s191 + $0x40] sm:$0xff]
      %v209 = vld [vmem:[%s191 + $0x48] sm:$0xff]
      %v210 = vld [vmem:[%s191 + $0x50] sm:$0xff]
      %v211 = vld [vmem:[%s191 + $0x58] sm:$0xff]
      %v212 = vld [vmem:[%s191 + $0x60] sm:$0xff]
      %v213 = vld [vmem:[%s191 + $0x68] sm:$0xff]
      %v214 = vld [vmem:[%s191 + $0x70] sm:$0xff]
      %v215 = vld [vmem:[%s191 + $0x78] sm:$0xff]
      %v216 = vld [vmem:[%s191 + $0x80] sm:$0xff]
      %v217 = vld [vmem:[%s191 + $0x88] sm:$0xff]
      %v218 = vld [vmem:[%s191 + $0x90] sm:$0xff]
      %v219 = vld [vmem:[%s191 + $0x98] sm:$0xff]
      %v220 = vld [vmem:[%s191 + $0xa0] sm:$0xff]
      %v221 = vld [vmem:[%s191 + $0xa8] sm:$0xff]
      %v222 = vld [vmem:[%s191 + $0xb0] sm:$0xff]
      %v223 = vld [vmem:[%s191 + $0xb8] sm:$0xff]
      %v224 = vld [vmem:[%s191 + $0xc0] sm:$0xff]
      %v225 = vld [vmem:[%s191 + $0xc8] sm:$0xff]
      %v226 = vld [vmem:[%s191 + $0xd0] sm:$0xff]
      %v227 = vld [vmem:[%s191 + $0xd8] sm:$0xff]
      %v228 = vld [vmem:[%s191 + $0xe0] sm:$0xff]
      %v229 = vld [vmem:[%s191 + $0xe8] sm:$0xff]
      %v230 = vld [vmem:[%s191 + $0xf0] sm:$0xff]
      %v231 = vld [vmem:[%s191 + $0xf8] sm:$0xff]
      %v232 = vld [vmem:[%s191 + $0x100] sm:$0xff]
      %v233 = vld [vmem:[%s191 + $0x108] sm:$0xff]
      %v234 = vld [vmem:[%s191 + $0x110] sm:$0xff]
      %v235 = vld [vmem:[%s191 + $0x118] sm:$0xff]
      %v236 = vld [vmem:[%s191 + $0x120] sm:$0xff]
      %v237 = vld [vmem:[%s191 + $0x128] sm:$0xff]
      %v238 = vld [vmem:[%s191 + $0x130] sm:$0xff]
      %v239 = vld [vmem:[%s191 + $0x138] sm:$0xff]
      %v240 = vld [vmem:[%s191 + $0x140] sm:$0xff]
      %v241 = vld [vmem:[%s191 + $0x148] sm:$0xff]
      %v242 = vld [vmem:[%s191 + $0x150] sm:$0xff]
      %v243 = vld [vmem:[%s191 + $0x158] sm:$0xff]
      %v244 = vld [vmem:[%s191 + $0x160] sm:$0xff]
      %v245 = vld [vmem:[%s191 + $0x168] sm:$0xff]
      %v246 = vld [vmem:[%s191 + $0x170] sm:$0xff]
      %v247 = vld [vmem:[%s191 + $0x178] sm:$0xff]
      %v248 = vld [vmem:[%s191 + $0x180] sm:$0xff]
      %v249 = vld [vmem:[%s191 + $0x188] sm:$0xff]
      %v250 = vld [vmem:[%s191 + $0x190] sm:$0xff]
      %v251 = vld [vmem:[%s191 + $0x198] sm:$0xff]
      %v252 = vld [vmem:[%s191 + $0x1a0] sm:$0xff]
      %v253 = vld [vmem:[%s191 + $0x1a8] sm:$0xff]
      %v254 = vld [vmem:[%s191 + $0x1b0] sm:$0xff]
      %v255 = vld [vmem:[%s191 + $0x1b8] sm:$0xff]
      %v256 = vld [vmem:[%s191 + $0x1c0] sm:$0xff]
      %v257 = vld [vmem:[%s191 + $0x1c8] sm:$0xff]
      %v258 = vld [vmem:[%s191 + $0x1d0] sm:$0xff]
      %v259 = vld [vmem:[%s191 + $0x1d8] sm:$0xff]
      %v260 = vld [vmem:[%s191 + $0x1e0] sm:$0xff]
      %v261 = vld [vmem:[%s191 + $0x1e8] sm:$0xff]
      %v262 = vld [vmem:[%s191 + $0x1f0] sm:$0xff]
      %v263 = vld [vmem:[%s191 + $0x1f8] sm:$0xff]
      %v264 = vld [vmem:[%s191 + $0x200] sm:$0xff]
      %v265 = vld [vmem:[%s191 + $0x208] sm:$0xff]
      %v266 = vld [vmem:[%s191 + $0x210] sm:$0xff]
      %v267 = vld [vmem:[%s191 + $0x218] sm:$0xff]
      %v268 = vld [vmem:[%s191 + $0x220] sm:$0xff]
      %v269 = vld [vmem:[%s191 + $0x228] sm:$0xff]
      %v270 = vld [vmem:[%s191 + $0x230] sm:$0xff]
      %v271 = vld [vmem:[%s191 + $0x238] sm:$0xff]
      %v272 = vld [vmem:[%s191 + $0x240] sm:$0xff]
      %v273 = vld [vmem:[%s191 + $0x248] sm:$0xff]
      %v274 = vld [vmem:[%s191 + $0x250] sm:$0xff]
      %v275 = vld [vmem:[%s191 + $0x258] sm:$0xff]
      %v276 = vld [vmem:[%s191 + $0x260] sm:$0xff]
      %v277 = vld [vmem:[%s191 + $0x268] sm:$0xff]
      %v278 = vld [vmem:[%s191 + $0x270] sm:$0xff]
      %v279 = vld [vmem:[%s191 + $0x278] sm:$0xff]
      %v280 = vld [vmem:[%s191 + $0x280] sm:$0xff]
      %v281 = vld [vmem:[%s191 + $0x288] sm:$0xff]
      %v282 = vld [vmem:[%s191 + $0x290] sm:$0xff]
      %v283 = vld [vmem:[%s191 + $0x298] sm:$0xff]
      %v284 = vld [vmem:[%s191 + $0x2a0] sm:$0xff]
      %v285 = vld [vmem:[%s191 + $0x2a8] sm:$0xff]
      %v286 = vld [vmem:[%s191 + $0x2b0] sm:$0xff]
      %v287 = vld [vmem:[%s191 + $0x2b8] sm:$0xff]
      %v288 = vld [vmem:[%s191 + $0x2c0] sm:$0xff]
      %v289 = vld [vmem:[%s191 + $0x2c8] sm:$0xff]
      %v290 = vld [vmem:[%s191 + $0x2d0] sm:$0xff]
      %v291 = vld [vmem:[%s191 + $0x2d8] sm:$0xff]
      %v292 = vld [vmem:[%s191 + $0x2e0] sm:$0xff]
      %v293 = vld [vmem:[%s191 + $0x2e8] sm:$0xff]
      %v294 = vld [vmem:[%s191 + $0x2f0] sm:$0xff]
      %v295 = vld [vmem:[%s191 + $0x2f8] sm:$0xff]
      %v296 = vld [vmem:[%s191 + $0x300] sm:$0xff]
      %v297 = vld [vmem:[%s191 + $0x308] sm:$0xff]
      %v298 = vld [vmem:[%s191 + $0x310] sm:$0xff]
      %v299 = vld [vmem:[%s191 + $0x318] sm:$0xff]
      %v300 = vld [vmem:[%s191 + $0x320] sm:$0xff]
      %v301 = vld [vmem:[%s191 + $0x328] sm:$0xff]
      %v302 = vld [vmem:[%s191 + $0x330] sm:$0xff]
      %v303 = vld [vmem:[%s191 + $0x338] sm:$0xff]
      %v304 = vld [vmem:[%s191 + $0x340] sm:$0xff]
      %v305 = vld [vmem:[%s191 + $0x348] sm:$0xff]
      %v306 = vld [vmem:[%s191 + $0x350] sm:$0xff]
      %v307 = vld [vmem:[%s191 + $0x358] sm:$0xff]
      %v308 = vld [vmem:[%s191 + $0x360] sm:$0xff]
      %v309 = vld [vmem:[%s191 + $0x368] sm:$0xff]
      %v310 = vld [vmem:[%s191 + $0x370] sm:$0xff]
      %v311 = vld [vmem:[%s191 + $0x378] sm:$0xff]
      %v312 = vld [vmem:[%s191 + $0x380] sm:$0xff]
      %v313 = vld [vmem:[%s191 + $0x388] sm:$0xff]
      %v314 = vld [vmem:[%s191 + $0x390] sm:$0xff]
      %v315 = vld [vmem:[%s191 + $0x398] sm:$0xff]
      %v316 = vld [vmem:[%s191 + $0x3a0] sm:$0xff]
      %v317 = vld [vmem:[%s191 + $0x3a8] sm:$0xff]
      %v318 = vld [vmem:[%s191 + $0x3b0] sm:$0xff]
      %v319 = vld [vmem:[%s191 + $0x3b8] sm:$0xff]
      %v320 = vld [vmem:[%s191 + $0x3c0] sm:$0xff]
      %v321 = vld [vmem:[%s191 + $0x3c8] sm:$0xff]
      %v322 = vld [vmem:[%s191 + $0x3d0] sm:$0xff]
      %v323 = vld [vmem:[%s191 + $0x3d8] sm:$0xff]
      %v324 = vld [vmem:[%s191 + $0x3e0] sm:$0xff]
      %v325 = vld [vmem:[%s191 + $0x3e8] sm:$0xff]
      %v326 = vld [vmem:[%s191 + $0x3f0] sm:$0xff]
      %v327 = vld [vmem:[%s191 + $0x3f8] sm:$0xff]
      %v328 = vld [vmem:[%s1] sm:$0xf]
      %v329 = vld [vmem:[%s1 + $0x4] sm:$0xf]
      %v330 = vld [vmem:[%s1 + $0x8] sm:$0xf]
      %v331 = vld [vmem:[%s1 + $0xc] sm:$0xf]
      %v332 = vld [vmem:[%s1 + $0x10] sm:$0xf]
      %v333 = vld [vmem:[%s1 + $0x14] sm:$0xf]
      %v334 = vld [vmem:[%s1 + $0x18] sm:$0xf]
      %v335 = vld [vmem:[%s1 + $0x1c] sm:$0xf]
      %v336 = vld [vmem:[%s1 + $0x20] sm:$0xf]
      %v337 = vld [vmem:[%s1 + $0x24] sm:$0xf]
      %v338 = vld [vmem:[%s1 + $0x28] sm:$0xf]
      %v339 = vld [vmem:[%s1 + $0x2c] sm:$0xf]
      %v340 = vld [vmem:[%s1 + $0x30] sm:$0xf]
      %v341 = vld [vmem:[%s1 + $0x34] sm:$0xf]
      %v342 = vld [vmem:[%s1 + $0x38] sm:$0xf]
      %v343 = vld [vmem:[%s1 + $0x3c] sm:$0xf]
      %v344 = vld [vmem:[%s1 + $0x40] sm:$0xf]
      %v345 = vld [vmem:[%s1 + $0x44] sm:$0xf]
      %v346 = vld [vmem:[%s1 + $0x48] sm:$0xf]
      %v347 = vld [vmem:[%s1 + $0x4c] sm:$0xf]
      %v348 = vld [vmem:[%s1 + $0x50] sm:$0xf]
      %v349 = vld [vmem:[%s1 + $0x54] sm:$0xf]
      %v350 = vld [vmem:[%s1 + $0x58] sm:$0xf]
      %v351 = vld [vmem:[%s1 + $0x5c] sm:$0xf]
      %v352 = vld [vmem:[%s1 + $0x60] sm:$0xf]
      %v353 = vld [vmem:[%s1 + $0x64] sm:$0xf]
      %v354 = vld [vmem:[%s1 + $0x68] sm:$0xf]
      %v355 = vld [vmem:[%s1 + $0x6c] sm:$0xf]
      %v356 = vld [vmem:[%s1 + $0x70] sm:$0xf]
      %v357 = vld [vmem:[%s1 + $0x74] sm:$0xf]
      %v358 = vld [vmem:[%s1 + $0x78] sm:$0xf]
      %v359 = vld [vmem:[%s1 + $0x7c] sm:$0xf]
      %v488 = vunpack.c.l.b16 %v200
      %v489 = vunpack.c.h.b16 %v200
      %v490 = vunpack.c.l.b16 %v201
      %v491 = vunpack.c.h.b16 %v201
      %v492 = vunpack.c.l.b16 %v202
      %v493 = vunpack.c.h.b16 %v202
      %v494 = vunpack.c.l.b16 %v203
      %v495 = vunpack.c.h.b16 %v203
      %v496 = vunpack.c.l.b16 %v204
      %v497 = vunpack.c.h.b16 %v204
      %v498 = vunpack.c.l.b16 %v205
      %v499 = vunpack.c.h.b16 %v205
      %v500 = vunpack.c.l.b16 %v206
      %v501 = vunpack.c.h.b16 %v206
      %v502 = vunpack.c.l.b16 %v207
      %v503 = vunpack.c.h.b16 %v207
      %v504 = vunpack.c.l.b16 %v208
      %v505 = vunpack.c.h.b16 %v208
      %v506 = vunpack.c.l.b16 %v209
      %v507 = vunpack.c.h.b16 %v209
      %v508 = vunpack.c.l.b16 %v210
      %v509 = vunpack.c.h.b16 %v210
      %v510 = vunpack.c.l.b16 %v211
      %v511 = vunpack.c.h.b16 %v211
      %v512 = vunpack.c.l.b16 %v212
      %v513 = vunpack.c.h.b16 %v212
      %v514 = vunpack.c.l.b16 %v213
      %v515 = vunpack.c.h.b16 %v213
      %v516 = vunpack.c.l.b16 %v214
      %v517 = vunpack.c.h.b16 %v214
      %v518 = vunpack.c.l.b16 %v215
      %v519 = vunpack.c.h.b16 %v215
      %v520 = vunpack.c.l.b16 %v216
      %v521 = vunpack.c.h.b16 %v216
      %v522 = vunpack.c.l.b16 %v217
      %v523 = vunpack.c.h.b16 %v217
      %v524 = vunpack.c.l.b16 %v218
      %v525 = vunpack.c.h.b16 %v218
      %v526 = vunpack.c.l.b16 %v219
      %v527 = vunpack.c.h.b16 %v219
      %v528 = vunpack.c.l.b16 %v220
      %v529 = vunpack.c.h.b16 %v220
      %v530 = vunpack.c.l.b16 %v221
      %v531 = vunpack.c.h.b16 %v221
      %v532 = vunpack.c.l.b16 %v222
      %v533 = vunpack.c.h.b16 %v222
      %v534 = vunpack.c.l.b16 %v223
      %v535 = vunpack.c.h.b16 %v223
      %v536 = vunpack.c.l.b16 %v224
      %v537 = vunpack.c.h.b16 %v224
      %v538 = vunpack.c.l.b16 %v225
      %v539 = vunpack.c.h.b16 %v225
      %v540 = vunpack.c.l.b16 %v226
      %v541 = vunpack.c.h.b16 %v226
      %v542 = vunpack.c.l.b16 %v227
      %v543 = vunpack.c.h.b16 %v227
      %v544 = vunpack.c.l.b16 %v228
      %v545 = vunpack.c.h.b16 %v228
      %v546 = vunpack.c.l.b16 %v229
      %v547 = vunpack.c.h.b16 %v229
      %v548 = vunpack.c.l.b16 %v230
      %v549 = vunpack.c.h.b16 %v230
      %v550 = vunpack.c.l.b16 %v231
      %v551 = vunpack.c.h.b16 %v231
      %v552 = vunpack.c.l.b16 %v232
      %v553 = vunpack.c.h.b16 %v232
      %v554 = vunpack.c.l.b16 %v233
      %v555 = vunpack.c.h.b16 %v233
      %v556 = vunpack.c.l.b16 %v234
      %v557 = vunpack.c.h.b16 %v234
      %v558 = vunpack.c.l.b16 %v235
      %v559 = vunpack.c.h.b16 %v235
      %v560 = vunpack.c.l.b16 %v236
      %v561 = vunpack.c.h.b16 %v236
      %v562 = vunpack.c.l.b16 %v237
      %v563 = vunpack.c.h.b16 %v237
      %v564 = vunpack.c.l.b16 %v238
      %v565 = vunpack.c.h.b16 %v238
      %v566 = vunpack.c.l.b16 %v239
      %v567 = vunpack.c.h.b16 %v239
      %v568 = vunpack.c.l.b16 %v240
      %v569 = vunpack.c.h.b16 %v240
      %v570 = vunpack.c.l.b16 %v241
      %v571 = vunpack.c.h.b16 %v241
      %v572 = vunpack.c.l.b16 %v242
      %v573 = vunpack.c.h.b16 %v242
      %v574 = vunpack.c.l.b16 %v243
      %v575 = vunpack.c.h.b16 %v243
      %v576 = vunpack.c.l.b16 %v244
      %v577 = vunpack.c.h.b16 %v244
      %v578 = vunpack.c.l.b16 %v245
      %v579 = vunpack.c.h.b16 %v245
      %v580 = vunpack.c.l.b16 %v246
      %v581 = vunpack.c.h.b16 %v246
      %v582 = vunpack.c.l.b16 %v247
      %v583 = vunpack.c.h.b16 %v247
      %v584 = vunpack.c.l.b16 %v248
      %v585 = vunpack.c.h.b16 %v248
      %v586 = vunpack.c.l.b16 %v249
      %v587 = vunpack.c.h.b16 %v249
      %v588 = vunpack.c.l.b16 %v250
      %v589 = vunpack.c.h.b16 %v250
      %v590 = vunpack.c.l.b16 %v251
      %v591 = vunpack.c.h.b16 %v251
      %v592 = vunpack.c.l.b16 %v252
      %v593 = vunpack.c.h.b16 %v252
      %v594 = vunpack.c.l.b16 %v253
      %v595 = vunpack.c.h.b16 %v253
      %v596 = vunpack.c.l.b16 %v254
      %v597 = vunpack.c.h.b16 %v254
      %v598 = vunpack.c.l.b16 %v255
      %v599 = vunpack.c.h.b16 %v255
      %v600 = vunpack.c.l.b16 %v256
      %v601 = vunpack.c.h.b16 %v256
      %v602 = vunpack.c.l.b16 %v257
      %v603 = vunpack.c.h.b16 %v257
      %v604 = vunpack.c.l.b16 %v258
      %v605 = vunpack.c.h.b16 %v258
      %v606 = vunpack.c.l.b16 %v259
      %v607 = vunpack.c.h.b16 %v259
      %v608 = vunpack.c.l.b16 %v260
      %v609 = vunpack.c.h.b16 %v260
      %v610 = vunpack.c.l.b16 %v261
      %v611 = vunpack.c.h.b16 %v261
      %v612 = vunpack.c.l.b16 %v262
      %v613 = vunpack.c.h.b16 %v262
      %v614 = vunpack.c.l.b16 %v263
      %v615 = vunpack.c.h.b16 %v263
      %v616 = vunpack.c.l.b16 %v264
      %v617 = vunpack.c.h.b16 %v264
      %v618 = vunpack.c.l.b16 %v265
      %v619 = vunpack.c.h.b16 %v265
      %v620 = vunpack.c.l.b16 %v266
      %v621 = vunpack.c.h.b16 %v266
      %v622 = vunpack.c.l.b16 %v267
      %v623 = vunpack.c.h.b16 %v267
      %v624 = vunpack.c.l.b16 %v268
      %v625 = vunpack.c.h.b16 %v268
      %v626 = vunpack.c.l.b16 %v269
      %v627 = vunpack.c.h.b16 %v269
      %v628 = vunpack.c.l.b16 %v270
      %v629 = vunpack.c.h.b16 %v270
      %v630 = vunpack.c.l.b16 %v271
      %v631 = vunpack.c.h.b16 %v271
      %v632 = vunpack.c.l.b16 %v272
      %v633 = vunpack.c.h.b16 %v272
      %v634 = vunpack.c.l.b16 %v273
      %v635 = vunpack.c.h.b16 %v273
      %v636 = vunpack.c.l.b16 %v274
      %v637 = vunpack.c.h.b16 %v274
      %v638 = vunpack.c.l.b16 %v275
      %v639 = vunpack.c.h.b16 %v275
      %v640 = vunpack.c.l.b16 %v276
      %v641 = vunpack.c.h.b16 %v276
      %v642 = vunpack.c.l.b16 %v277
      %v643 = vunpack.c.h.b16 %v277
      %v644 = vunpack.c.l.b16 %v278
      %v645 = vunpack.c.h.b16 %v278
      %v646 = vunpack.c.l.b16 %v279
      %v647 = vunpack.c.h.b16 %v279
      %v648 = vunpack.c.l.b16 %v280
      %v649 = vunpack.c.h.b16 %v280
      %v650 = vunpack.c.l.b16 %v281
      %v651 = vunpack.c.h.b16 %v281
      %v652 = vunpack.c.l.b16 %v282
      %v653 = vunpack.c.h.b16 %v282
      %v654 = vunpack.c.l.b16 %v283
      %v655 = vunpack.c.h.b16 %v283
      %v656 = vunpack.c.l.b16 %v284
      %v657 = vunpack.c.h.b16 %v284
      %v658 = vunpack.c.l.b16 %v285
      %v659 = vunpack.c.h.b16 %v285
      %v660 = vunpack.c.l.b16 %v286
      %v661 = vunpack.c.h.b16 %v286
      %v662 = vunpack.c.l.b16 %v287
      %v663 = vunpack.c.h.b16 %v287
      %v664 = vunpack.c.l.b16 %v288
      %v665 = vunpack.c.h.b16 %v288
      %v666 = vunpack.c.l.b16 %v289
      %v667 = vunpack.c.h.b16 %v289
      %v668 = vunpack.c.l.b16 %v290
      %v669 = vunpack.c.h.b16 %v290
      %v670 = vunpack.c.l.b16 %v291
      %v671 = vunpack.c.h.b16 %v291
      %v672 = vunpack.c.l.b16 %v292
      %v673 = vunpack.c.h.b16 %v292
      %v674 = vunpack.c.l.b16 %v293
      %v675 = vunpack.c.h.b16 %v293
      %v676 = vunpack.c.l.b16 %v294
      %v677 = vunpack.c.h.b16 %v294
      %v678 = vunpack.c.l.b16 %v295
      %v679 = vunpack.c.h.b16 %v295
      %v680 = vunpack.c.l.b16 %v296
      %v681 = vunpack.c.h.b16 %v296
      %v682 = vunpack.c.l.b16 %v297
      %v683 = vunpack.c.h.b16 %v297
      %v684 = vunpack.c.l.b16 %v298
      %v685 = vunpack.c.h.b16 %v298
      %v686 = vunpack.c.l.b16 %v299
      %v687 = vunpack.c.h.b16 %v299
      %v688 = vunpack.c.l.b16 %v300
      %v689 = vunpack.c.h.b16 %v300
      %v690 = vunpack.c.l.b16 %v301
      %v691 = vunpack.c.h.b16 %v301
      %v692 = vunpack.c.l.b16 %v302
      %v693 = vunpack.c.h.b16 %v302
      %v694 = vunpack.c.l.b16 %v303
      %v695 = vunpack.c.h.b16 %v303
      %v696 = vunpack.c.l.b16 %v304
      %v697 = vunpack.c.h.b16 %v304
      %v698 = vunpack.c.l.b16 %v305
      %v699 = vunpack.c.h.b16 %v305
      %v700 = vunpack.c.l.b16 %v306
      %v701 = vunpack.c.h.b16 %v306
      %v702 = vunpack.c.l.b16 %v307
      %v703 = vunpack.c.h.b16 %v307
      %v704 = vunpack.c.l.b16 %v308
      %v705 = vunpack.c.h.b16 %v308
      %v706 = vunpack.c.l.b16 %v309
      %v707 = vunpack.c.h.b16 %v309
      %v708 = vunpack.c.l.b16 %v310
      %v709 = vunpack.c.h.b16 %v310
      %v710 = vunpack.c.l.b16 %v311
      %v711 = vunpack.c.h.b16 %v311
      %v712 = vunpack.c.l.b16 %v312
      %v713 = vunpack.c.h.b16 %v312
      %v714 = vunpack.c.l.b16 %v313
      %v715 = vunpack.c.h.b16 %v313
      %v716 = vunpack.c.l.b16 %v314
      %v717 = vunpack.c.h.b16 %v314
      %v718 = vunpack.c.l.b16 %v315
      %v719 = vunpack.c.h.b16 %v315
      %v720 = vunpack.c.l.b16 %v316
      %v721 = vunpack.c.h.b16 %v316
      %v722 = vunpack.c.l.b16 %v317
      %v723 = vunpack.c.h.b16 %v317
      %v724 = vunpack.c.l.b16 %v318
      %v725 = vunpack.c.h.b16 %v318
      %v726 = vunpack.c.l.b16 %v319
      %v727 = vunpack.c.h.b16 %v319
      %v728 = vunpack.c.l.b16 %v320
      %v729 = vunpack.c.h.b16 %v320
      %v730 = vunpack.c.l.b16 %v321
      %v731 = vunpack.c.h.b16 %v321
      %v732 = vunpack.c.l.b16 %v322
      %v733 = vunpack.c.h.b16 %v322
      %v734 = vunpack.c.l.b16 %v323
      %v735 = vunpack.c.h.b16 %v323
      %v736 = vunpack.c.l.b16 %v324
      %v737 = vunpack.c.h.b16 %v324
      %v738 = vunpack.c.l.b16 %v325
      %v739 = vunpack.c.h.b16 %v325
      %v740 = vunpack.c.l.b16 %v326
      %v741 = vunpack.c.h.b16 %v326
      %v742 = vunpack.c.l.b16 %v327
      %v743 = vunpack.c.h.b16 %v327
      %v744 = vpack.c.b16 %v490, %v488
      %v745 = vpack.c.b16 %v491, %v489
      %v746 = vpack.c.b16 %v494, %v492
      %v747 = vpack.c.b16 %v495, %v493
      %v748 = vpack.c.b16 %v498, %v496
      %v749 = vpack.c.b16 %v499, %v497
      %v750 = vpack.c.b16 %v502, %v500
      %v751 = vpack.c.b16 %v503, %v501
      %v752 = vpack.c.b16 %v506, %v504
      %v753 = vpack.c.b16 %v507, %v505
      %v754 = vpack.c.b16 %v510, %v508
      %v755 = vpack.c.b16 %v511, %v509
      %v756 = vpack.c.b16 %v514, %v512
      %v757 = vpack.c.b16 %v515, %v513
      %v758 = vpack.c.b16 %v518, %v516
      %v759 = vpack.c.b16 %v519, %v517
      %v760 = vpack.c.b16 %v522, %v520
      %v761 = vpack.c.b16 %v523, %v521
      %v762 = vpack.c.b16 %v526, %v524
      %v763 = vpack.c.b16 %v527, %v525
      %v764 = vpack.c.b16 %v530, %v528
      %v765 = vpack.c.b16 %v531, %v529
      %v766 = vpack.c.b16 %v534, %v532
      %v767 = vpack.c.b16 %v535, %v533
      %v768 = vpack.c.b16 %v538, %v536
      %v769 = vpack.c.b16 %v539, %v537
      %v770 = vpack.c.b16 %v542, %v540
      %v771 = vpack.c.b16 %v543, %v541
      %v772 = vpack.c.b16 %v546, %v544
      %v773 = vpack.c.b16 %v547, %v545
      %v774 = vpack.c.b16 %v550, %v548
      %v775 = vpack.c.b16 %v551, %v549
      %v776 = vpack.c.b16 %v554, %v552
      %v777 = vpack.c.b16 %v555, %v553
      %v778 = vpack.c.b16 %v558, %v556
      %v779 = vpack.c.b16 %v559, %v557
      %v780 = vpack.c.b16 %v562, %v560
      %v781 = vpack.c.b16 %v563, %v561
      %v782 = vpack.c.b16 %v566, %v564
      %v783 = vpack.c.b16 %v567, %v565
      %v784 = vpack.c.b16 %v570, %v568
      %v785 = vpack.c.b16 %v571, %v569
      %v786 = vpack.c.b16 %v574, %v572
      %v787 = vpack.c.b16 %v575, %v573
      %v788 = vpack.c.b16 %v578, %v576
      %v789 = vpack.c.b16 %v579, %v577
      %v790 = vpack.c.b16 %v582, %v580
      %v791 = vpack.c.b16 %v583, %v581
      %v792 = vpack.c.b16 %v586, %v584
      %v793 = vpack.c.b16 %v587, %v585
      %v794 = vpack.c.b16 %v590, %v588
      %v795 = vpack.c.b16 %v591, %v589
      %v796 = vpack.c.b16 %v594, %v592
      %v797 = vpack.c.b16 %v595, %v593
      %v798 = vpack.c.b16 %v598, %v596
      %v799 = vpack.c.b16 %v599, %v597
      %v800 = vpack.c.b16 %v602, %v600
      %v801 = vpack.c.b16 %v603, %v601
      %v802 = vpack.c.b16 %v606, %v604
      %v803 = vpack.c.b16 %v607, %v605
      %v804 = vpack.c.b16 %v610, %v608
      %v805 = vpack.c.b16 %v611, %v609
      %v806 = vpack.c.b16 %v614, %v612
      %v807 = vpack.c.b16 %v615, %v613
      %v808 = vpack.c.b16 %v618, %v616
      %v809 = vpack.c.b16 %v619, %v617
      %v810 = vpack.c.b16 %v622, %v620
      %v811 = vpack.c.b16 %v623, %v621
      %v812 = vpack.c.b16 %v626, %v624
      %v813 = vpack.c.b16 %v627, %v625
      %v814 = vpack.c.b16 %v630, %v628
      %v815 = vpack.c.b16 %v631, %v629
      %v816 = vpack.c.b16 %v634, %v632
      %v817 = vpack.c.b16 %v635, %v633
      %v818 = vpack.c.b16 %v638, %v636
      %v819 = vpack.c.b16 %v639, %v637
      %v820 = vpack.c.b16 %v642, %v640
      %v821 = vpack.c.b16 %v643, %v641
      %v822 = vpack.c.b16 %v646, %v644
      %v823 = vpack.c.b16 %v647, %v645
      %v824 = vpack.c.b16 %v650, %v648
      %v825 = vpack.c.b16 %v651, %v649
      %v826 = vpack.c.b16 %v654, %v652
      %v827 = vpack.c.b16 %v655, %v653
      %v828 = vpack.c.b16 %v658, %v656
      %v829 = vpack.c.b16 %v659, %v657
      %v830 = vpack.c.b16 %v662, %v660
      %v831 = vpack.c.b16 %v663, %v661
      %v832 = vpack.c.b16 %v666, %v664
      %v833 = vpack.c.b16 %v667, %v665
      %v834 = vpack.c.b16 %v670, %v668
      %v835 = vpack.c.b16 %v671, %v669
      %v836 = vpack.c.b16 %v674, %v672
      %v837 = vpack.c.b16 %v675, %v673
      %v838 = vpack.c.b16 %v678, %v676
      %v839 = vpack.c.b16 %v679, %v677
      %v840 = vpack.c.b16 %v682, %v680
      %v841 = vpack.c.b16 %v683, %v681
      %v842 = vpack.c.b16 %v686, %v684
      %v843 = vpack.c.b16 %v687, %v685
      %v844 = vpack.c.b16 %v690, %v688
      %v845 = vpack.c.b16 %v691, %v689
      %v846 = vpack.c.b16 %v694, %v692
      %v847 = vpack.c.b16 %v695, %v693
      %v848 = vpack.c.b16 %v698, %v696
      %v849 = vpack.c.b16 %v699, %v697
      %v850 = vpack.c.b16 %v702, %v700
      %v851 = vpack.c.b16 %v703, %v701
      %v852 = vpack.c.b16 %v706, %v704
      %v853 = vpack.c.b16 %v707, %v705
      %v854 = vpack.c.b16 %v710, %v708
      %v855 = vpack.c.b16 %v711, %v709
      %v856 = vpack.c.b16 %v714, %v712
      %v857 = vpack.c.b16 %v715, %v713
      %v858 = vpack.c.b16 %v718, %v716
      %v859 = vpack.c.b16 %v719, %v717
      %v860 = vpack.c.b16 %v722, %v720
      %v861 = vpack.c.b16 %v723, %v721
      %v862 = vpack.c.b16 %v726, %v724
      %v863 = vpack.c.b16 %v727, %v725
      %v864 = vpack.c.b16 %v730, %v728
      %v865 = vpack.c.b16 %v731, %v729
      %v866 = vpack.c.b16 %v734, %v732
      %v867 = vpack.c.b16 %v735, %v733
      %v868 = vpack.c.b16 %v738, %v736
      %v869 = vpack.c.b16 %v739, %v737
      %v870 = vpack.c.b16 %v742, %v740
      %v871 = vpack.c.b16 %v743, %v741
      %v1032 = vunpack.c.l.b16 %v328
      %v1033 = vunpack.c.l.b16 %v329
      %v1034 = vunpack.c.l.b16 %v330
      %v1035 = vunpack.c.l.b16 %v331
      %v1036 = vunpack.c.l.b16 %v332
      %v1037 = vunpack.c.l.b16 %v333
      %v1038 = vunpack.c.l.b16 %v334
      %v1039 = vunpack.c.l.b16 %v335
      %v1040 = vunpack.c.l.b16 %v336
      %v1041 = vunpack.c.l.b16 %v337
      %v1042 = vunpack.c.l.b16 %v338
      %v1043 = vunpack.c.l.b16 %v339
      %v1044 = vunpack.c.l.b16 %v340
      %v1045 = vunpack.c.l.b16 %v341
      %v1046 = vunpack.c.l.b16 %v342
      %v1047 = vunpack.c.l.b16 %v343
      %v1048 = vunpack.c.l.b16 %v344
      %v1049 = vunpack.c.l.b16 %v345
      %v1050 = vunpack.c.l.b16 %v346
      %v1051 = vunpack.c.l.b16 %v347
      %v1052 = vunpack.c.l.b16 %v348
      %v1053 = vunpack.c.l.b16 %v349
      %v1054 = vunpack.c.l.b16 %v350
      %v1055 = vunpack.c.l.b16 %v351
      %v1056 = vunpack.c.l.b16 %v352
      %v1057 = vunpack.c.l.b16 %v353
      %v1058 = vunpack.c.l.b16 %v354
      %v1059 = vunpack.c.l.b16 %v355
      %v1060 = vunpack.c.l.b16 %v356
      %v1061 = vunpack.c.l.b16 %v357
      %v1062 = vunpack.c.l.b16 %v358
      %v1063 = vunpack.c.l.b16 %v359
      %v1064 = vpack.c.b16 %v1033, %v1032
      %v1065 = vpack.c.b16 %v1035, %v1034
      %v1066 = vpack.c.b16 %v1037, %v1036
      %v1067 = vpack.c.b16 %v1039, %v1038
      %v1068 = vpack.c.b16 %v1041, %v1040
      %v1069 = vpack.c.b16 %v1043, %v1042
      %v1070 = vpack.c.b16 %v1045, %v1044
      %v1071 = vpack.c.b16 %v1047, %v1046
      %v1072 = vpack.c.b16 %v1049, %v1048
      %v1073 = vpack.c.b16 %v1051, %v1050
      %v1074 = vpack.c.b16 %v1053, %v1052
      %v1075 = vpack.c.b16 %v1055, %v1054
      %v1076 = vpack.c.b16 %v1057, %v1056
      %v1077 = vpack.c.b16 %v1059, %v1058
      %v1078 = vpack.c.b16 %v1061, %v1060
      %v1079 = vpack.c.b16 %v1063, %v1062
      %1096 = vmatprep.subr.bf16.mxu0 0
      %1097 = vmatpush1.bf16.msra.mxu0 %v1071
      %1098 = vmatprep.subr.bf16.mxu0 0
      %1099 = vmatpush1.bf16.msra.mxu0 %v1070
      %1100 = vmatprep.subr.bf16.mxu0 0
      %1101 = vmatpush1.bf16.msra.mxu0 %v1069
      %1102 = vmatprep.subr.bf16.mxu0 0
      %1103 = vmatpush1.bf16.msra.mxu0 %v1068
      %1104 = vmatprep.subr.bf16.mxu0 0
      %1105 = vmatpush1.bf16.msra.mxu0 %v1067
      %1106 = vmatprep.subr.bf16.mxu0 0
      %1107 = vmatpush1.bf16.msra.mxu0 %v1066
      %1108 = vmatprep.subr.bf16.mxu0 0
      %1109 = vmatpush1.bf16.msra.mxu0 %v1065
      %1110 = vmatprep.subr.bf16.mxu0 0
      %1111 = vmatpush1.bf16.msra.mxu0 %v1064
      %1112 = vmatprep.subr.bf16.mxu0 0
      %1113 = vmatpush2.bf16.msra.mxu0 %v1079
      %1114 = vmatprep.subr.bf16.mxu0 0
      %1115 = vmatpush2.bf16.msra.mxu0 %v1078
      %1116 = vmatprep.subr.bf16.mxu0 0
      %1117 = vmatpush2.bf16.msra.mxu0 %v1077
      %1118 = vmatprep.subr.bf16.mxu0 0
      %1119 = vmatpush2.bf16.msra.mxu0 %v1076
      %1120 = vmatprep.subr.bf16.mxu0 0
      %1121 = vmatpush2.bf16.msra.mxu0 %v1075
      %1122 = vmatprep.subr.bf16.mxu0 0
      %1123 = vmatpush2.bf16.msra.mxu0 %v1074
      %1124 = vmatprep.subr.bf16.mxu0 0
      %1125 = vmatpush2.bf16.msra.mxu0 %v1073
      %1126 = vmatprep.subr.bf16.mxu0 0
      %1127 = vmatpush2.bf16.msra.mxu0 %v1072
      %1128 = vmatprep.mubr.bf16.mxu0 %v745
      %1129 = vmatmul.mubr.bf16.gmra.mxu0 %v744
      %v1130 = vpop.f32.mrf.mxu0
      %v1131 = vadd.f32 0.0, %v1130
      %v1132 = vpop.f32.mrf.mxu0
      %v1133 = vpop.f32.mrf.mxu0
      %v1134 = vadd.f32 0.0, %v1133
      %v1135 = vpop.f32.mrf.mxu0
      %1136 = vmatprep.mubr.bf16.mxu0 %v747
      %1137 = vmatmul.mubr.bf16.gmra.mxu0 %v746
      %v1138 = vpop.f32.mrf.mxu0
      %v1139 = vadd.f32 0.0, %v1138
      %v1140 = vpop.f32.mrf.mxu0
      %v1141 = vpop.f32.mrf.mxu0
      %v1142 = vadd.f32 0.0, %v1141
      %v1143 = vpop.f32.mrf.mxu0
      %1144 = vmatprep.mubr.bf16.mxu0 %v749
      %1145 = vmatmul.mubr.bf16.gmra.mxu0 %v748
      %v1146 = vpop.f32.mrf.mxu0
      %v1147 = vadd.f32 0.0, %v1146
      %v1148 = vpop.f32.mrf.mxu0
      %v1149 = vpop.f32.mrf.mxu0
      %v1150 = vadd.f32 0.0, %v1149
      %v1151 = vpop.f32.mrf.mxu0
      %1152 = vmatprep.mubr.bf16.mxu0 %v751
      %1153 = vmatmul.mubr.bf16.gmra.mxu0 %v750
      %v1154 = vpop.f32.mrf.mxu0
      %v1155 = vadd.f32 0.0, %v1154
      %v1156 = vpop.f32.mrf.mxu0
      %v1157 = vpop.f32.mrf.mxu0
      %v1158 = vadd.f32 0.0, %v1157
      %v1159 = vpop.f32.mrf.mxu0
      %1160 = vmatprep.mubr.bf16.mxu0 %v753
      %1161 = vmatmul.mubr.bf16.gmra.mxu0 %v752
      %v1162 = vpop.f32.mrf.mxu0
      %v1163 = vadd.f32 0.0, %v1162
      %v1164 = vpop.f32.mrf.mxu0
      %v1165 = vpop.f32.mrf.mxu0
      %v1166 = vadd.f32 0.0, %v1165
      %v1167 = vpop.f32.mrf.mxu0
      %1168 = vmatprep.mubr.bf16.mxu0 %v755
      %1169 = vmatmul.mubr.bf16.gmra.mxu0 %v754
      %v1170 = vpop.f32.mrf.mxu0
      %v1171 = vadd.f32 0.0, %v1170
      %v1172 = vpop.f32.mrf.mxu0
      %v1173 = vpop.f32.mrf.mxu0
      %v1174 = vadd.f32 0.0, %v1173
      %v1175 = vpop.f32.mrf.mxu0
      %1176 = vmatprep.mubr.bf16.mxu0 %v757
      %1177 = vmatmul.mubr.bf16.gmra.mxu0 %v756
      %v1178 = vpop.f32.mrf.mxu0
      %v1179 = vadd.f32 0.0, %v1178
      %v1180 = vpop.f32.mrf.mxu0
      %v1181 = vpop.f32.mrf.mxu0
      %v1182 = vadd.f32 0.0, %v1181
      %v1183 = vpop.f32.mrf.mxu0
      %1184 = vmatprep.mubr.bf16.mxu0 %v759
      %1185 = vmatmul.mubr.bf16.gmra.mxu0 %v758
      %v1186 = vpop.f32.mrf.mxu0
      %v1187 = vadd.f32 0.0, %v1186
      %v1188 = vpop.f32.mrf.mxu0
      %v1189 = vpop.f32.mrf.mxu0
      %v1190 = vadd.f32 0.0, %v1189
      %v1191 = vpop.f32.mrf.mxu0
      %1192 = vmatprep.mubr.bf16.mxu0 %v761
      %1193 = vmatmul.mubr.bf16.gmra.mxu0 %v760
      %v1194 = vpop.f32.mrf.mxu0
      %v1195 = vadd.f32 0.0, %v1194
      %v1196 = vpop.f32.mrf.mxu0
      %v1197 = vpop.f32.mrf.mxu0
      %v1198 = vadd.f32 0.0, %v1197
      %v1199 = vpop.f32.mrf.mxu0
      %1200 = vmatprep.mubr.bf16.mxu0 %v763
      %1201 = vmatmul.mubr.bf16.gmra.mxu0 %v762
      %v1202 = vpop.f32.mrf.mxu0
      %v1203 = vadd.f32 0.0, %v1202
      %v1204 = vpop.f32.mrf.mxu0
      %v1205 = vpop.f32.mrf.mxu0
      %v1206 = vadd.f32 0.0, %v1205
      %v1207 = vpop.f32.mrf.mxu0
      %1208 = vmatprep.mubr.bf16.mxu0 %v765
      %1209 = vmatmul.mubr.bf16.gmra.mxu0 %v764
      %v1210 = vpop.f32.mrf.mxu0
      %v1211 = vadd.f32 0.0, %v1210
      %v1212 = vpop.f32.mrf.mxu0
      %v1213 = vpop.f32.mrf.mxu0
      %v1214 = vadd.f32 0.0, %v1213
      %v1215 = vpop.f32.mrf.mxu0
      %1216 = vmatprep.mubr.bf16.mxu0 %v767
      %1217 = vmatmul.mubr.bf16.gmra.mxu0 %v766
      %v1218 = vpop.f32.mrf.mxu0
      %v1219 = vadd.f32 0.0, %v1218
      %v1220 = vpop.f32.mrf.mxu0
      %v1221 = vpop.f32.mrf.mxu0
      %v1222 = vadd.f32 0.0, %v1221
      %v1223 = vpop.f32.mrf.mxu0
      %1224 = vmatprep.mubr.bf16.mxu0 %v769
      %1225 = vmatmul.mubr.bf16.gmra.mxu0 %v768
      %v1226 = vpop.f32.mrf.mxu0
      %v1227 = vadd.f32 0.0, %v1226
      %v1228 = vpop.f32.mrf.mxu0
      %v1229 = vpop.f32.mrf.mxu0
      %v1230 = vadd.f32 0.0, %v1229
      %v1231 = vpop.f32.mrf.mxu0
      %1232 = vmatprep.mubr.bf16.mxu0 %v771
      %1233 = vmatmul.mubr.bf16.gmra.mxu0 %v770
      %v1234 = vpop.f32.mrf.mxu0
      %v1235 = vadd.f32 0.0, %v1234
      %v1236 = vpop.f32.mrf.mxu0
      %v1237 = vpop.f32.mrf.mxu0
      %v1238 = vadd.f32 0.0, %v1237
      %v1239 = vpop.f32.mrf.mxu0
      %1240 = vmatprep.mubr.bf16.mxu0 %v773
      %1241 = vmatmul.mubr.bf16.gmra.mxu0 %v772
      %v1242 = vpop.f32.mrf.mxu0
      %v1243 = vadd.f32 0.0, %v1242
      %v1244 = vpop.f32.mrf.mxu0
      %v1245 = vpop.f32.mrf.mxu0
      %v1246 = vadd.f32 0.0, %v1245
      %v1247 = vpop.f32.mrf.mxu0
      %1248 = vmatprep.mubr.bf16.mxu0 %v775
      %1249 = vmatmul.mubr.bf16.gmra.mxu0 %v774
      %v1250 = vpop.f32.mrf.mxu0
      %v1251 = vadd.f32 0.0, %v1250
      %v1252 = vpop.f32.mrf.mxu0
      %v1253 = vpop.f32.mrf.mxu0
      %v1254 = vadd.f32 0.0, %v1253
      %v1255 = vpop.f32.mrf.mxu0
      %1256 = vmatprep.mubr.bf16.mxu0 %v777
      %1257 = vmatmul.mubr.bf16.gmra.mxu0 %v776
      %v1258 = vpop.f32.mrf.mxu0
      %v1259 = vadd.f32 0.0, %v1258
      %v1260 = vpop.f32.mrf.mxu0
      %v1261 = vpop.f32.mrf.mxu0
      %v1262 = vadd.f32 0.0, %v1261
      %v1263 = vpop.f32.mrf.mxu0
      %1264 = vmatprep.mubr.bf16.mxu0 %v779
      %1265 = vmatmul.mubr.bf16.gmra.mxu0 %v778
      %v1266 = vpop.f32.mrf.mxu0
      %v1267 = vadd.f32 0.0, %v1266
      %v1268 = vpop.f32.mrf.mxu0
      %v1269 = vpop.f32.mrf.mxu0
      %v1270 = vadd.f32 0.0, %v1269
      %v1271 = vpop.f32.mrf.mxu0
      %1272 = vmatprep.mubr.bf16.mxu0 %v781
      %1273 = vmatmul.mubr.bf16.gmra.mxu0 %v780
      %v1274 = vpop.f32.mrf.mxu0
      %v1275 = vadd.f32 0.0, %v1274
      %v1276 = vpop.f32.mrf.mxu0
      %v1277 = vpop.f32.mrf.mxu0
      %v1278 = vadd.f32 0.0, %v1277
      %v1279 = vpop.f32.mrf.mxu0
      %1280 = vmatprep.mubr.bf16.mxu0 %v783
      %1281 = vmatmul.mubr.bf16.gmra.mxu0 %v782
      %v1282 = vpop.f32.mrf.mxu0
      %v1283 = vadd.f32 0.0, %v1282
      %v1284 = vpop.f32.mrf.mxu0
      %v1285 = vpop.f32.mrf.mxu0
      %v1286 = vadd.f32 0.0, %v1285
      %v1287 = vpop.f32.mrf.mxu0
      %1288 = vmatprep.mubr.bf16.mxu0 %v785
      %1289 = vmatmul.mubr.bf16.gmra.mxu0 %v784
      %v1290 = vpop.f32.mrf.mxu0
      %v1291 = vadd.f32 0.0, %v1290
      %v1292 = vpop.f32.mrf.mxu0
      %v1293 = vpop.f32.mrf.mxu0
      %v1294 = vadd.f32 0.0, %v1293
      %v1295 = vpop.f32.mrf.mxu0
      %1296 = vmatprep.mubr.bf16.mxu0 %v787
      %1297 = vmatmul.mubr.bf16.gmra.mxu0 %v786
      %v1298 = vpop.f32.mrf.mxu0
      %v1299 = vadd.f32 0.0, %v1298
      %v1300 = vpop.f32.mrf.mxu0
      %v1301 = vpop.f32.mrf.mxu0
      %v1302 = vadd.f32 0.0, %v1301
      %v1303 = vpop.f32.mrf.mxu0
      %1304 = vmatprep.mubr.bf16.mxu0 %v789
      %1305 = vmatmul.mubr.bf16.gmra.mxu0 %v788
      %v1306 = vpop.f32.mrf.mxu0
      %v1307 = vadd.f32 0.0, %v1306
      %v1308 = vpop.f32.mrf.mxu0
      %v1309 = vpop.f32.mrf.mxu0
      %v1310 = vadd.f32 0.0, %v1309
      %v1311 = vpop.f32.mrf.mxu0
      %1312 = vmatprep.mubr.bf16.mxu0 %v791
      %1313 = vmatmul.mubr.bf16.gmra.mxu0 %v790
      %v1314 = vpop.f32.mrf.mxu0
      %v1315 = vadd.f32 0.0, %v1314
      %v1316 = vpop.f32.mrf.mxu0
      %v1317 = vpop.f32.mrf.mxu0
      %v1318 = vadd.f32 0.0, %v1317
      %v1319 = vpop.f32.mrf.mxu0
      %1320 = vmatprep.mubr.bf16.mxu0 %v793
      %1321 = vmatmul.mubr.bf16.gmra.mxu0 %v792
      %v1322 = vpop.f32.mrf.mxu0
      %v1323 = vadd.f32 0.0, %v1322
      %v1324 = vpop.f32.mrf.mxu0
      %v1325 = vpop.f32.mrf.mxu0
      %v1326 = vadd.f32 0.0, %v1325
      %v1327 = vpop.f32.mrf.mxu0
      %1328 = vmatprep.mubr.bf16.mxu0 %v795
      %1329 = vmatmul.mubr.bf16.gmra.mxu0 %v794
      %v1330 = vpop.f32.mrf.mxu0
      %v1331 = vadd.f32 0.0, %v1330
      %v1332 = vpop.f32.mrf.mxu0
      %v1333 = vpop.f32.mrf.mxu0
      %v1334 = vadd.f32 0.0, %v1333
      %v1335 = vpop.f32.mrf.mxu0
      %1336 = vmatprep.mubr.bf16.mxu0 %v797
      %1337 = vmatmul.mubr.bf16.gmra.mxu0 %v796
      %v1338 = vpop.f32.mrf.mxu0
      %v1339 = vadd.f32 0.0, %v1338
      %v1340 = vpop.f32.mrf.mxu0
      %v1341 = vpop.f32.mrf.mxu0
      %v1342 = vadd.f32 0.0, %v1341
      %v1343 = vpop.f32.mrf.mxu0
      %1344 = vmatprep.mubr.bf16.mxu0 %v799
      %1345 = vmatmul.mubr.bf16.gmra.mxu0 %v798
      %v1346 = vpop.f32.mrf.mxu0
      %v1347 = vadd.f32 0.0, %v1346
      %v1348 = vpop.f32.mrf.mxu0
      %v1349 = vpop.f32.mrf.mxu0
      %v1350 = vadd.f32 0.0, %v1349
      %v1351 = vpop.f32.mrf.mxu0
      %1352 = vmatprep.mubr.bf16.mxu0 %v801
      %1353 = vmatmul.mubr.bf16.gmra.mxu0 %v800
      %v1354 = vpop.f32.mrf.mxu0
      %v1355 = vadd.f32 0.0, %v1354
      %v1356 = vpop.f32.mrf.mxu0
      %v1357 = vpop.f32.mrf.mxu0
      %v1358 = vadd.f32 0.0, %v1357
      %v1359 = vpop.f32.mrf.mxu0
      %1360 = vmatprep.mubr.bf16.mxu0 %v803
      %1361 = vmatmul.mubr.bf16.gmra.mxu0 %v802
      %v1362 = vpop.f32.mrf.mxu0
      %v1363 = vadd.f32 0.0, %v1362
      %v1364 = vpop.f32.mrf.mxu0
      %v1365 = vpop.f32.mrf.mxu0
      %v1366 = vadd.f32 0.0, %v1365
      %v1367 = vpop.f32.mrf.mxu0
      %1368 = vmatprep.mubr.bf16.mxu0 %v805
      %1369 = vmatmul.mubr.bf16.gmra.mxu0 %v804
      %v1370 = vpop.f32.mrf.mxu0
      %v1371 = vadd.f32 0.0, %v1370
      %v1372 = vpop.f32.mrf.mxu0
      %v1373 = vpop.f32.mrf.mxu0
      %v1374 = vadd.f32 0.0, %v1373
      %v1375 = vpop.f32.mrf.mxu0
      %1376 = vmatprep.mubr.bf16.mxu0 %v807
      %1377 = vmatmul.mubr.bf16.gmra.mxu0 %v806
      %v1378 = vpop.f32.mrf.mxu0
      %v1379 = vadd.f32 0.0, %v1378
      %v1380 = vpop.f32.mrf.mxu0
      %v1381 = vpop.f32.mrf.mxu0
      %v1382 = vadd.f32 0.0, %v1381
      %v1383 = vpop.f32.mrf.mxu0
      %1384 = vmatprep.mubr.bf16.mxu0 %v809
      %1385 = vmatmul.mubr.bf16.gmra.mxu0 %v808
      %v1386 = vpop.f32.mrf.mxu0
      %v1387 = vadd.f32 0.0, %v1386
      %v1388 = vpop.f32.mrf.mxu0
      %v1389 = vpop.f32.mrf.mxu0
      %v1390 = vadd.f32 0.0, %v1389
      %v1391 = vpop.f32.mrf.mxu0
      %1392 = vmatprep.mubr.bf16.mxu0 %v811
      %1393 = vmatmul.mubr.bf16.gmra.mxu0 %v810
      %v1394 = vpop.f32.mrf.mxu0
      %v1395 = vadd.f32 0.0, %v1394
      %v1396 = vpop.f32.mrf.mxu0
      %v1397 = vpop.f32.mrf.mxu0
      %v1398 = vadd.f32 0.0, %v1397
      %v1399 = vpop.f32.mrf.mxu0
      %1400 = vmatprep.mubr.bf16.mxu0 %v813
      %1401 = vmatmul.mubr.bf16.gmra.mxu0 %v812
      %v1402 = vpop.f32.mrf.mxu0
      %v1403 = vadd.f32 0.0, %v1402
      %v1404 = vpop.f32.mrf.mxu0
      %v1405 = vpop.f32.mrf.mxu0
      %v1406 = vadd.f32 0.0, %v1405
      %v1407 = vpop.f32.mrf.mxu0
      %1408 = vmatprep.mubr.bf16.mxu0 %v815
      %1409 = vmatmul.mubr.bf16.gmra.mxu0 %v814
      %v1410 = vpop.f32.mrf.mxu0
      %v1411 = vadd.f32 0.0, %v1410
      %v1412 = vpop.f32.mrf.mxu0
      %v1413 = vpop.f32.mrf.mxu0
      %v1414 = vadd.f32 0.0, %v1413
      %v1415 = vpop.f32.mrf.mxu0
      %1416 = vmatprep.mubr.bf16.mxu0 %v817
      %1417 = vmatmul.mubr.bf16.gmra.mxu0 %v816
      %v1418 = vpop.f32.mrf.mxu0
      %v1419 = vadd.f32 0.0, %v1418
      %v1420 = vpop.f32.mrf.mxu0
      %v1421 = vpop.f32.mrf.mxu0
      %v1422 = vadd.f32 0.0, %v1421
      %v1423 = vpop.f32.mrf.mxu0
      %1424 = vmatprep.mubr.bf16.mxu0 %v819
      %1425 = vmatmul.mubr.bf16.gmra.mxu0 %v818
      %v1426 = vpop.f32.mrf.mxu0
      %v1427 = vadd.f32 0.0, %v1426
      %v1428 = vpop.f32.mrf.mxu0
      %v1429 = vpop.f32.mrf.mxu0
      %v1430 = vadd.f32 0.0, %v1429
      %v1431 = vpop.f32.mrf.mxu0
      %1432 = vmatprep.mubr.bf16.mxu0 %v821
      %1433 = vmatmul.mubr.bf16.gmra.mxu0 %v820
      %v1434 = vpop.f32.mrf.mxu0
      %v1435 = vadd.f32 0.0, %v1434
      %v1436 = vpop.f32.mrf.mxu0
      %v1437 = vpop.f32.mrf.mxu0
      %v1438 = vadd.f32 0.0, %v1437
      %v1439 = vpop.f32.mrf.mxu0
      %1440 = vmatprep.mubr.bf16.mxu0 %v823
      %1441 = vmatmul.mubr.bf16.gmra.mxu0 %v822
      %v1442 = vpop.f32.mrf.mxu0
      %v1443 = vadd.f32 0.0, %v1442
      %v1444 = vpop.f32.mrf.mxu0
      %v1445 = vpop.f32.mrf.mxu0
      %v1446 = vadd.f32 0.0, %v1445
      %v1447 = vpop.f32.mrf.mxu0
      %1448 = vmatprep.mubr.bf16.mxu0 %v825
      %1449 = vmatmul.mubr.bf16.gmra.mxu0 %v824
      %v1450 = vpop.f32.mrf.mxu0
      %v1451 = vadd.f32 0.0, %v1450
      %v1452 = vpop.f32.mrf.mxu0
      %v1453 = vpop.f32.mrf.mxu0
      %v1454 = vadd.f32 0.0, %v1453
      %v1455 = vpop.f32.mrf.mxu0
      %1456 = vmatprep.mubr.bf16.mxu0 %v827
      %1457 = vmatmul.mubr.bf16.gmra.mxu0 %v826
      %v1458 = vpop.f32.mrf.mxu0
      %v1459 = vadd.f32 0.0, %v1458
      %v1460 = vpop.f32.mrf.mxu0
      %v1461 = vpop.f32.mrf.mxu0
      %v1462 = vadd.f32 0.0, %v1461
      %v1463 = vpop.f32.mrf.mxu0
      %1464 = vmatprep.mubr.bf16.mxu0 %v829
      %1465 = vmatmul.mubr.bf16.gmra.mxu0 %v828
      %v1466 = vpop.f32.mrf.mxu0
      %v1467 = vadd.f32 0.0, %v1466
      %v1468 = vpop.f32.mrf.mxu0
      %v1469 = vpop.f32.mrf.mxu0
      %v1470 = vadd.f32 0.0, %v1469
      %v1471 = vpop.f32.mrf.mxu0
      %1472 = vmatprep.mubr.bf16.mxu0 %v831
      %1473 = vmatmul.mubr.bf16.gmra.mxu0 %v830
      %v1474 = vpop.f32.mrf.mxu0
      %v1475 = vadd.f32 0.0, %v1474
      %v1476 = vpop.f32.mrf.mxu0
      %v1477 = vpop.f32.mrf.mxu0
      %v1478 = vadd.f32 0.0, %v1477
      %v1479 = vpop.f32.mrf.mxu0
      %1480 = vmatprep.mubr.bf16.mxu0 %v833
      %1481 = vmatmul.mubr.bf16.gmra.mxu0 %v832
      %v1482 = vpop.f32.mrf.mxu0
      %v1483 = vadd.f32 0.0, %v1482
      %v1484 = vpop.f32.mrf.mxu0
      %v1485 = vpop.f32.mrf.mxu0
      %v1486 = vadd.f32 0.0, %v1485
      %v1487 = vpop.f32.mrf.mxu0
      %1488 = vmatprep.mubr.bf16.mxu0 %v835
      %1489 = vmatmul.mubr.bf16.gmra.mxu0 %v834
      %v1490 = vpop.f32.mrf.mxu0
      %v1491 = vadd.f32 0.0, %v1490
      %v1492 = vpop.f32.mrf.mxu0
      %v1493 = vpop.f32.mrf.mxu0
      %v1494 = vadd.f32 0.0, %v1493
      %v1495 = vpop.f32.mrf.mxu0
      %1496 = vmatprep.mubr.bf16.mxu0 %v837
      %1497 = vmatmul.mubr.bf16.gmra.mxu0 %v836
      %v1498 = vpop.f32.mrf.mxu0
      %v1499 = vadd.f32 0.0, %v1498
      %v1500 = vpop.f32.mrf.mxu0
      %v1501 = vpop.f32.mrf.mxu0
      %v1502 = vadd.f32 0.0, %v1501
      %v1503 = vpop.f32.mrf.mxu0
      %1504 = vmatprep.mubr.bf16.mxu0 %v839
      %1505 = vmatmul.mubr.bf16.gmra.mxu0 %v838
      %v1506 = vpop.f32.mrf.mxu0
      %v1507 = vadd.f32 0.0, %v1506
      %v1508 = vpop.f32.mrf.mxu0
      %v1509 = vpop.f32.mrf.mxu0
      %v1510 = vadd.f32 0.0, %v1509
      %v1511 = vpop.f32.mrf.mxu0
      %1512 = vmatprep.mubr.bf16.mxu0 %v841
      %1513 = vmatmul.mubr.bf16.gmra.mxu0 %v840
      %v1514 = vpop.f32.mrf.mxu0
      %v1515 = vadd.f32 0.0, %v1514
      %v1516 = vpop.f32.mrf.mxu0
      %v1517 = vpop.f32.mrf.mxu0
      %v1518 = vadd.f32 0.0, %v1517
      %v1519 = vpop.f32.mrf.mxu0
      %1520 = vmatprep.mubr.bf16.mxu0 %v843
      %1521 = vmatmul.mubr.bf16.gmra.mxu0 %v842
      %v1522 = vpop.f32.mrf.mxu0
      %v1523 = vadd.f32 0.0, %v1522
      %v1524 = vpop.f32.mrf.mxu0
      %v1525 = vpop.f32.mrf.mxu0
      %v1526 = vadd.f32 0.0, %v1525
      %v1527 = vpop.f32.mrf.mxu0
      %1528 = vmatprep.mubr.bf16.mxu0 %v845
      %1529 = vmatmul.mubr.bf16.gmra.mxu0 %v844
      %v1530 = vpop.f32.mrf.mxu0
      %v1531 = vadd.f32 0.0, %v1530
      %v1532 = vpop.f32.mrf.mxu0
      %v1533 = vpop.f32.mrf.mxu0
      %v1534 = vadd.f32 0.0, %v1533
      %v1535 = vpop.f32.mrf.mxu0
      %1536 = vmatprep.mubr.bf16.mxu0 %v847
      %1537 = vmatmul.mubr.bf16.gmra.mxu0 %v846
      %v1538 = vpop.f32.mrf.mxu0
      %v1539 = vadd.f32 0.0, %v1538
      %v1540 = vpop.f32.mrf.mxu0
      %v1541 = vpop.f32.mrf.mxu0
      %v1542 = vadd.f32 0.0, %v1541
      %v1543 = vpop.f32.mrf.mxu0
      %1544 = vmatprep.mubr.bf16.mxu0 %v849
      %1545 = vmatmul.mubr.bf16.gmra.mxu0 %v848
      %v1546 = vpop.f32.mrf.mxu0
      %v1547 = vadd.f32 0.0, %v1546
      %v1548 = vpop.f32.mrf.mxu0
      %v1549 = vpop.f32.mrf.mxu0
      %v1550 = vadd.f32 0.0, %v1549
      %v1551 = vpop.f32.mrf.mxu0
      %1552 = vmatprep.mubr.bf16.mxu0 %v851
      %1553 = vmatmul.mubr.bf16.gmra.mxu0 %v850
      %v1554 = vpop.f32.mrf.mxu0
      %v1555 = vadd.f32 0.0, %v1554
      %v1556 = vpop.f32.mrf.mxu0
      %v1557 = vpop.f32.mrf.mxu0
      %v1558 = vadd.f32 0.0, %v1557
      %v1559 = vpop.f32.mrf.mxu0
      %1560 = vmatprep.mubr.bf16.mxu0 %v853
      %1561 = vmatmul.mubr.bf16.gmra.mxu0 %v852
      %v1562 = vpop.f32.mrf.mxu0
      %v1563 = vadd.f32 0.0, %v1562
      %v1564 = vpop.f32.mrf.mxu0
      %v1565 = vpop.f32.mrf.mxu0
      %v1566 = vadd.f32 0.0, %v1565
      %v1567 = vpop.f32.mrf.mxu0
      %1568 = vmatprep.mubr.bf16.mxu0 %v855
      %1569 = vmatmul.mubr.bf16.gmra.mxu0 %v854
      %v1570 = vpop.f32.mrf.mxu0
      %v1571 = vadd.f32 0.0, %v1570
      %v1572 = vpop.f32.mrf.mxu0
      %v1573 = vpop.f32.mrf.mxu0
      %v1574 = vadd.f32 0.0, %v1573
      %v1575 = vpop.f32.mrf.mxu0
      %1576 = vmatprep.mubr.bf16.mxu0 %v857
      %1577 = vmatmul.mubr.bf16.gmra.mxu0 %v856
      %v1578 = vpop.f32.mrf.mxu0
      %v1579 = vadd.f32 0.0, %v1578
      %v1580 = vpop.f32.mrf.mxu0
      %v1581 = vpop.f32.mrf.mxu0
      %v1582 = vadd.f32 0.0, %v1581
      %v1583 = vpop.f32.mrf.mxu0
      %1584 = vmatprep.mubr.bf16.mxu0 %v859
      %1585 = vmatmul.mubr.bf16.gmra.mxu0 %v858
      %v1586 = vpop.f32.mrf.mxu0
      %v1587 = vadd.f32 0.0, %v1586
      %v1588 = vpop.f32.mrf.mxu0
      %v1589 = vpop.f32.mrf.mxu0
      %v1590 = vadd.f32 0.0, %v1589
      %v1591 = vpop.f32.mrf.mxu0
      %1592 = vmatprep.mubr.bf16.mxu0 %v861
      %1593 = vmatmul.mubr.bf16.gmra.mxu0 %v860
      %v1594 = vpop.f32.mrf.mxu0
      %v1595 = vadd.f32 0.0, %v1594
      %v1596 = vpop.f32.mrf.mxu0
      %v1597 = vpop.f32.mrf.mxu0
      %v1598 = vadd.f32 0.0, %v1597
      %v1599 = vpop.f32.mrf.mxu0
      %1600 = vmatprep.mubr.bf16.mxu0 %v863
      %1601 = vmatmul.mubr.bf16.gmra.mxu0 %v862
      %v1602 = vpop.f32.mrf.mxu0
      %v1603 = vadd.f32 0.0, %v1602
      %v1604 = vpop.f32.mrf.mxu0
      %v1605 = vpop.f32.mrf.mxu0
      %v1606 = vadd.f32 0.0, %v1605
      %v1607 = vpop.f32.mrf.mxu0
      %1608 = vmatprep.mubr.bf16.mxu0 %v865
      %1609 = vmatmul.mubr.bf16.gmra.mxu0 %v864
      %v1610 = vpop.f32.mrf.mxu0
      %v1611 = vadd.f32 0.0, %v1610
      %v1612 = vpop.f32.mrf.mxu0
      %v1613 = vpop.f32.mrf.mxu0
      %v1614 = vadd.f32 0.0, %v1613
      %v1615 = vpop.f32.mrf.mxu0
      %1616 = vmatprep.mubr.bf16.mxu0 %v867
      %1617 = vmatmul.mubr.bf16.gmra.mxu0 %v866
      %v1618 = vpop.f32.mrf.mxu0
      %v1619 = vadd.f32 0.0, %v1618
      %v1620 = vpop.f32.mrf.mxu0
      %v1621 = vpop.f32.mrf.mxu0
      %v1622 = vadd.f32 0.0, %v1621
      %v1623 = vpop.f32.mrf.mxu0
      %1624 = vmatprep.mubr.bf16.mxu0 %v869
      %1625 = vmatmul.mubr.bf16.gmra.mxu0 %v868
      %v1626 = vpop.f32.mrf.mxu0
      %v1627 = vadd.f32 0.0, %v1626
      %v1628 = vpop.f32.mrf.mxu0
      %v1629 = vpop.f32.mrf.mxu0
      %v1630 = vadd.f32 0.0, %v1629
      %v1631 = vpop.f32.mrf.mxu0
      %1632 = vmatprep.mubr.bf16.mxu0 %v871
      %1633 = vmatmul.mubr.bf16.gmra.mxu0 %v870
      %v1634 = vpop.f32.mrf.mxu0
      %v1635 = vadd.f32 0.0, %v1634
      %v1636 = vpop.f32.mrf.mxu0
      %v1637 = vpop.f32.mrf.mxu0
      %v1638 = vadd.f32 0.0, %v1637
      %v1639 = vpop.f32.mrf.mxu0
      %1640 = vdwg.mxu0
      %1641 = vst [vmem:[%s197] sm:$0xff] %v1131
      %1642 = vst [vmem:[%s197 + $0x8] sm:$0xff] %v1134
      %1643 = vst [vmem:[%s197 + $0x10] sm:$0xff] %v1139
      %1644 = vst [vmem:[%s197 + $0x18] sm:$0xff] %v1142
      %1645 = vst [vmem:[%s197 + $0x20] sm:$0xff] %v1147
      %1646 = vst [vmem:[%s197 + $0x28] sm:$0xff] %v1150
      %1647 = vst [vmem:[%s197 + $0x30] sm:$0xff] %v1155
      %1648 = vst [vmem:[%s197 + $0x38] sm:$0xff] %v1158
      %1649 = vst [vmem:[%s197 + $0x40] sm:$0xff] %v1163
      %1650 = vst [vmem:[%s197 + $0x48] sm:$0xff] %v1166
      %1651 = vst [vmem:[%s197 + $0x50] sm:$0xff] %v1171
      %1652 = vst [vmem:[%s197 + $0x58] sm:$0xff] %v1174
      %1653 = vst [vmem:[%s197 + $0x60] sm:$0xff] %v1179
      %1654 = vst [vmem:[%s197 + $0x68] sm:$0xff] %v1182
      %1655 = vst [vmem:[%s197 + $0x70] sm:$0xff] %v1187
      %1656 = vst [vmem:[%s197 + $0x78] sm:$0xff] %v1190
      %1657 = vst [vmem:[%s197 + $0x80] sm:$0xff] %v1195
      %1658 = vst [vmem:[%s197 + $0x88] sm:$0xff] %v1198
      %1659 = vst [vmem:[%s197 + $0x90] sm:$0xff] %v1203
      %1660 = vst [vmem:[%s197 + $0x98] sm:$0xff] %v1206
      %1661 = vst [vmem:[%s197 + $0xa0] sm:$0xff] %v1211
      %1662 = vst [vmem:[%s197 + $0xa8] sm:$0xff] %v1214
      %1663 = vst [vmem:[%s197 + $0xb0] sm:$0xff] %v1219
      %1664 = vst [vmem:[%s197 + $0xb8] sm:$0xff] %v1222
      %1665 = vst [vmem:[%s197 + $0xc0] sm:$0xff] %v1227
      %1666 = vst [vmem:[%s197 + $0xc8] sm:$0xff] %v1230
      %1667 = vst [vmem:[%s197 + $0xd0] sm:$0xff] %v1235
      %1668 = vst [vmem:[%s197 + $0xd8] sm:$0xff] %v1238
      %1669 = vst [vmem:[%s197 + $0xe0] sm:$0xff] %v1243
      %1670 = vst [vmem:[%s197 + $0xe8] sm:$0xff] %v1246
      %1671 = vst [vmem:[%s197 + $0xf0] sm:$0xff] %v1251
      %1672 = vst [vmem:[%s197 + $0xf8] sm:$0xff] %v1254
      %1673 = vst [vmem:[%s197 + $0x100] sm:$0xff] %v1259
      %1674 = vst [vmem:[%s197 + $0x108] sm:$0xff] %v1262
      %1675 = vst [vmem:[%s197 + $0x110] sm:$0xff] %v1267
      %1676 = vst [vmem:[%s197 + $0x118] sm:$0xff] %v1270
      %1677 = vst [vmem:[%s197 + $0x120] sm:$0xff] %v1275
      %1678 = vst [vmem:[%s197 + $0x128] sm:$0xff] %v1278
      %1679 = vst [vmem:[%s197 + $0x130] sm:$0xff] %v1283
      %1680 = vst [vmem:[%s197 + $0x138] sm:$0xff] %v1286
      %1681 = vst [vmem:[%s197 + $0x140] sm:$0xff] %v1291
      %1682 = vst [vmem:[%s197 + $0x148] sm:$0xff] %v1294
      %1683 = vst [vmem:[%s197 + $0x150] sm:$0xff] %v1299
      %1684 = vst [vmem:[%s197 + $0x158] sm:$0xff] %v1302
      %1685 = vst [vmem:[%s197 + $0x160] sm:$0xff] %v1307
      %1686 = vst [vmem:[%s197 + $0x168] sm:$0xff] %v1310
      %1687 = vst [vmem:[%s197 + $0x170] sm:$0xff] %v1315
      %1688 = vst [vmem:[%s197 + $0x178] sm:$0xff] %v1318
      %1689 = vst [vmem:[%s197 + $0x180] sm:$0xff] %v1323
      %1690 = vst [vmem:[%s197 + $0x188] sm:$0xff] %v1326
      %1691 = vst [vmem:[%s197 + $0x190] sm:$0xff] %v1331
      %1692 = vst [vmem:[%s197 + $0x198] sm:$0xff] %v1334
      %1693 = vst [vmem:[%s197 + $0x1a0] sm:$0xff] %v1339
      %1694 = vst [vmem:[%s197 + $0x1a8] sm:$0xff] %v1342
      %1695 = vst [vmem:[%s197 + $0x1b0] sm:$0xff] %v1347
      %1696 = vst [vmem:[%s197 + $0x1b8] sm:$0xff] %v1350
      %1697 = vst [vmem:[%s197 + $0x1c0] sm:$0xff] %v1355
      %1698 = vst [vmem:[%s197 + $0x1c8] sm:$0xff] %v1358
      %1699 = vst [vmem:[%s197 + $0x1d0] sm:$0xff] %v1363
      %1700 = vst [vmem:[%s197 + $0x1d8] sm:$0xff] %v1366
      %1701 = vst [vmem:[%s197 + $0x1e0] sm:$0xff] %v1371
      %1702 = vst [vmem:[%s197 + $0x1e8] sm:$0xff] %v1374
      %1703 = vst [vmem:[%s197 + $0x1f0] sm:$0xff] %v1379
      %1704 = vst [vmem:[%s197 + $0x1f8] sm:$0xff] %v1382
      %1705 = vst [vmem:[%s197 + $0x200] sm:$0xff] %v1387
      %1706 = vst [vmem:[%s197 + $0x208] sm:$0xff] %v1390
      %1707 = vst [vmem:[%s197 + $0x210] sm:$0xff] %v1395
      %1708 = vst [vmem:[%s197 + $0x218] sm:$0xff] %v1398
      %1709 = vst [vmem:[%s197 + $0x220] sm:$0xff] %v1403
      %1710 = vst [vmem:[%s197 + $0x228] sm:$0xff] %v1406
      %1711 = vst [vmem:[%s197 + $0x230] sm:$0xff] %v1411
      %1712 = vst [vmem:[%s197 + $0x238] sm:$0xff] %v1414
      %1713 = vst [vmem:[%s197 + $0x240] sm:$0xff] %v1419
      %1714 = vst [vmem:[%s197 + $0x248] sm:$0xff] %v1422
      %1715 = vst [vmem:[%s197 + $0x250] sm:$0xff] %v1427
      %1716 = vst [vmem:[%s197 + $0x258] sm:$0xff] %v1430
      %1717 = vst [vmem:[%s197 + $0x260] sm:$0xff] %v1435
      %1718 = vst [vmem:[%s197 + $0x268] sm:$0xff] %v1438
      %1719 = vst [vmem:[%s197 + $0x270] sm:$0xff] %v1443
      %1720 = vst [vmem:[%s197 + $0x278] sm:$0xff] %v1446
      %1721 = vst [vmem:[%s197 + $0x280] sm:$0xff] %v1451
      %1722 = vst [vmem:[%s197 + $0x288] sm:$0xff] %v1454
      %1723 = vst [vmem:[%s197 + $0x290] sm:$0xff] %v1459
      %1724 = vst [vmem:[%s197 + $0x298] sm:$0xff] %v1462
      %1725 = vst [vmem:[%s197 + $0x2a0] sm:$0xff] %v1467
      %1726 = vst [vmem:[%s197 + $0x2a8] sm:$0xff] %v1470
      %1727 = vst [vmem:[%s197 + $0x2b0] sm:$0xff] %v1475
      %1728 = vst [vmem:[%s197 + $0x2b8] sm:$0xff] %v1478
      %1729 = vst [vmem:[%s197 + $0x2c0] sm:$0xff] %v1483
      %1730 = vst [vmem:[%s197 + $0x2c8] sm:$0xff] %v1486
      %1731 = vst [vmem:[%s197 + $0x2d0] sm:$0xff] %v1491
      %1732 = vst [vmem:[%s197 + $0x2d8] sm:$0xff] %v1494
      %1733 = vst [vmem:[%s197 + $0x2e0] sm:$0xff] %v1499
      %1734 = vst [vmem:[%s197 + $0x2e8] sm:$0xff] %v1502
      %1735 = vst [vmem:[%s197 + $0x2f0] sm:$0xff] %v1507
      %1736 = vst [vmem:[%s197 + $0x2f8] sm:$0xff] %v1510
      %1737 = vst [vmem:[%s197 + $0x300] sm:$0xff] %v1515
      %1738 = vst [vmem:[%s197 + $0x308] sm:$0xff] %v1518
      %1739 = vst [vmem:[%s197 + $0x310] sm:$0xff] %v1523
      %1740 = vst [vmem:[%s197 + $0x318] sm:$0xff] %v1526
      %1741 = vst [vmem:[%s197 + $0x320] sm:$0xff] %v1531
      %1742 = vst [vmem:[%s197 + $0x328] sm:$0xff] %v1534
      %1743 = vst [vmem:[%s197 + $0x330] sm:$0xff] %v1539
      %1744 = vst [vmem:[%s197 + $0x338] sm:$0xff] %v1542
      %1745 = vst [vmem:[%s197 + $0x340] sm:$0xff] %v1547
      %1746 = vst [vmem:[%s197 + $0x348] sm:$0xff] %v1550
      %1747 = vst [vmem:[%s197 + $0x350] sm:$0xff] %v1555
      %1748 = vst [vmem:[%s197 + $0x358] sm:$0xff] %v1558
      %1749 = vst [vmem:[%s197 + $0x360] sm:$0xff] %v1563
      %1750 = vst [vmem:[%s197 + $0x368] sm:$0xff] %v1566
      %1751 = vst [vmem:[%s197 + $0x370] sm:$0xff] %v1571
      %1752 = vst [vmem:[%s197 + $0x378] sm:$0xff] %v1574
      %1753 = vst [vmem:[%s197 + $0x380] sm:$0xff] %v1579
      %1754 = vst [vmem:[%s197 + $0x388] sm:$0xff] %v1582
      %1755 = vst [vmem:[%s197 + $0x390] sm:$0xff] %v1587
      %1756 = vst [vmem:[%s197 + $0x398] sm:$0xff] %v1590
      %1757 = vst [vmem:[%s197 + $0x3a0] sm:$0xff] %v1595
      %1758 = vst [vmem:[%s197 + $0x3a8] sm:$0xff] %v1598
      %1759 = vst [vmem:[%s197 + $0x3b0] sm:$0xff] %v1603
      %1760 = vst [vmem:[%s197 + $0x3b8] sm:$0xff] %v1606
      %1761 = vst [vmem:[%s197 + $0x3c0] sm:$0xff] %v1611
      %1762 = vst [vmem:[%s197 + $0x3c8] sm:$0xff] %v1614
      %1763 = vst [vmem:[%s197 + $0x3d0] sm:$0xff] %v1619
      %1764 = vst [vmem:[%s197 + $0x3d8] sm:$0xff] %v1622
      %1765 = vst [vmem:[%s197 + $0x3e0] sm:$0xff] %v1627
      %1766 = vst [vmem:[%s197 + $0x3e8] sm:$0xff] %v1630
      %1767 = vst [vmem:[%s197 + $0x3f0] sm:$0xff] %v1635
      %1768 = vst [vmem:[%s197 + $0x3f8] sm:$0xff] %v1638
      %p1769 = scmp.eq.s32.totalorder %s16, 0
      // Predicated region
      $region29: #{resnet_forward.19} parent=27 // pred_check
        %p1770 = pneg %p1769
      $region30: #{resnet_forward.19} parent=27 // pred_check_branch
        %1772 = sbr.rel (%p1770) target = $region32
      $region31: #{resnet_forward.19} parent=27 // pred_region
        %1773 = vst [vmem:[#allocation2] sm:$0x1] 0.0
        %1774 = vst [vmem:[#allocation3] sm:$0x1] 0.0
      $region32: #{resnet_forward.19} parent=27 // pred_fallthru
        _
      %v1775 = vld [vmem:[#allocation2] sm:$0x1]
      %v1776 = vadd.f32 %v1131, %v1134
      %v1777 = vadd.f32 %v1776, %v1139
      %v1778 = vadd.f32 %v1777, %v1142
      %v1779 = vadd.f32 %v1778, %v1147
      %v1780 = vadd.f32 %v1779, %v1150
      %v1781 = vadd.f32 %v1780, %v1155
      %v1782 = vadd.f32 %v1781, %v1158
      %v1783 = vadd.f32 %v1782, %v1163
      %v1784 = vadd.f32 %v1783, %v1166
      %v1785 = vadd.f32 %v1784, %v1171
      %v1786 = vadd.f32 %v1785, %v1174
      %v1787 = vadd.f32 %v1786, %v1179
      %v1788 = vadd.f32 %v1787, %v1182
      %v1789 = vadd.f32 %v1788, %v1187
      %v1790 = vadd.f32 %v1789, %v1190
      %v1791 = vadd.f32 %v1790, %v1195
      %v1792 = vadd.f32 %v1791, %v1198
      %v1793 = vadd.f32 %v1792, %v1203
      %v1794 = vadd.f32 %v1793, %v1206
      %v1795 = vadd.f32 %v1794, %v1211
      %v1796 = vadd.f32 %v1795, %v1214
      %v1797 = vadd.f32 %v1796, %v1219
      %v1798 = vadd.f32 %v1797, %v1222
      %v1799 = vadd.f32 %v1798, %v1227
      %v1800 = vadd.f32 %v1799, %v1230
      %v1801 = vadd.f32 %v1800, %v1235
      %v1802 = vadd.f32 %v1801, %v1238
      %v1803 = vadd.f32 %v1802, %v1243
      %v1804 = vadd.f32 %v1803, %v1246
      %v1805 = vadd.f32 %v1804, %v1251
      %v1806 = vadd.f32 %v1805, %v1254
      %v1807 = vadd.f32 %v1806, %v1259
      %v1808 = vadd.f32 %v1807, %v1262
      %v1809 = vadd.f32 %v1808, %v1267
      %v1810 = vadd.f32 %v1809, %v1270
      %v1811 = vadd.f32 %v1810, %v1275
      %v1812 = vadd.f32 %v1811, %v1278
      %v1813 = vadd.f32 %v1812, %v1283
      %v1814 = vadd.f32 %v1813, %v1286
      %v1815 = vadd.f32 %v1814, %v1291
      %v1816 = vadd.f32 %v1815, %v1294
      %v1817 = vadd.f32 %v1816, %v1299
      %v1818 = vadd.f32 %v1817, %v1302
      %v1819 = vadd.f32 %v1818, %v1307
      %v1820 = vadd.f32 %v1819, %v1310
      %v1821 = vadd.f32 %v1820, %v1315
      %v1822 = vadd.f32 %v1821, %v1318
      %v1823 = vadd.f32 %v1822, %v1323
      %v1824 = vadd.f32 %v1823, %v1326
      %v1825 = vadd.f32 %v1824, %v1331
      %v1826 = vadd.f32 %v1825, %v1334
      %v1827 = vadd.f32 %v1826, %v1339
      %v1828 = vadd.f32 %v1827, %v1342
      %v1829 = vadd.f32 %v1828, %v1347
      %v1830 = vadd.f32 %v1829, %v1350
      %v1831 = vadd.f32 %v1830, %v1355
      %v1832 = vadd.f32 %v1831, %v1358
      %v1833 = vadd.f32 %v1832, %v1363
      %v1834 = vadd.f32 %v1833, %v1366
      %v1835 = vadd.f32 %v1834, %v1371
      %v1836 = vadd.f32 %v1835, %v1374
      %v1837 = vadd.f32 %v1836, %v1379
      %v1838 = vadd.f32 %v1837, %v1382
      %v1839 = vadd.f32 %v1838, %v1387
      %v1840 = vadd.f32 %v1839, %v1390
      %v1841 = vadd.f32 %v1840, %v1395
      %v1842 = vadd.f32 %v1841, %v1398
      %v1843 = vadd.f32 %v1842, %v1403
      %v1844 = vadd.f32 %v1843, %v1406
      %v1845 = vadd.f32 %v1844, %v1411
      %v1846 = vadd.f32 %v1845, %v1414
      %v1847 = vadd.f32 %v1846, %v1419
      %v1848 = vadd.f32 %v1847, %v1422
      %v1849 = vadd.f32 %v1848, %v1427
      %v1850 = vadd.f32 %v1849, %v1430
      %v1851 = vadd.f32 %v1850, %v1435
      %v1852 = vadd.f32 %v1851, %v1438
      %v1853 = vadd.f32 %v1852, %v1443
      %v1854 = vadd.f32 %v1853, %v1446
      %v1855 = vadd.f32 %v1854, %v1451
      %v1856 = vadd.f32 %v1855, %v1454
      %v1857 = vadd.f32 %v1856, %v1459
      %v1858 = vadd.f32 %v1857, %v1462
      %v1859 = vadd.f32 %v1858, %v1467
      %v1860 = vadd.f32 %v1859, %v1470
      %v1861 = vadd.f32 %v1860, %v1475
      %v1862 = vadd.f32 %v1861, %v1478
      %v1863 = vadd.f32 %v1862, %v1483
      %v1864 = vadd.f32 %v1863, %v1486
      %v1865 = vadd.f32 %v1864, %v1491
      %v1866 = vadd.f32 %v1865, %v1494
      %v1867 = vadd.f32 %v1866, %v1499
      %v1868 = vadd.f32 %v1867, %v1502
      %v1869 = vadd.f32 %v1868, %v1507
      %v1870 = vadd.f32 %v1869, %v1510
      %v1871 = vadd.f32 %v1870, %v1515
      %v1872 = vadd.f32 %v1871, %v1518
      %v1873 = vadd.f32 %v1872, %v1523
      %v1874 = vadd.f32 %v1873, %v1526
      %v1875 = vadd.f32 %v1874, %v1531
      %v1876 = vadd.f32 %v1875, %v1534
      %v1877 = vadd.f32 %v1876, %v1539
      %v1878 = vadd.f32 %v1877, %v1542
      %v1879 = vadd.f32 %v1878, %v1547
      %v1880 = vadd.f32 %v1879, %v1550
      %v1881 = vadd.f32 %v1880, %v1555
      %v1882 = vadd.f32 %v1881, %v1558
      %v1883 = vadd.f32 %v1882, %v1563
      %v1884 = vadd.f32 %v1883, %v1566
      %v1885 = vadd.f32 %v1884, %v1571
      %v1886 = vadd.f32 %v1885, %v1574
      %v1887 = vadd.f32 %v1886, %v1579
      %v1888 = vadd.f32 %v1887, %v1582
      %v1889 = vadd.f32 %v1888, %v1587
      %v1890 = vadd.f32 %v1889, %v1590
      %v1891 = vadd.f32 %v1890, %v1595
      %v1892 = vadd.f32 %v1891, %v1598
      %v1893 = vadd.f32 %v1892, %v1603
      %v1894 = vadd.f32 %v1893, %v1606
      %v1895 = vadd.f32 %v1894, %v1611
      %v1896 = vadd.f32 %v1895, %v1614
      %v1897 = vadd.f32 %v1896, %v1619
      %v1898 = vadd.f32 %v1897, %v1622
      %v1899 = vadd.f32 %v1898, %v1627
      %v1900 = vadd.f32 %v1899, %v1630
      %v1901 = vadd.f32 %v1900, %v1635
      %v1902 = vadd.f32 %v1901, %v1638
      %v1903 = vrot.slane %v1902, 4
      %v1904 = vadd.f32 %v1902, %v1903
      %v1905 = vrot.slane %v1904, 2
      %v1906 = vadd.f32 %v1904, %v1905
      %v1907 = vrot.slane %v1906, 1
      %v1908 = vadd.f32 %v1906, %v1907
      %v1909 = vadd.f32 %v1775, %v1908
      %1910 = vst [vmem:[#allocation2] sm:$0x1] %v1909
      %v1911 = vld [vmem:[#allocation3] sm:$0x1]
      %v1912 = vmul.f32 %v1131, %v1131
      %v1913 = vmul.f32 %v1134, %v1134
      %v1914 = vmul.f32 %v1139, %v1139
      %v1915 = vmul.f32 %v1142, %v1142
      %v1916 = vmul.f32 %v1147, %v1147
      %v1917 = vmul.f32 %v1150, %v1150
      %v1918 = vmul.f32 %v1155, %v1155
      %v1919 = vmul.f32 %v1158, %v1158
      %v1920 = vmul.f32 %v1163, %v1163
      %v1921 = vmul.f32 %v1166, %v1166
      %v1922 = vmul.f32 %v1171, %v1171
      %v1923 = vmul.f32 %v1174, %v1174
      %v1924 = vmul.f32 %v1179, %v1179
      %v1925 = vmul.f32 %v1182, %v1182
      %v1926 = vmul.f32 %v1187, %v1187
      %v1927 = vmul.f32 %v1190, %v1190
      %v1928 = vmul.f32 %v1195, %v1195
      %v1929 = vmul.f32 %v1198, %v1198
      %v1930 = vmul.f32 %v1203, %v1203
      %v1931 = vmul.f32 %v1206, %v1206
      %v1932 = vmul.f32 %v1211, %v1211
      %v1933 = vmul.f32 %v1214, %v1214
      %v1934 = vmul.f32 %v1219, %v1219
      %v1935 = vmul.f32 %v1222, %v1222
      %v1936 = vmul.f32 %v1227, %v1227
      %v1937 = vmul.f32 %v1230, %v1230
      %v1938 = vmul.f32 %v1235, %v1235
      %v1939 = vmul.f32 %v1238, %v1238
      %v1940 = vmul.f32 %v1243, %v1243
      %v1941 = vmul.f32 %v1246, %v1246
      %v1942 = vmul.f32 %v1251, %v1251
      %v1943 = vmul.f32 %v1254, %v1254
      %v1944 = vmul.f32 %v1259, %v1259
      %v1945 = vmul.f32 %v1262, %v1262
      %v1946 = vmul.f32 %v1267, %v1267
      %v1947 = vmul.f32 %v1270, %v1270
      %v1948 = vmul.f32 %v1275, %v1275
      %v1949 = vmul.f32 %v1278, %v1278
      %v1950 = vmul.f32 %v1283, %v1283
      %v1951 = vmul.f32 %v1286, %v1286
      %v1952 = vmul.f32 %v1291, %v1291
      %v1953 = vmul.f32 %v1294, %v1294
      %v1954 = vmul.f32 %v1299, %v1299
      %v1955 = vmul.f32 %v1302, %v1302
      %v1956 = vmul.f32 %v1307, %v1307
      %v1957 = vmul.f32 %v1310, %v1310
      %v1958 = vmul.f32 %v1315, %v1315
      %v1959 = vmul.f32 %v1318, %v1318
      %v1960 = vmul.f32 %v1323, %v1323
      %v1961 = vmul.f32 %v1326, %v1326
      %v1962 = vmul.f32 %v1331, %v1331
      %v1963 = vmul.f32 %v1334, %v1334
      %v1964 = vmul.f32 %v1339, %v1339
      %v1965 = vmul.f32 %v1342, %v1342
      %v1966 = vmul.f32 %v1347, %v1347
      %v1967 = vmul.f32 %v1350, %v1350
      %v1968 = vmul.f32 %v1355, %v1355
      %v1969 = vmul.f32 %v1358, %v1358
      %v1970 = vmul.f32 %v1363, %v1363
      %v1971 = vmul.f32 %v1366, %v1366
      %v1972 = vmul.f32 %v1371, %v1371
      %v1973 = vmul.f32 %v1374, %v1374
      %v1974 = vmul.f32 %v1379, %v1379
      %v1975 = vmul.f32 %v1382, %v1382
      %v1976 = vmul.f32 %v1387, %v1387
      %v1977 = vmul.f32 %v1390, %v1390
      %v1978 = vmul.f32 %v1395, %v1395
      %v1979 = vmul.f32 %v1398, %v1398
      %v1980 = vmul.f32 %v1403, %v1403
      %v1981 = vmul.f32 %v1406, %v1406
      %v1982 = vmul.f32 %v1411, %v1411
      %v1983 = vmul.f32 %v1414, %v1414
      %v1984 = vmul.f32 %v1419, %v1419
      %v1985 = vmul.f32 %v1422, %v1422
      %v1986 = vmul.f32 %v1427, %v1427
      %v1987 = vmul.f32 %v1430, %v1430
      %v1988 = vmul.f32 %v1435, %v1435
      %v1989 = vmul.f32 %v1438, %v1438
      %v1990 = vmul.f32 %v1443, %v1443
      %v1991 = vmul.f32 %v1446, %v1446
      %v1992 = vmul.f32 %v1451, %v1451
      %v1993 = vmul.f32 %v1454, %v1454
      %v1994 = vmul.f32 %v1459, %v1459
      %v1995 = vmul.f32 %v1462, %v1462
      %v1996 = vmul.f32 %v1467, %v1467
      %v1997 = vmul.f32 %v1470, %v1470
      %v1998 = vmul.f32 %v1475, %v1475
      %v1999 = vmul.f32 %v1478, %v1478
      %v2000 = vmul.f32 %v1483, %v1483
      %v2001 = vmul.f32 %v1486, %v1486
      %v2002 = vmul.f32 %v1491, %v1491
      %v2003 = vmul.f32 %v1494, %v1494
      %v2004 = vmul.f32 %v1499, %v1499
      %v2005 = vmul.f32 %v1502, %v1502
      %v2006 = vmul.f32 %v1507, %v1507
      %v2007 = vmul.f32 %v1510, %v1510
      %v2008 = vmul.f32 %v1515, %v1515
      %v2009 = vmul.f32 %v1518, %v1518
      %v2010 = vmul.f32 %v1523, %v1523
      %v2011 = vmul.f32 %v1526, %v1526
      %v2012 = vmul.f32 %v1531, %v1531
      %v2013 = vmul.f32 %v1534, %v1534
      %v2014 = vmul.f32 %v1539, %v1539
      %v2015 = vmul.f32 %v1542, %v1542
      %v2016 = vmul.f32 %v1547, %v1547
      %v2017 = vmul.f32 %v1550, %v1550
      %v2018 = vmul.f32 %v1555, %v1555
      %v2019 = vmul.f32 %v1558, %v1558
      %v2020 = vmul.f32 %v1563, %v1563
      %v2021 = vmul.f32 %v1566, %v1566
      %v2022 = vmul.f32 %v1571, %v1571
      %v2023 = vmul.f32 %v1574, %v1574
      %v2024 = vmul.f32 %v1579, %v1579
      %v2025 = vmul.f32 %v1582, %v1582
      %v2026 = vmul.f32 %v1587, %v1587
      %v2027 = vmul.f32 %v1590, %v1590
      %v2028 = vmul.f32 %v1595, %v1595
      %v2029 = vmul.f32 %v1598, %v1598
      %v2030 = vmul.f32 %v1603, %v1603
      %v2031 = vmul.f32 %v1606, %v1606
      %v2032 = vmul.f32 %v1611, %v1611
      %v2033 = vmul.f32 %v1614, %v1614
      %v2034 = vmul.f32 %v1619, %v1619
      %v2035 = vmul.f32 %v1622, %v1622
      %v2036 = vmul.f32 %v1627, %v1627
      %v2037 = vmul.f32 %v1630, %v1630
      %v2038 = vmul.f32 %v1635, %v1635
      %v2039 = vmul.f32 %v1638, %v1638
      %v2040 = vadd.f32 %v1912, %v1913
      %v2041 = vadd.f32 %v2040, %v1914
      %v2042 = vadd.f32 %v2041, %v1915
      %v2043 = vadd.f32 %v2042, %v1916
      %v2044 = vadd.f32 %v2043, %v1917
      %v2045 = vadd.f32 %v2044, %v1918
      %v2046 = vadd.f32 %v2045, %v1919
      %v2047 = vadd.f32 %v2046, %v1920
      %v2048 = vadd.f32 %v2047, %v1921
      %v2049 = vadd.f32 %v2048, %v1922
      %v2050 = vadd.f32 %v2049, %v1923
      %v2051 = vadd.f32 %v2050, %v1924
      %v2052 = vadd.f32 %v2051, %v1925
      %v2053 = vadd.f32 %v2052, %v1926
      %v2054 = vadd.f32 %v2053, %v1927
      %v2055 = vadd.f32 %v2054, %v1928
      %v2056 = vadd.f32 %v2055, %v1929
      %v2057 = vadd.f32 %v2056, %v1930
      %v2058 = vadd.f32 %v2057, %v1931
      %v2059 = vadd.f32 %v2058, %v1932
      %v2060 = vadd.f32 %v2059, %v1933
      %v2061 = vadd.f32 %v2060, %v1934
      %v2062 = vadd.f32 %v2061, %v1935
      %v2063 = vadd.f32 %v2062, %v1936
      %v2064 = vadd.f32 %v2063, %v1937
      %v2065 = vadd.f32 %v2064, %v1938
      %v2066 = vadd.f32 %v2065, %v1939
      %v2067 = vadd.f32 %v2066, %v1940
      %v2068 = vadd.f32 %v2067, %v1941
      %v2069 = vadd.f32 %v2068, %v1942
      %v2070 = vadd.f32 %v2069, %v1943
      %v2071 = vadd.f32 %v2070, %v1944
      %v2072 = vadd.f32 %v2071, %v1945
      %v2073 = vadd.f32 %v2072, %v1946
      %v2074 = vadd.f32 %v2073, %v1947
      %v2075 = vadd.f32 %v2074, %v1948
      %v2076 = vadd.f32 %v2075, %v1949
      %v2077 = vadd.f32 %v2076, %v1950
      %v2078 = vadd.f32 %v2077, %v1951
      %v2079 = vadd.f32 %v2078, %v1952
      %v2080 = vadd.f32 %v2079, %v1953
      %v2081 = vadd.f32 %v2080, %v1954
      %v2082 = vadd.f32 %v2081, %v1955
      %v2083 = vadd.f32 %v2082, %v1956
      %v2084 = vadd.f32 %v2083, %v1957
      %v2085 = vadd.f32 %v2084, %v1958
      %v2086 = vadd.f32 %v2085, %v1959
      %v2087 = vadd.f32 %v2086, %v1960
      %v2088 = vadd.f32 %v2087, %v1961
      %v2089 = vadd.f32 %v2088, %v1962
      %v2090 = vadd.f32 %v2089, %v1963
      %v2091 = vadd.f32 %v2090, %v1964
      %v2092 = vadd.f32 %v2091, %v1965
      %v2093 = vadd.f32 %v2092, %v1966
      %v2094 = vadd.f32 %v2093, %v1967
      %v2095 = vadd.f32 %v2094, %v1968
      %v2096 = vadd.f32 %v2095, %v1969
      %v2097 = vadd.f32 %v2096, %v1970
      %v2098 = vadd.f32 %v2097, %v1971
      %v2099 = vadd.f32 %v2098, %v1972
      %v2100 = vadd.f32 %v2099, %v1973
      %v2101 = vadd.f32 %v2100, %v1974
      %v2102 = vadd.f32 %v2101, %v1975
      %v2103 = vadd.f32 %v2102, %v1976
      %v2104 = vadd.f32 %v2103, %v1977
      %v2105 = vadd.f32 %v2104, %v1978
      %v2106 = vadd.f32 %v2105, %v1979
      %v2107 = vadd.f32 %v2106, %v1980
      %v2108 = vadd.f32 %v2107, %v1981
      %v2109 = vadd.f32 %v2108, %v1982
      %v2110 = vadd.f32 %v2109, %v1983
      %v2111 = vadd.f32 %v2110, %v1984
      %v2112 = vadd.f32 %v2111, %v1985
      %v2113 = vadd.f32 %v2112, %v1986
      %v2114 = vadd.f32 %v2113, %v1987
      %v2115 = vadd.f32 %v2114, %v1988
      %v2116 = vadd.f32 %v2115, %v1989
      %v2117 = vadd.f32 %v2116, %v1990
      %v2118 = vadd.f32 %v2117, %v1991
      %v2119 = vadd.f32 %v2118, %v1992
      %v2120 = vadd.f32 %v2119, %v1993
      %v2121 = vadd.f32 %v2120, %v1994
      %v2122 = vadd.f32 %v2121, %v1995
      %v2123 = vadd.f32 %v2122, %v1996
      %v2124 = vadd.f32 %v2123, %v1997
      %v2125 = vadd.f32 %v2124, %v1998
      %v2126 = vadd.f32 %v2125, %v1999
      %v2127 = vadd.f32 %v2126, %v2000
      %v2128 = vadd.f32 %v2127, %v2001
      %v2129 = vadd.f32 %v2128, %v2002
      %v2130 = vadd.f32 %v2129, %v2003
      %v2131 = vadd.f32 %v2130, %v2004
      %v2132 = vadd.f32 %v2131, %v2005
      %v2133 = vadd.f32 %v2132, %v2006
      %v2134 = vadd.f32 %v2133, %v2007
      %v2135 = vadd.f32 %v2134, %v2008
      %v2136 = vadd.f32 %v2135, %v2009
      %v2137 = vadd.f32 %v2136, %v2010
      %v2138 = vadd.f32 %v2137, %v2011
      %v2139 = vadd.f32 %v2138, %v2012
      %v2140 = vadd.f32 %v2139, %v2013
      %v2141 = vadd.f32 %v2140, %v2014
      %v2142 = vadd.f32 %v2141, %v2015
      %v2143 = vadd.f32 %v2142, %v2016
      %v2144 = vadd.f32 %v2143, %v2017
      %v2145 = vadd.f32 %v2144, %v2018
      %v2146 = vadd.f32 %v2145, %v2019
      %v2147 = vadd.f32 %v2146, %v2020
      %v2148 = vadd.f32 %v2147, %v2021
      %v2149 = vadd.f32 %v2148, %v2022
      %v2150 = vadd.f32 %v2149, %v2023
      %v2151 = vadd.f32 %v2150, %v2024
      %v2152 = vadd.f32 %v2151, %v2025
      %v2153 = vadd.f32 %v2152, %v2026
      %v2154 = vadd.f32 %v2153, %v2027
      %v2155 = vadd.f32 %v2154, %v2028
      %v2156 = vadd.f32 %v2155, %v2029
      %v2157 = vadd.f32 %v2156, %v2030
      %v2158 = vadd.f32 %v2157, %v2031
      %v2159 = vadd.f32 %v2158, %v2032
      %v2160 = vadd.f32 %v2159, %v2033
      %v2161 = vadd.f32 %v2160, %v2034
      %v2162 = vadd.f32 %v2161, %v2035
      %v2163 = vadd.f32 %v2162, %v2036
      %v2164 = vadd.f32 %v2163, %v2037
      %v2165 = vadd.f32 %v2164, %v2038
      %v2166 = vadd.f32 %v2165, %v2039
      %v2167 = vrot.slane %v2166, 4
      %v2168 = vadd.f32 %v2166, %v2167
      %v2169 = vrot.slane %v2168, 2
      %v2170 = vadd.f32 %v2168, %v2169
      %v2171 = vrot.slane %v2170, 1
      %v2172 = vadd.f32 %v2170, %v2171
      %v2173 = vadd.f32 %v1911, %v2172
      %2174 = vst [vmem:[#allocation3] sm:$0x1] %v2173
      %p2175 = scmp.eq.s32.totalorder %s16, 1
      // Predicated region
      $region33: #{resnet_forward.19} parent=27 // pred_check
        %p2176 = pneg %p2175
      $region34: #{resnet_forward.19} parent=27 // pred_check_branch
        %2178 = sbr.rel (%p2176) target = $region36
      $region35: #{resnet_forward.19} parent=27 // pred_region
        %v2179 = vld [vmem:[#allocation2] sm:$0x1]
        %v2180 = vmul.f32 %v2179, 0.00048828125
        %2181 = vst [vmem:[%s3] sm:$0x1] %v2180
        %v2182 = vld [vmem:[#allocation3] sm:$0x1]
        %v2183 = vmul.f32 %v2182, 0.00048828125
        %v2184 = vmul.f32 %v2180, %v2180
        %v2185 = vsub.f32 %v2183, %v2184
        %v2186 = vmax.f32 %v2185, 0.0
        %2187 = vst [vmem:[%s4] sm:$0x1] %v2186
      $region36: #{resnet_forward.19} parent=27 // pred_fallthru
        _
      %s2188 = smul.u32 128, %s16
      %p2189 = scmp.lt.s32.totalorder %s2188, 255
      %s2190 = scalar_select %p2189, %s2188, 255
      %s2191 = smul.addr %s2190, 8
      %s2192 = scalar_lea.vmem %s2, %s2191
      // Predicated region
      $region37: #{resnet_forward.19} parent=27 // pred_check
        %p2193 = pneg %p81
      $region38: #{resnet_forward.19} parent=27 // pred_check_branch
        %2195 = sbr.rel (%p2193) target = $region40
      $region39: #{resnet_forward.19} parent=27 // pred_region
        %s2196 = smul.u32 128, %s16
      $region40: #{resnet_forward.19} parent=27 // pred_fallthru
        _
      // Predicated region
      $region41: #{resnet_forward.19} parent=27 // pred_check
        %p2197 = pneg %p102
      $region42: #{resnet_forward.19} parent=27 // pred_check_branch
        %2199 = sbr.rel (%p2197) target = $region44
      $region43: #{resnet_forward.19} parent=27 // pred_region
        _
      $region44: #{resnet_forward.19} parent=27 // pred_fallthru
        _
      // Predicated region
      $region45: #{resnet_forward.19} parent=27 // pred_check
        %p2200 = pneg %p123
      $region46: #{resnet_forward.19} parent=27 // pred_check_branch
        %2202 = sbr.rel (%p2200) target = $region48
      $region47: #{resnet_forward.19} parent=27 // pred_region
        _
      $region48: #{resnet_forward.19} parent=27 // pred_fallthru
        _
      // Predicated region
      $region49: #{resnet_forward.19} parent=27 // pred_check
        %p2203 = pneg %p102
      $region50: #{resnet_forward.19} parent=27 // pred_check_branch
        %2205 = sbr.rel (%p2203) target = $region52
      $region51: #{resnet_forward.19} parent=27 // pred_region
        _
      $region52: #{resnet_forward.19} parent=27 // pred_fallthru
        _
      // Predicated region
      $region53: #{resnet_forward.19} parent=27 // pred_check
        %p2206 = pneg %p123
      $region54: #{resnet_forward.19} parent=27 // pred_check_branch
        %2208 = sbr.rel (%p2206) target = $region56
      $region55: #{resnet_forward.19} parent=27 // pred_region
        _
      $region56: #{resnet_forward.19} parent=27 // pred_fallthru
        _
    $region28: #{resnet_forward.19} parent=5 // pred_fallthru
      _
    %p2209 = scmp.le.s32.totalorder 2, %s11
    // Predicated region
    $region57: #{resnet_forward.19} parent=5 // pred_check
      %p2210 = pneg %p2209
    $region58: #{resnet_forward.19} parent=5 // pred_check_branch
      %2212 = sbr.rel (%p2210) target = $region60
    $region59: #{resnet_forward.19} parent=5 // pred_region
      %s2213 = ssub.s32 %s11, 2
      // Predicated region
      $region61: #{resnet_forward.19} parent=59 // pred_check
        %p2214 = pneg %p87
      $region62: #{resnet_forward.19} parent=59 // pred_check_branch
        %2216 = sbr.rel (%p2214) target = $region64
      $region63: #{resnet_forward.19} parent=59 // pred_region
        %s2217 = smul.u32 128, %s17
        %p2218 = scmp.lt.s32.totalorder %s2217, 255
        %s2219 = scalar_select %p2218, %s2217, 255
        %s2220 = smul.addr %s2219, 8
        %s2221 = scalar_lea.vmem %s2, %s2220
      $region64: #{resnet_forward.19} parent=59 // pred_fallthru
        _
    $region60: #{resnet_forward.19} parent=5 // pred_fallthru
      _
  $region6: #{resnet_forward.19} parent=0 // loop_footer
    %s15 = sadd.s32 1, %s11
  $region7: #{resnet_forward.19} parent=0 // loop_footer_branch
    %10 = sbr.rel target = $region3
  $region8: #{resnet_forward.19} parent=0 // loop_exit
    _

// kernel: resnet_forward.21
$region0: #{resnet_forward.21}
  #allocation0 [shape = 'u32[]', space=smem, size = 0x4, offset = 0x4, fixed_abs, tag = 'smem constant byte address 0x4 - core index']
  #allocation1 [shape = 'u32[144,128]{1,0:T(1,128)}', space=vmem, size = 0x12000, scoped, tag = 'internal scratch']
  #allocation2 [shape = 'f32[1,128]{1,0:T(1,128)}', space=vmem, size = 0x200, scoped, tag = 'scratch operand']
  #allocation3 [shape = 'f32[1,128]{1,0:T(1,128)}', space=vmem, size = 0x200, scoped, tag = 'scratch operand']
  %s0 = inlined_call_operand.vmem [shape: bf16[512,128], index: 0, kind: input, shape index: {}]
  %s1 = inlined_call_operand.vmem [shape: bf16[128,128], index: 1, kind: input, shape index: {}]
  %s2 = inlined_call_operand.vmem [shape: f32[512,128], index: 2, kind: output, shape index: {0}]
  %s3 = inlined_call_operand.vmem [shape: f32[1,128], index: 3, kind: output, shape index: {1}]
  %s4 = inlined_call_operand.vmem [shape: f32[1,128], index: 4, kind: output, shape index: {2}]
  %5 = xla_tuple %s2, %s3, %s4
  %s6 = sld [smem:[#allocation0]]
  $region42: #{resnet_forward.21} parent=0
    _
  %s8 = ssub.s32 1, %s6
  %s9 = scalar_select 0, %s8, %s6
  // Predicated region
  $region2: #{resnet_forward.21} parent=0 // pred_check
    _
  $region3: #{resnet_forward.21} parent=0 // pred_check_branch
    %11 = sbr.rel (0) target = $region5
  $region4: #{resnet_forward.21} parent=0 // pred_region
    _
  $region5: #{resnet_forward.21} parent=0 // pred_fallthru
    _
  // Predicated region
  $region6: #{resnet_forward.21} parent=0 // pred_check
    _
  $region7: #{resnet_forward.21} parent=0 // pred_check_branch
    %13 = sbr.rel (0) target = $region9
  $region8: #{resnet_forward.21} parent=0 // pred_region
    _
  $region9: #{resnet_forward.21} parent=0 // pred_fallthru
    _
  %v15 = vld [vmem:[%s0] sm:$0xf]
  %v16 = vld [vmem:[%s0 + $0x4] sm:$0xf]
  %v17 = vld [vmem:[%s0 + $0x8] sm:$0xf]
  %v18 = vld [vmem:[%s0 + $0xc] sm:$0xf]
  %v19 = vld [vmem:[%s0 + $0x10] sm:$0xf]
  %v20 = vld [vmem:[%s0 + $0x14] sm:$0xf]
  %v21 = vld [vmem:[%s0 + $0x18] sm:$0xf]
  %v22 = vld [vmem:[%s0 + $0x1c] sm:$0xf]
  %v23 = vld [vmem:[%s0 + $0x20] sm:$0xf]
  %v24 = vld [vmem:[%s0 + $0x24] sm:$0xf]
  %v25 = vld [vmem:[%s0 + $0x28] sm:$0xf]
  %v26 = vld [vmem:[%s0 + $0x2c] sm:$0xf]
  %v27 = vld [vmem:[%s0 + $0x30] sm:$0xf]
  %v28 = vld [vmem:[%s0 + $0x34] sm:$0xf]
  %v29 = vld [vmem:[%s0 + $0x38] sm:$0xf]
  %v30 = vld [vmem:[%s0 + $0x3c] sm:$0xf]
  %v31 = vld [vmem:[%s0 + $0x40] sm:$0xf]
  %v32 = vld [vmem:[%s0 + $0x44] sm:$0xf]
  %v33 = vld [vmem:[%s0 + $0x48] sm:$0xf]
  %v34 = vld [vmem:[%s0 + $0x4c] sm:$0xf]
  %v35 = vld [vmem:[%s0 + $0x50] sm:$0xf]
  %v36 = vld [vmem:[%s0 + $0x54] sm:$0xf]
  %v37 = vld [vmem:[%s0 + $0x58] sm:$0xf]
  %v38 = vld [vmem:[%s0 + $0x5c] sm:$0xf]
  %v39 = vld [vmem:[%s0 + $0x60] sm:$0xf]
  %v40 = vld [vmem:[%s0 + $0x64] sm:$0xf]
  %v41 = vld [vmem:[%s0 + $0x68] sm:$0xf]
  %v42 = vld [vmem:[%s0 + $0x6c] sm:$0xf]
  %v43 = vld [vmem:[%s0 + $0x70] sm:$0xf]
  %v44 = vld [vmem:[%s0 + $0x74] sm:$0xf]
  %v45 = vld [vmem:[%s0 + $0x78] sm:$0xf]
  %v46 = vld [vmem:[%s0 + $0x7c] sm:$0xf]
  %v47 = vld [vmem:[%s0 + $0x80] sm:$0xf]
  %v48 = vld [vmem:[%s0 + $0x84] sm:$0xf]
  %v49 = vld [vmem:[%s0 + $0x88] sm:$0xf]
  %v50 = vld [vmem:[%s0 + $0x8c] sm:$0xf]
  %v51 = vld [vmem:[%s0 + $0x90] sm:$0xf]
  %v52 = vld [vmem:[%s0 + $0x94] sm:$0xf]
  %v53 = vld [vmem:[%s0 + $0x98] sm:$0xf]
  %v54 = vld [vmem:[%s0 + $0x9c] sm:$0xf]
  %v55 = vld [vmem:[%s0 + $0xa0] sm:$0xf]
  %v56 = vld [vmem:[%s0 + $0xa4] sm:$0xf]
  %v57 = vld [vmem:[%s0 + $0xa8] sm:$0xf]
  %v58 = vld [vmem:[%s0 + $0xac] sm:$0xf]
  %v59 = vld [vmem:[%s0 + $0xb0] sm:$0xf]
  %v60 = vld [vmem:[%s0 + $0xb4] sm:$0xf]
  %v61 = vld [vmem:[%s0 + $0xb8] sm:$0xf]
  %v62 = vld [vmem:[%s0 + $0xbc] sm:$0xf]
  %v63 = vld [vmem:[%s0 + $0xc0] sm:$0xf]
  %v64 = vld [vmem:[%s0 + $0xc4] sm:$0xf]
  %v65 = vld [vmem:[%s0 + $0xc8] sm:$0xf]
  %v66 = vld [vmem:[%s0 + $0xcc] sm:$0xf]
  %v67 = vld [vmem:[%s0 + $0xd0] sm:$0xf]
  %v68 = vld [vmem:[%s0 + $0xd4] sm:$0xf]
  %v69 = vld [vmem:[%s0 + $0xd8] sm:$0xf]
  %v70 = vld [vmem:[%s0 + $0xdc] sm:$0xf]
  %v71 = vld [vmem:[%s0 + $0xe0] sm:$0xf]
  %v72 = vld [vmem:[%s0 + $0xe4] sm:$0xf]
  %v73 = vld [vmem:[%s0 + $0xe8] sm:$0xf]
  %v74 = vld [vmem:[%s0 + $0xec] sm:$0xf]
  %v75 = vld [vmem:[%s0 + $0xf0] sm:$0xf]
  %v76 = vld [vmem:[%s0 + $0xf4] sm:$0xf]
  %v77 = vld [vmem:[%s0 + $0xf8] sm:$0xf]
  %v78 = vld [vmem:[%s0 + $0xfc] sm:$0xf]
  %v79 = vld [vmem:[%s1] sm:$0xf]
  %v80 = vld [vmem:[%s1 + $0x4] sm:$0xf]
  %v81 = vld [vmem:[%s1 + $0x8] sm:$0xf]
  %v82 = vld [vmem:[%s1 + $0xc] sm:$0xf]
  %v83 = vld [vmem:[%s1 + $0x10] sm:$0xf]
  %v84 = vld [vmem:[%s1 + $0x14] sm:$0xf]
  %v85 = vld [vmem:[%s1 + $0x18] sm:$0xf]
  %v86 = vld [vmem:[%s1 + $0x1c] sm:$0xf]
  %v87 = vld [vmem:[%s1 + $0x20] sm:$0xf]
  %v88 = vld [vmem:[%s1 + $0x24] sm:$0xf]
  %v89 = vld [vmem:[%s1 + $0x28] sm:$0xf]
  %v90 = vld [vmem:[%s1 + $0x2c] sm:$0xf]
  %v91 = vld [vmem:[%s1 + $0x30] sm:$0xf]
  %v92 = vld [vmem:[%s1 + $0x34] sm:$0xf]
  %v93 = vld [vmem:[%s1 + $0x38] sm:$0xf]
  %v94 = vld [vmem:[%s1 + $0x3c] sm:$0xf]
  %v159 = vunpack.c.l.b16 %v15
  %v160 = vunpack.c.l.b16 %v16
  %v161 = vunpack.c.l.b16 %v17
  %v162 = vunpack.c.l.b16 %v18
  %v163 = vunpack.c.l.b16 %v19
  %v164 = vunpack.c.l.b16 %v20
  %v165 = vunpack.c.l.b16 %v21
  %v166 = vunpack.c.l.b16 %v22
  %v167 = vunpack.c.l.b16 %v23
  %v168 = vunpack.c.l.b16 %v24
  %v169 = vunpack.c.l.b16 %v25
  %v170 = vunpack.c.l.b16 %v26
  %v171 = vunpack.c.l.b16 %v27
  %v172 = vunpack.c.l.b16 %v28
  %v173 = vunpack.c.l.b16 %v29
  %v174 = vunpack.c.l.b16 %v30
  %v175 = vunpack.c.l.b16 %v31
  %v176 = vunpack.c.l.b16 %v32
  %v177 = vunpack.c.l.b16 %v33
  %v178 = vunpack.c.l.b16 %v34
  %v179 = vunpack.c.l.b16 %v35
  %v180 = vunpack.c.l.b16 %v36
  %v181 = vunpack.c.l.b16 %v37
  %v182 = vunpack.c.l.b16 %v38
  %v183 = vunpack.c.l.b16 %v39
  %v184 = vunpack.c.l.b16 %v40
  %v185 = vunpack.c.l.b16 %v41
  %v186 = vunpack.c.l.b16 %v42
  %v187 = vunpack.c.l.b16 %v43
  %v188 = vunpack.c.l.b16 %v44
  %v189 = vunpack.c.l.b16 %v45
  %v190 = vunpack.c.l.b16 %v46
  %v191 = vunpack.c.l.b16 %v47
  %v192 = vunpack.c.l.b16 %v48
  %v193 = vunpack.c.l.b16 %v49
  %v194 = vunpack.c.l.b16 %v50
  %v195 = vunpack.c.l.b16 %v51
  %v196 = vunpack.c.l.b16 %v52
  %v197 = vunpack.c.l.b16 %v53
  %v198 = vunpack.c.l.b16 %v54
  %v199 = vunpack.c.l.b16 %v55
  %v200 = vunpack.c.l.b16 %v56
  %v201 = vunpack.c.l.b16 %v57
  %v202 = vunpack.c.l.b16 %v58
  %v203 = vunpack.c.l.b16 %v59
  %v204 = vunpack.c.l.b16 %v60
  %v205 = vunpack.c.l.b16 %v61
  %v206 = vunpack.c.l.b16 %v62
  %v207 = vunpack.c.l.b16 %v63
  %v208 = vunpack.c.l.b16 %v64
  %v209 = vunpack.c.l.b16 %v65
  %v210 = vunpack.c.l.b16 %v66
  %v211 = vunpack.c.l.b16 %v67
  %v212 = vunpack.c.l.b16 %v68
  %v213 = vunpack.c.l.b16 %v69
  %v214 = vunpack.c.l.b16 %v70
  %v215 = vunpack.c.l.b16 %v71
  %v216 = vunpack.c.l.b16 %v72
  %v217 = vunpack.c.l.b16 %v73
  %v218 = vunpack.c.l.b16 %v74
  %v219 = vunpack.c.l.b16 %v75
  %v220 = vunpack.c.l.b16 %v76
  %v221 = vunpack.c.l.b16 %v77
  %v222 = vunpack.c.l.b16 %v78
  %v223 = vpack.c.b16 %v160, %v159
  %v224 = vpack.c.b16 %v162, %v161
  %v225 = vpack.c.b16 %v164, %v163
  %v226 = vpack.c.b16 %v166, %v165
  %v227 = vpack.c.b16 %v168, %v167
  %v228 = vpack.c.b16 %v170, %v169
  %v229 = vpack.c.b16 %v172, %v171
  %v230 = vpack.c.b16 %v174, %v173
  %v231 = vpack.c.b16 %v176, %v175
  %v232 = vpack.c.b16 %v178, %v177
  %v233 = vpack.c.b16 %v180, %v179
  %v234 = vpack.c.b16 %v182, %v181
  %v235 = vpack.c.b16 %v184, %v183
  %v236 = vpack.c.b16 %v186, %v185
  %v237 = vpack.c.b16 %v188, %v187
  %v238 = vpack.c.b16 %v190, %v189
  %v239 = vpack.c.b16 %v192, %v191
  %v240 = vpack.c.b16 %v194, %v193
  %v241 = vpack.c.b16 %v196, %v195
  %v242 = vpack.c.b16 %v198, %v197
  %v243 = vpack.c.b16 %v200, %v199
  %v244 = vpack.c.b16 %v202, %v201
  %v245 = vpack.c.b16 %v204, %v203
  %v246 = vpack.c.b16 %v206, %v205
  %v247 = vpack.c.b16 %v208, %v207
  %v248 = vpack.c.b16 %v210, %v209
  %v249 = vpack.c.b16 %v212, %v211
  %v250 = vpack.c.b16 %v214, %v213
  %v251 = vpack.c.b16 %v216, %v215
  %v252 = vpack.c.b16 %v218, %v217
  %v253 = vpack.c.b16 %v220, %v219
  %v254 = vpack.c.b16 %v222, %v221
  %v303 = vunpack.c.l.b16 %v79
  %v304 = vunpack.c.l.b16 %v80
  %v305 = vunpack.c.l.b16 %v81
  %v306 = vunpack.c.l.b16 %v82
  %v307 = vunpack.c.l.b16 %v83
  %v308 = vunpack.c.l.b16 %v84
  %v309 = vunpack.c.l.b16 %v85
  %v310 = vunpack.c.l.b16 %v86
  %v311 = vunpack.c.l.b16 %v87
  %v312 = vunpack.c.l.b16 %v88
  %v313 = vunpack.c.l.b16 %v89
  %v314 = vunpack.c.l.b16 %v90
  %v315 = vunpack.c.l.b16 %v91
  %v316 = vunpack.c.l.b16 %v92
  %v317 = vunpack.c.l.b16 %v93
  %v318 = vunpack.c.l.b16 %v94
  %v319 = vpack.c.b16 %v304, %v303
  %v320 = vpack.c.b16 %v306, %v305
  %v321 = vpack.c.b16 %v308, %v307
  %v322 = vpack.c.b16 %v310, %v309
  %v323 = vpack.c.b16 %v312, %v311
  %v324 = vpack.c.b16 %v314, %v313
  %v325 = vpack.c.b16 %v316, %v315
  %v326 = vpack.c.b16 %v318, %v317
  %335 = vmatprep.subr.bf16.mxu0 0
  %336 = vmatpush1.bf16.msra.mxu0 %v326
  %337 = vmatprep.subr.bf16.mxu0 0
  %338 = vmatpush1.bf16.msra.mxu0 %v325
  %339 = vmatprep.subr.bf16.mxu0 0
  %340 = vmatpush1.bf16.msra.mxu0 %v324
  %341 = vmatprep.subr.bf16.mxu0 0
  %342 = vmatpush1.bf16.msra.mxu0 %v323
  %343 = vmatprep.subr.bf16.mxu0 0
  %344 = vmatpush1.bf16.msra.mxu0 %v322
  %345 = vmatprep.subr.bf16.mxu0 0
  %346 = vmatpush1.bf16.msra.mxu0 %v321
  %347 = vmatprep.subr.bf16.mxu0 0
  %348 = vmatpush1.bf16.msra.mxu0 %v320
  %349 = vmatprep.subr.bf16.mxu0 0
  %350 = vmatpush1.bf16.msra.mxu0 %v319
  %351 = vmatprep.subr.bf16.mxu0 0
  %352 = vmatpush2.bf16.msra.mxu0 0
  %353 = vmatprep.subr.bf16.mxu0 0
  %354 = vmatpush2.bf16.msra.mxu0 0
  %355 = vmatprep.subr.bf16.mxu0 0
  %356 = vmatpush2.bf16.msra.mxu0 0
  %357 = vmatprep.subr.bf16.mxu0 0
  %358 = vmatpush2.bf16.msra.mxu0 0
  %359 = vmatprep.subr.bf16.mxu0 0
  %360 = vmatpush2.bf16.msra.mxu0 0
  %361 = vmatprep.subr.bf16.mxu0 0
  %362 = vmatpush2.bf16.msra.mxu0 0
  %363 = vmatprep.subr.bf16.mxu0 0
  %364 = vmatpush2.bf16.msra.mxu0 0
  %365 = vmatprep.subr.bf16.mxu0 0
  %366 = vmatpush2.bf16.msra.mxu0 0
  %367 = vmatprep.mubr.bf16.mxu0 0
  %368 = vmatmul.mubr.bf16.gmra.mxu0 %v223
  %v369 = vpop.f32.mrf.mxu0
  %v370 = vadd.f32 0.0, %v369
  %v371 = vpop.f32.mrf.mxu0
  %v372 = vpop.f32.mrf.mxu0
  %v373 = vadd.f32 0.0, %v372
  %v374 = vpop.f32.mrf.mxu0
  %375 = vmatprep.mubr.bf16.mxu0 0
  %376 = vmatmul.mubr.bf16.gmra.mxu0 %v224
  %v377 = vpop.f32.mrf.mxu0
  %v378 = vadd.f32 0.0, %v377
  %v379 = vpop.f32.mrf.mxu0
  %v380 = vpop.f32.mrf.mxu0
  %v381 = vadd.f32 0.0, %v380
  %v382 = vpop.f32.mrf.mxu0
  %383 = vmatprep.mubr.bf16.mxu0 0
  %384 = vmatmul.mubr.bf16.gmra.mxu0 %v225
  %v385 = vpop.f32.mrf.mxu0
  %v386 = vadd.f32 0.0, %v385
  %v387 = vpop.f32.mrf.mxu0
  %v388 = vpop.f32.mrf.mxu0
  %v389 = vadd.f32 0.0, %v388
  %v390 = vpop.f32.mrf.mxu0
  %391 = vmatprep.mubr.bf16.mxu0 0
  %392 = vmatmul.mubr.bf16.gmra.mxu0 %v226
  %v393 = vpop.f32.mrf.mxu0
  %v394 = vadd.f32 0.0, %v393
  %v395 = vpop.f32.mrf.mxu0
  %v396 = vpop.f32.mrf.mxu0
  %v397 = vadd.f32 0.0, %v396
  %v398 = vpop.f32.mrf.mxu0
  %399 = vmatprep.mubr.bf16.mxu0 0
  %400 = vmatmul.mubr.bf16.gmra.mxu0 %v227
  %v401 = vpop.f32.mrf.mxu0
  %v402 = vadd.f32 0.0, %v401
  %v403 = vpop.f32.mrf.mxu0
  %v404 = vpop.f32.mrf.mxu0
  %v405 = vadd.f32 0.0, %v404
  %v406 = vpop.f32.mrf.mxu0
  %407 = vmatprep.mubr.bf16.mxu0 0
  %408 = vmatmul.mubr.bf16.gmra.mxu0 %v228
  %v409 = vpop.f32.mrf.mxu0
  %v410 = vadd.f32 0.0, %v409
  %v411 = vpop.f32.mrf.mxu0
  %v412 = vpop.f32.mrf.mxu0
  %v413 = vadd.f32 0.0, %v412
  %v414 = vpop.f32.mrf.mxu0
  %415 = vmatprep.mubr.bf16.mxu0 0
  %416 = vmatmul.mubr.bf16.gmra.mxu0 %v229
  %v417 = vpop.f32.mrf.mxu0
  %v418 = vadd.f32 0.0, %v417
  %v419 = vpop.f32.mrf.mxu0
  %v420 = vpop.f32.mrf.mxu0
  %v421 = vadd.f32 0.0, %v420
  %v422 = vpop.f32.mrf.mxu0
  %423 = vmatprep.mubr.bf16.mxu0 0
  %424 = vmatmul.mubr.bf16.gmra.mxu0 %v230
  %v425 = vpop.f32.mrf.mxu0
  %v426 = vadd.f32 0.0, %v425
  %v427 = vpop.f32.mrf.mxu0
  %v428 = vpop.f32.mrf.mxu0
  %v429 = vadd.f32 0.0, %v428
  %v430 = vpop.f32.mrf.mxu0
  %431 = vmatprep.mubr.bf16.mxu0 0
  %432 = vmatmul.mubr.bf16.gmra.mxu0 %v231
  %v433 = vpop.f32.mrf.mxu0
  %v434 = vadd.f32 0.0, %v433
  %v435 = vpop.f32.mrf.mxu0
  %v436 = vpop.f32.mrf.mxu0
  %v437 = vadd.f32 0.0, %v436
  %v438 = vpop.f32.mrf.mxu0
  %439 = vmatprep.mubr.bf16.mxu0 0
  %440 = vmatmul.mubr.bf16.gmra.mxu0 %v232
  %v441 = vpop.f32.mrf.mxu0
  %v442 = vadd.f32 0.0, %v441
  %v443 = vpop.f32.mrf.mxu0
  %v444 = vpop.f32.mrf.mxu0
  %v445 = vadd.f32 0.0, %v444
  %v446 = vpop.f32.mrf.mxu0
  %447 = vmatprep.mubr.bf16.mxu0 0
  %448 = vmatmul.mubr.bf16.gmra.mxu0 %v233
  %v449 = vpop.f32.mrf.mxu0
  %v450 = vadd.f32 0.0, %v449
  %v451 = vpop.f32.mrf.mxu0
  %v452 = vpop.f32.mrf.mxu0
  %v453 = vadd.f32 0.0, %v452
  %v454 = vpop.f32.mrf.mxu0
  %455 = vmatprep.mubr.bf16.mxu0 0
  %456 = vmatmul.mubr.bf16.gmra.mxu0 %v234
  %v457 = vpop.f32.mrf.mxu0
  %v458 = vadd.f32 0.0, %v457
  %v459 = vpop.f32.mrf.mxu0
  %v460 = vpop.f32.mrf.mxu0
  %v461 = vadd.f32 0.0, %v460
  %v462 = vpop.f32.mrf.mxu0
  %463 = vmatprep.mubr.bf16.mxu0 0
  %464 = vmatmul.mubr.bf16.gmra.mxu0 %v235
  %v465 = vpop.f32.mrf.mxu0
  %v466 = vadd.f32 0.0, %v465
  %v467 = vpop.f32.mrf.mxu0
  %v468 = vpop.f32.mrf.mxu0
  %v469 = vadd.f32 0.0, %v468
  %v470 = vpop.f32.mrf.mxu0
  %471 = vmatprep.mubr.bf16.mxu0 0
  %472 = vmatmul.mubr.bf16.gmra.mxu0 %v236
  %v473 = vpop.f32.mrf.mxu0
  %v474 = vadd.f32 0.0, %v473
  %v475 = vpop.f32.mrf.mxu0
  %v476 = vpop.f32.mrf.mxu0
  %v477 = vadd.f32 0.0, %v476
  %v478 = vpop.f32.mrf.mxu0
  %479 = vmatprep.mubr.bf16.mxu0 0
  %480 = vmatmul.mubr.bf16.gmra.mxu0 %v237
  %v481 = vpop.f32.mrf.mxu0
  %v482 = vadd.f32 0.0, %v481
  %v483 = vpop.f32.mrf.mxu0
  %v484 = vpop.f32.mrf.mxu0
  %v485 = vadd.f32 0.0, %v484
  %v486 = vpop.f32.mrf.mxu0
  %487 = vmatprep.mubr.bf16.mxu0 0
  %488 = vmatmul.mubr.bf16.gmra.mxu0 %v238
  %v489 = vpop.f32.mrf.mxu0
  %v490 = vadd.f32 0.0, %v489
  %v491 = vpop.f32.mrf.mxu0
  %v492 = vpop.f32.mrf.mxu0
  %v493 = vadd.f32 0.0, %v492
  %v494 = vpop.f32.mrf.mxu0
  %495 = vmatprep.mubr.bf16.mxu0 0
  %496 = vmatmul.mubr.bf16.gmra.mxu0 %v239
  %v497 = vpop.f32.mrf.mxu0
  %v498 = vadd.f32 0.0, %v497
  %v499 = vpop.f32.mrf.mxu0
  %v500 = vpop.f32.mrf.mxu0
  %v501 = vadd.f32 0.0, %v500
  %v502 = vpop.f32.mrf.mxu0
  %503 = vmatprep.mubr.bf16.mxu0 0
  %504 = vmatmul.mubr.bf16.gmra.mxu0 %v240
  %v505 = vpop.f32.mrf.mxu0
  %v506 = vadd.f32 0.0, %v505
  %v507 = vpop.f32.mrf.mxu0
  %v508 = vpop.f32.mrf.mxu0
  %v509 = vadd.f32 0.0, %v508
  %v510 = vpop.f32.mrf.mxu0
  %511 = vmatprep.mubr.bf16.mxu0 0
  %512 = vmatmul.mubr.bf16.gmra.mxu0 %v241
  %v513 = vpop.f32.mrf.mxu0
  %v514 = vadd.f32 0.0, %v513
  %v515 = vpop.f32.mrf.mxu0
  %v516 = vpop.f32.mrf.mxu0
  %v517 = vadd.f32 0.0, %v516
  %v518 = vpop.f32.mrf.mxu0
  %519 = vmatprep.mubr.bf16.mxu0 0
  %520 = vmatmul.mubr.bf16.gmra.mxu0 %v242
  %v521 = vpop.f32.mrf.mxu0
  %v522 = vadd.f32 0.0, %v521
  %v523 = vpop.f32.mrf.mxu0
  %v524 = vpop.f32.mrf.mxu0
  %v525 = vadd.f32 0.0, %v524
  %v526 = vpop.f32.mrf.mxu0
  %527 = vmatprep.mubr.bf16.mxu0 0
  %528 = vmatmul.mubr.bf16.gmra.mxu0 %v243
  %v529 = vpop.f32.mrf.mxu0
  %v530 = vadd.f32 0.0, %v529
  %v531 = vpop.f32.mrf.mxu0
  %v532 = vpop.f32.mrf.mxu0
  %v533 = vadd.f32 0.0, %v532
  %v534 = vpop.f32.mrf.mxu0
  %535 = vmatprep.mubr.bf16.mxu0 0
  %536 = vmatmul.mubr.bf16.gmra.mxu0 %v244
  %v537 = vpop.f32.mrf.mxu0
  %v538 = vadd.f32 0.0, %v537
  %v539 = vpop.f32.mrf.mxu0
  %v540 = vpop.f32.mrf.mxu0
  %v541 = vadd.f32 0.0, %v540
  %v542 = vpop.f32.mrf.mxu0
  %543 = vmatprep.mubr.bf16.mxu0 0
  %544 = vmatmul.mubr.bf16.gmra.mxu0 %v245
  %v545 = vpop.f32.mrf.mxu0
  %v546 = vadd.f32 0.0, %v545
  %v547 = vpop.f32.mrf.mxu0
  %v548 = vpop.f32.mrf.mxu0
  %v549 = vadd.f32 0.0, %v548
  %v550 = vpop.f32.mrf.mxu0
  %551 = vmatprep.mubr.bf16.mxu0 0
  %552 = vmatmul.mubr.bf16.gmra.mxu0 %v246
  %v553 = vpop.f32.mrf.mxu0
  %v554 = vadd.f32 0.0, %v553
  %v555 = vpop.f32.mrf.mxu0
  %v556 = vpop.f32.mrf.mxu0
  %v557 = vadd.f32 0.0, %v556
  %v558 = vpop.f32.mrf.mxu0
  %559 = vmatprep.mubr.bf16.mxu0 0
  %560 = vmatmul.mubr.bf16.gmra.mxu0 %v247
  %v561 = vpop.f32.mrf.mxu0
  %v562 = vadd.f32 0.0, %v561
  %v563 = vpop.f32.mrf.mxu0
  %v564 = vpop.f32.mrf.mxu0
  %v565 = vadd.f32 0.0, %v564
  %v566 = vpop.f32.mrf.mxu0
  %567 = vmatprep.mubr.bf16.mxu0 0
  %568 = vmatmul.mubr.bf16.gmra.mxu0 %v248
  %v569 = vpop.f32.mrf.mxu0
  %v570 = vadd.f32 0.0, %v569
  %v571 = vpop.f32.mrf.mxu0
  %v572 = vpop.f32.mrf.mxu0
  %v573 = vadd.f32 0.0, %v572
  %v574 = vpop.f32.mrf.mxu0
  %575 = vmatprep.mubr.bf16.mxu0 0
  %576 = vmatmul.mubr.bf16.gmra.mxu0 %v249
  %v577 = vpop.f32.mrf.mxu0
  %v578 = vadd.f32 0.0, %v577
  %v579 = vpop.f32.mrf.mxu0
  %v580 = vpop.f32.mrf.mxu0
  %v581 = vadd.f32 0.0, %v580
  %v582 = vpop.f32.mrf.mxu0
  %583 = vmatprep.mubr.bf16.mxu0 0
  %584 = vmatmul.mubr.bf16.gmra.mxu0 %v250
  %v585 = vpop.f32.mrf.mxu0
  %v586 = vadd.f32 0.0, %v585
  %v587 = vpop.f32.mrf.mxu0
  %v588 = vpop.f32.mrf.mxu0
  %v589 = vadd.f32 0.0, %v588
  %v590 = vpop.f32.mrf.mxu0
  %591 = vmatprep.mubr.bf16.mxu0 0
  %592 = vmatmul.mubr.bf16.gmra.mxu0 %v251
  %v593 = vpop.f32.mrf.mxu0
  %v594 = vadd.f32 0.0, %v593
  %v595 = vpop.f32.mrf.mxu0
  %v596 = vpop.f32.mrf.mxu0
  %v597 = vadd.f32 0.0, %v596
  %v598 = vpop.f32.mrf.mxu0
  %599 = vmatprep.mubr.bf16.mxu0 0
  %600 = vmatmul.mubr.bf16.gmra.mxu0 %v252
  %v601 = vpop.f32.mrf.mxu0
  %v602 = vadd.f32 0.0, %v601
  %v603 = vpop.f32.mrf.mxu0
  %v604 = vpop.f32.mrf.mxu0
  %v605 = vadd.f32 0.0, %v604
  %v606 = vpop.f32.mrf.mxu0
  %607 = vmatprep.mubr.bf16.mxu0 0
  %608 = vmatmul.mubr.bf16.gmra.mxu0 %v253
  %v609 = vpop.f32.mrf.mxu0
  %v610 = vadd.f32 0.0, %v609
  %v611 = vpop.f32.mrf.mxu0
  %v612 = vpop.f32.mrf.mxu0
  %v613 = vadd.f32 0.0, %v612
  %v614 = vpop.f32.mrf.mxu0
  %615 = vmatprep.mubr.bf16.mxu0 0
  %616 = vmatmul.mubr.bf16.gmra.mxu0 %v254
  %v617 = vpop.f32.mrf.mxu0
  %v618 = vadd.f32 0.0, %v617
  %v619 = vpop.f32.mrf.mxu0
  %v620 = vpop.f32.mrf.mxu0
  %v621 = vadd.f32 0.0, %v620
  %v622 = vpop.f32.mrf.mxu0
  %623 = vdwg.mxu0
  %624 = vst [vmem:[%s2] sm:$0xff] %v370
  %625 = vst [vmem:[%s2 + $0x8] sm:$0xff] %v373
  %626 = vst [vmem:[%s2 + $0x10] sm:$0xff] %v378
  %627 = vst [vmem:[%s2 + $0x18] sm:$0xff] %v381
  %628 = vst [vmem:[%s2 + $0x20] sm:$0xff] %v386
  %629 = vst [vmem:[%s2 + $0x28] sm:$0xff] %v389
  %630 = vst [vmem:[%s2 + $0x30] sm:$0xff] %v394
  %631 = vst [vmem:[%s2 + $0x38] sm:$0xff] %v397
  %632 = vst [vmem:[%s2 + $0x40] sm:$0xff] %v402
  %633 = vst [vmem:[%s2 + $0x48] sm:$0xff] %v405
  %634 = vst [vmem:[%s2 + $0x50] sm:$0xff] %v410
  %635 = vst [vmem:[%s2 + $0x58] sm:$0xff] %v413
  %636 = vst [vmem:[%s2 + $0x60] sm:$0xff] %v418
  %637 = vst [vmem:[%s2 + $0x68] sm:$0xff] %v421
  %638 = vst [vmem:[%s2 + $0x70] sm:$0xff] %v426
  %639 = vst [vmem:[%s2 + $0x78] sm:$0xff] %v429
  %640 = vst [vmem:[%s2 + $0x80] sm:$0xff] %v434
  %641 = vst [vmem:[%s2 + $0x88] sm:$0xff] %v437
  %642 = vst [vmem:[%s2 + $0x90] sm:$0xff] %v442
  %643 = vst [vmem:[%s2 + $0x98] sm:$0xff] %v445
  %644 = vst [vmem:[%s2 + $0xa0] sm:$0xff] %v450
  %645 = vst [vmem:[%s2 + $0xa8] sm:$0xff] %v453
  %646 = vst [vmem:[%s2 + $0xb0] sm:$0xff] %v458
  %647 = vst [vmem:[%s2 + $0xb8] sm:$0xff] %v461
  %648 = vst [vmem:[%s2 + $0xc0] sm:$0xff] %v466
  %649 = vst [vmem:[%s2 + $0xc8] sm:$0xff] %v469
  %650 = vst [vmem:[%s2 + $0xd0] sm:$0xff] %v474
  %651 = vst [vmem:[%s2 + $0xd8] sm:$0xff] %v477
  %652 = vst [vmem:[%s2 + $0xe0] sm:$0xff] %v482
  %653 = vst [vmem:[%s2 + $0xe8] sm:$0xff] %v485
  %654 = vst [vmem:[%s2 + $0xf0] sm:$0xff] %v490
  %655 = vst [vmem:[%s2 + $0xf8] sm:$0xff] %v493
  %656 = vst [vmem:[%s2 + $0x100] sm:$0xff] %v498
  %657 = vst [vmem:[%s2 + $0x108] sm:$0xff] %v501
  %658 = vst [vmem:[%s2 + $0x110] sm:$0xff] %v506
  %659 = vst [vmem:[%s2 + $0x118] sm:$0xff] %v509
  %660 = vst [vmem:[%s2 + $0x120] sm:$0xff] %v514
  %661 = vst [vmem:[%s2 + $0x128] sm:$0xff] %v517
  %662 = vst [vmem:[%s2 + $0x130] sm:$0xff] %v522
  %663 = vst [vmem:[%s2 + $0x138] sm:$0xff] %v525
  %664 = vst [vmem:[%s2 + $0x140] sm:$0xff] %v530
  %665 = vst [vmem:[%s2 + $0x148] sm:$0xff] %v533
  %666 = vst [vmem:[%s2 + $0x150] sm:$0xff] %v538
  %667 = vst [vmem:[%s2 + $0x158] sm:$0xff] %v541
  %668 = vst [vmem:[%s2 + $0x160] sm:$0xff] %v546
  %669 = vst [vmem:[%s2 + $0x168] sm:$0xff] %v549
  %670 = vst [vmem:[%s2 + $0x170] sm:$0xff] %v554
  %671 = vst [vmem:[%s2 + $0x178] sm:$0xff] %v557
  %672 = vst [vmem:[%s2 + $0x180] sm:$0xff] %v562
  %673 = vst [vmem:[%s2 + $0x188] sm:$0xff] %v565
  %674 = vst [vmem:[%s2 + $0x190] sm:$0xff] %v570
  %675 = vst [vmem:[%s2 + $0x198] sm:$0xff] %v573
  %676 = vst [vmem:[%s2 + $0x1a0] sm:$0xff] %v578
  %677 = vst [vmem:[%s2 + $0x1a8] sm:$0xff] %v581
  %678 = vst [vmem:[%s2 + $0x1b0] sm:$0xff] %v586
  %679 = vst [vmem:[%s2 + $0x1b8] sm:$0xff] %v589
  %680 = vst [vmem:[%s2 + $0x1c0] sm:$0xff] %v594
  %681 = vst [vmem:[%s2 + $0x1c8] sm:$0xff] %v597
  %682 = vst [vmem:[%s2 + $0x1d0] sm:$0xff] %v602
  %683 = vst [vmem:[%s2 + $0x1d8] sm:$0xff] %v605
  %684 = vst [vmem:[%s2 + $0x1e0] sm:$0xff] %v610
  %685 = vst [vmem:[%s2 + $0x1e8] sm:$0xff] %v613
  %686 = vst [vmem:[%s2 + $0x1f0] sm:$0xff] %v618
  %687 = vst [vmem:[%s2 + $0x1f8] sm:$0xff] %v621
  %p688 = scmp.eq.s32.totalorder 0, 0
  // Predicated region
  $region10: #{resnet_forward.21} parent=0 // pred_check
    %p689 = pneg %p688
  $region11: #{resnet_forward.21} parent=0 // pred_check_branch
    %691 = sbr.rel (%p689) target = $region13
  $region12: #{resnet_forward.21} parent=0 // pred_region
    %692 = vst [vmem:[#allocation2] sm:$0x1] 0.0
    %693 = vst [vmem:[#allocation3] sm:$0x1] 0.0
  $region13: #{resnet_forward.21} parent=0 // pred_fallthru
    _
  %v694 = vld [vmem:[#allocation2] sm:$0x1]
  %v695 = vadd.f32 %v370, %v373
  %v696 = vadd.f32 %v695, %v378
  %v697 = vadd.f32 %v696, %v381
  %v698 = vadd.f32 %v697, %v386
  %v699 = vadd.f32 %v698, %v389
  %v700 = vadd.f32 %v699, %v394
  %v701 = vadd.f32 %v700, %v397
  %v702 = vadd.f32 %v701, %v402
  %v703 = vadd.f32 %v702, %v405
  %v704 = vadd.f32 %v703, %v410
  %v705 = vadd.f32 %v704, %v413
  %v706 = vadd.f32 %v705, %v418
  %v707 = vadd.f32 %v706, %v421
  %v708 = vadd.f32 %v707, %v426
  %v709 = vadd.f32 %v708, %v429
  %v710 = vadd.f32 %v709, %v434
  %v711 = vadd.f32 %v710, %v437
  %v712 = vadd.f32 %v711, %v442
  %v713 = vadd.f32 %v712, %v445
  %v714 = vadd.f32 %v713, %v450
  %v715 = vadd.f32 %v714, %v453
  %v716 = vadd.f32 %v715, %v458
  %v717 = vadd.f32 %v716, %v461
  %v718 = vadd.f32 %v717, %v466
  %v719 = vadd.f32 %v718, %v469
  %v720 = vadd.f32 %v719, %v474
  %v721 = vadd.f32 %v720, %v477
  %v722 = vadd.f32 %v721, %v482
  %v723 = vadd.f32 %v722, %v485
  %v724 = vadd.f32 %v723, %v490
  %v725 = vadd.f32 %v724, %v493
  %v726 = vadd.f32 %v725, %v498
  %v727 = vadd.f32 %v726, %v501
  %v728 = vadd.f32 %v727, %v506
  %v729 = vadd.f32 %v728, %v509
  %v730 = vadd.f32 %v729, %v514
  %v731 = vadd.f32 %v730, %v517
  %v732 = vadd.f32 %v731, %v522
  %v733 = vadd.f32 %v732, %v525
  %v734 = vadd.f32 %v733, %v530
  %v735 = vadd.f32 %v734, %v533
  %v736 = vadd.f32 %v735, %v538
  %v737 = vadd.f32 %v736, %v541
  %v738 = vadd.f32 %v737, %v546
  %v739 = vadd.f32 %v738, %v549
  %v740 = vadd.f32 %v739, %v554
  %v741 = vadd.f32 %v740, %v557
  %v742 = vadd.f32 %v741, %v562
  %v743 = vadd.f32 %v742, %v565
  %v744 = vadd.f32 %v743, %v570
  %v745 = vadd.f32 %v744, %v573
  %v746 = vadd.f32 %v745, %v578
  %v747 = vadd.f32 %v746, %v581
  %v748 = vadd.f32 %v747, %v586
  %v749 = vadd.f32 %v748, %v589
  %v750 = vadd.f32 %v749, %v594
  %v751 = vadd.f32 %v750, %v597
  %v752 = vadd.f32 %v751, %v602
  %v753 = vadd.f32 %v752, %v605
  %v754 = vadd.f32 %v753, %v610
  %v755 = vadd.f32 %v754, %v613
  %v756 = vadd.f32 %v755, %v618
  %v757 = vadd.f32 %v756, %v621
  %v758 = vrot.slane %v757, 4
  %v759 = vadd.f32 %v757, %v758
  %v760 = vrot.slane %v759, 2
  %v761 = vadd.f32 %v759, %v760
  %v762 = vrot.slane %v761, 1
  %v763 = vadd.f32 %v761, %v762
  %v764 = vadd.f32 %v694, %v763
  %765 = vst [vmem:[#allocation2] sm:$0x1] %v764
  %v766 = vld [vmem:[#allocation3] sm:$0x1]
  %v767 = vmul.f32 %v370, %v370
  %v768 = vmul.f32 %v373, %v373
  %v769 = vmul.f32 %v378, %v378
  %v770 = vmul.f32 %v381, %v381
  %v771 = vmul.f32 %v386, %v386
  %v772 = vmul.f32 %v389, %v389
  %v773 = vmul.f32 %v394, %v394
  %v774 = vmul.f32 %v397, %v397
  %v775 = vmul.f32 %v402, %v402
  %v776 = vmul.f32 %v405, %v405
  %v777 = vmul.f32 %v410, %v410
  %v778 = vmul.f32 %v413, %v413
  %v779 = vmul.f32 %v418, %v418
  %v780 = vmul.f32 %v421, %v421
  %v781 = vmul.f32 %v426, %v426
  %v782 = vmul.f32 %v429, %v429
  %v783 = vmul.f32 %v434, %v434
  %v784 = vmul.f32 %v437, %v437
  %v785 = vmul.f32 %v442, %v442
  %v786 = vmul.f32 %v445, %v445
  %v787 = vmul.f32 %v450, %v450
  %v788 = vmul.f32 %v453, %v453
  %v789 = vmul.f32 %v458, %v458
  %v790 = vmul.f32 %v461, %v461
  %v791 = vmul.f32 %v466, %v466
  %v792 = vmul.f32 %v469, %v469
  %v793 = vmul.f32 %v474, %v474
  %v794 = vmul.f32 %v477, %v477
  %v795 = vmul.f32 %v482, %v482
  %v796 = vmul.f32 %v485, %v485
  %v797 = vmul.f32 %v490, %v490
  %v798 = vmul.f32 %v493, %v493
  %v799 = vmul.f32 %v498, %v498
  %v800 = vmul.f32 %v501, %v501
  %v801 = vmul.f32 %v506, %v506
  %v802 = vmul.f32 %v509, %v509
  %v803 = vmul.f32 %v514, %v514
  %v804 = vmul.f32 %v517, %v517
  %v805 = vmul.f32 %v522, %v522
  %v806 = vmul.f32 %v525, %v525
  %v807 = vmul.f32 %v530, %v530
  %v808 = vmul.f32 %v533, %v533
  %v809 = vmul.f32 %v538, %v538
  %v810 = vmul.f32 %v541, %v541
  %v811 = vmul.f32 %v546, %v546
  %v812 = vmul.f32 %v549, %v549
  %v813 = vmul.f32 %v554, %v554
  %v814 = vmul.f32 %v557, %v557
  %v815 = vmul.f32 %v562, %v562
  %v816 = vmul.f32 %v565, %v565
  %v817 = vmul.f32 %v570, %v570
  %v818 = vmul.f32 %v573, %v573
  %v819 = vmul.f32 %v578, %v578
  %v820 = vmul.f32 %v581, %v581
  %v821 = vmul.f32 %v586, %v586
  %v822 = vmul.f32 %v589, %v589
  %v823 = vmul.f32 %v594, %v594
  %v824 = vmul.f32 %v597, %v597
  %v825 = vmul.f32 %v602, %v602
  %v826 = vmul.f32 %v605, %v605
  %v827 = vmul.f32 %v610, %v610
  %v828 = vmul.f32 %v613, %v613
  %v829 = vmul.f32 %v618, %v618
  %v830 = vmul.f32 %v621, %v621
  %v831 = vadd.f32 %v767, %v768
  %v832 = vadd.f32 %v831, %v769
  %v833 = vadd.f32 %v832, %v770
  %v834 = vadd.f32 %v833, %v771
  %v835 = vadd.f32 %v834, %v772
  %v836 = vadd.f32 %v835, %v773
  %v837 = vadd.f32 %v836, %v774
  %v838 = vadd.f32 %v837, %v775
  %v839 = vadd.f32 %v838, %v776
  %v840 = vadd.f32 %v839, %v777
  %v841 = vadd.f32 %v840, %v778
  %v842 = vadd.f32 %v841, %v779
  %v843 = vadd.f32 %v842, %v780
  %v844 = vadd.f32 %v843, %v781
  %v845 = vadd.f32 %v844, %v782
  %v846 = vadd.f32 %v845, %v783
  %v847 = vadd.f32 %v846, %v784
  %v848 = vadd.f32 %v847, %v785
  %v849 = vadd.f32 %v848, %v786
  %v850 = vadd.f32 %v849, %v787
  %v851 = vadd.f32 %v850, %v788
  %v852 = vadd.f32 %v851, %v789
  %v853 = vadd.f32 %v852, %v790
  %v854 = vadd.f32 %v853, %v791
  %v855 = vadd.f32 %v854, %v792
  %v856 = vadd.f32 %v855, %v793
  %v857 = vadd.f32 %v856, %v794
  %v858 = vadd.f32 %v857, %v795
  %v859 = vadd.f32 %v858, %v796
  %v860 = vadd.f32 %v859, %v797
  %v861 = vadd.f32 %v860, %v798
  %v862 = vadd.f32 %v861, %v799
  %v863 = vadd.f32 %v862, %v800
  %v864 = vadd.f32 %v863, %v801
  %v865 = vadd.f32 %v864, %v802
  %v866 = vadd.f32 %v865, %v803
  %v867 = vadd.f32 %v866, %v804
  %v868 = vadd.f32 %v867, %v805
  %v869 = vadd.f32 %v868, %v806
  %v870 = vadd.f32 %v869, %v807
  %v871 = vadd.f32 %v870, %v808
  %v872 = vadd.f32 %v871, %v809
  %v873 = vadd.f32 %v872, %v810
  %v874 = vadd.f32 %v873, %v811
  %v875 = vadd.f32 %v874, %v812
  %v876 = vadd.f32 %v875, %v813
  %v877 = vadd.f32 %v876, %v814
  %v878 = vadd.f32 %v877, %v815
  %v879 = vadd.f32 %v878, %v816
  %v880 = vadd.f32 %v879, %v817
  %v881 = vadd.f32 %v880, %v818
  %v882 = vadd.f32 %v881, %v819
  %v883 = vadd.f32 %v882, %v820
  %v884 = vadd.f32 %v883, %v821
  %v885 = vadd.f32 %v884, %v822
  %v886 = vadd.f32 %v885, %v823
  %v887 = vadd.f32 %v886, %v824
  %v888 = vadd.f32 %v887, %v825
  %v889 = vadd.f32 %v888, %v826
  %v890 = vadd.f32 %v889, %v827
  %v891 = vadd.f32 %v890, %v828
  %v892 = vadd.f32 %v891, %v829
  %v893 = vadd.f32 %v892, %v830
  %v894 = vrot.slane %v893, 4
  %v895 = vadd.f32 %v893, %v894
  %v896 = vrot.slane %v895, 2
  %v897 = vadd.f32 %v895, %v896
  %v898 = vrot.slane %v897, 1
  %v899 = vadd.f32 %v897, %v898
  %v900 = vadd.f32 %v766, %v899
  %901 = vst [vmem:[#allocation3] sm:$0x1] %v900
  // Predicated region
  $region14: #{resnet_forward.21} parent=0 // pred_check
    %p902 = pneg %p688
  $region15: #{resnet_forward.21} parent=0 // pred_check_branch
    %904 = sbr.rel (%p902) target = $region17
  $region16: #{resnet_forward.21} parent=0 // pred_region
    %v905 = vld [vmem:[#allocation2] sm:$0x1]
    %v906 = vmul.f32 %v905, 0.001953125
    %907 = vst [vmem:[%s3] sm:$0x1] %v906
    %v908 = vld [vmem:[#allocation3] sm:$0x1]
    %v909 = vmul.f32 %v908, 0.001953125
    %v910 = vmul.f32 %v906, %v906
    %v911 = vsub.f32 %v909, %v910
    %v912 = vmax.f32 %v911, 0.0
    %913 = vst [vmem:[%s4] sm:$0x1] %v912
  $region17: #{resnet_forward.21} parent=0 // pred_fallthru
    _
  // Predicated region
  $region18: #{resnet_forward.21} parent=0 // pred_check
    _
  $region19: #{resnet_forward.21} parent=0 // pred_check_branch
    %915 = sbr.rel (0) target = $region21
  $region20: #{resnet_forward.21} parent=0 // pred_region
    _
  $region21: #{resnet_forward.21} parent=0 // pred_fallthru
    _
  // Predicated region
  $region22: #{resnet_forward.21} parent=0 // pred_check
    _
  $region23: #{resnet_forward.21} parent=0 // pred_check_branch
    %917 = sbr.rel (0) target = $region25
  $region24: #{resnet_forward.21} parent=0 // pred_region
    _
  $region25: #{resnet_forward.21} parent=0 // pred_fallthru
    _
  // Predicated region
  $region26: #{resnet_forward.21} parent=0 // pred_check
    _
  $region27: #{resnet_forward.21} parent=0 // pred_check_branch
    %919 = sbr.rel (0) target = $region29
  $region28: #{resnet_forward.21} parent=0 // pred_region
    _
  $region29: #{resnet_forward.21} parent=0 // pred_fallthru
    _
  // Predicated region
  $region30: #{resnet_forward.21} parent=0 // pred_check
    _
  $region31: #{resnet_forward.21} parent=0 // pred_check_branch
    %921 = sbr.rel (0) target = $region33
  $region32: #{resnet_forward.21} parent=0 // pred_region
    _
  $region33: #{resnet_forward.21} parent=0 // pred_fallthru
    _
  // Predicated region
  $region34: #{resnet_forward.21} parent=0 // pred_check
    _
  $region35: #{resnet_forward.21} parent=0 // pred_check_branch
    %923 = sbr.rel (0) target = $region37
  $region36: #{resnet_forward.21} parent=0 // pred_region
    _
  $region37: #{resnet_forward.21} parent=0 // pred_fallthru
    _
  // Predicated region
  $region38: #{resnet_forward.21} parent=0 // pred_check
    _
  $region39: #{resnet_forward.21} parent=0 // pred_check_branch
    %925 = sbr.rel (0) target = $region41
  $region40: #{resnet_forward.21} parent=0 // pred_region
    _
  $region41: #{resnet_forward.21} parent=0 // pred_fallthru
    _

// kernel: resnet_forward.22
$region0: #{resnet_forward.22}
  #allocation0 [shape = 'u32[]', space=smem, size = 0x4, offset = 0x4, fixed_abs, tag = 'smem constant byte address 0x4 - core index']
  #allocation1 [shape = 'u32[144,128]{1,0:T(1,128)}', space=vmem, size = 0x12000, scoped, tag = 'internal scratch']
  %s0 = inlined_call_operand.vmem [shape: f32[512,128], index: 0, kind: input, shape index: {}]
  %s1 = inlined_call_operand.vmem [shape: f32[1,128], index: 1, kind: input, shape index: {}]
  %s2 = inlined_call_operand.vmem [shape: f32[1,128], index: 2, kind: input, shape index: {}]
  %s3 = inlined_call_operand.vmem [shape: f32[1,128], index: 3, kind: input, shape index: {}]
  %s4 = inlined_call_operand.vmem [shape: f32[1,128], index: 4, kind: input, shape index: {}]
  %s5 = inlined_call_operand.vmem [shape: bf16[512,128], index: 5, kind: output, shape index: {}]
  %s6 = sld [smem:[#allocation0]]
  $region30: #{resnet_forward.22} parent=0
    _
  %s8 = ssub.s32 1, %s6
  %s9 = scalar_select 0, %s8, %s6
  // Predicated region
  $region2: #{resnet_forward.22} parent=0 // pred_check
    _
  $region3: #{resnet_forward.22} parent=0 // pred_check_branch
    %11 = sbr.rel (0) target = $region5
  $region4: #{resnet_forward.22} parent=0 // pred_region
    _
  $region5: #{resnet_forward.22} parent=0 // pred_fallthru
    _
  // Predicated region
  $region6: #{resnet_forward.22} parent=0 // pred_check
    _
  $region7: #{resnet_forward.22} parent=0 // pred_check_branch
    %13 = sbr.rel (0) target = $region9
  $region8: #{resnet_forward.22} parent=0 // pred_region
    _
  $region9: #{resnet_forward.22} parent=0 // pred_fallthru
    _
  // Predicated region
  $region10: #{resnet_forward.22} parent=0 // pred_check
    _
  $region11: #{resnet_forward.22} parent=0 // pred_check_branch
    %15 = sbr.rel (0) target = $region13
  $region12: #{resnet_forward.22} parent=0 // pred_region
    _
  $region13: #{resnet_forward.22} parent=0 // pred_fallthru
    _
  // Predicated region
  $region14: #{resnet_forward.22} parent=0 // pred_check
    _
  $region15: #{resnet_forward.22} parent=0 // pred_check_branch
    %17 = sbr.rel (0) target = $region17
  $region16: #{resnet_forward.22} parent=0 // pred_region
    _
  $region17: #{resnet_forward.22} parent=0 // pred_fallthru
    _
  // Predicated region
  $region18: #{resnet_forward.22} parent=0 // pred_check
    _
  $region19: #{resnet_forward.22} parent=0 // pred_check_branch
    %19 = sbr.rel (0) target = $region21
  $region20: #{resnet_forward.22} parent=0 // pred_region
    _
  $region21: #{resnet_forward.22} parent=0 // pred_fallthru
    _
  %v20 = vld [vmem:[%s0] sm:$0xff]
  %v21 = vld [vmem:[%s0 + $0x8] sm:$0xff]
  %v22 = vld [vmem:[%s0 + $0x10] sm:$0xff]
  %v23 = vld [vmem:[%s0 + $0x18] sm:$0xff]
  %v24 = vld [vmem:[%s0 + $0x20] sm:$0xff]
  %v25 = vld [vmem:[%s0 + $0x28] sm:$0xff]
  %v26 = vld [vmem:[%s0 + $0x30] sm:$0xff]
  %v27 = vld [vmem:[%s0 + $0x38] sm:$0xff]
  %v28 = vld [vmem:[%s0 + $0x40] sm:$0xff]
  %v29 = vld [vmem:[%s0 + $0x48] sm:$0xff]
  %v30 = vld [vmem:[%s0 + $0x50] sm:$0xff]
  %v31 = vld [vmem:[%s0 + $0x58] sm:$0xff]
  %v32 = vld [vmem:[%s0 + $0x60] sm:$0xff]
  %v33 = vld [vmem:[%s0 + $0x68] sm:$0xff]
  %v34 = vld [vmem:[%s0 + $0x70] sm:$0xff]
  %v35 = vld [vmem:[%s0 + $0x78] sm:$0xff]
  %v36 = vld [vmem:[%s0 + $0x80] sm:$0xff]
  %v37 = vld [vmem:[%s0 + $0x88] sm:$0xff]
  %v38 = vld [vmem:[%s0 + $0x90] sm:$0xff]
  %v39 = vld [vmem:[%s0 + $0x98] sm:$0xff]
  %v40 = vld [vmem:[%s0 + $0xa0] sm:$0xff]
  %v41 = vld [vmem:[%s0 + $0xa8] sm:$0xff]
  %v42 = vld [vmem:[%s0 + $0xb0] sm:$0xff]
  %v43 = vld [vmem:[%s0 + $0xb8] sm:$0xff]
  %v44 = vld [vmem:[%s0 + $0xc0] sm:$0xff]
  %v45 = vld [vmem:[%s0 + $0xc8] sm:$0xff]
  %v46 = vld [vmem:[%s0 + $0xd0] sm:$0xff]
  %v47 = vld [vmem:[%s0 + $0xd8] sm:$0xff]
  %v48 = vld [vmem:[%s0 + $0xe0] sm:$0xff]
  %v49 = vld [vmem:[%s0 + $0xe8] sm:$0xff]
  %v50 = vld [vmem:[%s0 + $0xf0] sm:$0xff]
  %v51 = vld [vmem:[%s0 + $0xf8] sm:$0xff]
  %v52 = vld [vmem:[%s0 + $0x100] sm:$0xff]
  %v53 = vld [vmem:[%s0 + $0x108] sm:$0xff]
  %v54 = vld [vmem:[%s0 + $0x110] sm:$0xff]
  %v55 = vld [vmem:[%s0 + $0x118] sm:$0xff]
  %v56 = vld [vmem:[%s0 + $0x120] sm:$0xff]
  %v57 = vld [vmem:[%s0 + $0x128] sm:$0xff]
  %v58 = vld [vmem:[%s0 + $0x130] sm:$0xff]
  %v59 = vld [vmem:[%s0 + $0x138] sm:$0xff]
  %v60 = vld [vmem:[%s0 + $0x140] sm:$0xff]
  %v61 = vld [vmem:[%s0 + $0x148] sm:$0xff]
  %v62 = vld [vmem:[%s0 + $0x150] sm:$0xff]
  %v63 = vld [vmem:[%s0 + $0x158] sm:$0xff]
  %v64 = vld [vmem:[%s0 + $0x160] sm:$0xff]
  %v65 = vld [vmem:[%s0 + $0x168] sm:$0xff]
  %v66 = vld [vmem:[%s0 + $0x170] sm:$0xff]
  %v67 = vld [vmem:[%s0 + $0x178] sm:$0xff]
  %v68 = vld [vmem:[%s0 + $0x180] sm:$0xff]
  %v69 = vld [vmem:[%s0 + $0x188] sm:$0xff]
  %v70 = vld [vmem:[%s0 + $0x190] sm:$0xff]
  %v71 = vld [vmem:[%s0 + $0x198] sm:$0xff]
  %v72 = vld [vmem:[%s0 + $0x1a0] sm:$0xff]
  %v73 = vld [vmem:[%s0 + $0x1a8] sm:$0xff]
  %v74 = vld [vmem:[%s0 + $0x1b0] sm:$0xff]
  %v75 = vld [vmem:[%s0 + $0x1b8] sm:$0xff]
  %v76 = vld [vmem:[%s0 + $0x1c0] sm:$0xff]
  %v77 = vld [vmem:[%s0 + $0x1c8] sm:$0xff]
  %v78 = vld [vmem:[%s0 + $0x1d0] sm:$0xff]
  %v79 = vld [vmem:[%s0 + $0x1d8] sm:$0xff]
  %v80 = vld [vmem:[%s0 + $0x1e0] sm:$0xff]
  %v81 = vld [vmem:[%s0 + $0x1e8] sm:$0xff]
  %v82 = vld [vmem:[%s0 + $0x1f0] sm:$0xff]
  %v83 = vld [vmem:[%s0 + $0x1f8] sm:$0xff]
  %v84 = vld [vmem:[%s2] sm:$0x1]
  %v85 = vadd.f32 %v84, 1e-05
  %v86 = vrsqrt.pop %v85
  %v87 = vld [vmem:[%s3] sm:$0x1]
  %v88 = vmul.f32 %v86, %v87
  %v89 = vld [vmem:[%s1] sm:$0x1]
  %v91 = vlaneseq
  %v92 = vshrl.u32 %v91, 7
  %v93 = vsub.s32 0, %v92
  %v94 = vrot.slane %v89, %v93
  %v96 = vsub.f32 %v20, %v94
  %v97 = vsub.f32 %v21, %v94
  %v98 = vsub.f32 %v22, %v94
  %v99 = vsub.f32 %v23, %v94
  %v100 = vsub.f32 %v24, %v94
  %v101 = vsub.f32 %v25, %v94
  %v102 = vsub.f32 %v26, %v94
  %v103 = vsub.f32 %v27, %v94
  %v104 = vsub.f32 %v28, %v94
  %v105 = vsub.f32 %v29, %v94
  %v106 = vsub.f32 %v30, %v94
  %v107 = vsub.f32 %v31, %v94
  %v108 = vsub.f32 %v32, %v94
  %v109 = vsub.f32 %v33, %v94
  %v110 = vsub.f32 %v34, %v94
  %v111 = vsub.f32 %v35, %v94
  %v112 = vsub.f32 %v36, %v94
  %v113 = vsub.f32 %v37, %v94
  %v114 = vsub.f32 %v38, %v94
  %v115 = vsub.f32 %v39, %v94
  %v116 = vsub.f32 %v40, %v94
  %v117 = vsub.f32 %v41, %v94
  %v118 = vsub.f32 %v42, %v94
  %v119 = vsub.f32 %v43, %v94
  %v120 = vsub.f32 %v44, %v94
  %v121 = vsub.f32 %v45, %v94
  %v122 = vsub.f32 %v46, %v94
  %v123 = vsub.f32 %v47, %v94
  %v124 = vsub.f32 %v48, %v94
  %v125 = vsub.f32 %v49, %v94
  %v126 = vsub.f32 %v50, %v94
  %v127 = vsub.f32 %v51, %v94
  %v128 = vsub.f32 %v52, %v94
  %v129 = vsub.f32 %v53, %v94
  %v130 = vsub.f32 %v54, %v94
  %v131 = vsub.f32 %v55, %v94
  %v132 = vsub.f32 %v56, %v94
  %v133 = vsub.f32 %v57, %v94
  %v134 = vsub.f32 %v58, %v94
  %v135 = vsub.f32 %v59, %v94
  %v136 = vsub.f32 %v60, %v94
  %v137 = vsub.f32 %v61, %v94
  %v138 = vsub.f32 %v62, %v94
  %v139 = vsub.f32 %v63, %v94
  %v140 = vsub.f32 %v64, %v94
  %v141 = vsub.f32 %v65, %v94
  %v142 = vsub.f32 %v66, %v94
  %v143 = vsub.f32 %v67, %v94
  %v144 = vsub.f32 %v68, %v94
  %v145 = vsub.f32 %v69, %v94
  %v146 = vsub.f32 %v70, %v94
  %v147 = vsub.f32 %v71, %v94
  %v148 = vsub.f32 %v72, %v94
  %v149 = vsub.f32 %v73, %v94
  %v150 = vsub.f32 %v74, %v94
  %v151 = vsub.f32 %v75, %v94
  %v152 = vsub.f32 %v76, %v94
  %v153 = vsub.f32 %v77, %v94
  %v154 = vsub.f32 %v78, %v94
  %v155 = vsub.f32 %v79, %v94
  %v156 = vsub.f32 %v80, %v94
  %v157 = vsub.f32 %v81, %v94
  %v158 = vsub.f32 %v82, %v94
  %v159 = vsub.f32 %v83, %v94
  %v161 = vlaneseq
  %v162 = vshrl.u32 %v161, 7
  %v163 = vsub.s32 0, %v162
  %v164 = vrot.slane %v88, %v163
  %v166 = vmul.f32 %v96, %v164
  %v167 = vmul.f32 %v97, %v164
  %v168 = vmul.f32 %v98, %v164
  %v169 = vmul.f32 %v99, %v164
  %v170 = vmul.f32 %v100, %v164
  %v171 = vmul.f32 %v101, %v164
  %v172 = vmul.f32 %v102, %v164
  %v173 = vmul.f32 %v103, %v164
  %v174 = vmul.f32 %v104, %v164
  %v175 = vmul.f32 %v105, %v164
  %v176 = vmul.f32 %v106, %v164
  %v177 = vmul.f32 %v107, %v164
  %v178 = vmul.f32 %v108, %v164
  %v179 = vmul.f32 %v109, %v164
  %v180 = vmul.f32 %v110, %v164
  %v181 = vmul.f32 %v111, %v164
  %v182 = vmul.f32 %v112, %v164
  %v183 = vmul.f32 %v113, %v164
  %v184 = vmul.f32 %v114, %v164
  %v185 = vmul.f32 %v115, %v164
  %v186 = vmul.f32 %v116, %v164
  %v187 = vmul.f32 %v117, %v164
  %v188 = vmul.f32 %v118, %v164
  %v189 = vmul.f32 %v119, %v164
  %v190 = vmul.f32 %v120, %v164
  %v191 = vmul.f32 %v121, %v164
  %v192 = vmul.f32 %v122, %v164
  %v193 = vmul.f32 %v123, %v164
  %v194 = vmul.f32 %v124, %v164
  %v195 = vmul.f32 %v125, %v164
  %v196 = vmul.f32 %v126, %v164
  %v197 = vmul.f32 %v127, %v164
  %v198 = vmul.f32 %v128, %v164
  %v199 = vmul.f32 %v129, %v164
  %v200 = vmul.f32 %v130, %v164
  %v201 = vmul.f32 %v131, %v164
  %v202 = vmul.f32 %v132, %v164
  %v203 = vmul.f32 %v133, %v164
  %v204 = vmul.f32 %v134, %v164
  %v205 = vmul.f32 %v135, %v164
  %v206 = vmul.f32 %v136, %v164
  %v207 = vmul.f32 %v137, %v164
  %v208 = vmul.f32 %v138, %v164
  %v209 = vmul.f32 %v139, %v164
  %v210 = vmul.f32 %v140, %v164
  %v211 = vmul.f32 %v141, %v164
  %v212 = vmul.f32 %v142, %v164
  %v213 = vmul.f32 %v143, %v164
  %v214 = vmul.f32 %v144, %v164
  %v215 = vmul.f32 %v145, %v164
  %v216 = vmul.f32 %v146, %v164
  %v217 = vmul.f32 %v147, %v164
  %v218 = vmul.f32 %v148, %v164
  %v219 = vmul.f32 %v149, %v164
  %v220 = vmul.f32 %v150, %v164
  %v221 = vmul.f32 %v151, %v164
  %v222 = vmul.f32 %v152, %v164
  %v223 = vmul.f32 %v153, %v164
  %v224 = vmul.f32 %v154, %v164
  %v225 = vmul.f32 %v155, %v164
  %v226 = vmul.f32 %v156, %v164
  %v227 = vmul.f32 %v157, %v164
  %v228 = vmul.f32 %v158, %v164
  %v229 = vmul.f32 %v159, %v164
  %v230 = vld [vmem:[%s4] sm:$0x1]
  %v232 = vlaneseq
  %v233 = vshrl.u32 %v232, 7
  %v234 = vsub.s32 0, %v233
  %v235 = vrot.slane %v230, %v234
  %v237 = vadd.f32 %v166, %v235
  %v238 = vadd.f32 %v167, %v235
  %v239 = vadd.f32 %v168, %v235
  %v240 = vadd.f32 %v169, %v235
  %v241 = vadd.f32 %v170, %v235
  %v242 = vadd.f32 %v171, %v235
  %v243 = vadd.f32 %v172, %v235
  %v244 = vadd.f32 %v173, %v235
  %v245 = vadd.f32 %v174, %v235
  %v246 = vadd.f32 %v175, %v235
  %v247 = vadd.f32 %v176, %v235
  %v248 = vadd.f32 %v177, %v235
  %v249 = vadd.f32 %v178, %v235
  %v250 = vadd.f32 %v179, %v235
  %v251 = vadd.f32 %v180, %v235
  %v252 = vadd.f32 %v181, %v235
  %v253 = vadd.f32 %v182, %v235
  %v254 = vadd.f32 %v183, %v235
  %v255 = vadd.f32 %v184, %v235
  %v256 = vadd.f32 %v185, %v235
  %v257 = vadd.f32 %v186, %v235
  %v258 = vadd.f32 %v187, %v235
  %v259 = vadd.f32 %v188, %v235
  %v260 = vadd.f32 %v189, %v235
  %v261 = vadd.f32 %v190, %v235
  %v262 = vadd.f32 %v191, %v235
  %v263 = vadd.f32 %v192, %v235
  %v264 = vadd.f32 %v193, %v235
  %v265 = vadd.f32 %v194, %v235
  %v266 = vadd.f32 %v195, %v235
  %v267 = vadd.f32 %v196, %v235
  %v268 = vadd.f32 %v197, %v235
  %v269 = vadd.f32 %v198, %v235
  %v270 = vadd.f32 %v199, %v235
  %v271 = vadd.f32 %v200, %v235
  %v272 = vadd.f32 %v201, %v235
  %v273 = vadd.f32 %v202, %v235
  %v274 = vadd.f32 %v203, %v235
  %v275 = vadd.f32 %v204, %v235
  %v276 = vadd.f32 %v205, %v235
  %v277 = vadd.f32 %v206, %v235
  %v278 = vadd.f32 %v207, %v235
  %v279 = vadd.f32 %v208, %v235
  %v280 = vadd.f32 %v209, %v235
  %v281 = vadd.f32 %v210, %v235
  %v282 = vadd.f32 %v211, %v235
  %v283 = vadd.f32 %v212, %v235
  %v284 = vadd.f32 %v213, %v235
  %v285 = vadd.f32 %v214, %v235
  %v286 = vadd.f32 %v215, %v235
  %v287 = vadd.f32 %v216, %v235
  %v288 = vadd.f32 %v217, %v235
  %v289 = vadd.f32 %v218, %v235
  %v290 = vadd.f32 %v219, %v235
  %v291 = vadd.f32 %v220, %v235
  %v292 = vadd.f32 %v221, %v235
  %v293 = vadd.f32 %v222, %v235
  %v294 = vadd.f32 %v223, %v235
  %v295 = vadd.f32 %v224, %v235
  %v296 = vadd.f32 %v225, %v235
  %v297 = vadd.f32 %v226, %v235
  %v298 = vadd.f32 %v227, %v235
  %v299 = vadd.f32 %v228, %v235
  %v300 = vadd.f32 %v229, %v235
  %v301 = vmax.f32 %v237, 0.0
  %v302 = vmax.f32 %v238, 0.0
  %v303 = vmax.f32 %v239, 0.0
  %v304 = vmax.f32 %v240, 0.0
  %v305 = vmax.f32 %v241, 0.0
  %v306 = vmax.f32 %v242, 0.0
  %v307 = vmax.f32 %v243, 0.0
  %v308 = vmax.f32 %v244, 0.0
  %v309 = vmax.f32 %v245, 0.0
  %v310 = vmax.f32 %v246, 0.0
  %v311 = vmax.f32 %v247, 0.0
  %v312 = vmax.f32 %v248, 0.0
  %v313 = vmax.f32 %v249, 0.0
  %v314 = vmax.f32 %v250, 0.0
  %v315 = vmax.f32 %v251, 0.0
  %v316 = vmax.f32 %v252, 0.0
  %v317 = vmax.f32 %v253, 0.0
  %v318 = vmax.f32 %v254, 0.0
  %v319 = vmax.f32 %v255, 0.0
  %v320 = vmax.f32 %v256, 0.0
  %v321 = vmax.f32 %v257, 0.0
  %v322 = vmax.f32 %v258, 0.0
  %v323 = vmax.f32 %v259, 0.0
  %v324 = vmax.f32 %v260, 0.0
  %v325 = vmax.f32 %v261, 0.0
  %v326 = vmax.f32 %v262, 0.0
  %v327 = vmax.f32 %v263, 0.0
  %v328 = vmax.f32 %v264, 0.0
  %v329 = vmax.f32 %v265, 0.0
  %v330 = vmax.f32 %v266, 0.0
  %v331 = vmax.f32 %v267, 0.0
  %v332 = vmax.f32 %v268, 0.0
  %v333 = vmax.f32 %v269, 0.0
  %v334 = vmax.f32 %v270, 0.0
  %v335 = vmax.f32 %v271, 0.0
  %v336 = vmax.f32 %v272, 0.0
  %v337 = vmax.f32 %v273, 0.0
  %v338 = vmax.f32 %v274, 0.0
  %v339 = vmax.f32 %v275, 0.0
  %v340 = vmax.f32 %v276, 0.0
  %v341 = vmax.f32 %v277, 0.0
  %v342 = vmax.f32 %v278, 0.0
  %v343 = vmax.f32 %v279, 0.0
  %v344 = vmax.f32 %v280, 0.0
  %v345 = vmax.f32 %v281, 0.0
  %v346 = vmax.f32 %v282, 0.0
  %v347 = vmax.f32 %v283, 0.0
  %v348 = vmax.f32 %v284, 0.0
  %v349 = vmax.f32 %v285, 0.0
  %v350 = vmax.f32 %v286, 0.0
  %v351 = vmax.f32 %v287, 0.0
  %v352 = vmax.f32 %v288, 0.0
  %v353 = vmax.f32 %v289, 0.0
  %v354 = vmax.f32 %v290, 0.0
  %v355 = vmax.f32 %v291, 0.0
  %v356 = vmax.f32 %v292, 0.0
  %v357 = vmax.f32 %v293, 0.0
  %v358 = vmax.f32 %v294, 0.0
  %v359 = vmax.f32 %v295, 0.0
  %v360 = vmax.f32 %v296, 0.0
  %v361 = vmax.f32 %v297, 0.0
  %v362 = vmax.f32 %v298, 0.0
  %v363 = vmax.f32 %v299, 0.0
  %v364 = vmax.f32 %v300, 0.0
  %v365 = vpack.c.bf16 %v302, %v301
  %v366 = vpack.c.bf16 %v304, %v303
  %v367 = vpack.c.bf16 %v306, %v305
  %v368 = vpack.c.bf16 %v308, %v307
  %v369 = vpack.c.bf16 %v310, %v309
  %v370 = vpack.c.bf16 %v312, %v311
  %v371 = vpack.c.bf16 %v314, %v313
  %v372 = vpack.c.bf16 %v316, %v315
  %v373 = vpack.c.bf16 %v318, %v317
  %v374 = vpack.c.bf16 %v320, %v319
  %v375 = vpack.c.bf16 %v322, %v321
  %v376 = vpack.c.bf16 %v324, %v323
  %v377 = vpack.c.bf16 %v326, %v325
  %v378 = vpack.c.bf16 %v328, %v327
  %v379 = vpack.c.bf16 %v330, %v329
  %v380 = vpack.c.bf16 %v332, %v331
  %v381 = vpack.c.bf16 %v334, %v333
  %v382 = vpack.c.bf16 %v336, %v335
  %v383 = vpack.c.bf16 %v338, %v337
  %v384 = vpack.c.bf16 %v340, %v339
  %v385 = vpack.c.bf16 %v342, %v341
  %v386 = vpack.c.bf16 %v344, %v343
  %v387 = vpack.c.bf16 %v346, %v345
  %v388 = vpack.c.bf16 %v348, %v347
  %v389 = vpack.c.bf16 %v350, %v349
  %v390 = vpack.c.bf16 %v352, %v351
  %v391 = vpack.c.bf16 %v354, %v353
  %v392 = vpack.c.bf16 %v356, %v355
  %v393 = vpack.c.bf16 %v358, %v357
  %v394 = vpack.c.bf16 %v360, %v359
  %v395 = vpack.c.bf16 %v362, %v361
  %v396 = vpack.c.bf16 %v364, %v363
  %v429 = vunpack.c.l.b16 %v365
  %v430 = vunpack.c.h.b16 %v365
  %v431 = vunpack.c.l.b16 %v366
  %v432 = vunpack.c.h.b16 %v366
  %v433 = vunpack.c.l.b16 %v367
  %v434 = vunpack.c.h.b16 %v367
  %v435 = vunpack.c.l.b16 %v368
  %v436 = vunpack.c.h.b16 %v368
  %v437 = vunpack.c.l.b16 %v369
  %v438 = vunpack.c.h.b16 %v369
  %v439 = vunpack.c.l.b16 %v370
  %v440 = vunpack.c.h.b16 %v370
  %v441 = vunpack.c.l.b16 %v371
  %v442 = vunpack.c.h.b16 %v371
  %v443 = vunpack.c.l.b16 %v372
  %v444 = vunpack.c.h.b16 %v372
  %v445 = vunpack.c.l.b16 %v373
  %v446 = vunpack.c.h.b16 %v373
  %v447 = vunpack.c.l.b16 %v374
  %v448 = vunpack.c.h.b16 %v374
  %v449 = vunpack.c.l.b16 %v375
  %v450 = vunpack.c.h.b16 %v375
  %v451 = vunpack.c.l.b16 %v376
  %v452 = vunpack.c.h.b16 %v376
  %v453 = vunpack.c.l.b16 %v377
  %v454 = vunpack.c.h.b16 %v377
  %v455 = vunpack.c.l.b16 %v378
  %v456 = vunpack.c.h.b16 %v378
  %v457 = vunpack.c.l.b16 %v379
  %v458 = vunpack.c.h.b16 %v379
  %v459 = vunpack.c.l.b16 %v380
  %v460 = vunpack.c.h.b16 %v380
  %v461 = vunpack.c.l.b16 %v381
  %v462 = vunpack.c.h.b16 %v381
  %v463 = vunpack.c.l.b16 %v382
  %v464 = vunpack.c.h.b16 %v382
  %v465 = vunpack.c.l.b16 %v383
  %v466 = vunpack.c.h.b16 %v383
  %v467 = vunpack.c.l.b16 %v384
  %v468 = vunpack.c.h.b16 %v384
  %v469 = vunpack.c.l.b16 %v385
  %v470 = vunpack.c.h.b16 %v385
  %v471 = vunpack.c.l.b16 %v386
  %v472 = vunpack.c.h.b16 %v386
  %v473 = vunpack.c.l.b16 %v387
  %v474 = vunpack.c.h.b16 %v387
  %v475 = vunpack.c.l.b16 %v388
  %v476 = vunpack.c.h.b16 %v388
  %v477 = vunpack.c.l.b16 %v389
  %v478 = vunpack.c.h.b16 %v389
  %v479 = vunpack.c.l.b16 %v390
  %v480 = vunpack.c.h.b16 %v390
  %v481 = vunpack.c.l.b16 %v391
  %v482 = vunpack.c.h.b16 %v391
  %v483 = vunpack.c.l.b16 %v392
  %v484 = vunpack.c.h.b16 %v392
  %v485 = vunpack.c.l.b16 %v393
  %v486 = vunpack.c.h.b16 %v393
  %v487 = vunpack.c.l.b16 %v394
  %v488 = vunpack.c.h.b16 %v394
  %v489 = vunpack.c.l.b16 %v395
  %v490 = vunpack.c.h.b16 %v395
  %v491 = vunpack.c.l.b16 %v396
  %v492 = vunpack.c.h.b16 %v396
  %v493 = vpack.c.b16 %v429, %v429
  %v494 = vpack.c.b16 %v430, %v430
  %v495 = vpack.c.b16 %v431, %v431
  %v496 = vpack.c.b16 %v432, %v432
  %v497 = vpack.c.b16 %v433, %v433
  %v498 = vpack.c.b16 %v434, %v434
  %v499 = vpack.c.b16 %v435, %v435
  %v500 = vpack.c.b16 %v436, %v436
  %v501 = vpack.c.b16 %v437, %v437
  %v502 = vpack.c.b16 %v438, %v438
  %v503 = vpack.c.b16 %v439, %v439
  %v504 = vpack.c.b16 %v440, %v440
  %v505 = vpack.c.b16 %v441, %v441
  %v506 = vpack.c.b16 %v442, %v442
  %v507 = vpack.c.b16 %v443, %v443
  %v508 = vpack.c.b16 %v444, %v444
  %v509 = vpack.c.b16 %v445, %v445
  %v510 = vpack.c.b16 %v446, %v446
  %v511 = vpack.c.b16 %v447, %v447
  %v512 = vpack.c.b16 %v448, %v448
  %v513 = vpack.c.b16 %v449, %v449
  %v514 = vpack.c.b16 %v450, %v450
  %v515 = vpack.c.b16 %v451, %v451
  %v516 = vpack.c.b16 %v452, %v452
  %v517 = vpack.c.b16 %v453, %v453
  %v518 = vpack.c.b16 %v454, %v454
  %v519 = vpack.c.b16 %v455, %v455
  %v520 = vpack.c.b16 %v456, %v456
  %v521 = vpack.c.b16 %v457, %v457
  %v522 = vpack.c.b16 %v458, %v458
  %v523 = vpack.c.b16 %v459, %v459
  %v524 = vpack.c.b16 %v460, %v460
  %v525 = vpack.c.b16 %v461, %v461
  %v526 = vpack.c.b16 %v462, %v462
  %v527 = vpack.c.b16 %v463, %v463
  %v528 = vpack.c.b16 %v464, %v464
  %v529 = vpack.c.b16 %v465, %v465
  %v530 = vpack.c.b16 %v466, %v466
  %v531 = vpack.c.b16 %v467, %v467
  %v532 = vpack.c.b16 %v468, %v468
  %v533 = vpack.c.b16 %v469, %v469
  %v534 = vpack.c.b16 %v470, %v470
  %v535 = vpack.c.b16 %v471, %v471
  %v536 = vpack.c.b16 %v472, %v472
  %v537 = vpack.c.b16 %v473, %v473
  %v538 = vpack.c.b16 %v474, %v474
  %v539 = vpack.c.b16 %v475, %v475
  %v540 = vpack.c.b16 %v476, %v476
  %v541 = vpack.c.b16 %v477, %v477
  %v542 = vpack.c.b16 %v478, %v478
  %v543 = vpack.c.b16 %v479, %v479
  %v544 = vpack.c.b16 %v480, %v480
  %v545 = vpack.c.b16 %v481, %v481
  %v546 = vpack.c.b16 %v482, %v482
  %v547 = vpack.c.b16 %v483, %v483
  %v548 = vpack.c.b16 %v484, %v484
  %v549 = vpack.c.b16 %v485, %v485
  %v550 = vpack.c.b16 %v486, %v486
  %v551 = vpack.c.b16 %v487, %v487
  %v552 = vpack.c.b16 %v488, %v488
  %v553 = vpack.c.b16 %v489, %v489
  %v554 = vpack.c.b16 %v490, %v490
  %v555 = vpack.c.b16 %v491, %v491
  %v556 = vpack.c.b16 %v492, %v492
  %621 = vst [vmem:[%s5] sm:$0xf] %v493
  %622 = vst [vmem:[%s5 + $0x4] sm:$0xf] %v494
  %623 = vst [vmem:[%s5 + $0x8] sm:$0xf] %v495
  %624 = vst [vmem:[%s5 + $0xc] sm:$0xf] %v496
  %625 = vst [vmem:[%s5 + $0x10] sm:$0xf] %v497
  %626 = vst [vmem:[%s5 + $0x14] sm:$0xf] %v498
  %627 = vst [vmem:[%s5 + $0x18] sm:$0xf] %v499
  %628 = vst [vmem:[%s5 + $0x1c] sm:$0xf] %v500
  %629 = vst [vmem:[%s5 + $0x20] sm:$0xf] %v501
  %630 = vst [vmem:[%s5 + $0x24] sm:$0xf] %v502
  %631 = vst [vmem:[%s5 + $0x28] sm:$0xf] %v503
  %632 = vst [vmem:[%s5 + $0x2c] sm:$0xf] %v504
  %633 = vst [vmem:[%s5 + $0x30] sm:$0xf] %v505
  %634 = vst [vmem:[%s5 + $0x34] sm:$0xf] %v506
  %635 = vst [vmem:[%s5 + $0x38] sm:$0xf] %v507
  %636 = vst [vmem:[%s5 + $0x3c] sm:$0xf] %v508
  %637 = vst [vmem:[%s5 + $0x40] sm:$0xf] %v509
  %638 = vst [vmem:[%s5 + $0x44] sm:$0xf] %v510
  %639 = vst [vmem:[%s5 + $0x48] sm:$0xf] %v511
  %640 = vst [vmem:[%s5 + $0x4c] sm:$0xf] %v512
  %641 = vst [vmem:[%s5 + $0x50] sm:$0xf] %v513
  %642 = vst [vmem:[%s5 + $0x54] sm:$0xf] %v514
  %643 = vst [vmem:[%s5 + $0x58] sm:$0xf] %v515
  %644 = vst [vmem:[%s5 + $0x5c] sm:$0xf] %v516
  %645 = vst [vmem:[%s5 + $0x60] sm:$0xf] %v517
  %646 = vst [vmem:[%s5 + $0x64] sm:$0xf] %v518
  %647 = vst [vmem:[%s5 + $0x68] sm:$0xf] %v519
  %648 = vst [vmem:[%s5 + $0x6c] sm:$0xf] %v520
  %649 = vst [vmem:[%s5 + $0x70] sm:$0xf] %v521
  %650 = vst [vmem:[%s5 + $0x74] sm:$0xf] %v522
  %651 = vst [vmem:[%s5 + $0x78] sm:$0xf] %v523
  %652 = vst [vmem:[%s5 + $0x7c] sm:$0xf] %v524
  %653 = vst [vmem:[%s5 + $0x80] sm:$0xf] %v525
  %654 = vst [vmem:[%s5 + $0x84] sm:$0xf] %v526
  %655 = vst [vmem:[%s5 + $0x88] sm:$0xf] %v527
  %656 = vst [vmem:[%s5 + $0x8c] sm:$0xf] %v528
  %657 = vst [vmem:[%s5 + $0x90] sm:$0xf] %v529
  %658 = vst [vmem:[%s5 + $0x94] sm:$0xf] %v530
  %659 = vst [vmem:[%s5 + $0x98] sm:$0xf] %v531
  %660 = vst [vmem:[%s5 + $0x9c] sm:$0xf] %v532
  %661 = vst [vmem:[%s5 + $0xa0] sm:$0xf] %v533
  %662 = vst [vmem:[%s5 + $0xa4] sm:$0xf] %v534
  %663 = vst [vmem:[%s5 + $0xa8] sm:$0xf] %v535
  %664 = vst [vmem:[%s5 + $0xac] sm:$0xf] %v536
  %665 = vst [vmem:[%s5 + $0xb0] sm:$0xf] %v537
  %666 = vst [vmem:[%s5 + $0xb4] sm:$0xf] %v538
  %667 = vst [vmem:[%s5 + $0xb8] sm:$0xf] %v539
  %668 = vst [vmem:[%s5 + $0xbc] sm:$0xf] %v540
  %669 = vst [vmem:[%s5 + $0xc0] sm:$0xf] %v541
  %670 = vst [vmem:[%s5 + $0xc4] sm:$0xf] %v542
  %671 = vst [vmem:[%s5 + $0xc8] sm:$0xf] %v543
  %672 = vst [vmem:[%s5 + $0xcc] sm:$0xf] %v544
  %673 = vst [vmem:[%s5 + $0xd0] sm:$0xf] %v545
  %674 = vst [vmem:[%s5 + $0xd4] sm:$0xf] %v546
  %675 = vst [vmem:[%s5 + $0xd8] sm:$0xf] %v547
  %676 = vst [vmem:[%s5 + $0xdc] sm:$0xf] %v548
  %677 = vst [vmem:[%s5 + $0xe0] sm:$0xf] %v549
  %678 = vst [vmem:[%s5 + $0xe4] sm:$0xf] %v550
  %679 = vst [vmem:[%s5 + $0xe8] sm:$0xf] %v551
  %680 = vst [vmem:[%s5 + $0xec] sm:$0xf] %v552
  %681 = vst [vmem:[%s5 + $0xf0] sm:$0xf] %v553
  %682 = vst [vmem:[%s5 + $0xf4] sm:$0xf] %v554
  %683 = vst [vmem:[%s5 + $0xf8] sm:$0xf] %v555
  %684 = vst [vmem:[%s5 + $0xfc] sm:$0xf] %v556
  // Predicated region
  $region22: #{resnet_forward.22} parent=0 // pred_check
    _
  $region23: #{resnet_forward.22} parent=0 // pred_check_branch
    %686 = sbr.rel (0) target = $region25
  $region24: #{resnet_forward.22} parent=0 // pred_region
    _
  $region25: #{resnet_forward.22} parent=0 // pred_fallthru
    _
  // Predicated region
  $region26: #{resnet_forward.22} parent=0 // pred_check
    _
  $region27: #{resnet_forward.22} parent=0 // pred_check_branch
    %688 = sbr.rel (0) target = $region29
  $region28: #{resnet_forward.22} parent=0 // pred_region
    _
  $region29: #{resnet_forward.22} parent=0 // pred_fallthru
    _

// kernel: resnet_forward.23
$region0: #{resnet_forward.23}
  #allocation0 [shape = 'u32[]', space=smem, size = 0x4, offset = 0x4, fixed_abs, tag = 'smem constant byte address 0x4 - core index']
  #allocation1 [shape = 'u32[144,128]{1,0:T(1,128)}', space=vmem, size = 0x12000, scoped, tag = 'internal scratch']
  #allocation2 [shape = 'f32[1,128]{1,0:T(1,128)}', space=vmem, size = 0x200, scoped, tag = 'scratch operand']
  #allocation3 [shape = 'f32[1,128]{1,0:T(1,128)}', space=vmem, size = 0x200, scoped, tag = 'scratch operand']
  %s0 = inlined_call_operand.vmem [shape: bf16[128,256], index: 0, kind: input, shape index: {}]
  %s1 = inlined_call_operand.vmem [shape: bf16[256,128], index: 1, kind: input, shape index: {}]
  %s2 = inlined_call_operand.vmem [shape: f32[128,128], index: 2, kind: output, shape index: {0}]
  %s3 = inlined_call_operand.vmem [shape: f32[1,128], index: 3, kind: output, shape index: {1}]
  %s4 = inlined_call_operand.vmem [shape: f32[1,128], index: 4, kind: output, shape index: {2}]
  %5 = xla_tuple %s2, %s3, %s4
  %s6 = sld [smem:[#allocation0]]
  $region42: #{resnet_forward.23} parent=0
    _
  %s8 = ssub.s32 1, %s6
  %s9 = scalar_select 0, %s8, %s6
  // Predicated region
  $region2: #{resnet_forward.23} parent=0 // pred_check
    _
  $region3: #{resnet_forward.23} parent=0 // pred_check_branch
    %11 = sbr.rel (0) target = $region5
  $region4: #{resnet_forward.23} parent=0 // pred_region
    _
  $region5: #{resnet_forward.23} parent=0 // pred_fallthru
    _
  // Predicated region
  $region6: #{resnet_forward.23} parent=0 // pred_check
    _
  $region7: #{resnet_forward.23} parent=0 // pred_check_branch
    %13 = sbr.rel (0) target = $region9
  $region8: #{resnet_forward.23} parent=0 // pred_region
    _
  $region9: #{resnet_forward.23} parent=0 // pred_fallthru
    _
  %v15 = vld [vmem:[%s0] sm:$0xff]
  %v16 = vld [vmem:[%s0 + $0x8] sm:$0xff]
  %v17 = vld [vmem:[%s0 + $0x10] sm:$0xff]
  %v18 = vld [vmem:[%s0 + $0x18] sm:$0xff]
  %v19 = vld [vmem:[%s0 + $0x20] sm:$0xff]
  %v20 = vld [vmem:[%s0 + $0x28] sm:$0xff]
  %v21 = vld [vmem:[%s0 + $0x30] sm:$0xff]
  %v22 = vld [vmem:[%s0 + $0x38] sm:$0xff]
  %v23 = vld [vmem:[%s0 + $0x40] sm:$0xff]
  %v24 = vld [vmem:[%s0 + $0x48] sm:$0xff]
  %v25 = vld [vmem:[%s0 + $0x50] sm:$0xff]
  %v26 = vld [vmem:[%s0 + $0x58] sm:$0xff]
  %v27 = vld [vmem:[%s0 + $0x60] sm:$0xff]
  %v28 = vld [vmem:[%s0 + $0x68] sm:$0xff]
  %v29 = vld [vmem:[%s0 + $0x70] sm:$0xff]
  %v30 = vld [vmem:[%s0 + $0x78] sm:$0xff]
  %v31 = vld [vmem:[%s1] sm:$0xf]
  %v32 = vld [vmem:[%s1 + $0x4] sm:$0xf]
  %v33 = vld [vmem:[%s1 + $0x8] sm:$0xf]
  %v34 = vld [vmem:[%s1 + $0xc] sm:$0xf]
  %v35 = vld [vmem:[%s1 + $0x10] sm:$0xf]
  %v36 = vld [vmem:[%s1 + $0x14] sm:$0xf]
  %v37 = vld [vmem:[%s1 + $0x18] sm:$0xf]
  %v38 = vld [vmem:[%s1 + $0x1c] sm:$0xf]
  %v39 = vld [vmem:[%s1 + $0x20] sm:$0xf]
  %v40 = vld [vmem:[%s1 + $0x24] sm:$0xf]
  %v41 = vld [vmem:[%s1 + $0x28] sm:$0xf]
  %v42 = vld [vmem:[%s1 + $0x2c] sm:$0xf]
  %v43 = vld [vmem:[%s1 + $0x30] sm:$0xf]
  %v44 = vld [vmem:[%s1 + $0x34] sm:$0xf]
  %v45 = vld [vmem:[%s1 + $0x38] sm:$0xf]
  %v46 = vld [vmem:[%s1 + $0x3c] sm:$0xf]
  %v47 = vld [vmem:[%s1 + $0x40] sm:$0xf]
  %v48 = vld [vmem:[%s1 + $0x44] sm:$0xf]
  %v49 = vld [vmem:[%s1 + $0x48] sm:$0xf]
  %v50 = vld [vmem:[%s1 + $0x4c] sm:$0xf]
  %v51 = vld [vmem:[%s1 + $0x50] sm:$0xf]
  %v52 = vld [vmem:[%s1 + $0x54] sm:$0xf]
  %v53 = vld [vmem:[%s1 + $0x58] sm:$0xf]
  %v54 = vld [vmem:[%s1 + $0x5c] sm:$0xf]
  %v55 = vld [vmem:[%s1 + $0x60] sm:$0xf]
  %v56 = vld [vmem:[%s1 + $0x64] sm:$0xf]
  %v57 = vld [vmem:[%s1 + $0x68] sm:$0xf]
  %v58 = vld [vmem:[%s1 + $0x6c] sm:$0xf]
  %v59 = vld [vmem:[%s1 + $0x70] sm:$0xf]
  %v60 = vld [vmem:[%s1 + $0x74] sm:$0xf]
  %v61 = vld [vmem:[%s1 + $0x78] sm:$0xf]
  %v62 = vld [vmem:[%s1 + $0x7c] sm:$0xf]
  %v79 = vunpack.c.l.b16 %v15
  %v80 = vunpack.c.h.b16 %v15
  %v81 = vunpack.c.l.b16 %v16
  %v82 = vunpack.c.h.b16 %v16
  %v83 = vunpack.c.l.b16 %v17
  %v84 = vunpack.c.h.b16 %v17
  %v85 = vunpack.c.l.b16 %v18
  %v86 = vunpack.c.h.b16 %v18
  %v87 = vunpack.c.l.b16 %v19
  %v88 = vunpack.c.h.b16 %v19
  %v89 = vunpack.c.l.b16 %v20
  %v90 = vunpack.c.h.b16 %v20
  %v91 = vunpack.c.l.b16 %v21
  %v92 = vunpack.c.h.b16 %v21
  %v93 = vunpack.c.l.b16 %v22
  %v94 = vunpack.c.h.b16 %v22
  %v95 = vunpack.c.l.b16 %v23
  %v96 = vunpack.c.h.b16 %v23
  %v97 = vunpack.c.l.b16 %v24
  %v98 = vunpack.c.h.b16 %v24
  %v99 = vunpack.c.l.b16 %v25
  %v100 = vunpack.c.h.b16 %v25
  %v101 = vunpack.c.l.b16 %v26
  %v102 = vunpack.c.h.b16 %v26
  %v103 = vunpack.c.l.b16 %v27
  %v104 = vunpack.c.h.b16 %v27
  %v105 = vunpack.c.l.b16 %v28
  %v106 = vunpack.c.h.b16 %v28
  %v107 = vunpack.c.l.b16 %v29
  %v108 = vunpack.c.h.b16 %v29
  %v109 = vunpack.c.l.b16 %v30
  %v110 = vunpack.c.h.b16 %v30
  %v111 = vpack.c.b16 %v81, %v79
  %v112 = vpack.c.b16 %v82, %v80
  %v113 = vpack.c.b16 %v85, %v83
  %v114 = vpack.c.b16 %v86, %v84
  %v115 = vpack.c.b16 %v89, %v87
  %v116 = vpack.c.b16 %v90, %v88
  %v117 = vpack.c.b16 %v93, %v91
  %v118 = vpack.c.b16 %v94, %v92
  %v119 = vpack.c.b16 %v97, %v95
  %v120 = vpack.c.b16 %v98, %v96
  %v121 = vpack.c.b16 %v101, %v99
  %v122 = vpack.c.b16 %v102, %v100
  %v123 = vpack.c.b16 %v105, %v103
  %v124 = vpack.c.b16 %v106, %v104
  %v125 = vpack.c.b16 %v109, %v107
  %v126 = vpack.c.b16 %v110, %v108
  %v175 = vunpack.c.l.b16 %v31
  %v176 = vunpack.c.l.b16 %v32
  %v177 = vunpack.c.l.b16 %v33
  %v178 = vunpack.c.l.b16 %v34
  %v179 = vunpack.c.l.b16 %v35
  %v180 = vunpack.c.l.b16 %v36
  %v181 = vunpack.c.l.b16 %v37
  %v182 = vunpack.c.l.b16 %v38
  %v183 = vunpack.c.l.b16 %v39
  %v184 = vunpack.c.l.b16 %v40
  %v185 = vunpack.c.l.b16 %v41
  %v186 = vunpack.c.l.b16 %v42
  %v187 = vunpack.c.l.b16 %v43
  %v188 = vunpack.c.l.b16 %v44
  %v189 = vunpack.c.l.b16 %v45
  %v190 = vunpack.c.l.b16 %v46
  %v191 = vunpack.c.l.b16 %v47
  %v192 = vunpack.c.l.b16 %v48
  %v193 = vunpack.c.l.b16 %v49
  %v194 = vunpack.c.l.b16 %v50
  %v195 = vunpack.c.l.b16 %v51
  %v196 = vunpack.c.l.b16 %v52
  %v197 = vunpack.c.l.b16 %v53
  %v198 = vunpack.c.l.b16 %v54
  %v199 = vunpack.c.l.b16 %v55
  %v200 = vunpack.c.l.b16 %v56
  %v201 = vunpack.c.l.b16 %v57
  %v202 = vunpack.c.l.b16 %v58
  %v203 = vunpack.c.l.b16 %v59
  %v204 = vunpack.c.l.b16 %v60
  %v205 = vunpack.c.l.b16 %v61
  %v206 = vunpack.c.l.b16 %v62
  %v207 = vpack.c.b16 %v176, %v175
  %v208 = vpack.c.b16 %v178, %v177
  %v209 = vpack.c.b16 %v180, %v179
  %v210 = vpack.c.b16 %v182, %v181
  %v211 = vpack.c.b16 %v184, %v183
  %v212 = vpack.c.b16 %v186, %v185
  %v213 = vpack.c.b16 %v188, %v187
  %v214 = vpack.c.b16 %v190, %v189
  %v215 = vpack.c.b16 %v192, %v191
  %v216 = vpack.c.b16 %v194, %v193
  %v217 = vpack.c.b16 %v196, %v195
  %v218 = vpack.c.b16 %v198, %v197
  %v219 = vpack.c.b16 %v200, %v199
  %v220 = vpack.c.b16 %v202, %v201
  %v221 = vpack.c.b16 %v204, %v203
  %v222 = vpack.c.b16 %v206, %v205
  %239 = vmatprep.subr.bf16.mxu0 0
  %240 = vmatpush1.bf16.msra.mxu0 %v214
  %241 = vmatprep.subr.bf16.mxu0 0
  %242 = vmatpush1.bf16.msra.mxu0 %v213
  %243 = vmatprep.subr.bf16.mxu0 0
  %244 = vmatpush1.bf16.msra.mxu0 %v212
  %245 = vmatprep.subr.bf16.mxu0 0
  %246 = vmatpush1.bf16.msra.mxu0 %v211
  %247 = vmatprep.subr.bf16.mxu0 0
  %248 = vmatpush1.bf16.msra.mxu0 %v210
  %249 = vmatprep.subr.bf16.mxu0 0
  %250 = vmatpush1.bf16.msra.mxu0 %v209
  %251 = vmatprep.subr.bf16.mxu0 0
  %252 = vmatpush1.bf16.msra.mxu0 %v208
  %253 = vmatprep.subr.bf16.mxu0 0
  %254 = vmatpush1.bf16.msra.mxu0 %v207
  %255 = vmatprep.subr.bf16.mxu0 0
  %256 = vmatpush2.bf16.msra.mxu0 %v222
  %257 = vmatprep.subr.bf16.mxu0 0
  %258 = vmatpush2.bf16.msra.mxu0 %v221
  %259 = vmatprep.subr.bf16.mxu0 0
  %260 = vmatpush2.bf16.msra.mxu0 %v220
  %261 = vmatprep.subr.bf16.mxu0 0
  %262 = vmatpush2.bf16.msra.mxu0 %v219
  %263 = vmatprep.subr.bf16.mxu0 0
  %264 = vmatpush2.bf16.msra.mxu0 %v218
  %265 = vmatprep.subr.bf16.mxu0 0
  %266 = vmatpush2.bf16.msra.mxu0 %v217
  %267 = vmatprep.subr.bf16.mxu0 0
  %268 = vmatpush2.bf16.msra.mxu0 %v216
  %269 = vmatprep.subr.bf16.mxu0 0
  %270 = vmatpush2.bf16.msra.mxu0 %v215
  %271 = vmatprep.mubr.bf16.mxu0 %v112
  %272 = vmatmul.mubr.bf16.gmra.mxu0 %v111
  %v273 = vpop.f32.mrf.mxu0
  %v274 = vadd.f32 0.0, %v273
  %v275 = vpop.f32.mrf.mxu0
  %v276 = vpop.f32.mrf.mxu0
  %v277 = vadd.f32 0.0, %v276
  %v278 = vpop.f32.mrf.mxu0
  %279 = vmatprep.mubr.bf16.mxu0 %v114
  %280 = vmatmul.mubr.bf16.gmra.mxu0 %v113
  %v281 = vpop.f32.mrf.mxu0
  %v282 = vadd.f32 0.0, %v281
  %v283 = vpop.f32.mrf.mxu0
  %v284 = vpop.f32.mrf.mxu0
  %v285 = vadd.f32 0.0, %v284
  %v286 = vpop.f32.mrf.mxu0
  %287 = vmatprep.mubr.bf16.mxu0 %v116
  %288 = vmatmul.mubr.bf16.gmra.mxu0 %v115
  %v289 = vpop.f32.mrf.mxu0
  %v290 = vadd.f32 0.0, %v289
  %v291 = vpop.f32.mrf.mxu0
  %v292 = vpop.f32.mrf.mxu0
  %v293 = vadd.f32 0.0, %v292
  %v294 = vpop.f32.mrf.mxu0
  %295 = vmatprep.mubr.bf16.mxu0 %v118
  %296 = vmatmul.mubr.bf16.gmra.mxu0 %v117
  %v297 = vpop.f32.mrf.mxu0
  %v298 = vadd.f32 0.0, %v297
  %v299 = vpop.f32.mrf.mxu0
  %v300 = vpop.f32.mrf.mxu0
  %v301 = vadd.f32 0.0, %v300
  %v302 = vpop.f32.mrf.mxu0
  %303 = vmatprep.mubr.bf16.mxu0 %v120
  %304 = vmatmul.mubr.bf16.gmra.mxu0 %v119
  %v305 = vpop.f32.mrf.mxu0
  %v306 = vadd.f32 0.0, %v305
  %v307 = vpop.f32.mrf.mxu0
  %v308 = vpop.f32.mrf.mxu0
  %v309 = vadd.f32 0.0, %v308
  %v310 = vpop.f32.mrf.mxu0
  %311 = vmatprep.mubr.bf16.mxu0 %v122
  %312 = vmatmul.mubr.bf16.gmra.mxu0 %v121
  %v313 = vpop.f32.mrf.mxu0
  %v314 = vadd.f32 0.0, %v313
  %v315 = vpop.f32.mrf.mxu0
  %v316 = vpop.f32.mrf.mxu0
  %v317 = vadd.f32 0.0, %v316
  %v318 = vpop.f32.mrf.mxu0
  %319 = vmatprep.mubr.bf16.mxu0 %v124
  %320 = vmatmul.mubr.bf16.gmra.mxu0 %v123
  %v321 = vpop.f32.mrf.mxu0
  %v322 = vadd.f32 0.0, %v321
  %v323 = vpop.f32.mrf.mxu0
  %v324 = vpop.f32.mrf.mxu0
  %v325 = vadd.f32 0.0, %v324
  %v326 = vpop.f32.mrf.mxu0
  %327 = vmatprep.mubr.bf16.mxu0 %v126
  %328 = vmatmul.mubr.bf16.gmra.mxu0 %v125
  %v329 = vpop.f32.mrf.mxu0
  %v330 = vadd.f32 0.0, %v329
  %v331 = vpop.f32.mrf.mxu0
  %v332 = vpop.f32.mrf.mxu0
  %v333 = vadd.f32 0.0, %v332
  %v334 = vpop.f32.mrf.mxu0
  %335 = vdwg.mxu0
  %336 = vst [vmem:[%s2] sm:$0xff] %v274
  %337 = vst [vmem:[%s2 + $0x8] sm:$0xff] %v277
  %338 = vst [vmem:[%s2 + $0x10] sm:$0xff] %v282
  %339 = vst [vmem:[%s2 + $0x18] sm:$0xff] %v285
  %340 = vst [vmem:[%s2 + $0x20] sm:$0xff] %v290
  %341 = vst [vmem:[%s2 + $0x28] sm:$0xff] %v293
  %342 = vst [vmem:[%s2 + $0x30] sm:$0xff] %v298
  %343 = vst [vmem:[%s2 + $0x38] sm:$0xff] %v301
  %344 = vst [vmem:[%s2 + $0x40] sm:$0xff] %v306
  %345 = vst [vmem:[%s2 + $0x48] sm:$0xff] %v309
  %346 = vst [vmem:[%s2 + $0x50] sm:$0xff] %v314
  %347 = vst [vmem:[%s2 + $0x58] sm:$0xff] %v317
  %348 = vst [vmem:[%s2 + $0x60] sm:$0xff] %v322
  %349 = vst [vmem:[%s2 + $0x68] sm:$0xff] %v325
  %350 = vst [vmem:[%s2 + $0x70] sm:$0xff] %v330
  %351 = vst [vmem:[%s2 + $0x78] sm:$0xff] %v333
  %p352 = scmp.eq.s32.totalorder 0, 0
  // Predicated region
  $region10: #{resnet_forward.23} parent=0 // pred_check
    %p353 = pneg %p352
  $region11: #{resnet_forward.23} parent=0 // pred_check_branch
    %355 = sbr.rel (%p353) target = $region13
  $region12: #{resnet_forward.23} parent=0 // pred_region
    %356 = vst [vmem:[#allocation2] sm:$0x1] 0.0
    %357 = vst [vmem:[#allocation3] sm:$0x1] 0.0
  $region13: #{resnet_forward.23} parent=0 // pred_fallthru
    _
  %v358 = vld [vmem:[#allocation2] sm:$0x1]
  %v359 = vadd.f32 %v274, %v277
  %v360 = vadd.f32 %v359, %v282
  %v361 = vadd.f32 %v360, %v285
  %v362 = vadd.f32 %v361, %v290
  %v363 = vadd.f32 %v362, %v293
  %v364 = vadd.f32 %v363, %v298
  %v365 = vadd.f32 %v364, %v301
  %v366 = vadd.f32 %v365, %v306
  %v367 = vadd.f32 %v366, %v309
  %v368 = vadd.f32 %v367, %v314
  %v369 = vadd.f32 %v368, %v317
  %v370 = vadd.f32 %v369, %v322
  %v371 = vadd.f32 %v370, %v325
  %v372 = vadd.f32 %v371, %v330
  %v373 = vadd.f32 %v372, %v333
  %v374 = vrot.slane %v373, 4
  %v375 = vadd.f32 %v373, %v374
  %v376 = vrot.slane %v375, 2
  %v377 = vadd.f32 %v375, %v376
  %v378 = vrot.slane %v377, 1
  %v379 = vadd.f32 %v377, %v378
  %v380 = vadd.f32 %v358, %v379
  %381 = vst [vmem:[#allocation2] sm:$0x1] %v380
  %v382 = vld [vmem:[#allocation3] sm:$0x1]
  %v383 = vmul.f32 %v274, %v274
  %v384 = vmul.f32 %v277, %v277
  %v385 = vmul.f32 %v282, %v282
  %v386 = vmul.f32 %v285, %v285
  %v387 = vmul.f32 %v290, %v290
  %v388 = vmul.f32 %v293, %v293
  %v389 = vmul.f32 %v298, %v298
  %v390 = vmul.f32 %v301, %v301
  %v391 = vmul.f32 %v306, %v306
  %v392 = vmul.f32 %v309, %v309
  %v393 = vmul.f32 %v314, %v314
  %v394 = vmul.f32 %v317, %v317
  %v395 = vmul.f32 %v322, %v322
  %v396 = vmul.f32 %v325, %v325
  %v397 = vmul.f32 %v330, %v330
  %v398 = vmul.f32 %v333, %v333
  %v399 = vadd.f32 %v383, %v384
  %v400 = vadd.f32 %v399, %v385
  %v401 = vadd.f32 %v400, %v386
  %v402 = vadd.f32 %v401, %v387
  %v403 = vadd.f32 %v402, %v388
  %v404 = vadd.f32 %v403, %v389
  %v405 = vadd.f32 %v404, %v390
  %v406 = vadd.f32 %v405, %v391
  %v407 = vadd.f32 %v406, %v392
  %v408 = vadd.f32 %v407, %v393
  %v409 = vadd.f32 %v408, %v394
  %v410 = vadd.f32 %v409, %v395
  %v411 = vadd.f32 %v410, %v396
  %v412 = vadd.f32 %v411, %v397
  %v413 = vadd.f32 %v412, %v398
  %v414 = vrot.slane %v413, 4
  %v415 = vadd.f32 %v413, %v414
  %v416 = vrot.slane %v415, 2
  %v417 = vadd.f32 %v415, %v416
  %v418 = vrot.slane %v417, 1
  %v419 = vadd.f32 %v417, %v418
  %v420 = vadd.f32 %v382, %v419
  %421 = vst [vmem:[#allocation3] sm:$0x1] %v420
  // Predicated region
  $region14: #{resnet_forward.23} parent=0 // pred_check
    %p422 = pneg %p352
  $region15: #{resnet_forward.23} parent=0 // pred_check_branch
    %424 = sbr.rel (%p422) target = $region17
  $region16: #{resnet_forward.23} parent=0 // pred_region
    %v425 = vld [vmem:[#allocation2] sm:$0x1]
    %v426 = vmul.f32 %v425, 0.0078125
    %427 = vst [vmem:[%s3] sm:$0x1] %v426
    %v428 = vld [vmem:[#allocation3] sm:$0x1]
    %v429 = vmul.f32 %v428, 0.0078125
    %v430 = vmul.f32 %v426, %v426
    %v431 = vsub.f32 %v429, %v430
    %v432 = vmax.f32 %v431, 0.0
    %433 = vst [vmem:[%s4] sm:$0x1] %v432
  $region17: #{resnet_forward.23} parent=0 // pred_fallthru
    _
  // Predicated region
  $region18: #{resnet_forward.23} parent=0 // pred_check
    _
  $region19: #{resnet_forward.23} parent=0 // pred_check_branch
    %435 = sbr.rel (0) target = $region21
  $region20: #{resnet_forward.23} parent=0 // pred_region
    _
  $region21: #{resnet_forward.23} parent=0 // pred_fallthru
    _
  // Predicated region
  $region22: #{resnet_forward.23} parent=0 // pred_check
    _
  $region23: #{resnet_forward.23} parent=0 // pred_check_branch
    %437 = sbr.rel (0) target = $region25
  $region24: #{resnet_forward.23} parent=0 // pred_region
    _
  $region25: #{resnet_forward.23} parent=0 // pred_fallthru
    _
  // Predicated region
  $region26: #{resnet_forward.23} parent=0 // pred_check
    _
  $region27: #{resnet_forward.23} parent=0 // pred_check_branch
    %439 = sbr.rel (0) target = $region29
  $region28: #{resnet_forward.23} parent=0 // pred_region
    _
  $region29: #{resnet_forward.23} parent=0 // pred_fallthru
    _
  // Predicated region
  $region30: #{resnet_forward.23} parent=0 // pred_check
    _
  $region31: #{resnet_forward.23} parent=0 // pred_check_branch
    %441 = sbr.rel (0) target = $region33
  $region32: #{resnet_forward.23} parent=0 // pred_region
    _
  $region33: #{resnet_forward.23} parent=0 // pred_fallthru
    _
  // Predicated region
  $region34: #{resnet_forward.23} parent=0 // pred_check
    _
  $region35: #{resnet_forward.23} parent=0 // pred_check_branch
    %443 = sbr.rel (0) target = $region37
  $region36: #{resnet_forward.23} parent=0 // pred_region
    _
  $region37: #{resnet_forward.23} parent=0 // pred_fallthru
    _
  // Predicated region
  $region38: #{resnet_forward.23} parent=0 // pred_check
    _
  $region39: #{resnet_forward.23} parent=0 // pred_check_branch
    %445 = sbr.rel (0) target = $region41
  $region40: #{resnet_forward.23} parent=0 // pred_region
    _
  $region41: #{resnet_forward.23} parent=0 // pred_fallthru
    _

// kernel: resnet_forward.24
$region0: #{resnet_forward.24}
  #allocation0 [shape = 'u32[]', space=smem, size = 0x4, offset = 0x4, fixed_abs, tag = 'smem constant byte address 0x4 - core index']
  #allocation1 [shape = 'u32[144,128]{1,0:T(1,128)}', space=vmem, size = 0x12000, scoped, tag = 'internal scratch']
  %s0 = inlined_call_operand.vmem [shape: f32[128,128], index: 0, kind: input, shape index: {}]
  %s1 = inlined_call_operand.vmem [shape: f32[1,128], index: 1, kind: input, shape index: {}]
  %s2 = inlined_call_operand.vmem [shape: f32[1,128], index: 2, kind: input, shape index: {}]
  %s3 = inlined_call_operand.vmem [shape: f32[1,128], index: 3, kind: input, shape index: {}]
  %s4 = inlined_call_operand.vmem [shape: f32[1,128], index: 4, kind: input, shape index: {}]
  %s5 = inlined_call_operand.vmem [shape: bf16[128,128], index: 5, kind: output, shape index: {}]
  %s6 = sld [smem:[#allocation0]]
  $region30: #{resnet_forward.24} parent=0
    _
  %s8 = ssub.s32 1, %s6
  %s9 = scalar_select 0, %s8, %s6
  // Predicated region
  $region2: #{resnet_forward.24} parent=0 // pred_check
    _
  $region3: #{resnet_forward.24} parent=0 // pred_check_branch
    %11 = sbr.rel (0) target = $region5
  $region4: #{resnet_forward.24} parent=0 // pred_region
    _
  $region5: #{resnet_forward.24} parent=0 // pred_fallthru
    _
  // Predicated region
  $region6: #{resnet_forward.24} parent=0 // pred_check
    _
  $region7: #{resnet_forward.24} parent=0 // pred_check_branch
    %13 = sbr.rel (0) target = $region9
  $region8: #{resnet_forward.24} parent=0 // pred_region
    _
  $region9: #{resnet_forward.24} parent=0 // pred_fallthru
    _
  // Predicated region
  $region10: #{resnet_forward.24} parent=0 // pred_check
    _
  $region11: #{resnet_forward.24} parent=0 // pred_check_branch
    %15 = sbr.rel (0) target = $region13
  $region12: #{resnet_forward.24} parent=0 // pred_region
    _
  $region13: #{resnet_forward.24} parent=0 // pred_fallthru
    _
  // Predicated region
  $region14: #{resnet_forward.24} parent=0 // pred_check
    _
  $region15: #{resnet_forward.24} parent=0 // pred_check_branch
    %17 = sbr.rel (0) target = $region17
  $region16: #{resnet_forward.24} parent=0 // pred_region
    _
  $region17: #{resnet_forward.24} parent=0 // pred_fallthru
    _
  // Predicated region
  $region18: #{resnet_forward.24} parent=0 // pred_check
    _
  $region19: #{resnet_forward.24} parent=0 // pred_check_branch
    %19 = sbr.rel (0) target = $region21
  $region20: #{resnet_forward.24} parent=0 // pred_region
    _
  $region21: #{resnet_forward.24} parent=0 // pred_fallthru
    _
  %v20 = vld [vmem:[%s0] sm:$0xff]
  %v21 = vld [vmem:[%s0 + $0x8] sm:$0xff]
  %v22 = vld [vmem:[%s0 + $0x10] sm:$0xff]
  %v23 = vld [vmem:[%s0 + $0x18] sm:$0xff]
  %v24 = vld [vmem:[%s0 + $0x20] sm:$0xff]
  %v25 = vld [vmem:[%s0 + $0x28] sm:$0xff]
  %v26 = vld [vmem:[%s0 + $0x30] sm:$0xff]
  %v27 = vld [vmem:[%s0 + $0x38] sm:$0xff]
  %v28 = vld [vmem:[%s0 + $0x40] sm:$0xff]
  %v29 = vld [vmem:[%s0 + $0x48] sm:$0xff]
  %v30 = vld [vmem:[%s0 + $0x50] sm:$0xff]
  %v31 = vld [vmem:[%s0 + $0x58] sm:$0xff]
  %v32 = vld [vmem:[%s0 + $0x60] sm:$0xff]
  %v33 = vld [vmem:[%s0 + $0x68] sm:$0xff]
  %v34 = vld [vmem:[%s0 + $0x70] sm:$0xff]
  %v35 = vld [vmem:[%s0 + $0x78] sm:$0xff]
  %v36 = vld [vmem:[%s2] sm:$0x1]
  %v37 = vadd.f32 %v36, 1e-05
  %v38 = vrsqrt.pop %v37
  %v39 = vld [vmem:[%s3] sm:$0x1]
  %v40 = vmul.f32 %v38, %v39
  %v41 = vld [vmem:[%s1] sm:$0x1]
  %v43 = vlaneseq
  %v44 = vshrl.u32 %v43, 7
  %v45 = vsub.s32 0, %v44
  %v46 = vrot.slane %v41, %v45
  %v48 = vsub.f32 %v20, %v46
  %v49 = vsub.f32 %v21, %v46
  %v50 = vsub.f32 %v22, %v46
  %v51 = vsub.f32 %v23, %v46
  %v52 = vsub.f32 %v24, %v46
  %v53 = vsub.f32 %v25, %v46
  %v54 = vsub.f32 %v26, %v46
  %v55 = vsub.f32 %v27, %v46
  %v56 = vsub.f32 %v28, %v46
  %v57 = vsub.f32 %v29, %v46
  %v58 = vsub.f32 %v30, %v46
  %v59 = vsub.f32 %v31, %v46
  %v60 = vsub.f32 %v32, %v46
  %v61 = vsub.f32 %v33, %v46
  %v62 = vsub.f32 %v34, %v46
  %v63 = vsub.f32 %v35, %v46
  %v65 = vlaneseq
  %v66 = vshrl.u32 %v65, 7
  %v67 = vsub.s32 0, %v66
  %v68 = vrot.slane %v40, %v67
  %v70 = vmul.f32 %v48, %v68
  %v71 = vmul.f32 %v49, %v68
  %v72 = vmul.f32 %v50, %v68
  %v73 = vmul.f32 %v51, %v68
  %v74 = vmul.f32 %v52, %v68
  %v75 = vmul.f32 %v53, %v68
  %v76 = vmul.f32 %v54, %v68
  %v77 = vmul.f32 %v55, %v68
  %v78 = vmul.f32 %v56, %v68
  %v79 = vmul.f32 %v57, %v68
  %v80 = vmul.f32 %v58, %v68
  %v81 = vmul.f32 %v59, %v68
  %v82 = vmul.f32 %v60, %v68
  %v83 = vmul.f32 %v61, %v68
  %v84 = vmul.f32 %v62, %v68
  %v85 = vmul.f32 %v63, %v68
  %v86 = vld [vmem:[%s4] sm:$0x1]
  %v88 = vlaneseq
  %v89 = vshrl.u32 %v88, 7
  %v90 = vsub.s32 0, %v89
  %v91 = vrot.slane %v86, %v90
  %v93 = vadd.f32 %v70, %v91
  %v94 = vadd.f32 %v71, %v91
  %v95 = vadd.f32 %v72, %v91
  %v96 = vadd.f32 %v73, %v91
  %v97 = vadd.f32 %v74, %v91
  %v98 = vadd.f32 %v75, %v91
  %v99 = vadd.f32 %v76, %v91
  %v100 = vadd.f32 %v77, %v91
  %v101 = vadd.f32 %v78, %v91
  %v102 = vadd.f32 %v79, %v91
  %v103 = vadd.f32 %v80, %v91
  %v104 = vadd.f32 %v81, %v91
  %v105 = vadd.f32 %v82, %v91
  %v106 = vadd.f32 %v83, %v91
  %v107 = vadd.f32 %v84, %v91
  %v108 = vadd.f32 %v85, %v91
  %v109 = vmax.f32 %v93, 0.0
  %v110 = vmax.f32 %v94, 0.0
  %v111 = vmax.f32 %v95, 0.0
  %v112 = vmax.f32 %v96, 0.0
  %v113 = vmax.f32 %v97, 0.0
  %v114 = vmax.f32 %v98, 0.0
  %v115 = vmax.f32 %v99, 0.0
  %v116 = vmax.f32 %v100, 0.0
  %v117 = vmax.f32 %v101, 0.0
  %v118 = vmax.f32 %v102, 0.0
  %v119 = vmax.f32 %v103, 0.0
  %v120 = vmax.f32 %v104, 0.0
  %v121 = vmax.f32 %v105, 0.0
  %v122 = vmax.f32 %v106, 0.0
  %v123 = vmax.f32 %v107, 0.0
  %v124 = vmax.f32 %v108, 0.0
  %v125 = vpack.c.bf16 %v110, %v109
  %v126 = vpack.c.bf16 %v112, %v111
  %v127 = vpack.c.bf16 %v114, %v113
  %v128 = vpack.c.bf16 %v116, %v115
  %v129 = vpack.c.bf16 %v118, %v117
  %v130 = vpack.c.bf16 %v120, %v119
  %v131 = vpack.c.bf16 %v122, %v121
  %v132 = vpack.c.bf16 %v124, %v123
  %v141 = vunpack.c.l.b16 %v125
  %v142 = vunpack.c.h.b16 %v125
  %v143 = vunpack.c.l.b16 %v126
  %v144 = vunpack.c.h.b16 %v126
  %v145 = vunpack.c.l.b16 %v127
  %v146 = vunpack.c.h.b16 %v127
  %v147 = vunpack.c.l.b16 %v128
  %v148 = vunpack.c.h.b16 %v128
  %v149 = vunpack.c.l.b16 %v129
  %v150 = vunpack.c.h.b16 %v129
  %v151 = vunpack.c.l.b16 %v130
  %v152 = vunpack.c.h.b16 %v130
  %v153 = vunpack.c.l.b16 %v131
  %v154 = vunpack.c.h.b16 %v131
  %v155 = vunpack.c.l.b16 %v132
  %v156 = vunpack.c.h.b16 %v132
  %v157 = vpack.c.b16 %v141, %v141
  %v158 = vpack.c.b16 %v142, %v142
  %v159 = vpack.c.b16 %v143, %v143
  %v160 = vpack.c.b16 %v144, %v144
  %v161 = vpack.c.b16 %v145, %v145
  %v162 = vpack.c.b16 %v146, %v146
  %v163 = vpack.c.b16 %v147, %v147
  %v164 = vpack.c.b16 %v148, %v148
  %v165 = vpack.c.b16 %v149, %v149
  %v166 = vpack.c.b16 %v150, %v150
  %v167 = vpack.c.b16 %v151, %v151
  %v168 = vpack.c.b16 %v152, %v152
  %v169 = vpack.c.b16 %v153, %v153
  %v170 = vpack.c.b16 %v154, %v154
  %v171 = vpack.c.b16 %v155, %v155
  %v172 = vpack.c.b16 %v156, %v156
  %189 = vst [vmem:[%s5] sm:$0xf] %v157
  %190 = vst [vmem:[%s5 + $0x4] sm:$0xf] %v158
  %191 = vst [vmem:[%s5 + $0x8] sm:$0xf] %v159
  %192 = vst [vmem:[%s5 + $0xc] sm:$0xf] %v160
  %193 = vst [vmem:[%s5 + $0x10] sm:$0xf] %v161
  %194 = vst [vmem:[%s5 + $0x14] sm:$0xf] %v162
  %195 = vst [vmem:[%s5 + $0x18] sm:$0xf] %v163
  %196 = vst [vmem:[%s5 + $0x1c] sm:$0xf] %v164
  %197 = vst [vmem:[%s5 + $0x20] sm:$0xf] %v165
  %198 = vst [vmem:[%s5 + $0x24] sm:$0xf] %v166
  %199 = vst [vmem:[%s5 + $0x28] sm:$0xf] %v167
  %200 = vst [vmem:[%s5 + $0x2c] sm:$0xf] %v168
  %201 = vst [vmem:[%s5 + $0x30] sm:$0xf] %v169
  %202 = vst [vmem:[%s5 + $0x34] sm:$0xf] %v170
  %203 = vst [vmem:[%s5 + $0x38] sm:$0xf] %v171
  %204 = vst [vmem:[%s5 + $0x3c] sm:$0xf] %v172
  // Predicated region
  $region22: #{resnet_forward.24} parent=0 // pred_check
    _
  $region23: #{resnet_forward.24} parent=0 // pred_check_branch
    %206 = sbr.rel (0) target = $region25
  $region24: #{resnet_forward.24} parent=0 // pred_region
    _
  $region25: #{resnet_forward.24} parent=0 // pred_fallthru
    _
  // Predicated region
  $region26: #{resnet_forward.24} parent=0 // pred_check
    _
  $region27: #{resnet_forward.24} parent=0 // pred_check_branch
    %208 = sbr.rel (0) target = $region29
  $region28: #{resnet_forward.24} parent=0 // pred_region
    _
  $region29: #{resnet_forward.24} parent=0 // pred_fallthru
    _

// kernel: resnet_forward.28
$region0: #{resnet_forward.28}
  #allocation0 [shape = 'u32[]', space=smem, size = 0x4, offset = 0x4, fixed_abs, tag = 'smem constant byte address 0x4 - core index']
  #allocation1 [shape = 'u32[144,128]{1,0:T(1,128)}', space=vmem, size = 0x12000, scoped, tag = 'internal scratch']
  %s0 = inlined_call_operand.vmem [shape: f32[128,128], index: 0, kind: input, shape index: {}]
  %s1 = inlined_call_operand.vmem [shape: f32[1,128], index: 1, kind: input, shape index: {}]
  %s2 = inlined_call_operand.vmem [shape: f32[1,128], index: 2, kind: input, shape index: {}]
  %s3 = inlined_call_operand.vmem [shape: f32[1,128], index: 3, kind: input, shape index: {}]
  %s4 = inlined_call_operand.vmem [shape: f32[1,128], index: 4, kind: input, shape index: {}]
  %s5 = inlined_call_operand.vmem [shape: bf16[128,128], index: 5, kind: input, shape index: {}]
  %s6 = inlined_call_operand.vmem [shape: bf16[128,128], index: 6, kind: output, shape index: {}]
  %s7 = sld [smem:[#allocation0]]
  $region34: #{resnet_forward.28} parent=0
    _
  %s9 = ssub.s32 1, %s7
  %s10 = scalar_select 0, %s9, %s7
  // Predicated region
  $region2: #{resnet_forward.28} parent=0 // pred_check
    _
  $region3: #{resnet_forward.28} parent=0 // pred_check_branch
    %12 = sbr.rel (0) target = $region5
  $region4: #{resnet_forward.28} parent=0 // pred_region
    _
  $region5: #{resnet_forward.28} parent=0 // pred_fallthru
    _
  // Predicated region
  $region6: #{resnet_forward.28} parent=0 // pred_check
    _
  $region7: #{resnet_forward.28} parent=0 // pred_check_branch
    %14 = sbr.rel (0) target = $region9
  $region8: #{resnet_forward.28} parent=0 // pred_region
    _
  $region9: #{resnet_forward.28} parent=0 // pred_fallthru
    _
  // Predicated region
  $region10: #{resnet_forward.28} parent=0 // pred_check
    _
  $region11: #{resnet_forward.28} parent=0 // pred_check_branch
    %16 = sbr.rel (0) target = $region13
  $region12: #{resnet_forward.28} parent=0 // pred_region
    _
  $region13: #{resnet_forward.28} parent=0 // pred_fallthru
    _
  // Predicated region
  $region14: #{resnet_forward.28} parent=0 // pred_check
    _
  $region15: #{resnet_forward.28} parent=0 // pred_check_branch
    %18 = sbr.rel (0) target = $region17
  $region16: #{resnet_forward.28} parent=0 // pred_region
    _
  $region17: #{resnet_forward.28} parent=0 // pred_fallthru
    _
  // Predicated region
  $region18: #{resnet_forward.28} parent=0 // pred_check
    _
  $region19: #{resnet_forward.28} parent=0 // pred_check_branch
    %20 = sbr.rel (0) target = $region21
  $region20: #{resnet_forward.28} parent=0 // pred_region
    _
  $region21: #{resnet_forward.28} parent=0 // pred_fallthru
    _
  // Predicated region
  $region22: #{resnet_forward.28} parent=0 // pred_check
    _
  $region23: #{resnet_forward.28} parent=0 // pred_check_branch
    %22 = sbr.rel (0) target = $region25
  $region24: #{resnet_forward.28} parent=0 // pred_region
    _
  $region25: #{resnet_forward.28} parent=0 // pred_fallthru
    _
  %v23 = vld [vmem:[%s0] sm:$0xff]
  %v24 = vld [vmem:[%s0 + $0x8] sm:$0xff]
  %v25 = vld [vmem:[%s0 + $0x10] sm:$0xff]
  %v26 = vld [vmem:[%s0 + $0x18] sm:$0xff]
  %v27 = vld [vmem:[%s0 + $0x20] sm:$0xff]
  %v28 = vld [vmem:[%s0 + $0x28] sm:$0xff]
  %v29 = vld [vmem:[%s0 + $0x30] sm:$0xff]
  %v30 = vld [vmem:[%s0 + $0x38] sm:$0xff]
  %v31 = vld [vmem:[%s0 + $0x40] sm:$0xff]
  %v32 = vld [vmem:[%s0 + $0x48] sm:$0xff]
  %v33 = vld [vmem:[%s0 + $0x50] sm:$0xff]
  %v34 = vld [vmem:[%s0 + $0x58] sm:$0xff]
  %v35 = vld [vmem:[%s0 + $0x60] sm:$0xff]
  %v36 = vld [vmem:[%s0 + $0x68] sm:$0xff]
  %v37 = vld [vmem:[%s0 + $0x70] sm:$0xff]
  %v38 = vld [vmem:[%s0 + $0x78] sm:$0xff]
  %v39 = vld [vmem:[%s2] sm:$0x1]
  %v40 = vadd.f32 %v39, 1e-05
  %v41 = vrsqrt.pop %v40
  %v42 = vld [vmem:[%s3] sm:$0x1]
  %v43 = vmul.f32 %v41, %v42
  %v44 = vld [vmem:[%s1] sm:$0x1]
  %v46 = vlaneseq
  %v47 = vshrl.u32 %v46, 7
  %v48 = vsub.s32 0, %v47
  %v49 = vrot.slane %v44, %v48
  %v51 = vsub.f32 %v23, %v49
  %v52 = vsub.f32 %v24, %v49
  %v53 = vsub.f32 %v25, %v49
  %v54 = vsub.f32 %v26, %v49
  %v55 = vsub.f32 %v27, %v49
  %v56 = vsub.f32 %v28, %v49
  %v57 = vsub.f32 %v29, %v49
  %v58 = vsub.f32 %v30, %v49
  %v59 = vsub.f32 %v31, %v49
  %v60 = vsub.f32 %v32, %v49
  %v61 = vsub.f32 %v33, %v49
  %v62 = vsub.f32 %v34, %v49
  %v63 = vsub.f32 %v35, %v49
  %v64 = vsub.f32 %v36, %v49
  %v65 = vsub.f32 %v37, %v49
  %v66 = vsub.f32 %v38, %v49
  %v68 = vlaneseq
  %v69 = vshrl.u32 %v68, 7
  %v70 = vsub.s32 0, %v69
  %v71 = vrot.slane %v43, %v70
  %v73 = vmul.f32 %v51, %v71
  %v74 = vmul.f32 %v52, %v71
  %v75 = vmul.f32 %v53, %v71
  %v76 = vmul.f32 %v54, %v71
  %v77 = vmul.f32 %v55, %v71
  %v78 = vmul.f32 %v56, %v71
  %v79 = vmul.f32 %v57, %v71
  %v80 = vmul.f32 %v58, %v71
  %v81 = vmul.f32 %v59, %v71
  %v82 = vmul.f32 %v60, %v71
  %v83 = vmul.f32 %v61, %v71
  %v84 = vmul.f32 %v62, %v71
  %v85 = vmul.f32 %v63, %v71
  %v86 = vmul.f32 %v64, %v71
  %v87 = vmul.f32 %v65, %v71
  %v88 = vmul.f32 %v66, %v71
  %v89 = vld [vmem:[%s4] sm:$0x1]
  %v91 = vlaneseq
  %v92 = vshrl.u32 %v91, 7
  %v93 = vsub.s32 0, %v92
  %v94 = vrot.slane %v89, %v93
  %v96 = vadd.f32 %v73, %v94
  %v97 = vadd.f32 %v74, %v94
  %v98 = vadd.f32 %v75, %v94
  %v99 = vadd.f32 %v76, %v94
  %v100 = vadd.f32 %v77, %v94
  %v101 = vadd.f32 %v78, %v94
  %v102 = vadd.f32 %v79, %v94
  %v103 = vadd.f32 %v80, %v94
  %v104 = vadd.f32 %v81, %v94
  %v105 = vadd.f32 %v82, %v94
  %v106 = vadd.f32 %v83, %v94
  %v107 = vadd.f32 %v84, %v94
  %v108 = vadd.f32 %v85, %v94
  %v109 = vadd.f32 %v86, %v94
  %v110 = vadd.f32 %v87, %v94
  %v111 = vadd.f32 %v88, %v94
  %v112 = vld [vmem:[%s5] sm:$0xf]
  %v113 = vld [vmem:[%s5 + $0x4] sm:$0xf]
  %v114 = vld [vmem:[%s5 + $0x8] sm:$0xf]
  %v115 = vld [vmem:[%s5 + $0xc] sm:$0xf]
  %v116 = vld [vmem:[%s5 + $0x10] sm:$0xf]
  %v117 = vld [vmem:[%s5 + $0x14] sm:$0xf]
  %v118 = vld [vmem:[%s5 + $0x18] sm:$0xf]
  %v119 = vld [vmem:[%s5 + $0x1c] sm:$0xf]
  %v120 = vld [vmem:[%s5 + $0x20] sm:$0xf]
  %v121 = vld [vmem:[%s5 + $0x24] sm:$0xf]
  %v122 = vld [vmem:[%s5 + $0x28] sm:$0xf]
  %v123 = vld [vmem:[%s5 + $0x2c] sm:$0xf]
  %v124 = vld [vmem:[%s5 + $0x30] sm:$0xf]
  %v125 = vld [vmem:[%s5 + $0x34] sm:$0xf]
  %v126 = vld [vmem:[%s5 + $0x38] sm:$0xf]
  %v127 = vld [vmem:[%s5 + $0x3c] sm:$0xf]
  %v128 = vunpack.c.l.bf16 %v112
  %v129 = vunpack.c.l.bf16 %v113
  %v130 = vunpack.c.l.bf16 %v114
  %v131 = vunpack.c.l.bf16 %v115
  %v132 = vunpack.c.l.bf16 %v116
  %v133 = vunpack.c.l.bf16 %v117
  %v134 = vunpack.c.l.bf16 %v118
  %v135 = vunpack.c.l.bf16 %v119
  %v136 = vunpack.c.l.bf16 %v120
  %v137 = vunpack.c.l.bf16 %v121
  %v138 = vunpack.c.l.bf16 %v122
  %v139 = vunpack.c.l.bf16 %v123
  %v140 = vunpack.c.l.bf16 %v124
  %v141 = vunpack.c.l.bf16 %v125
  %v142 = vunpack.c.l.bf16 %v126
  %v143 = vunpack.c.l.bf16 %v127
  %v144 = vadd.f32 %v96, %v128
  %v145 = vadd.f32 %v97, %v129
  %v146 = vadd.f32 %v98, %v130
  %v147 = vadd.f32 %v99, %v131
  %v148 = vadd.f32 %v100, %v132
  %v149 = vadd.f32 %v101, %v133
  %v150 = vadd.f32 %v102, %v134
  %v151 = vadd.f32 %v103, %v135
  %v152 = vadd.f32 %v104, %v136
  %v153 = vadd.f32 %v105, %v137
  %v154 = vadd.f32 %v106, %v138
  %v155 = vadd.f32 %v107, %v139
  %v156 = vadd.f32 %v108, %v140
  %v157 = vadd.f32 %v109, %v141
  %v158 = vadd.f32 %v110, %v142
  %v159 = vadd.f32 %v111, %v143
  %v160 = vpack.c.bf16 %v145, %v144
  %v161 = vpack.c.bf16 %v147, %v146
  %v162 = vpack.c.bf16 %v149, %v148
  %v163 = vpack.c.bf16 %v151, %v150
  %v164 = vpack.c.bf16 %v153, %v152
  %v165 = vpack.c.bf16 %v155, %v154
  %v166 = vpack.c.bf16 %v157, %v156
  %v167 = vpack.c.bf16 %v159, %v158
  %v176 = vunpack.c.l.b16 %v160
  %v177 = vunpack.c.h.b16 %v160
  %v178 = vunpack.c.l.b16 %v161
  %v179 = vunpack.c.h.b16 %v161
  %v180 = vunpack.c.l.b16 %v162
  %v181 = vunpack.c.h.b16 %v162
  %v182 = vunpack.c.l.b16 %v163
  %v183 = vunpack.c.h.b16 %v163
  %v184 = vunpack.c.l.b16 %v164
  %v185 = vunpack.c.h.b16 %v164
  %v186 = vunpack.c.l.b16 %v165
  %v187 = vunpack.c.h.b16 %v165
  %v188 = vunpack.c.l.b16 %v166
  %v189 = vunpack.c.h.b16 %v166
  %v190 = vunpack.c.l.b16 %v167
  %v191 = vunpack.c.h.b16 %v167
  %v192 = vpack.c.b16 %v176, %v176
  %v193 = vpack.c.b16 %v177, %v177
  %v194 = vpack.c.b16 %v178, %v178
  %v195 = vpack.c.b16 %v179, %v179
  %v196 = vpack.c.b16 %v180, %v180
  %v197 = vpack.c.b16 %v181, %v181
  %v198 = vpack.c.b16 %v182, %v182
  %v199 = vpack.c.b16 %v183, %v183
  %v200 = vpack.c.b16 %v184, %v184
  %v201 = vpack.c.b16 %v185, %v185
  %v202 = vpack.c.b16 %v186, %v186
  %v203 = vpack.c.b16 %v187, %v187
  %v204 = vpack.c.b16 %v188, %v188
  %v205 = vpack.c.b16 %v189, %v189
  %v206 = vpack.c.b16 %v190, %v190
  %v207 = vpack.c.b16 %v191, %v191
  %224 = vst [vmem:[%s6] sm:$0xf] %v192
  %225 = vst [vmem:[%s6 + $0x4] sm:$0xf] %v193
  %226 = vst [vmem:[%s6 + $0x8] sm:$0xf] %v194
  %227 = vst [vmem:[%s6 + $0xc] sm:$0xf] %v195
  %228 = vst [vmem:[%s6 + $0x10] sm:$0xf] %v196
  %229 = vst [vmem:[%s6 + $0x14] sm:$0xf] %v197
  %230 = vst [vmem:[%s6 + $0x18] sm:$0xf] %v198
  %231 = vst [vmem:[%s6 + $0x1c] sm:$0xf] %v199
  %232 = vst [vmem:[%s6 + $0x20] sm:$0xf] %v200
  %233 = vst [vmem:[%s6 + $0x24] sm:$0xf] %v201
  %234 = vst [vmem:[%s6 + $0x28] sm:$0xf] %v202
  %235 = vst [vmem:[%s6 + $0x2c] sm:$0xf] %v203
  %236 = vst [vmem:[%s6 + $0x30] sm:$0xf] %v204
  %237 = vst [vmem:[%s6 + $0x34] sm:$0xf] %v205
  %238 = vst [vmem:[%s6 + $0x38] sm:$0xf] %v206
  %239 = vst [vmem:[%s6 + $0x3c] sm:$0xf] %v207
  // Predicated region
  $region26: #{resnet_forward.28} parent=0 // pred_check
    _
  $region27: #{resnet_forward.28} parent=0 // pred_check_branch
    %241 = sbr.rel (0) target = $region29
  $region28: #{resnet_forward.28} parent=0 // pred_region
    _
  $region29: #{resnet_forward.28} parent=0 // pred_fallthru
    _
  // Predicated region
  $region30: #{resnet_forward.28} parent=0 // pred_check
    _
  $region31: #{resnet_forward.28} parent=0 // pred_check_branch
    %243 = sbr.rel (0) target = $region33
  $region32: #{resnet_forward.28} parent=0 // pred_region
    _
  $region33: #{resnet_forward.28} parent=0 // pred_fallthru
    _

// kernel: resnet_forward.25
$region0: #{resnet_forward.25}
  #allocation0 [shape = 'u32[]', space=smem, size = 0x4, offset = 0x4, fixed_abs, tag = 'smem constant byte address 0x4 - core index']
  #allocation1 [shape = 'u32[144,128]{1,0:T(1,128)}', space=vmem, size = 0x12000, scoped, tag = 'internal scratch']
  #allocation2 [shape = 'f32[1,128]{1,0:T(1,128)}', space=vmem, size = 0x200, scoped, tag = 'scratch operand']
  #allocation3 [shape = 'f32[1,128]{1,0:T(1,128)}', space=vmem, size = 0x200, scoped, tag = 'scratch operand']
  %s0 = inlined_call_operand.vmem [shape: bf16[128,384], index: 0, kind: input, shape index: {}]
  %s1 = inlined_call_operand.vmem [shape: bf16[384,128], index: 1, kind: input, shape index: {}]
  %s2 = inlined_call_operand.vmem [shape: f32[128,128], index: 2, kind: output, shape index: {0}]
  %s3 = inlined_call_operand.vmem [shape: f32[1,128], index: 3, kind: output, shape index: {1}]
  %s4 = inlined_call_operand.vmem [shape: f32[1,128], index: 4, kind: output, shape index: {2}]
  %5 = xla_tuple %s2, %s3, %s4
  %s6 = sld [smem:[#allocation0]]
  $region42: #{resnet_forward.25} parent=0
    _
  %s8 = ssub.s32 1, %s6
  %s9 = scalar_select 0, %s8, %s6
  // Predicated region
  $region2: #{resnet_forward.25} parent=0 // pred_check
    _
  $region3: #{resnet_forward.25} parent=0 // pred_check_branch
    %11 = sbr.rel (0) target = $region5
  $region4: #{resnet_forward.25} parent=0 // pred_region
    _
  $region5: #{resnet_forward.25} parent=0 // pred_fallthru
    _
  // Predicated region
  $region6: #{resnet_forward.25} parent=0 // pred_check
    _
  $region7: #{resnet_forward.25} parent=0 // pred_check_branch
    %13 = sbr.rel (0) target = $region9
  $region8: #{resnet_forward.25} parent=0 // pred_region
    _
  $region9: #{resnet_forward.25} parent=0 // pred_fallthru
    _
  %v15 = vld [vmem:[%s0] sm:$0xff]
  %v16 = vld [vmem:[%s0 + $0x8] sm:$0xf]
  %v17 = vld [vmem:[%s0 + $0xc] sm:$0xff]
  %v18 = vld [vmem:[%s0 + $0x14] sm:$0xf]
  %v19 = vld [vmem:[%s0 + $0x18] sm:$0xff]
  %v20 = vld [vmem:[%s0 + $0x20] sm:$0xf]
  %v21 = vld [vmem:[%s0 + $0x24] sm:$0xff]
  %v22 = vld [vmem:[%s0 + $0x2c] sm:$0xf]
  %v23 = vld [vmem:[%s0 + $0x30] sm:$0xff]
  %v24 = vld [vmem:[%s0 + $0x38] sm:$0xf]
  %v25 = vld [vmem:[%s0 + $0x3c] sm:$0xff]
  %v26 = vld [vmem:[%s0 + $0x44] sm:$0xf]
  %v27 = vld [vmem:[%s0 + $0x48] sm:$0xff]
  %v28 = vld [vmem:[%s0 + $0x50] sm:$0xf]
  %v29 = vld [vmem:[%s0 + $0x54] sm:$0xff]
  %v30 = vld [vmem:[%s0 + $0x5c] sm:$0xf]
  %v31 = vld [vmem:[%s0 + $0x60] sm:$0xff]
  %v32 = vld [vmem:[%s0 + $0x68] sm:$0xf]
  %v33 = vld [vmem:[%s0 + $0x6c] sm:$0xff]
  %v34 = vld [vmem:[%s0 + $0x74] sm:$0xf]
  %v35 = vld [vmem:[%s0 + $0x78] sm:$0xff]
  %v36 = vld [vmem:[%s0 + $0x80] sm:$0xf]
  %v37 = vld [vmem:[%s0 + $0x84] sm:$0xff]
  %v38 = vld [vmem:[%s0 + $0x8c] sm:$0xf]
  %v39 = vld [vmem:[%s0 + $0x90] sm:$0xff]
  %v40 = vld [vmem:[%s0 + $0x98] sm:$0xf]
  %v41 = vld [vmem:[%s0 + $0x9c] sm:$0xff]
  %v42 = vld [vmem:[%s0 + $0xa4] sm:$0xf]
  %v43 = vld [vmem:[%s0 + $0xa8] sm:$0xff]
  %v44 = vld [vmem:[%s0 + $0xb0] sm:$0xf]
  %v45 = vld [vmem:[%s0 + $0xb4] sm:$0xff]
  %v46 = vld [vmem:[%s0 + $0xbc] sm:$0xf]
  %v47 = vld [vmem:[%s1] sm:$0xf]
  %v48 = vld [vmem:[%s1 + $0x4] sm:$0xf]
  %v49 = vld [vmem:[%s1 + $0x8] sm:$0xf]
  %v50 = vld [vmem:[%s1 + $0xc] sm:$0xf]
  %v51 = vld [vmem:[%s1 + $0x10] sm:$0xf]
  %v52 = vld [vmem:[%s1 + $0x14] sm:$0xf]
  %v53 = vld [vmem:[%s1 + $0x18] sm:$0xf]
  %v54 = vld [vmem:[%s1 + $0x1c] sm:$0xf]
  %v55 = vld [vmem:[%s1 + $0x20] sm:$0xf]
  %v56 = vld [vmem:[%s1 + $0x24] sm:$0xf]
  %v57 = vld [vmem:[%s1 + $0x28] sm:$0xf]
  %v58 = vld [vmem:[%s1 + $0x2c] sm:$0xf]
  %v59 = vld [vmem:[%s1 + $0x30] sm:$0xf]
  %v60 = vld [vmem:[%s1 + $0x34] sm:$0xf]
  %v61 = vld [vmem:[%s1 + $0x38] sm:$0xf]
  %v62 = vld [vmem:[%s1 + $0x3c] sm:$0xf]
  %v63 = vld [vmem:[%s1 + $0x40] sm:$0xf]
  %v64 = vld [vmem:[%s1 + $0x44] sm:$0xf]
  %v65 = vld [vmem:[%s1 + $0x48] sm:$0xf]
  %v66 = vld [vmem:[%s1 + $0x4c] sm:$0xf]
  %v67 = vld [vmem:[%s1 + $0x50] sm:$0xf]
  %v68 = vld [vmem:[%s1 + $0x54] sm:$0xf]
  %v69 = vld [vmem:[%s1 + $0x58] sm:$0xf]
  %v70 = vld [vmem:[%s1 + $0x5c] sm:$0xf]
  %v71 = vld [vmem:[%s1 + $0x60] sm:$0xf]
  %v72 = vld [vmem:[%s1 + $0x64] sm:$0xf]
  %v73 = vld [vmem:[%s1 + $0x68] sm:$0xf]
  %v74 = vld [vmem:[%s1 + $0x6c] sm:$0xf]
  %v75 = vld [vmem:[%s1 + $0x70] sm:$0xf]
  %v76 = vld [vmem:[%s1 + $0x74] sm:$0xf]
  %v77 = vld [vmem:[%s1 + $0x78] sm:$0xf]
  %v78 = vld [vmem:[%s1 + $0x7c] sm:$0xf]
  %v79 = vld [vmem:[%s1 + $0x80] sm:$0xf]
  %v80 = vld [vmem:[%s1 + $0x84] sm:$0xf]
  %v81 = vld [vmem:[%s1 + $0x88] sm:$0xf]
  %v82 = vld [vmem:[%s1 + $0x8c] sm:$0xf]
  %v83 = vld [vmem:[%s1 + $0x90] sm:$0xf]
  %v84 = vld [vmem:[%s1 + $0x94] sm:$0xf]
  %v85 = vld [vmem:[%s1 + $0x98] sm:$0xf]
  %v86 = vld [vmem:[%s1 + $0x9c] sm:$0xf]
  %v87 = vld [vmem:[%s1 + $0xa0] sm:$0xf]
  %v88 = vld [vmem:[%s1 + $0xa4] sm:$0xf]
  %v89 = vld [vmem:[%s1 + $0xa8] sm:$0xf]
  %v90 = vld [vmem:[%s1 + $0xac] sm:$0xf]
  %v91 = vld [vmem:[%s1 + $0xb0] sm:$0xf]
  %v92 = vld [vmem:[%s1 + $0xb4] sm:$0xf]
  %v93 = vld [vmem:[%s1 + $0xb8] sm:$0xf]
  %v94 = vld [vmem:[%s1 + $0xbc] sm:$0xf]
  %v127 = vunpack.c.l.b16 %v15
  %v128 = vunpack.c.h.b16 %v15
  %v129 = vunpack.c.l.b16 %v16
  %v130 = vunpack.c.l.b16 %v17
  %v131 = vunpack.c.h.b16 %v17
  %v132 = vunpack.c.l.b16 %v18
  %v133 = vunpack.c.l.b16 %v19
  %v134 = vunpack.c.h.b16 %v19
  %v135 = vunpack.c.l.b16 %v20
  %v136 = vunpack.c.l.b16 %v21
  %v137 = vunpack.c.h.b16 %v21
  %v138 = vunpack.c.l.b16 %v22
  %v139 = vunpack.c.l.b16 %v23
  %v140 = vunpack.c.h.b16 %v23
  %v141 = vunpack.c.l.b16 %v24
  %v142 = vunpack.c.l.b16 %v25
  %v143 = vunpack.c.h.b16 %v25
  %v144 = vunpack.c.l.b16 %v26
  %v145 = vunpack.c.l.b16 %v27
  %v146 = vunpack.c.h.b16 %v27
  %v147 = vunpack.c.l.b16 %v28
  %v148 = vunpack.c.l.b16 %v29
  %v149 = vunpack.c.h.b16 %v29
  %v150 = vunpack.c.l.b16 %v30
  %v151 = vunpack.c.l.b16 %v31
  %v152 = vunpack.c.h.b16 %v31
  %v153 = vunpack.c.l.b16 %v32
  %v154 = vunpack.c.l.b16 %v33
  %v155 = vunpack.c.h.b16 %v33
  %v156 = vunpack.c.l.b16 %v34
  %v157 = vunpack.c.l.b16 %v35
  %v158 = vunpack.c.h.b16 %v35
  %v159 = vunpack.c.l.b16 %v36
  %v160 = vunpack.c.l.b16 %v37
  %v161 = vunpack.c.h.b16 %v37
  %v162 = vunpack.c.l.b16 %v38
  %v163 = vunpack.c.l.b16 %v39
  %v164 = vunpack.c.h.b16 %v39
  %v165 = vunpack.c.l.b16 %v40
  %v166 = vunpack.c.l.b16 %v41
  %v167 = vunpack.c.h.b16 %v41
  %v168 = vunpack.c.l.b16 %v42
  %v169 = vunpack.c.l.b16 %v43
  %v170 = vunpack.c.h.b16 %v43
  %v171 = vunpack.c.l.b16 %v44
  %v172 = vunpack.c.l.b16 %v45
  %v173 = vunpack.c.h.b16 %v45
  %v174 = vunpack.c.l.b16 %v46
  %v175 = vpack.c.b16 %v130, %v127
  %v176 = vpack.c.b16 %v131, %v128
  %v177 = vpack.c.b16 %v132, %v129
  %v178 = vpack.c.b16 %v136, %v133
  %v179 = vpack.c.b16 %v137, %v134
  %v180 = vpack.c.b16 %v138, %v135
  %v181 = vpack.c.b16 %v142, %v139
  %v182 = vpack.c.b16 %v143, %v140
  %v183 = vpack.c.b16 %v144, %v141
  %v184 = vpack.c.b16 %v148, %v145
  %v185 = vpack.c.b16 %v149, %v146
  %v186 = vpack.c.b16 %v150, %v147
  %v187 = vpack.c.b16 %v154, %v151
  %v188 = vpack.c.b16 %v155, %v152
  %v189 = vpack.c.b16 %v156, %v153
  %v190 = vpack.c.b16 %v160, %v157
  %v191 = vpack.c.b16 %v161, %v158
  %v192 = vpack.c.b16 %v162, %v159
  %v193 = vpack.c.b16 %v166, %v163
  %v194 = vpack.c.b16 %v167, %v164
  %v195 = vpack.c.b16 %v168, %v165
  %v196 = vpack.c.b16 %v172, %v169
  %v197 = vpack.c.b16 %v173, %v170
  %v198 = vpack.c.b16 %v174, %v171
  %v271 = vunpack.c.l.b16 %v47
  %v272 = vunpack.c.l.b16 %v48
  %v273 = vunpack.c.l.b16 %v49
  %v274 = vunpack.c.l.b16 %v50
  %v275 = vunpack.c.l.b16 %v51
  %v276 = vunpack.c.l.b16 %v52
  %v277 = vunpack.c.l.b16 %v53
  %v278 = vunpack.c.l.b16 %v54
  %v279 = vunpack.c.l.b16 %v55
  %v280 = vunpack.c.l.b16 %v56
  %v281 = vunpack.c.l.b16 %v57
  %v282 = vunpack.c.l.b16 %v58
  %v283 = vunpack.c.l.b16 %v59
  %v284 = vunpack.c.l.b16 %v60
  %v285 = vunpack.c.l.b16 %v61
  %v286 = vunpack.c.l.b16 %v62
  %v287 = vunpack.c.l.b16 %v63
  %v288 = vunpack.c.l.b16 %v64
  %v289 = vunpack.c.l.b16 %v65
  %v290 = vunpack.c.l.b16 %v66
  %v291 = vunpack.c.l.b16 %v67
  %v292 = vunpack.c.l.b16 %v68
  %v293 = vunpack.c.l.b16 %v69
  %v294 = vunpack.c.l.b16 %v70
  %v295 = vunpack.c.l.b16 %v71
  %v296 = vunpack.c.l.b16 %v72
  %v297 = vunpack.c.l.b16 %v73
  %v298 = vunpack.c.l.b16 %v74
  %v299 = vunpack.c.l.b16 %v75
  %v300 = vunpack.c.l.b16 %v76
  %v301 = vunpack.c.l.b16 %v77
  %v302 = vunpack.c.l.b16 %v78
  %v303 = vunpack.c.l.b16 %v79
  %v304 = vunpack.c.l.b16 %v80
  %v305 = vunpack.c.l.b16 %v81
  %v306 = vunpack.c.l.b16 %v82
  %v307 = vunpack.c.l.b16 %v83
  %v308 = vunpack.c.l.b16 %v84
  %v309 = vunpack.c.l.b16 %v85
  %v310 = vunpack.c.l.b16 %v86
  %v311 = vunpack.c.l.b16 %v87
  %v312 = vunpack.c.l.b16 %v88
  %v313 = vunpack.c.l.b16 %v89
  %v314 = vunpack.c.l.b16 %v90
  %v315 = vunpack.c.l.b16 %v91
  %v316 = vunpack.c.l.b16 %v92
  %v317 = vunpack.c.l.b16 %v93
  %v318 = vunpack.c.l.b16 %v94
  %v319 = vpack.c.b16 %v272, %v271
  %v320 = vpack.c.b16 %v274, %v273
  %v321 = vpack.c.b16 %v276, %v275
  %v322 = vpack.c.b16 %v278, %v277
  %v323 = vpack.c.b16 %v280, %v279
  %v324 = vpack.c.b16 %v282, %v281
  %v325 = vpack.c.b16 %v284, %v283
  %v326 = vpack.c.b16 %v286, %v285
  %v327 = vpack.c.b16 %v288, %v287
  %v328 = vpack.c.b16 %v290, %v289
  %v329 = vpack.c.b16 %v292, %v291
  %v330 = vpack.c.b16 %v294, %v293
  %v331 = vpack.c.b16 %v296, %v295
  %v332 = vpack.c.b16 %v298, %v297
  %v333 = vpack.c.b16 %v300, %v299
  %v334 = vpack.c.b16 %v302, %v301
  %v335 = vpack.c.b16 %v304, %v303
  %v336 = vpack.c.b16 %v306, %v305
  %v337 = vpack.c.b16 %v308, %v307
  %v338 = vpack.c.b16 %v310, %v309
  %v339 = vpack.c.b16 %v312, %v311
  %v340 = vpack.c.b16 %v314, %v313
  %v341 = vpack.c.b16 %v316, %v315
  %v342 = vpack.c.b16 %v318, %v317
  %367 = vmatprep.subr.bf16.mxu0 0
  %368 = vmatpush1.bf16.msra.mxu0 %v326
  %369 = vmatprep.subr.bf16.mxu0 0
  %370 = vmatpush1.bf16.msra.mxu0 %v325
  %371 = vmatprep.subr.bf16.mxu0 0
  %372 = vmatpush1.bf16.msra.mxu0 %v324
  %373 = vmatprep.subr.bf16.mxu0 0
  %374 = vmatpush1.bf16.msra.mxu0 %v323
  %375 = vmatprep.subr.bf16.mxu0 0
  %376 = vmatpush1.bf16.msra.mxu0 %v322
  %377 = vmatprep.subr.bf16.mxu0 0
  %378 = vmatpush1.bf16.msra.mxu0 %v321
  %379 = vmatprep.subr.bf16.mxu0 0
  %380 = vmatpush1.bf16.msra.mxu0 %v320
  %381 = vmatprep.subr.bf16.mxu0 0
  %382 = vmatpush1.bf16.msra.mxu0 %v319
  %383 = vmatprep.subr.bf16.mxu0 0
  %384 = vmatpush2.bf16.msra.mxu0 %v334
  %385 = vmatprep.subr.bf16.mxu0 0
  %386 = vmatpush2.bf16.msra.mxu0 %v333
  %387 = vmatprep.subr.bf16.mxu0 0
  %388 = vmatpush2.bf16.msra.mxu0 %v332
  %389 = vmatprep.subr.bf16.mxu0 0
  %390 = vmatpush2.bf16.msra.mxu0 %v331
  %391 = vmatprep.subr.bf16.mxu0 0
  %392 = vmatpush2.bf16.msra.mxu0 %v330
  %393 = vmatprep.subr.bf16.mxu0 0
  %394 = vmatpush2.bf16.msra.mxu0 %v329
  %395 = vmatprep.subr.bf16.mxu0 0
  %396 = vmatpush2.bf16.msra.mxu0 %v328
  %397 = vmatprep.subr.bf16.mxu0 0
  %398 = vmatpush2.bf16.msra.mxu0 %v327
  %399 = vmatprep.mubr.bf16.mxu0 %v176
  %400 = vmatmul.mubr.bf16.gmra.mxu0 %v175
  %v401 = vpop.f32.mrf.mxu0
  %v402 = vadd.f32 0.0, %v401
  %v403 = vpop.f32.mrf.mxu0
  %v404 = vpop.f32.mrf.mxu0
  %v405 = vadd.f32 0.0, %v404
  %v406 = vpop.f32.mrf.mxu0
  %407 = vmatprep.mubr.bf16.mxu0 %v179
  %408 = vmatmul.mubr.bf16.gmra.mxu0 %v178
  %v409 = vpop.f32.mrf.mxu0
  %v410 = vadd.f32 0.0, %v409
  %v411 = vpop.f32.mrf.mxu0
  %v412 = vpop.f32.mrf.mxu0
  %v413 = vadd.f32 0.0, %v412
  %v414 = vpop.f32.mrf.mxu0
  %415 = vmatprep.mubr.bf16.mxu0 %v182
  %416 = vmatmul.mubr.bf16.gmra.mxu0 %v181
  %v417 = vpop.f32.mrf.mxu0
  %v418 = vadd.f32 0.0, %v417
  %v419 = vpop.f32.mrf.mxu0
  %v420 = vpop.f32.mrf.mxu0
  %v421 = vadd.f32 0.0, %v420
  %v422 = vpop.f32.mrf.mxu0
  %423 = vmatprep.mubr.bf16.mxu0 %v185
  %424 = vmatmul.mubr.bf16.gmra.mxu0 %v184
  %v425 = vpop.f32.mrf.mxu0
  %v426 = vadd.f32 0.0, %v425
  %v427 = vpop.f32.mrf.mxu0
  %v428 = vpop.f32.mrf.mxu0
  %v429 = vadd.f32 0.0, %v428
  %v430 = vpop.f32.mrf.mxu0
  %431 = vmatprep.mubr.bf16.mxu0 %v188
  %432 = vmatmul.mubr.bf16.gmra.mxu0 %v187
  %v433 = vpop.f32.mrf.mxu0
  %v434 = vadd.f32 0.0, %v433
  %v435 = vpop.f32.mrf.mxu0
  %v436 = vpop.f32.mrf.mxu0
  %v437 = vadd.f32 0.0, %v436
  %v438 = vpop.f32.mrf.mxu0
  %439 = vmatprep.mubr.bf16.mxu0 %v191
  %440 = vmatmul.mubr.bf16.gmra.mxu0 %v190
  %v441 = vpop.f32.mrf.mxu0
  %v442 = vadd.f32 0.0, %v441
  %v443 = vpop.f32.mrf.mxu0
  %v444 = vpop.f32.mrf.mxu0
  %v445 = vadd.f32 0.0, %v444
  %v446 = vpop.f32.mrf.mxu0
  %447 = vmatprep.mubr.bf16.mxu0 %v194
  %448 = vmatmul.mubr.bf16.gmra.mxu0 %v193
  %v449 = vpop.f32.mrf.mxu0
  %v450 = vadd.f32 0.0, %v449
  %v451 = vpop.f32.mrf.mxu0
  %v452 = vpop.f32.mrf.mxu0
  %v453 = vadd.f32 0.0, %v452
  %v454 = vpop.f32.mrf.mxu0
  %455 = vmatprep.mubr.bf16.mxu0 %v197
  %456 = vmatmul.mubr.bf16.gmra.mxu0 %v196
  %v457 = vpop.f32.mrf.mxu0
  %v458 = vadd.f32 0.0, %v457
  %v459 = vpop.f32.mrf.mxu0
  %v460 = vpop.f32.mrf.mxu0
  %v461 = vadd.f32 0.0, %v460
  %v462 = vpop.f32.mrf.mxu0
  %463 = vdwg.mxu0
  %464 = vmatprep.subr.bf16.mxu0 0
  %465 = vmatpush1.bf16.msra.mxu0 %v342
  %466 = vmatprep.subr.bf16.mxu0 0
  %467 = vmatpush1.bf16.msra.mxu0 %v341
  %468 = vmatprep.subr.bf16.mxu0 0
  %469 = vmatpush1.bf16.msra.mxu0 %v340
  %470 = vmatprep.subr.bf16.mxu0 0
  %471 = vmatpush1.bf16.msra.mxu0 %v339
  %472 = vmatprep.subr.bf16.mxu0 0
  %473 = vmatpush1.bf16.msra.mxu0 %v338
  %474 = vmatprep.subr.bf16.mxu0 0
  %475 = vmatpush1.bf16.msra.mxu0 %v337
  %476 = vmatprep.subr.bf16.mxu0 0
  %477 = vmatpush1.bf16.msra.mxu0 %v336
  %478 = vmatprep.subr.bf16.mxu0 0
  %479 = vmatpush1.bf16.msra.mxu0 %v335
  %480 = vmatprep.subr.bf16.mxu0 0
  %481 = vmatpush2.bf16.msra.mxu0 0
  %482 = vmatprep.subr.bf16.mxu0 0
  %483 = vmatpush2.bf16.msra.mxu0 0
  %484 = vmatprep.subr.bf16.mxu0 0
  %485 = vmatpush2.bf16.msra.mxu0 0
  %486 = vmatprep.subr.bf16.mxu0 0
  %487 = vmatpush2.bf16.msra.mxu0 0
  %488 = vmatprep.subr.bf16.mxu0 0
  %489 = vmatpush2.bf16.msra.mxu0 0
  %490 = vmatprep.subr.bf16.mxu0 0
  %491 = vmatpush2.bf16.msra.mxu0 0
  %492 = vmatprep.subr.bf16.mxu0 0
  %493 = vmatpush2.bf16.msra.mxu0 0
  %494 = vmatprep.subr.bf16.mxu0 0
  %495 = vmatpush2.bf16.msra.mxu0 0
  %496 = vmatprep.mubr.bf16.mxu0 0
  %497 = vmatmul.mubr.bf16.gmra.mxu0 %v177
  %v498 = vpop.f32.mrf.mxu0
  %v499 = vadd.f32 %v402, %v498
  %v500 = vpop.f32.mrf.mxu0
  %v501 = vpop.f32.mrf.mxu0
  %v502 = vadd.f32 %v405, %v501
  %v503 = vpop.f32.mrf.mxu0
  %504 = vmatprep.mubr.bf16.mxu0 0
  %505 = vmatmul.mubr.bf16.gmra.mxu0 %v180
  %v506 = vpop.f32.mrf.mxu0
  %v507 = vadd.f32 %v410, %v506
  %v508 = vpop.f32.mrf.mxu0
  %v509 = vpop.f32.mrf.mxu0
  %v510 = vadd.f32 %v413, %v509
  %v511 = vpop.f32.mrf.mxu0
  %512 = vmatprep.mubr.bf16.mxu0 0
  %513 = vmatmul.mubr.bf16.gmra.mxu0 %v183
  %v514 = vpop.f32.mrf.mxu0
  %v515 = vadd.f32 %v418, %v514
  %v516 = vpop.f32.mrf.mxu0
  %v517 = vpop.f32.mrf.mxu0
  %v518 = vadd.f32 %v421, %v517
  %v519 = vpop.f32.mrf.mxu0
  %520 = vmatprep.mubr.bf16.mxu0 0
  %521 = vmatmul.mubr.bf16.gmra.mxu0 %v186
  %v522 = vpop.f32.mrf.mxu0
  %v523 = vadd.f32 %v426, %v522
  %v524 = vpop.f32.mrf.mxu0
  %v525 = vpop.f32.mrf.mxu0
  %v526 = vadd.f32 %v429, %v525
  %v527 = vpop.f32.mrf.mxu0
  %528 = vmatprep.mubr.bf16.mxu0 0
  %529 = vmatmul.mubr.bf16.gmra.mxu0 %v189
  %v530 = vpop.f32.mrf.mxu0
  %v531 = vadd.f32 %v434, %v530
  %v532 = vpop.f32.mrf.mxu0
  %v533 = vpop.f32.mrf.mxu0
  %v534 = vadd.f32 %v437, %v533
  %v535 = vpop.f32.mrf.mxu0
  %536 = vmatprep.mubr.bf16.mxu0 0
  %537 = vmatmul.mubr.bf16.gmra.mxu0 %v192
  %v538 = vpop.f32.mrf.mxu0
  %v539 = vadd.f32 %v442, %v538
  %v540 = vpop.f32.mrf.mxu0
  %v541 = vpop.f32.mrf.mxu0
  %v542 = vadd.f32 %v445, %v541
  %v543 = vpop.f32.mrf.mxu0
  %544 = vmatprep.mubr.bf16.mxu0 0
  %545 = vmatmul.mubr.bf16.gmra.mxu0 %v195
  %v546 = vpop.f32.mrf.mxu0
  %v547 = vadd.f32 %v450, %v546
  %v548 = vpop.f32.mrf.mxu0
  %v549 = vpop.f32.mrf.mxu0
  %v550 = vadd.f32 %v453, %v549
  %v551 = vpop.f32.mrf.mxu0
  %552 = vmatprep.mubr.bf16.mxu0 0
  %553 = vmatmul.mubr.bf16.gmra.mxu0 %v198
  %v554 = vpop.f32.mrf.mxu0
  %v555 = vadd.f32 %v458, %v554
  %v556 = vpop.f32.mrf.mxu0
  %v557 = vpop.f32.mrf.mxu0
  %v558 = vadd.f32 %v461, %v557
  %v559 = vpop.f32.mrf.mxu0
  %560 = vdwg.mxu0
  %561 = vst [vmem:[%s2] sm:$0xff] %v499
  %562 = vst [vmem:[%s2 + $0x8] sm:$0xff] %v502
  %563 = vst [vmem:[%s2 + $0x10] sm:$0xff] %v507
  %564 = vst [vmem:[%s2 + $0x18] sm:$0xff] %v510
  %565 = vst [vmem:[%s2 + $0x20] sm:$0xff] %v515
  %566 = vst [vmem:[%s2 + $0x28] sm:$0xff] %v518
  %567 = vst [vmem:[%s2 + $0x30] sm:$0xff] %v523
  %568 = vst [vmem:[%s2 + $0x38] sm:$0xff] %v526
  %569 = vst [vmem:[%s2 + $0x40] sm:$0xff] %v531
  %570 = vst [vmem:[%s2 + $0x48] sm:$0xff] %v534
  %571 = vst [vmem:[%s2 + $0x50] sm:$0xff] %v539
  %572 = vst [vmem:[%s2 + $0x58] sm:$0xff] %v542
  %573 = vst [vmem:[%s2 + $0x60] sm:$0xff] %v547
  %574 = vst [vmem:[%s2 + $0x68] sm:$0xff] %v550
  %575 = vst [vmem:[%s2 + $0x70] sm:$0xff] %v555
  %576 = vst [vmem:[%s2 + $0x78] sm:$0xff] %v558
  %p577 = scmp.eq.s32.totalorder 0, 0
  // Predicated region
  $region10: #{resnet_forward.25} parent=0 // pred_check
    %p578 = pneg %p577
  $region11: #{resnet_forward.25} parent=0 // pred_check_branch
    %580 = sbr.rel (%p578) target = $region13
  $region12: #{resnet_forward.25} parent=0 // pred_region
    %581 = vst [vmem:[#allocation2] sm:$0x1] 0.0
    %582 = vst [vmem:[#allocation3] sm:$0x1] 0.0
  $region13: #{resnet_forward.25} parent=0 // pred_fallthru
    _
  %v583 = vld [vmem:[#allocation2] sm:$0x1]
  %v584 = vadd.f32 %v499, %v502
  %v585 = vadd.f32 %v584, %v507
  %v586 = vadd.f32 %v585, %v510
  %v587 = vadd.f32 %v586, %v515
  %v588 = vadd.f32 %v587, %v518
  %v589 = vadd.f32 %v588, %v523
  %v590 = vadd.f32 %v589, %v526
  %v591 = vadd.f32 %v590, %v531
  %v592 = vadd.f32 %v591, %v534
  %v593 = vadd.f32 %v592, %v539
  %v594 = vadd.f32 %v593, %v542
  %v595 = vadd.f32 %v594, %v547
  %v596 = vadd.f32 %v595, %v550
  %v597 = vadd.f32 %v596, %v555
  %v598 = vadd.f32 %v597, %v558
  %v599 = vrot.slane %v598, 4
  %v600 = vadd.f32 %v598, %v599
  %v601 = vrot.slane %v600, 2
  %v602 = vadd.f32 %v600, %v601
  %v603 = vrot.slane %v602, 1
  %v604 = vadd.f32 %v602, %v603
  %v605 = vadd.f32 %v583, %v604
  %606 = vst [vmem:[#allocation2] sm:$0x1] %v605
  %v607 = vld [vmem:[#allocation3] sm:$0x1]
  %v608 = vmul.f32 %v499, %v499
  %v609 = vmul.f32 %v502, %v502
  %v610 = vmul.f32 %v507, %v507
  %v611 = vmul.f32 %v510, %v510
  %v612 = vmul.f32 %v515, %v515
  %v613 = vmul.f32 %v518, %v518
  %v614 = vmul.f32 %v523, %v523
  %v615 = vmul.f32 %v526, %v526
  %v616 = vmul.f32 %v531, %v531
  %v617 = vmul.f32 %v534, %v534
  %v618 = vmul.f32 %v539, %v539
  %v619 = vmul.f32 %v542, %v542
  %v620 = vmul.f32 %v547, %v547
  %v621 = vmul.f32 %v550, %v550
  %v622 = vmul.f32 %v555, %v555
  %v623 = vmul.f32 %v558, %v558
  %v624 = vadd.f32 %v608, %v609
  %v625 = vadd.f32 %v624, %v610
  %v626 = vadd.f32 %v625, %v611
  %v627 = vadd.f32 %v626, %v612
  %v628 = vadd.f32 %v627, %v613
  %v629 = vadd.f32 %v628, %v614
  %v630 = vadd.f32 %v629, %v615
  %v631 = vadd.f32 %v630, %v616
  %v632 = vadd.f32 %v631, %v617
  %v633 = vadd.f32 %v632, %v618
  %v634 = vadd.f32 %v633, %v619
  %v635 = vadd.f32 %v634, %v620
  %v636 = vadd.f32 %v635, %v621
  %v637 = vadd.f32 %v636, %v622
  %v638 = vadd.f32 %v637, %v623
  %v639 = vrot.slane %v638, 4
  %v640 = vadd.f32 %v638, %v639
  %v641 = vrot.slane %v640, 2
  %v642 = vadd.f32 %v640, %v641
  %v643 = vrot.slane %v642, 1
  %v644 = vadd.f32 %v642, %v643
  %v645 = vadd.f32 %v607, %v644
  %646 = vst [vmem:[#allocation3] sm:$0x1] %v645
  // Predicated region
  $region14: #{resnet_forward.25} parent=0 // pred_check
    %p647 = pneg %p577
  $region15: #{resnet_forward.25} parent=0 // pred_check_branch
    %649 = sbr.rel (%p647) target = $region17
  $region16: #{resnet_forward.25} parent=0 // pred_region
    %v650 = vld [vmem:[#allocation2] sm:$0x1]
    %v651 = vmul.f32 %v650, 0.0078125
    %652 = vst [vmem:[%s3] sm:$0x1] %v651
    %v653 = vld [vmem:[#allocation3] sm:$0x1]
    %v654 = vmul.f32 %v653, 0.0078125
    %v655 = vmul.f32 %v651, %v651
    %v656 = vsub.f32 %v654, %v655
    %v657 = vmax.f32 %v656, 0.0
    %658 = vst [vmem:[%s4] sm:$0x1] %v657
  $region17: #{resnet_forward.25} parent=0 // pred_fallthru
    _
  // Predicated region
  $region18: #{resnet_forward.25} parent=0 // pred_check
    _
  $region19: #{resnet_forward.25} parent=0 // pred_check_branch
    %660 = sbr.rel (0) target = $region21
  $region20: #{resnet_forward.25} parent=0 // pred_region
    _
  $region21: #{resnet_forward.25} parent=0 // pred_fallthru
    _
  // Predicated region
  $region22: #{resnet_forward.25} parent=0 // pred_check
    _
  $region23: #{resnet_forward.25} parent=0 // pred_check_branch
    %662 = sbr.rel (0) target = $region25
  $region24: #{resnet_forward.25} parent=0 // pred_region
    _
  $region25: #{resnet_forward.25} parent=0 // pred_fallthru
    _
  // Predicated region
  $region26: #{resnet_forward.25} parent=0 // pred_check
    _
  $region27: #{resnet_forward.25} parent=0 // pred_check_branch
    %664 = sbr.rel (0) target = $region29
  $region28: #{resnet_forward.25} parent=0 // pred_region
    _
  $region29: #{resnet_forward.25} parent=0 // pred_fallthru
    _
  // Predicated region
  $region30: #{resnet_forward.25} parent=0 // pred_check
    _
  $region31: #{resnet_forward.25} parent=0 // pred_check_branch
    %666 = sbr.rel (0) target = $region33
  $region32: #{resnet_forward.25} parent=0 // pred_region
    _
  $region33: #{resnet_forward.25} parent=0 // pred_fallthru
    _
  // Predicated region
  $region34: #{resnet_forward.25} parent=0 // pred_check
    _
  $region35: #{resnet_forward.25} parent=0 // pred_check_branch
    %668 = sbr.rel (0) target = $region37
  $region36: #{resnet_forward.25} parent=0 // pred_region
    _
  $region37: #{resnet_forward.25} parent=0 // pred_fallthru
    _
  // Predicated region
  $region38: #{resnet_forward.25} parent=0 // pred_check
    _
  $region39: #{resnet_forward.25} parent=0 // pred_check_branch
    %670 = sbr.rel (0) target = $region41
  $region40: #{resnet_forward.25} parent=0 // pred_region
    _
  $region41: #{resnet_forward.25} parent=0 // pred_fallthru
    _

// kernel: resnet_forward.33
$region0: #{resnet_forward.33}
  #allocation0 [shape = 'u32[]', space=smem, size = 0x4, offset = 0x4, fixed_abs, tag = 'smem constant byte address 0x4 - core index']
  #allocation1 [shape = 'u32[144,128]{1,0:T(1,128)}', space=vmem, size = 0x12000, scoped, tag = 'internal scratch']
  #allocation2 [shape = 'f32[1,128]{1,0:T(1,128)}', space=vmem, size = 0x200, scoped, tag = 'scratch operand']
  #allocation3 [shape = 'f32[1,128]{1,0:T(1,128)}', space=vmem, size = 0x200, scoped, tag = 'scratch operand']
  %s0 = inlined_call_operand.vmem [shape: bf16[512,512], index: 0, kind: input, shape index: {}]
  %s1 = inlined_call_operand.vmem [shape: bf16[512,128], index: 1, kind: input, shape index: {}]
  %s2 = inlined_call_operand.vmem [shape: f32[512,128], index: 2, kind: output, shape index: {0}]
  %s3 = inlined_call_operand.vmem [shape: f32[1,128], index: 3, kind: output, shape index: {1}]
  %s4 = inlined_call_operand.vmem [shape: f32[1,128], index: 4, kind: output, shape index: {2}]
  %5 = xla_tuple %s2, %s3, %s4
  %s6 = sld [smem:[#allocation0]]
  $region42: #{resnet_forward.33} parent=0
    _
  %s8 = ssub.s32 1, %s6
  %s9 = scalar_select 0, %s8, %s6
  // Predicated region
  $region2: #{resnet_forward.33} parent=0 // pred_check
    _
  $region3: #{resnet_forward.33} parent=0 // pred_check_branch
    %11 = sbr.rel (0) target = $region5
  $region4: #{resnet_forward.33} parent=0 // pred_region
    _
  $region5: #{resnet_forward.33} parent=0 // pred_fallthru
    _
  // Predicated region
  $region6: #{resnet_forward.33} parent=0 // pred_check
    _
  $region7: #{resnet_forward.33} parent=0 // pred_check_branch
    %13 = sbr.rel (0) target = $region9
  $region8: #{resnet_forward.33} parent=0 // pred_region
    _
  $region9: #{resnet_forward.33} parent=0 // pred_fallthru
    _
  %v15 = vld [vmem:[%s0] sm:$0xff]
  %v16 = vld [vmem:[%s0 + $0x8] sm:$0xff]
  %v17 = vld [vmem:[%s0 + $0x10] sm:$0xff]
  %v18 = vld [vmem:[%s0 + $0x18] sm:$0xff]
  %v19 = vld [vmem:[%s0 + $0x20] sm:$0xff]
  %v20 = vld [vmem:[%s0 + $0x28] sm:$0xff]
  %v21 = vld [vmem:[%s0 + $0x30] sm:$0xff]
  %v22 = vld [vmem:[%s0 + $0x38] sm:$0xff]
  %v23 = vld [vmem:[%s0 + $0x40] sm:$0xff]
  %v24 = vld [vmem:[%s0 + $0x48] sm:$0xff]
  %v25 = vld [vmem:[%s0 + $0x50] sm:$0xff]
  %v26 = vld [vmem:[%s0 + $0x58] sm:$0xff]
  %v27 = vld [vmem:[%s0 + $0x60] sm:$0xff]
  %v28 = vld [vmem:[%s0 + $0x68] sm:$0xff]
  %v29 = vld [vmem:[%s0 + $0x70] sm:$0xff]
  %v30 = vld [vmem:[%s0 + $0x78] sm:$0xff]
  %v31 = vld [vmem:[%s0 + $0x80] sm:$0xff]
  %v32 = vld [vmem:[%s0 + $0x88] sm:$0xff]
  %v33 = vld [vmem:[%s0 + $0x90] sm:$0xff]
  %v34 = vld [vmem:[%s0 + $0x98] sm:$0xff]
  %v35 = vld [vmem:[%s0 + $0xa0] sm:$0xff]
  %v36 = vld [vmem:[%s0 + $0xa8] sm:$0xff]
  %v37 = vld [vmem:[%s0 + $0xb0] sm:$0xff]
  %v38 = vld [vmem:[%s0 + $0xb8] sm:$0xff]
  %v39 = vld [vmem:[%s0 + $0xc0] sm:$0xff]
  %v40 = vld [vmem:[%s0 + $0xc8] sm:$0xff]
  %v41 = vld [vmem:[%s0 + $0xd0] sm:$0xff]
  %v42 = vld [vmem:[%s0 + $0xd8] sm:$0xff]
  %v43 = vld [vmem:[%s0 + $0xe0] sm:$0xff]
  %v44 = vld [vmem:[%s0 + $0xe8] sm:$0xff]
  %v45 = vld [vmem:[%s0 + $0xf0] sm:$0xff]
  %v46 = vld [vmem:[%s0 + $0xf8] sm:$0xff]
  %v47 = vld [vmem:[%s0 + $0x100] sm:$0xff]
  %v48 = vld [vmem:[%s0 + $0x108] sm:$0xff]
  %v49 = vld [vmem:[%s0 + $0x110] sm:$0xff]
  %v50 = vld [vmem:[%s0 + $0x118] sm:$0xff]
  %v51 = vld [vmem:[%s0 + $0x120] sm:$0xff]
  %v52 = vld [vmem:[%s0 + $0x128] sm:$0xff]
  %v53 = vld [vmem:[%s0 + $0x130] sm:$0xff]
  %v54 = vld [vmem:[%s0 + $0x138] sm:$0xff]
  %v55 = vld [vmem:[%s0 + $0x140] sm:$0xff]
  %v56 = vld [vmem:[%s0 + $0x148] sm:$0xff]
  %v57 = vld [vmem:[%s0 + $0x150] sm:$0xff]
  %v58 = vld [vmem:[%s0 + $0x158] sm:$0xff]
  %v59 = vld [vmem:[%s0 + $0x160] sm:$0xff]
  %v60 = vld [vmem:[%s0 + $0x168] sm:$0xff]
  %v61 = vld [vmem:[%s0 + $0x170] sm:$0xff]
  %v62 = vld [vmem:[%s0 + $0x178] sm:$0xff]
  %v63 = vld [vmem:[%s0 + $0x180] sm:$0xff]
  %v64 = vld [vmem:[%s0 + $0x188] sm:$0xff]
  %v65 = vld [vmem:[%s0 + $0x190] sm:$0xff]
  %v66 = vld [vmem:[%s0 + $0x198] sm:$0xff]
  %v67 = vld [vmem:[%s0 + $0x1a0] sm:$0xff]
  %v68 = vld [vmem:[%s0 + $0x1a8] sm:$0xff]
  %v69 = vld [vmem:[%s0 + $0x1b0] sm:$0xff]
  %v70 = vld [vmem:[%s0 + $0x1b8] sm:$0xff]
  %v71 = vld [vmem:[%s0 + $0x1c0] sm:$0xff]
  %v72 = vld [vmem:[%s0 + $0x1c8] sm:$0xff]
  %v73 = vld [vmem:[%s0 + $0x1d0] sm:$0xff]
  %v74 = vld [vmem:[%s0 + $0x1d8] sm:$0xff]
  %v75 = vld [vmem:[%s0 + $0x1e0] sm:$0xff]
  %v76 = vld [vmem:[%s0 + $0x1e8] sm:$0xff]
  %v77 = vld [vmem:[%s0 + $0x1f0] sm:$0xff]
  %v78 = vld [vmem:[%s0 + $0x1f8] sm:$0xff]
  %v79 = vld [vmem:[%s0 + $0x200] sm:$0xff]
  %v80 = vld [vmem:[%s0 + $0x208] sm:$0xff]
  %v81 = vld [vmem:[%s0 + $0x210] sm:$0xff]
  %v82 = vld [vmem:[%s0 + $0x218] sm:$0xff]
  %v83 = vld [vmem:[%s0 + $0x220] sm:$0xff]
  %v84 = vld [vmem:[%s0 + $0x228] sm:$0xff]
  %v85 = vld [vmem:[%s0 + $0x230] sm:$0xff]
  %v86 = vld [vmem:[%s0 + $0x238] sm:$0xff]
  %v87 = vld [vmem:[%s0 + $0x240] sm:$0xff]
  %v88 = vld [vmem:[%s0 + $0x248] sm:$0xff]
  %v89 = vld [vmem:[%s0 + $0x250] sm:$0xff]
  %v90 = vld [vmem:[%s0 + $0x258] sm:$0xff]
  %v91 = vld [vmem:[%s0 + $0x260] sm:$0xff]
  %v92 = vld [vmem:[%s0 + $0x268] sm:$0xff]
  %v93 = vld [vmem:[%s0 + $0x270] sm:$0xff]
  %v94 = vld [vmem:[%s0 + $0x278] sm:$0xff]
  %v95 = vld [vmem:[%s0 + $0x280] sm:$0xff]
  %v96 = vld [vmem:[%s0 + $0x288] sm:$0xff]
  %v97 = vld [vmem:[%s0 + $0x290] sm:$0xff]
  %v98 = vld [vmem:[%s0 + $0x298] sm:$0xff]
  %v99 = vld [vmem:[%s0 + $0x2a0] sm:$0xff]
  %v100 = vld [vmem:[%s0 + $0x2a8] sm:$0xff]
  %v101 = vld [vmem:[%s0 + $0x2b0] sm:$0xff]
  %v102 = vld [vmem:[%s0 + $0x2b8] sm:$0xff]
  %v103 = vld [vmem:[%s0 + $0x2c0] sm:$0xff]
  %v104 = vld [vmem:[%s0 + $0x2c8] sm:$0xff]
  %v105 = vld [vmem:[%s0 + $0x2d0] sm:$0xff]
  %v106 = vld [vmem:[%s0 + $0x2d8] sm:$0xff]
  %v107 = vld [vmem:[%s0 + $0x2e0] sm:$0xff]
  %v108 = vld [vmem:[%s0 + $0x2e8] sm:$0xff]
  %v109 = vld [vmem:[%s0 + $0x2f0] sm:$0xff]
  %v110 = vld [vmem:[%s0 + $0x2f8] sm:$0xff]
  %v111 = vld [vmem:[%s0 + $0x300] sm:$0xff]
  %v112 = vld [vmem:[%s0 + $0x308] sm:$0xff]
  %v113 = vld [vmem:[%s0 + $0x310] sm:$0xff]
  %v114 = vld [vmem:[%s0 + $0x318] sm:$0xff]
  %v115 = vld [vmem:[%s0 + $0x320] sm:$0xff]
  %v116 = vld [vmem:[%s0 + $0x328] sm:$0xff]
  %v117 = vld [vmem:[%s0 + $0x330] sm:$0xff]
  %v118 = vld [vmem:[%s0 + $0x338] sm:$0xff]
  %v119 = vld [vmem:[%s0 + $0x340] sm:$0xff]
  %v120 = vld [vmem:[%s0 + $0x348] sm:$0xff]
  %v121 = vld [vmem:[%s0 + $0x350] sm:$0xff]
  %v122 = vld [vmem:[%s0 + $0x358] sm:$0xff]
  %v123 = vld [vmem:[%s0 + $0x360] sm:$0xff]
  %v124 = vld [vmem:[%s0 + $0x368] sm:$0xff]
  %v125 = vld [vmem:[%s0 + $0x370] sm:$0xff]
  %v126 = vld [vmem:[%s0 + $0x378] sm:$0xff]
  %v127 = vld [vmem:[%s0 + $0x380] sm:$0xff]
  %v128 = vld [vmem:[%s0 + $0x388] sm:$0xff]
  %v129 = vld [vmem:[%s0 + $0x390] sm:$0xff]
  %v130 = vld [vmem:[%s0 + $0x398] sm:$0xff]
  %v131 = vld [vmem:[%s0 + $0x3a0] sm:$0xff]
  %v132 = vld [vmem:[%s0 + $0x3a8] sm:$0xff]
  %v133 = vld [vmem:[%s0 + $0x3b0] sm:$0xff]
  %v134 = vld [vmem:[%s0 + $0x3b8] sm:$0xff]
  %v135 = vld [vmem:[%s0 + $0x3c0] sm:$0xff]
  %v136 = vld [vmem:[%s0 + $0x3c8] sm:$0xff]
  %v137 = vld [vmem:[%s0 + $0x3d0] sm:$0xff]
  %v138 = vld [vmem:[%s0 + $0x3d8] sm:$0xff]
  %v139 = vld [vmem:[%s0 + $0x3e0] sm:$0xff]
  %v140 = vld [vmem:[%s0 + $0x3e8] sm:$0xff]
  %v141 = vld [vmem:[%s0 + $0x3f0] sm:$0xff]
  %v142 = vld [vmem:[%s0 + $0x3f8] sm:$0xff]
  %v143 = vld [vmem:[%s1] sm:$0xf]
  %v144 = vld [vmem:[%s1 + $0x4] sm:$0xf]
  %v145 = vld [vmem:[%s1 + $0x8] sm:$0xf]
  %v146 = vld [vmem:[%s1 + $0xc] sm:$0xf]
  %v147 = vld [vmem:[%s1 + $0x10] sm:$0xf]
  %v148 = vld [vmem:[%s1 + $0x14] sm:$0xf]
  %v149 = vld [vmem:[%s1 + $0x18] sm:$0xf]
  %v150 = vld [vmem:[%s1 + $0x1c] sm:$0xf]
  %v151 = vld [vmem:[%s1 + $0x20] sm:$0xf]
  %v152 = vld [vmem:[%s1 + $0x24] sm:$0xf]
  %v153 = vld [vmem:[%s1 + $0x28] sm:$0xf]
  %v154 = vld [vmem:[%s1 + $0x2c] sm:$0xf]
  %v155 = vld [vmem:[%s1 + $0x30] sm:$0xf]
  %v156 = vld [vmem:[%s1 + $0x34] sm:$0xf]
  %v157 = vld [vmem:[%s1 + $0x38] sm:$0xf]
  %v158 = vld [vmem:[%s1 + $0x3c] sm:$0xf]
  %v159 = vld [vmem:[%s1 + $0x40] sm:$0xf]
  %v160 = vld [vmem:[%s1 + $0x44] sm:$0xf]
  %v161 = vld [vmem:[%s1 + $0x48] sm:$0xf]
  %v162 = vld [vmem:[%s1 + $0x4c] sm:$0xf]
  %v163 = vld [vmem:[%s1 + $0x50] sm:$0xf]
  %v164 = vld [vmem:[%s1 + $0x54] sm:$0xf]
  %v165 = vld [vmem:[%s1 + $0x58] sm:$0xf]
  %v166 = vld [vmem:[%s1 + $0x5c] sm:$0xf]
  %v167 = vld [vmem:[%s1 + $0x60] sm:$0xf]
  %v168 = vld [vmem:[%s1 + $0x64] sm:$0xf]
  %v169 = vld [vmem:[%s1 + $0x68] sm:$0xf]
  %v170 = vld [vmem:[%s1 + $0x6c] sm:$0xf]
  %v171 = vld [vmem:[%s1 + $0x70] sm:$0xf]
  %v172 = vld [vmem:[%s1 + $0x74] sm:$0xf]
  %v173 = vld [vmem:[%s1 + $0x78] sm:$0xf]
  %v174 = vld [vmem:[%s1 + $0x7c] sm:$0xf]
  %v175 = vld [vmem:[%s1 + $0x80] sm:$0xf]
  %v176 = vld [vmem:[%s1 + $0x84] sm:$0xf]
  %v177 = vld [vmem:[%s1 + $0x88] sm:$0xf]
  %v178 = vld [vmem:[%s1 + $0x8c] sm:$0xf]
  %v179 = vld [vmem:[%s1 + $0x90] sm:$0xf]
  %v180 = vld [vmem:[%s1 + $0x94] sm:$0xf]
  %v181 = vld [vmem:[%s1 + $0x98] sm:$0xf]
  %v182 = vld [vmem:[%s1 + $0x9c] sm:$0xf]
  %v183 = vld [vmem:[%s1 + $0xa0] sm:$0xf]
  %v184 = vld [vmem:[%s1 + $0xa4] sm:$0xf]
  %v185 = vld [vmem:[%s1 + $0xa8] sm:$0xf]
  %v186 = vld [vmem:[%s1 + $0xac] sm:$0xf]
  %v187 = vld [vmem:[%s1 + $0xb0] sm:$0xf]
  %v188 = vld [vmem:[%s1 + $0xb4] sm:$0xf]
  %v189 = vld [vmem:[%s1 + $0xb8] sm:$0xf]
  %v190 = vld [vmem:[%s1 + $0xbc] sm:$0xf]
  %v191 = vld [vmem:[%s1 + $0xc0] sm:$0xf]
  %v192 = vld [vmem:[%s1 + $0xc4] sm:$0xf]
  %v193 = vld [vmem:[%s1 + $0xc8] sm:$0xf]
  %v194 = vld [vmem:[%s1 + $0xcc] sm:$0xf]
  %v195 = vld [vmem:[%s1 + $0xd0] sm:$0xf]
  %v196 = vld [vmem:[%s1 + $0xd4] sm:$0xf]
  %v197 = vld [vmem:[%s1 + $0xd8] sm:$0xf]
  %v198 = vld [vmem:[%s1 + $0xdc] sm:$0xf]
  %v199 = vld [vmem:[%s1 + $0xe0] sm:$0xf]
  %v200 = vld [vmem:[%s1 + $0xe4] sm:$0xf]
  %v201 = vld [vmem:[%s1 + $0xe8] sm:$0xf]
  %v202 = vld [vmem:[%s1 + $0xec] sm:$0xf]
  %v203 = vld [vmem:[%s1 + $0xf0] sm:$0xf]
  %v204 = vld [vmem:[%s1 + $0xf4] sm:$0xf]
  %v205 = vld [vmem:[%s1 + $0xf8] sm:$0xf]
  %v206 = vld [vmem:[%s1 + $0xfc] sm:$0xf]
  %v335 = vunpack.c.l.b16 %v15
  %v336 = vunpack.c.h.b16 %v15
  %v337 = vunpack.c.l.b16 %v16
  %v338 = vunpack.c.h.b16 %v16
  %v339 = vunpack.c.l.b16 %v17
  %v340 = vunpack.c.h.b16 %v17
  %v341 = vunpack.c.l.b16 %v18
  %v342 = vunpack.c.h.b16 %v18
  %v343 = vunpack.c.l.b16 %v19
  %v344 = vunpack.c.h.b16 %v19
  %v345 = vunpack.c.l.b16 %v20
  %v346 = vunpack.c.h.b16 %v20
  %v347 = vunpack.c.l.b16 %v21
  %v348 = vunpack.c.h.b16 %v21
  %v349 = vunpack.c.l.b16 %v22
  %v350 = vunpack.c.h.b16 %v22
  %v351 = vunpack.c.l.b16 %v23
  %v352 = vunpack.c.h.b16 %v23
  %v353 = vunpack.c.l.b16 %v24
  %v354 = vunpack.c.h.b16 %v24
  %v355 = vunpack.c.l.b16 %v25
  %v356 = vunpack.c.h.b16 %v25
  %v357 = vunpack.c.l.b16 %v26
  %v358 = vunpack.c.h.b16 %v26
  %v359 = vunpack.c.l.b16 %v27
  %v360 = vunpack.c.h.b16 %v27
  %v361 = vunpack.c.l.b16 %v28
  %v362 = vunpack.c.h.b16 %v28
  %v363 = vunpack.c.l.b16 %v29
  %v364 = vunpack.c.h.b16 %v29
  %v365 = vunpack.c.l.b16 %v30
  %v366 = vunpack.c.h.b16 %v30
  %v367 = vunpack.c.l.b16 %v31
  %v368 = vunpack.c.h.b16 %v31
  %v369 = vunpack.c.l.b16 %v32
  %v370 = vunpack.c.h.b16 %v32
  %v371 = vunpack.c.l.b16 %v33
  %v372 = vunpack.c.h.b16 %v33
  %v373 = vunpack.c.l.b16 %v34
  %v374 = vunpack.c.h.b16 %v34
  %v375 = vunpack.c.l.b16 %v35
  %v376 = vunpack.c.h.b16 %v35
  %v377 = vunpack.c.l.b16 %v36
  %v378 = vunpack.c.h.b16 %v36
  %v379 = vunpack.c.l.b16 %v37
  %v380 = vunpack.c.h.b16 %v37
  %v381 = vunpack.c.l.b16 %v38
  %v382 = vunpack.c.h.b16 %v38
  %v383 = vunpack.c.l.b16 %v39
  %v384 = vunpack.c.h.b16 %v39
  %v385 = vunpack.c.l.b16 %v40
  %v386 = vunpack.c.h.b16 %v40
  %v387 = vunpack.c.l.b16 %v41
  %v388 = vunpack.c.h.b16 %v41
  %v389 = vunpack.c.l.b16 %v42
  %v390 = vunpack.c.h.b16 %v42
  %v391 = vunpack.c.l.b16 %v43
  %v392 = vunpack.c.h.b16 %v43
  %v393 = vunpack.c.l.b16 %v44
  %v394 = vunpack.c.h.b16 %v44
  %v395 = vunpack.c.l.b16 %v45
  %v396 = vunpack.c.h.b16 %v45
  %v397 = vunpack.c.l.b16 %v46
  %v398 = vunpack.c.h.b16 %v46
  %v399 = vunpack.c.l.b16 %v47
  %v400 = vunpack.c.h.b16 %v47
  %v401 = vunpack.c.l.b16 %v48
  %v402 = vunpack.c.h.b16 %v48
  %v403 = vunpack.c.l.b16 %v49
  %v404 = vunpack.c.h.b16 %v49
  %v405 = vunpack.c.l.b16 %v50
  %v406 = vunpack.c.h.b16 %v50
  %v407 = vunpack.c.l.b16 %v51
  %v408 = vunpack.c.h.b16 %v51
  %v409 = vunpack.c.l.b16 %v52
  %v410 = vunpack.c.h.b16 %v52
  %v411 = vunpack.c.l.b16 %v53
  %v412 = vunpack.c.h.b16 %v53
  %v413 = vunpack.c.l.b16 %v54
  %v414 = vunpack.c.h.b16 %v54
  %v415 = vunpack.c.l.b16 %v55
  %v416 = vunpack.c.h.b16 %v55
  %v417 = vunpack.c.l.b16 %v56
  %v418 = vunpack.c.h.b16 %v56
  %v419 = vunpack.c.l.b16 %v57
  %v420 = vunpack.c.h.b16 %v57
  %v421 = vunpack.c.l.b16 %v58
  %v422 = vunpack.c.h.b16 %v58
  %v423 = vunpack.c.l.b16 %v59
  %v424 = vunpack.c.h.b16 %v59
  %v425 = vunpack.c.l.b16 %v60
  %v426 = vunpack.c.h.b16 %v60
  %v427 = vunpack.c.l.b16 %v61
  %v428 = vunpack.c.h.b16 %v61
  %v429 = vunpack.c.l.b16 %v62
  %v430 = vunpack.c.h.b16 %v62
  %v431 = vunpack.c.l.b16 %v63
  %v432 = vunpack.c.h.b16 %v63
  %v433 = vunpack.c.l.b16 %v64
  %v434 = vunpack.c.h.b16 %v64
  %v435 = vunpack.c.l.b16 %v65
  %v436 = vunpack.c.h.b16 %v65
  %v437 = vunpack.c.l.b16 %v66
  %v438 = vunpack.c.h.b16 %v66
  %v439 = vunpack.c.l.b16 %v67
  %v440 = vunpack.c.h.b16 %v67
  %v441 = vunpack.c.l.b16 %v68
  %v442 = vunpack.c.h.b16 %v68
  %v443 = vunpack.c.l.b16 %v69
  %v444 = vunpack.c.h.b16 %v69
  %v445 = vunpack.c.l.b16 %v70
  %v446 = vunpack.c.h.b16 %v70
  %v447 = vunpack.c.l.b16 %v71
  %v448 = vunpack.c.h.b16 %v71
  %v449 = vunpack.c.l.b16 %v72
  %v450 = vunpack.c.h.b16 %v72
  %v451 = vunpack.c.l.b16 %v73
  %v452 = vunpack.c.h.b16 %v73
  %v453 = vunpack.c.l.b16 %v74
  %v454 = vunpack.c.h.b16 %v74
  %v455 = vunpack.c.l.b16 %v75
  %v456 = vunpack.c.h.b16 %v75
  %v457 = vunpack.c.l.b16 %v76
  %v458 = vunpack.c.h.b16 %v76
  %v459 = vunpack.c.l.b16 %v77
  %v460 = vunpack.c.h.b16 %v77
  %v461 = vunpack.c.l.b16 %v78
  %v462 = vunpack.c.h.b16 %v78
  %v463 = vunpack.c.l.b16 %v79
  %v464 = vunpack.c.h.b16 %v79
  %v465 = vunpack.c.l.b16 %v80
  %v466 = vunpack.c.h.b16 %v80
  %v467 = vunpack.c.l.b16 %v81
  %v468 = vunpack.c.h.b16 %v81
  %v469 = vunpack.c.l.b16 %v82
  %v470 = vunpack.c.h.b16 %v82
  %v471 = vunpack.c.l.b16 %v83
  %v472 = vunpack.c.h.b16 %v83
  %v473 = vunpack.c.l.b16 %v84
  %v474 = vunpack.c.h.b16 %v84
  %v475 = vunpack.c.l.b16 %v85
  %v476 = vunpack.c.h.b16 %v85
  %v477 = vunpack.c.l.b16 %v86
  %v478 = vunpack.c.h.b16 %v86
  %v479 = vunpack.c.l.b16 %v87
  %v480 = vunpack.c.h.b16 %v87
  %v481 = vunpack.c.l.b16 %v88
  %v482 = vunpack.c.h.b16 %v88
  %v483 = vunpack.c.l.b16 %v89
  %v484 = vunpack.c.h.b16 %v89
  %v485 = vunpack.c.l.b16 %v90
  %v486 = vunpack.c.h.b16 %v90
  %v487 = vunpack.c.l.b16 %v91
  %v488 = vunpack.c.h.b16 %v91
  %v489 = vunpack.c.l.b16 %v92
  %v490 = vunpack.c.h.b16 %v92
  %v491 = vunpack.c.l.b16 %v93
  %v492 = vunpack.c.h.b16 %v93
  %v493 = vunpack.c.l.b16 %v94
  %v494 = vunpack.c.h.b16 %v94
  %v495 = vunpack.c.l.b16 %v95
  %v496 = vunpack.c.h.b16 %v95
  %v497 = vunpack.c.l.b16 %v96
  %v498 = vunpack.c.h.b16 %v96
  %v499 = vunpack.c.l.b16 %v97
  %v500 = vunpack.c.h.b16 %v97
  %v501 = vunpack.c.l.b16 %v98
  %v502 = vunpack.c.h.b16 %v98
  %v503 = vunpack.c.l.b16 %v99
  %v504 = vunpack.c.h.b16 %v99
  %v505 = vunpack.c.l.b16 %v100
  %v506 = vunpack.c.h.b16 %v100
  %v507 = vunpack.c.l.b16 %v101
  %v508 = vunpack.c.h.b16 %v101
  %v509 = vunpack.c.l.b16 %v102
  %v510 = vunpack.c.h.b16 %v102
  %v511 = vunpack.c.l.b16 %v103
  %v512 = vunpack.c.h.b16 %v103
  %v513 = vunpack.c.l.b16 %v104
  %v514 = vunpack.c.h.b16 %v104
  %v515 = vunpack.c.l.b16 %v105
  %v516 = vunpack.c.h.b16 %v105
  %v517 = vunpack.c.l.b16 %v106
  %v518 = vunpack.c.h.b16 %v106
  %v519 = vunpack.c.l.b16 %v107
  %v520 = vunpack.c.h.b16 %v107
  %v521 = vunpack.c.l.b16 %v108
  %v522 = vunpack.c.h.b16 %v108
  %v523 = vunpack.c.l.b16 %v109
  %v524 = vunpack.c.h.b16 %v109
  %v525 = vunpack.c.l.b16 %v110
  %v526 = vunpack.c.h.b16 %v110
  %v527 = vunpack.c.l.b16 %v111
  %v528 = vunpack.c.h.b16 %v111
  %v529 = vunpack.c.l.b16 %v112
  %v530 = vunpack.c.h.b16 %v112
  %v531 = vunpack.c.l.b16 %v113
  %v532 = vunpack.c.h.b16 %v113
  %v533 = vunpack.c.l.b16 %v114
  %v534 = vunpack.c.h.b16 %v114
  %v535 = vunpack.c.l.b16 %v115
  %v536 = vunpack.c.h.b16 %v115
  %v537 = vunpack.c.l.b16 %v116
  %v538 = vunpack.c.h.b16 %v116
  %v539 = vunpack.c.l.b16 %v117
  %v540 = vunpack.c.h.b16 %v117
  %v541 = vunpack.c.l.b16 %v118
  %v542 = vunpack.c.h.b16 %v118
  %v543 = vunpack.c.l.b16 %v119
  %v544 = vunpack.c.h.b16 %v119
  %v545 = vunpack.c.l.b16 %v120
  %v546 = vunpack.c.h.b16 %v120
  %v547 = vunpack.c.l.b16 %v121
  %v548 = vunpack.c.h.b16 %v121
  %v549 = vunpack.c.l.b16 %v122
  %v550 = vunpack.c.h.b16 %v122
  %v551 = vunpack.c.l.b16 %v123
  %v552 = vunpack.c.h.b16 %v123
  %v553 = vunpack.c.l.b16 %v124
  %v554 = vunpack.c.h.b16 %v124
  %v555 = vunpack.c.l.b16 %v125
  %v556 = vunpack.c.h.b16 %v125
  %v557 = vunpack.c.l.b16 %v126
  %v558 = vunpack.c.h.b16 %v126
  %v559 = vunpack.c.l.b16 %v127
  %v560 = vunpack.c.h.b16 %v127
  %v561 = vunpack.c.l.b16 %v128
  %v562 = vunpack.c.h.b16 %v128
  %v563 = vunpack.c.l.b16 %v129
  %v564 = vunpack.c.h.b16 %v129
  %v565 = vunpack.c.l.b16 %v130
  %v566 = vunpack.c.h.b16 %v130
  %v567 = vunpack.c.l.b16 %v131
  %v568 = vunpack.c.h.b16 %v131
  %v569 = vunpack.c.l.b16 %v132
  %v570 = vunpack.c.h.b16 %v132
  %v571 = vunpack.c.l.b16 %v133
  %v572 = vunpack.c.h.b16 %v133
  %v573 = vunpack.c.l.b16 %v134
  %v574 = vunpack.c.h.b16 %v134
  %v575 = vunpack.c.l.b16 %v135
  %v576 = vunpack.c.h.b16 %v135
  %v577 = vunpack.c.l.b16 %v136
  %v578 = vunpack.c.h.b16 %v136
  %v579 = vunpack.c.l.b16 %v137
  %v580 = vunpack.c.h.b16 %v137
  %v581 = vunpack.c.l.b16 %v138
  %v582 = vunpack.c.h.b16 %v138
  %v583 = vunpack.c.l.b16 %v139
  %v584 = vunpack.c.h.b16 %v139
  %v585 = vunpack.c.l.b16 %v140
  %v586 = vunpack.c.h.b16 %v140
  %v587 = vunpack.c.l.b16 %v141
  %v588 = vunpack.c.h.b16 %v141
  %v589 = vunpack.c.l.b16 %v142
  %v590 = vunpack.c.h.b16 %v142
  %v591 = vpack.c.b16 %v339, %v335
  %v592 = vpack.c.b16 %v340, %v336
  %v593 = vpack.c.b16 %v341, %v337
  %v594 = vpack.c.b16 %v342, %v338
  %v595 = vpack.c.b16 %v347, %v343
  %v596 = vpack.c.b16 %v348, %v344
  %v597 = vpack.c.b16 %v349, %v345
  %v598 = vpack.c.b16 %v350, %v346
  %v599 = vpack.c.b16 %v355, %v351
  %v600 = vpack.c.b16 %v356, %v352
  %v601 = vpack.c.b16 %v357, %v353
  %v602 = vpack.c.b16 %v358, %v354
  %v603 = vpack.c.b16 %v363, %v359
  %v604 = vpack.c.b16 %v364, %v360
  %v605 = vpack.c.b16 %v365, %v361
  %v606 = vpack.c.b16 %v366, %v362
  %v607 = vpack.c.b16 %v371, %v367
  %v608 = vpack.c.b16 %v372, %v368
  %v609 = vpack.c.b16 %v373, %v369
  %v610 = vpack.c.b16 %v374, %v370
  %v611 = vpack.c.b16 %v379, %v375
  %v612 = vpack.c.b16 %v380, %v376
  %v613 = vpack.c.b16 %v381, %v377
  %v614 = vpack.c.b16 %v382, %v378
  %v615 = vpack.c.b16 %v387, %v383
  %v616 = vpack.c.b16 %v388, %v384
  %v617 = vpack.c.b16 %v389, %v385
  %v618 = vpack.c.b16 %v390, %v386
  %v619 = vpack.c.b16 %v395, %v391
  %v620 = vpack.c.b16 %v396, %v392
  %v621 = vpack.c.b16 %v397, %v393
  %v622 = vpack.c.b16 %v398, %v394
  %v623 = vpack.c.b16 %v403, %v399
  %v624 = vpack.c.b16 %v404, %v400
  %v625 = vpack.c.b16 %v405, %v401
  %v626 = vpack.c.b16 %v406, %v402
  %v627 = vpack.c.b16 %v411, %v407
  %v628 = vpack.c.b16 %v412, %v408
  %v629 = vpack.c.b16 %v413, %v409
  %v630 = vpack.c.b16 %v414, %v410
  %v631 = vpack.c.b16 %v419, %v415
  %v632 = vpack.c.b16 %v420, %v416
  %v633 = vpack.c.b16 %v421, %v417
  %v634 = vpack.c.b16 %v422, %v418
  %v635 = vpack.c.b16 %v427, %v423
  %v636 = vpack.c.b16 %v428, %v424
  %v637 = vpack.c.b16 %v429, %v425
  %v638 = vpack.c.b16 %v430, %v426
  %v639 = vpack.c.b16 %v435, %v431
  %v640 = vpack.c.b16 %v436, %v432
  %v641 = vpack.c.b16 %v437, %v433
  %v642 = vpack.c.b16 %v438, %v434
  %v643 = vpack.c.b16 %v443, %v439
  %v644 = vpack.c.b16 %v444, %v440
  %v645 = vpack.c.b16 %v445, %v441
  %v646 = vpack.c.b16 %v446, %v442
  %v647 = vpack.c.b16 %v451, %v447
  %v648 = vpack.c.b16 %v452, %v448
  %v649 = vpack.c.b16 %v453, %v449
  %v650 = vpack.c.b16 %v454, %v450
  %v651 = vpack.c.b16 %v459, %v455
  %v652 = vpack.c.b16 %v460, %v456
  %v653 = vpack.c.b16 %v461, %v457
  %v654 = vpack.c.b16 %v462, %v458
  %v655 = vpack.c.b16 %v467, %v463
  %v656 = vpack.c.b16 %v468, %v464
  %v657 = vpack.c.b16 %v469, %v465
  %v658 = vpack.c.b16 %v470, %v466
  %v659 = vpack.c.b16 %v475, %v471
  %v660 = vpack.c.b16 %v476, %v472
  %v661 = vpack.c.b16 %v477, %v473
  %v662 = vpack.c.b16 %v478, %v474
  %v663 = vpack.c.b16 %v483, %v479
  %v664 = vpack.c.b16 %v484, %v480
  %v665 = vpack.c.b16 %v485, %v481
  %v666 = vpack.c.b16 %v486, %v482
  %v667 = vpack.c.b16 %v491, %v487
  %v668 = vpack.c.b16 %v492, %v488
  %v669 = vpack.c.b16 %v493, %v489
  %v670 = vpack.c.b16 %v494, %v490
  %v671 = vpack.c.b16 %v499, %v495
  %v672 = vpack.c.b16 %v500, %v496
  %v673 = vpack.c.b16 %v501, %v497
  %v674 = vpack.c.b16 %v502, %v498
  %v675 = vpack.c.b16 %v507, %v503
  %v676 = vpack.c.b16 %v508, %v504
  %v677 = vpack.c.b16 %v509, %v505
  %v678 = vpack.c.b16 %v510, %v506
  %v679 = vpack.c.b16 %v515, %v511
  %v680 = vpack.c.b16 %v516, %v512
  %v681 = vpack.c.b16 %v517, %v513
  %v682 = vpack.c.b16 %v518, %v514
  %v683 = vpack.c.b16 %v523, %v519
  %v684 = vpack.c.b16 %v524, %v520
  %v685 = vpack.c.b16 %v525, %v521
  %v686 = vpack.c.b16 %v526, %v522
  %v687 = vpack.c.b16 %v531, %v527
  %v688 = vpack.c.b16 %v532, %v528
  %v689 = vpack.c.b16 %v533, %v529
  %v690 = vpack.c.b16 %v534, %v530
  %v691 = vpack.c.b16 %v539, %v535
  %v692 = vpack.c.b16 %v540, %v536
  %v693 = vpack.c.b16 %v541, %v537
  %v694 = vpack.c.b16 %v542, %v538
  %v695 = vpack.c.b16 %v547, %v543
  %v696 = vpack.c.b16 %v548, %v544
  %v697 = vpack.c.b16 %v549, %v545
  %v698 = vpack.c.b16 %v550, %v546
  %v699 = vpack.c.b16 %v555, %v551
  %v700 = vpack.c.b16 %v556, %v552
  %v701 = vpack.c.b16 %v557, %v553
  %v702 = vpack.c.b16 %v558, %v554
  %v703 = vpack.c.b16 %v563, %v559
  %v704 = vpack.c.b16 %v564, %v560
  %v705 = vpack.c.b16 %v565, %v561
  %v706 = vpack.c.b16 %v566, %v562
  %v707 = vpack.c.b16 %v571, %v567
  %v708 = vpack.c.b16 %v572, %v568
  %v709 = vpack.c.b16 %v573, %v569
  %v710 = vpack.c.b16 %v574, %v570
  %v711 = vpack.c.b16 %v579, %v575
  %v712 = vpack.c.b16 %v580, %v576
  %v713 = vpack.c.b16 %v581, %v577
  %v714 = vpack.c.b16 %v582, %v578
  %v715 = vpack.c.b16 %v587, %v583
  %v716 = vpack.c.b16 %v588, %v584
  %v717 = vpack.c.b16 %v589, %v585
  %v718 = vpack.c.b16 %v590, %v586
  %v911 = vunpack.c.l.b16 %v143
  %v912 = vunpack.c.l.b16 %v144
  %v913 = vunpack.c.l.b16 %v145
  %v914 = vunpack.c.l.b16 %v146
  %v915 = vunpack.c.l.b16 %v147
  %v916 = vunpack.c.l.b16 %v148
  %v917 = vunpack.c.l.b16 %v149
  %v918 = vunpack.c.l.b16 %v150
  %v919 = vunpack.c.l.b16 %v151
  %v920 = vunpack.c.l.b16 %v152
  %v921 = vunpack.c.l.b16 %v153
  %v922 = vunpack.c.l.b16 %v154
  %v923 = vunpack.c.l.b16 %v155
  %v924 = vunpack.c.l.b16 %v156
  %v925 = vunpack.c.l.b16 %v157
  %v926 = vunpack.c.l.b16 %v158
  %v927 = vunpack.c.l.b16 %v159
  %v928 = vunpack.c.l.b16 %v160
  %v929 = vunpack.c.l.b16 %v161
  %v930 = vunpack.c.l.b16 %v162
  %v931 = vunpack.c.l.b16 %v163
  %v932 = vunpack.c.l.b16 %v164
  %v933 = vunpack.c.l.b16 %v165
  %v934 = vunpack.c.l.b16 %v166
  %v935 = vunpack.c.l.b16 %v167
  %v936 = vunpack.c.l.b16 %v168
  %v937 = vunpack.c.l.b16 %v169
  %v938 = vunpack.c.l.b16 %v170
  %v939 = vunpack.c.l.b16 %v171
  %v940 = vunpack.c.l.b16 %v172
  %v941 = vunpack.c.l.b16 %v173
  %v942 = vunpack.c.l.b16 %v174
  %v943 = vunpack.c.l.b16 %v175
  %v944 = vunpack.c.l.b16 %v176
  %v945 = vunpack.c.l.b16 %v177
  %v946 = vunpack.c.l.b16 %v178
  %v947 = vunpack.c.l.b16 %v179
  %v948 = vunpack.c.l.b16 %v180
  %v949 = vunpack.c.l.b16 %v181
  %v950 = vunpack.c.l.b16 %v182
  %v951 = vunpack.c.l.b16 %v183
  %v952 = vunpack.c.l.b16 %v184
  %v953 = vunpack.c.l.b16 %v185
  %v954 = vunpack.c.l.b16 %v186
  %v955 = vunpack.c.l.b16 %v187
  %v956 = vunpack.c.l.b16 %v188
  %v957 = vunpack.c.l.b16 %v189
  %v958 = vunpack.c.l.b16 %v190
  %v959 = vunpack.c.l.b16 %v191
  %v960 = vunpack.c.l.b16 %v192
  %v961 = vunpack.c.l.b16 %v193
  %v962 = vunpack.c.l.b16 %v194
  %v963 = vunpack.c.l.b16 %v195
  %v964 = vunpack.c.l.b16 %v196
  %v965 = vunpack.c.l.b16 %v197
  %v966 = vunpack.c.l.b16 %v198
  %v967 = vunpack.c.l.b16 %v199
  %v968 = vunpack.c.l.b16 %v200
  %v969 = vunpack.c.l.b16 %v201
  %v970 = vunpack.c.l.b16 %v202
  %v971 = vunpack.c.l.b16 %v203
  %v972 = vunpack.c.l.b16 %v204
  %v973 = vunpack.c.l.b16 %v205
  %v974 = vunpack.c.l.b16 %v206
  %v975 = vpack.c.b16 %v912, %v911
  %v976 = vpack.c.b16 %v914, %v913
  %v977 = vpack.c.b16 %v916, %v915
  %v978 = vpack.c.b16 %v918, %v917
  %v979 = vpack.c.b16 %v920, %v919
  %v980 = vpack.c.b16 %v922, %v921
  %v981 = vpack.c.b16 %v924, %v923
  %v982 = vpack.c.b16 %v926, %v925
  %v983 = vpack.c.b16 %v928, %v927
  %v984 = vpack.c.b16 %v930, %v929
  %v985 = vpack.c.b16 %v932, %v931
  %v986 = vpack.c.b16 %v934, %v933
  %v987 = vpack.c.b16 %v936, %v935
  %v988 = vpack.c.b16 %v938, %v937
  %v989 = vpack.c.b16 %v940, %v939
  %v990 = vpack.c.b16 %v942, %v941
  %v991 = vpack.c.b16 %v944, %v943
  %v992 = vpack.c.b16 %v946, %v945
  %v993 = vpack.c.b16 %v948, %v947
  %v994 = vpack.c.b16 %v950, %v949
  %v995 = vpack.c.b16 %v952, %v951
  %v996 = vpack.c.b16 %v954, %v953
  %v997 = vpack.c.b16 %v956, %v955
  %v998 = vpack.c.b16 %v958, %v957
  %v999 = vpack.c.b16 %v960, %v959
  %v1000 = vpack.c.b16 %v962, %v961
  %v1001 = vpack.c.b16 %v964, %v963
  %v1002 = vpack.c.b16 %v966, %v965
  %v1003 = vpack.c.b16 %v968, %v967
  %v1004 = vpack.c.b16 %v970, %v969
  %v1005 = vpack.c.b16 %v972, %v971
  %v1006 = vpack.c.b16 %v974, %v973
  %1039 = vmatprep.subr.bf16.mxu0 0
  %1040 = vmatpush1.bf16.msra.mxu0 %v982
  %1041 = vmatprep.subr.bf16.mxu0 0
  %1042 = vmatpush1.bf16.msra.mxu0 %v981
  %1043 = vmatprep.subr.bf16.mxu0 0
  %1044 = vmatpush1.bf16.msra.mxu0 %v980
  %1045 = vmatprep.subr.bf16.mxu0 0
  %1046 = vmatpush1.bf16.msra.mxu0 %v979
  %1047 = vmatprep.subr.bf16.mxu0 0
  %1048 = vmatpush1.bf16.msra.mxu0 %v978
  %1049 = vmatprep.subr.bf16.mxu0 0
  %1050 = vmatpush1.bf16.msra.mxu0 %v977
  %1051 = vmatprep.subr.bf16.mxu0 0
  %1052 = vmatpush1.bf16.msra.mxu0 %v976
  %1053 = vmatprep.subr.bf16.mxu0 0
  %1054 = vmatpush1.bf16.msra.mxu0 %v975
  %1055 = vmatprep.subr.bf16.mxu0 0
  %1056 = vmatpush2.bf16.msra.mxu0 %v990
  %1057 = vmatprep.subr.bf16.mxu0 0
  %1058 = vmatpush2.bf16.msra.mxu0 %v989
  %1059 = vmatprep.subr.bf16.mxu0 0
  %1060 = vmatpush2.bf16.msra.mxu0 %v988
  %1061 = vmatprep.subr.bf16.mxu0 0
  %1062 = vmatpush2.bf16.msra.mxu0 %v987
  %1063 = vmatprep.subr.bf16.mxu0 0
  %1064 = vmatpush2.bf16.msra.mxu0 %v986
  %1065 = vmatprep.subr.bf16.mxu0 0
  %1066 = vmatpush2.bf16.msra.mxu0 %v985
  %1067 = vmatprep.subr.bf16.mxu0 0
  %1068 = vmatpush2.bf16.msra.mxu0 %v984
  %1069 = vmatprep.subr.bf16.mxu0 0
  %1070 = vmatpush2.bf16.msra.mxu0 %v983
  %1071 = vmatprep.mubr.bf16.mxu0 %v592
  %1072 = vmatmul.mubr.bf16.gmra.mxu0 %v591
  %v1073 = vpop.f32.mrf.mxu0
  %v1074 = vadd.f32 0.0, %v1073
  %v1075 = vpop.f32.mrf.mxu0
  %v1076 = vpop.f32.mrf.mxu0
  %v1077 = vadd.f32 0.0, %v1076
  %v1078 = vpop.f32.mrf.mxu0
  %1079 = vmatprep.mubr.bf16.mxu0 %v596
  %1080 = vmatmul.mubr.bf16.gmra.mxu0 %v595
  %v1081 = vpop.f32.mrf.mxu0
  %v1082 = vadd.f32 0.0, %v1081
  %v1083 = vpop.f32.mrf.mxu0
  %v1084 = vpop.f32.mrf.mxu0
  %v1085 = vadd.f32 0.0, %v1084
  %v1086 = vpop.f32.mrf.mxu0
  %1087 = vmatprep.mubr.bf16.mxu0 %v600
  %1088 = vmatmul.mubr.bf16.gmra.mxu0 %v599
  %v1089 = vpop.f32.mrf.mxu0
  %v1090 = vadd.f32 0.0, %v1089
  %v1091 = vpop.f32.mrf.mxu0
  %v1092 = vpop.f32.mrf.mxu0
  %v1093 = vadd.f32 0.0, %v1092
  %v1094 = vpop.f32.mrf.mxu0
  %1095 = vmatprep.mubr.bf16.mxu0 %v604
  %1096 = vmatmul.mubr.bf16.gmra.mxu0 %v603
  %v1097 = vpop.f32.mrf.mxu0
  %v1098 = vadd.f32 0.0, %v1097
  %v1099 = vpop.f32.mrf.mxu0
  %v1100 = vpop.f32.mrf.mxu0
  %v1101 = vadd.f32 0.0, %v1100
  %v1102 = vpop.f32.mrf.mxu0
  %1103 = vmatprep.mubr.bf16.mxu0 %v608
  %1104 = vmatmul.mubr.bf16.gmra.mxu0 %v607
  %v1105 = vpop.f32.mrf.mxu0
  %v1106 = vadd.f32 0.0, %v1105
  %v1107 = vpop.f32.mrf.mxu0
  %v1108 = vpop.f32.mrf.mxu0
  %v1109 = vadd.f32 0.0, %v1108
  %v1110 = vpop.f32.mrf.mxu0
  %1111 = vmatprep.mubr.bf16.mxu0 %v612
  %1112 = vmatmul.mubr.bf16.gmra.mxu0 %v611
  %v1113 = vpop.f32.mrf.mxu0
  %v1114 = vadd.f32 0.0, %v1113
  %v1115 = vpop.f32.mrf.mxu0
  %v1116 = vpop.f32.mrf.mxu0
  %v1117 = vadd.f32 0.0, %v1116
  %v1118 = vpop.f32.mrf.mxu0
  %1119 = vmatprep.mubr.bf16.mxu0 %v616
  %1120 = vmatmul.mubr.bf16.gmra.mxu0 %v615
  %v1121 = vpop.f32.mrf.mxu0
  %v1122 = vadd.f32 0.0, %v1121
  %v1123 = vpop.f32.mrf.mxu0
  %v1124 = vpop.f32.mrf.mxu0
  %v1125 = vadd.f32 0.0, %v1124
  %v1126 = vpop.f32.mrf.mxu0
  %1127 = vmatprep.mubr.bf16.mxu0 %v620
  %1128 = vmatmul.mubr.bf16.gmra.mxu0 %v619
  %v1129 = vpop.f32.mrf.mxu0
  %v1130 = vadd.f32 0.0, %v1129
  %v1131 = vpop.f32.mrf.mxu0
  %v1132 = vpop.f32.mrf.mxu0
  %v1133 = vadd.f32 0.0, %v1132
  %v1134 = vpop.f32.mrf.mxu0
  %1135 = vmatprep.mubr.bf16.mxu0 %v624
  %1136 = vmatmul.mubr.bf16.gmra.mxu0 %v623
  %v1137 = vpop.f32.mrf.mxu0
  %v1138 = vadd.f32 0.0, %v1137
  %v1139 = vpop.f32.mrf.mxu0
  %v1140 = vpop.f32.mrf.mxu0
  %v1141 = vadd.f32 0.0, %v1140
  %v1142 = vpop.f32.mrf.mxu0
  %1143 = vmatprep.mubr.bf16.mxu0 %v628
  %1144 = vmatmul.mubr.bf16.gmra.mxu0 %v627
  %v1145 = vpop.f32.mrf.mxu0
  %v1146 = vadd.f32 0.0, %v1145
  %v1147 = vpop.f32.mrf.mxu0
  %v1148 = vpop.f32.mrf.mxu0
  %v1149 = vadd.f32 0.0, %v1148
  %v1150 = vpop.f32.mrf.mxu0
  %1151 = vmatprep.mubr.bf16.mxu0 %v632
  %1152 = vmatmul.mubr.bf16.gmra.mxu0 %v631
  %v1153 = vpop.f32.mrf.mxu0
  %v1154 = vadd.f32 0.0, %v1153
  %v1155 = vpop.f32.mrf.mxu0
  %v1156 = vpop.f32.mrf.mxu0
  %v1157 = vadd.f32 0.0, %v1156
  %v1158 = vpop.f32.mrf.mxu0
  %1159 = vmatprep.mubr.bf16.mxu0 %v636
  %1160 = vmatmul.mubr.bf16.gmra.mxu0 %v635
  %v1161 = vpop.f32.mrf.mxu0
  %v1162 = vadd.f32 0.0, %v1161
  %v1163 = vpop.f32.mrf.mxu0
  %v1164 = vpop.f32.mrf.mxu0
  %v1165 = vadd.f32 0.0, %v1164
  %v1166 = vpop.f32.mrf.mxu0
  %1167 = vmatprep.mubr.bf16.mxu0 %v640
  %1168 = vmatmul.mubr.bf16.gmra.mxu0 %v639
  %v1169 = vpop.f32.mrf.mxu0
  %v1170 = vadd.f32 0.0, %v1169
  %v1171 = vpop.f32.mrf.mxu0
  %v1172 = vpop.f32.mrf.mxu0
  %v1173 = vadd.f32 0.0, %v1172
  %v1174 = vpop.f32.mrf.mxu0
  %1175 = vmatprep.mubr.bf16.mxu0 %v644
  %1176 = vmatmul.mubr.bf16.gmra.mxu0 %v643
  %v1177 = vpop.f32.mrf.mxu0
  %v1178 = vadd.f32 0.0, %v1177
  %v1179 = vpop.f32.mrf.mxu0
  %v1180 = vpop.f32.mrf.mxu0
  %v1181 = vadd.f32 0.0, %v1180
  %v1182 = vpop.f32.mrf.mxu0
  %1183 = vmatprep.mubr.bf16.mxu0 %v648
  %1184 = vmatmul.mubr.bf16.gmra.mxu0 %v647
  %v1185 = vpop.f32.mrf.mxu0
  %v1186 = vadd.f32 0.0, %v1185
  %v1187 = vpop.f32.mrf.mxu0
  %v1188 = vpop.f32.mrf.mxu0
  %v1189 = vadd.f32 0.0, %v1188
  %v1190 = vpop.f32.mrf.mxu0
  %1191 = vmatprep.mubr.bf16.mxu0 %v652
  %1192 = vmatmul.mubr.bf16.gmra.mxu0 %v651
  %v1193 = vpop.f32.mrf.mxu0
  %v1194 = vadd.f32 0.0, %v1193
  %v1195 = vpop.f32.mrf.mxu0
  %v1196 = vpop.f32.mrf.mxu0
  %v1197 = vadd.f32 0.0, %v1196
  %v1198 = vpop.f32.mrf.mxu0
  %1199 = vmatprep.mubr.bf16.mxu0 %v656
  %1200 = vmatmul.mubr.bf16.gmra.mxu0 %v655
  %v1201 = vpop.f32.mrf.mxu0
  %v1202 = vadd.f32 0.0, %v1201
  %v1203 = vpop.f32.mrf.mxu0
  %v1204 = vpop.f32.mrf.mxu0
  %v1205 = vadd.f32 0.0, %v1204
  %v1206 = vpop.f32.mrf.mxu0
  %1207 = vmatprep.mubr.bf16.mxu0 %v660
  %1208 = vmatmul.mubr.bf16.gmra.mxu0 %v659
  %v1209 = vpop.f32.mrf.mxu0
  %v1210 = vadd.f32 0.0, %v1209
  %v1211 = vpop.f32.mrf.mxu0
  %v1212 = vpop.f32.mrf.mxu0
  %v1213 = vadd.f32 0.0, %v1212
  %v1214 = vpop.f32.mrf.mxu0
  %1215 = vmatprep.mubr.bf16.mxu0 %v664
  %1216 = vmatmul.mubr.bf16.gmra.mxu0 %v663
  %v1217 = vpop.f32.mrf.mxu0
  %v1218 = vadd.f32 0.0, %v1217
  %v1219 = vpop.f32.mrf.mxu0
  %v1220 = vpop.f32.mrf.mxu0
  %v1221 = vadd.f32 0.0, %v1220
  %v1222 = vpop.f32.mrf.mxu0
  %1223 = vmatprep.mubr.bf16.mxu0 %v668
  %1224 = vmatmul.mubr.bf16.gmra.mxu0 %v667
  %v1225 = vpop.f32.mrf.mxu0
  %v1226 = vadd.f32 0.0, %v1225
  %v1227 = vpop.f32.mrf.mxu0
  %v1228 = vpop.f32.mrf.mxu0
  %v1229 = vadd.f32 0.0, %v1228
  %v1230 = vpop.f32.mrf.mxu0
  %1231 = vmatprep.mubr.bf16.mxu0 %v672
  %1232 = vmatmul.mubr.bf16.gmra.mxu0 %v671
  %v1233 = vpop.f32.mrf.mxu0
  %v1234 = vadd.f32 0.0, %v1233
  %v1235 = vpop.f32.mrf.mxu0
  %v1236 = vpop.f32.mrf.mxu0
  %v1237 = vadd.f32 0.0, %v1236
  %v1238 = vpop.f32.mrf.mxu0
  %1239 = vmatprep.mubr.bf16.mxu0 %v676
  %1240 = vmatmul.mubr.bf16.gmra.mxu0 %v675
  %v1241 = vpop.f32.mrf.mxu0
  %v1242 = vadd.f32 0.0, %v1241
  %v1243 = vpop.f32.mrf.mxu0
  %v1244 = vpop.f32.mrf.mxu0
  %v1245 = vadd.f32 0.0, %v1244
  %v1246 = vpop.f32.mrf.mxu0
  %1247 = vmatprep.mubr.bf16.mxu0 %v680
  %1248 = vmatmul.mubr.bf16.gmra.mxu0 %v679
  %v1249 = vpop.f32.mrf.mxu0
  %v1250 = vadd.f32 0.0, %v1249
  %v1251 = vpop.f32.mrf.mxu0
  %v1252 = vpop.f32.mrf.mxu0
  %v1253 = vadd.f32 0.0, %v1252
  %v1254 = vpop.f32.mrf.mxu0
  %1255 = vmatprep.mubr.bf16.mxu0 %v684
  %1256 = vmatmul.mubr.bf16.gmra.mxu0 %v683
  %v1257 = vpop.f32.mrf.mxu0
  %v1258 = vadd.f32 0.0, %v1257
  %v1259 = vpop.f32.mrf.mxu0
  %v1260 = vpop.f32.mrf.mxu0
  %v1261 = vadd.f32 0.0, %v1260
  %v1262 = vpop.f32.mrf.mxu0
  %1263 = vmatprep.mubr.bf16.mxu0 %v688
  %1264 = vmatmul.mubr.bf16.gmra.mxu0 %v687
  %v1265 = vpop.f32.mrf.mxu0
  %v1266 = vadd.f32 0.0, %v1265
  %v1267 = vpop.f32.mrf.mxu0
  %v1268 = vpop.f32.mrf.mxu0
  %v1269 = vadd.f32 0.0, %v1268
  %v1270 = vpop.f32.mrf.mxu0
  %1271 = vmatprep.mubr.bf16.mxu0 %v692
  %1272 = vmatmul.mubr.bf16.gmra.mxu0 %v691
  %v1273 = vpop.f32.mrf.mxu0
  %v1274 = vadd.f32 0.0, %v1273
  %v1275 = vpop.f32.mrf.mxu0
  %v1276 = vpop.f32.mrf.mxu0
  %v1277 = vadd.f32 0.0, %v1276
  %v1278 = vpop.f32.mrf.mxu0
  %1279 = vmatprep.mubr.bf16.mxu0 %v696
  %1280 = vmatmul.mubr.bf16.gmra.mxu0 %v695
  %v1281 = vpop.f32.mrf.mxu0
  %v1282 = vadd.f32 0.0, %v1281
  %v1283 = vpop.f32.mrf.mxu0
  %v1284 = vpop.f32.mrf.mxu0
  %v1285 = vadd.f32 0.0, %v1284
  %v1286 = vpop.f32.mrf.mxu0
  %1287 = vmatprep.mubr.bf16.mxu0 %v700
  %1288 = vmatmul.mubr.bf16.gmra.mxu0 %v699
  %v1289 = vpop.f32.mrf.mxu0
  %v1290 = vadd.f32 0.0, %v1289
  %v1291 = vpop.f32.mrf.mxu0
  %v1292 = vpop.f32.mrf.mxu0
  %v1293 = vadd.f32 0.0, %v1292
  %v1294 = vpop.f32.mrf.mxu0
  %1295 = vmatprep.mubr.bf16.mxu0 %v704
  %1296 = vmatmul.mubr.bf16.gmra.mxu0 %v703
  %v1297 = vpop.f32.mrf.mxu0
  %v1298 = vadd.f32 0.0, %v1297
  %v1299 = vpop.f32.mrf.mxu0
  %v1300 = vpop.f32.mrf.mxu0
  %v1301 = vadd.f32 0.0, %v1300
  %v1302 = vpop.f32.mrf.mxu0
  %1303 = vmatprep.mubr.bf16.mxu0 %v708
  %1304 = vmatmul.mubr.bf16.gmra.mxu0 %v707
  %v1305 = vpop.f32.mrf.mxu0
  %v1306 = vadd.f32 0.0, %v1305
  %v1307 = vpop.f32.mrf.mxu0
  %v1308 = vpop.f32.mrf.mxu0
  %v1309 = vadd.f32 0.0, %v1308
  %v1310 = vpop.f32.mrf.mxu0
  %1311 = vmatprep.mubr.bf16.mxu0 %v712
  %1312 = vmatmul.mubr.bf16.gmra.mxu0 %v711
  %v1313 = vpop.f32.mrf.mxu0
  %v1314 = vadd.f32 0.0, %v1313
  %v1315 = vpop.f32.mrf.mxu0
  %v1316 = vpop.f32.mrf.mxu0
  %v1317 = vadd.f32 0.0, %v1316
  %v1318 = vpop.f32.mrf.mxu0
  %1319 = vmatprep.mubr.bf16.mxu0 %v716
  %1320 = vmatmul.mubr.bf16.gmra.mxu0 %v715
  %v1321 = vpop.f32.mrf.mxu0
  %v1322 = vadd.f32 0.0, %v1321
  %v1323 = vpop.f32.mrf.mxu0
  %v1324 = vpop.f32.mrf.mxu0
  %v1325 = vadd.f32 0.0, %v1324
  %v1326 = vpop.f32.mrf.mxu0
  %1327 = vdwg.mxu0
  %1328 = vmatprep.subr.bf16.mxu0 0
  %1329 = vmatpush1.bf16.msra.mxu0 %v998
  %1330 = vmatprep.subr.bf16.mxu0 0
  %1331 = vmatpush1.bf16.msra.mxu0 %v997
  %1332 = vmatprep.subr.bf16.mxu0 0
  %1333 = vmatpush1.bf16.msra.mxu0 %v996
  %1334 = vmatprep.subr.bf16.mxu0 0
  %1335 = vmatpush1.bf16.msra.mxu0 %v995
  %1336 = vmatprep.subr.bf16.mxu0 0
  %1337 = vmatpush1.bf16.msra.mxu0 %v994
  %1338 = vmatprep.subr.bf16.mxu0 0
  %1339 = vmatpush1.bf16.msra.mxu0 %v993
  %1340 = vmatprep.subr.bf16.mxu0 0
  %1341 = vmatpush1.bf16.msra.mxu0 %v992
  %1342 = vmatprep.subr.bf16.mxu0 0
  %1343 = vmatpush1.bf16.msra.mxu0 %v991
  %1344 = vmatprep.subr.bf16.mxu0 0
  %1345 = vmatpush2.bf16.msra.mxu0 %v1006
  %1346 = vmatprep.subr.bf16.mxu0 0
  %1347 = vmatpush2.bf16.msra.mxu0 %v1005
  %1348 = vmatprep.subr.bf16.mxu0 0
  %1349 = vmatpush2.bf16.msra.mxu0 %v1004
  %1350 = vmatprep.subr.bf16.mxu0 0
  %1351 = vmatpush2.bf16.msra.mxu0 %v1003
  %1352 = vmatprep.subr.bf16.mxu0 0
  %1353 = vmatpush2.bf16.msra.mxu0 %v1002
  %1354 = vmatprep.subr.bf16.mxu0 0
  %1355 = vmatpush2.bf16.msra.mxu0 %v1001
  %1356 = vmatprep.subr.bf16.mxu0 0
  %1357 = vmatpush2.bf16.msra.mxu0 %v1000
  %1358 = vmatprep.subr.bf16.mxu0 0
  %1359 = vmatpush2.bf16.msra.mxu0 %v999
  %1360 = vmatprep.mubr.bf16.mxu0 %v594
  %1361 = vmatmul.mubr.bf16.gmra.mxu0 %v593
  %v1362 = vpop.f32.mrf.mxu0
  %v1363 = vadd.f32 %v1074, %v1362
  %v1364 = vpop.f32.mrf.mxu0
  %v1365 = vpop.f32.mrf.mxu0
  %v1366 = vadd.f32 %v1077, %v1365
  %v1367 = vpop.f32.mrf.mxu0
  %1368 = vmatprep.mubr.bf16.mxu0 %v598
  %1369 = vmatmul.mubr.bf16.gmra.mxu0 %v597
  %v1370 = vpop.f32.mrf.mxu0
  %v1371 = vadd.f32 %v1082, %v1370
  %v1372 = vpop.f32.mrf.mxu0
  %v1373 = vpop.f32.mrf.mxu0
  %v1374 = vadd.f32 %v1085, %v1373
  %v1375 = vpop.f32.mrf.mxu0
  %1376 = vmatprep.mubr.bf16.mxu0 %v602
  %1377 = vmatmul.mubr.bf16.gmra.mxu0 %v601
  %v1378 = vpop.f32.mrf.mxu0
  %v1379 = vadd.f32 %v1090, %v1378
  %v1380 = vpop.f32.mrf.mxu0
  %v1381 = vpop.f32.mrf.mxu0
  %v1382 = vadd.f32 %v1093, %v1381
  %v1383 = vpop.f32.mrf.mxu0
  %1384 = vmatprep.mubr.bf16.mxu0 %v606
  %1385 = vmatmul.mubr.bf16.gmra.mxu0 %v605
  %v1386 = vpop.f32.mrf.mxu0
  %v1387 = vadd.f32 %v1098, %v1386
  %v1388 = vpop.f32.mrf.mxu0
  %v1389 = vpop.f32.mrf.mxu0
  %v1390 = vadd.f32 %v1101, %v1389
  %v1391 = vpop.f32.mrf.mxu0
  %1392 = vmatprep.mubr.bf16.mxu0 %v610
  %1393 = vmatmul.mubr.bf16.gmra.mxu0 %v609
  %v1394 = vpop.f32.mrf.mxu0
  %v1395 = vadd.f32 %v1106, %v1394
  %v1396 = vpop.f32.mrf.mxu0
  %v1397 = vpop.f32.mrf.mxu0
  %v1398 = vadd.f32 %v1109, %v1397
  %v1399 = vpop.f32.mrf.mxu0
  %1400 = vmatprep.mubr.bf16.mxu0 %v614
  %1401 = vmatmul.mubr.bf16.gmra.mxu0 %v613
  %v1402 = vpop.f32.mrf.mxu0
  %v1403 = vadd.f32 %v1114, %v1402
  %v1404 = vpop.f32.mrf.mxu0
  %v1405 = vpop.f32.mrf.mxu0
  %v1406 = vadd.f32 %v1117, %v1405
  %v1407 = vpop.f32.mrf.mxu0
  %1408 = vmatprep.mubr.bf16.mxu0 %v618
  %1409 = vmatmul.mubr.bf16.gmra.mxu0 %v617
  %v1410 = vpop.f32.mrf.mxu0
  %v1411 = vadd.f32 %v1122, %v1410
  %v1412 = vpop.f32.mrf.mxu0
  %v1413 = vpop.f32.mrf.mxu0
  %v1414 = vadd.f32 %v1125, %v1413
  %v1415 = vpop.f32.mrf.mxu0
  %1416 = vmatprep.mubr.bf16.mxu0 %v622
  %1417 = vmatmul.mubr.bf16.gmra.mxu0 %v621
  %v1418 = vpop.f32.mrf.mxu0
  %v1419 = vadd.f32 %v1130, %v1418
  %v1420 = vpop.f32.mrf.mxu0
  %v1421 = vpop.f32.mrf.mxu0
  %v1422 = vadd.f32 %v1133, %v1421
  %v1423 = vpop.f32.mrf.mxu0
  %1424 = vmatprep.mubr.bf16.mxu0 %v626
  %1425 = vmatmul.mubr.bf16.gmra.mxu0 %v625
  %v1426 = vpop.f32.mrf.mxu0
  %v1427 = vadd.f32 %v1138, %v1426
  %v1428 = vpop.f32.mrf.mxu0
  %v1429 = vpop.f32.mrf.mxu0
  %v1430 = vadd.f32 %v1141, %v1429
  %v1431 = vpop.f32.mrf.mxu0
  %1432 = vmatprep.mubr.bf16.mxu0 %v630
  %1433 = vmatmul.mubr.bf16.gmra.mxu0 %v629
  %v1434 = vpop.f32.mrf.mxu0
  %v1435 = vadd.f32 %v1146, %v1434
  %v1436 = vpop.f32.mrf.mxu0
  %v1437 = vpop.f32.mrf.mxu0
  %v1438 = vadd.f32 %v1149, %v1437
  %v1439 = vpop.f32.mrf.mxu0
  %1440 = vmatprep.mubr.bf16.mxu0 %v634
  %1441 = vmatmul.mubr.bf16.gmra.mxu0 %v633
  %v1442 = vpop.f32.mrf.mxu0
  %v1443 = vadd.f32 %v1154, %v1442
  %v1444 = vpop.f32.mrf.mxu0
  %v1445 = vpop.f32.mrf.mxu0
  %v1446 = vadd.f32 %v1157, %v1445
  %v1447 = vpop.f32.mrf.mxu0
  %1448 = vmatprep.mubr.bf16.mxu0 %v638
  %1449 = vmatmul.mubr.bf16.gmra.mxu0 %v637
  %v1450 = vpop.f32.mrf.mxu0
  %v1451 = vadd.f32 %v1162, %v1450
  %v1452 = vpop.f32.mrf.mxu0
  %v1453 = vpop.f32.mrf.mxu0
  %v1454 = vadd.f32 %v1165, %v1453
  %v1455 = vpop.f32.mrf.mxu0
  %1456 = vmatprep.mubr.bf16.mxu0 %v642
  %1457 = vmatmul.mubr.bf16.gmra.mxu0 %v641
  %v1458 = vpop.f32.mrf.mxu0
  %v1459 = vadd.f32 %v1170, %v1458
  %v1460 = vpop.f32.mrf.mxu0
  %v1461 = vpop.f32.mrf.mxu0
  %v1462 = vadd.f32 %v1173, %v1461
  %v1463 = vpop.f32.mrf.mxu0
  %1464 = vmatprep.mubr.bf16.mxu0 %v646
  %1465 = vmatmul.mubr.bf16.gmra.mxu0 %v645
  %v1466 = vpop.f32.mrf.mxu0
  %v1467 = vadd.f32 %v1178, %v1466
  %v1468 = vpop.f32.mrf.mxu0
  %v1469 = vpop.f32.mrf.mxu0
  %v1470 = vadd.f32 %v1181, %v1469
  %v1471 = vpop.f32.mrf.mxu0
  %1472 = vmatprep.mubr.bf16.mxu0 %v650
  %1473 = vmatmul.mubr.bf16.gmra.mxu0 %v649
  %v1474 = vpop.f32.mrf.mxu0
  %v1475 = vadd.f32 %v1186, %v1474
  %v1476 = vpop.f32.mrf.mxu0
  %v1477 = vpop.f32.mrf.mxu0
  %v1478 = vadd.f32 %v1189, %v1477
  %v1479 = vpop.f32.mrf.mxu0
  %1480 = vmatprep.mubr.bf16.mxu0 %v654
  %1481 = vmatmul.mubr.bf16.gmra.mxu0 %v653
  %v1482 = vpop.f32.mrf.mxu0
  %v1483 = vadd.f32 %v1194, %v1482
  %v1484 = vpop.f32.mrf.mxu0
  %v1485 = vpop.f32.mrf.mxu0
  %v1486 = vadd.f32 %v1197, %v1485
  %v1487 = vpop.f32.mrf.mxu0
  %1488 = vmatprep.mubr.bf16.mxu0 %v658
  %1489 = vmatmul.mubr.bf16.gmra.mxu0 %v657
  %v1490 = vpop.f32.mrf.mxu0
  %v1491 = vadd.f32 %v1202, %v1490
  %v1492 = vpop.f32.mrf.mxu0
  %v1493 = vpop.f32.mrf.mxu0
  %v1494 = vadd.f32 %v1205, %v1493
  %v1495 = vpop.f32.mrf.mxu0
  %1496 = vmatprep.mubr.bf16.mxu0 %v662
  %1497 = vmatmul.mubr.bf16.gmra.mxu0 %v661
  %v1498 = vpop.f32.mrf.mxu0
  %v1499 = vadd.f32 %v1210, %v1498
  %v1500 = vpop.f32.mrf.mxu0
  %v1501 = vpop.f32.mrf.mxu0
  %v1502 = vadd.f32 %v1213, %v1501
  %v1503 = vpop.f32.mrf.mxu0
  %1504 = vmatprep.mubr.bf16.mxu0 %v666
  %1505 = vmatmul.mubr.bf16.gmra.mxu0 %v665
  %v1506 = vpop.f32.mrf.mxu0
  %v1507 = vadd.f32 %v1218, %v1506
  %v1508 = vpop.f32.mrf.mxu0
  %v1509 = vpop.f32.mrf.mxu0
  %v1510 = vadd.f32 %v1221, %v1509
  %v1511 = vpop.f32.mrf.mxu0
  %1512 = vmatprep.mubr.bf16.mxu0 %v670
  %1513 = vmatmul.mubr.bf16.gmra.mxu0 %v669
  %v1514 = vpop.f32.mrf.mxu0
  %v1515 = vadd.f32 %v1226, %v1514
  %v1516 = vpop.f32.mrf.mxu0
  %v1517 = vpop.f32.mrf.mxu0
  %v1518 = vadd.f32 %v1229, %v1517
  %v1519 = vpop.f32.mrf.mxu0
  %1520 = vmatprep.mubr.bf16.mxu0 %v674
  %1521 = vmatmul.mubr.bf16.gmra.mxu0 %v673
  %v1522 = vpop.f32.mrf.mxu0
  %v1523 = vadd.f32 %v1234, %v1522
  %v1524 = vpop.f32.mrf.mxu0
  %v1525 = vpop.f32.mrf.mxu0
  %v1526 = vadd.f32 %v1237, %v1525
  %v1527 = vpop.f32.mrf.mxu0
  %1528 = vmatprep.mubr.bf16.mxu0 %v678
  %1529 = vmatmul.mubr.bf16.gmra.mxu0 %v677
  %v1530 = vpop.f32.mrf.mxu0
  %v1531 = vadd.f32 %v1242, %v1530
  %v1532 = vpop.f32.mrf.mxu0
  %v1533 = vpop.f32.mrf.mxu0
  %v1534 = vadd.f32 %v1245, %v1533
  %v1535 = vpop.f32.mrf.mxu0
  %1536 = vmatprep.mubr.bf16.mxu0 %v682
  %1537 = vmatmul.mubr.bf16.gmra.mxu0 %v681
  %v1538 = vpop.f32.mrf.mxu0
  %v1539 = vadd.f32 %v1250, %v1538
  %v1540 = vpop.f32.mrf.mxu0
  %v1541 = vpop.f32.mrf.mxu0
  %v1542 = vadd.f32 %v1253, %v1541
  %v1543 = vpop.f32.mrf.mxu0
  %1544 = vmatprep.mubr.bf16.mxu0 %v686
  %1545 = vmatmul.mubr.bf16.gmra.mxu0 %v685
  %v1546 = vpop.f32.mrf.mxu0
  %v1547 = vadd.f32 %v1258, %v1546
  %v1548 = vpop.f32.mrf.mxu0
  %v1549 = vpop.f32.mrf.mxu0
  %v1550 = vadd.f32 %v1261, %v1549
  %v1551 = vpop.f32.mrf.mxu0
  %1552 = vmatprep.mubr.bf16.mxu0 %v690
  %1553 = vmatmul.mubr.bf16.gmra.mxu0 %v689
  %v1554 = vpop.f32.mrf.mxu0
  %v1555 = vadd.f32 %v1266, %v1554
  %v1556 = vpop.f32.mrf.mxu0
  %v1557 = vpop.f32.mrf.mxu0
  %v1558 = vadd.f32 %v1269, %v1557
  %v1559 = vpop.f32.mrf.mxu0
  %1560 = vmatprep.mubr.bf16.mxu0 %v694
  %1561 = vmatmul.mubr.bf16.gmra.mxu0 %v693
  %v1562 = vpop.f32.mrf.mxu0
  %v1563 = vadd.f32 %v1274, %v1562
  %v1564 = vpop.f32.mrf.mxu0
  %v1565 = vpop.f32.mrf.mxu0
  %v1566 = vadd.f32 %v1277, %v1565
  %v1567 = vpop.f32.mrf.mxu0
  %1568 = vmatprep.mubr.bf16.mxu0 %v698
  %1569 = vmatmul.mubr.bf16.gmra.mxu0 %v697
  %v1570 = vpop.f32.mrf.mxu0
  %v1571 = vadd.f32 %v1282, %v1570
  %v1572 = vpop.f32.mrf.mxu0
  %v1573 = vpop.f32.mrf.mxu0
  %v1574 = vadd.f32 %v1285, %v1573
  %v1575 = vpop.f32.mrf.mxu0
  %1576 = vmatprep.mubr.bf16.mxu0 %v702
  %1577 = vmatmul.mubr.bf16.gmra.mxu0 %v701
  %v1578 = vpop.f32.mrf.mxu0
  %v1579 = vadd.f32 %v1290, %v1578
  %v1580 = vpop.f32.mrf.mxu0
  %v1581 = vpop.f32.mrf.mxu0
  %v1582 = vadd.f32 %v1293, %v1581
  %v1583 = vpop.f32.mrf.mxu0
  %1584 = vmatprep.mubr.bf16.mxu0 %v706
  %1585 = vmatmul.mubr.bf16.gmra.mxu0 %v705
  %v1586 = vpop.f32.mrf.mxu0
  %v1587 = vadd.f32 %v1298, %v1586
  %v1588 = vpop.f32.mrf.mxu0
  %v1589 = vpop.f32.mrf.mxu0
  %v1590 = vadd.f32 %v1301, %v1589
  %v1591 = vpop.f32.mrf.mxu0
  %1592 = vmatprep.mubr.bf16.mxu0 %v710
  %1593 = vmatmul.mubr.bf16.gmra.mxu0 %v709
  %v1594 = vpop.f32.mrf.mxu0
  %v1595 = vadd.f32 %v1306, %v1594
  %v1596 = vpop.f32.mrf.mxu0
  %v1597 = vpop.f32.mrf.mxu0
  %v1598 = vadd.f32 %v1309, %v1597
  %v1599 = vpop.f32.mrf.mxu0
  %1600 = vmatprep.mubr.bf16.mxu0 %v714
  %1601 = vmatmul.mubr.bf16.gmra.mxu0 %v713
  %v1602 = vpop.f32.mrf.mxu0
  %v1603 = vadd.f32 %v1314, %v1602
  %v1604 = vpop.f32.mrf.mxu0
  %v1605 = vpop.f32.mrf.mxu0
  %v1606 = vadd.f32 %v1317, %v1605
  %v1607 = vpop.f32.mrf.mxu0
  %1608 = vmatprep.mubr.bf16.mxu0 %v718
  %1609 = vmatmul.mubr.bf16.gmra.mxu0 %v717
  %v1610 = vpop.f32.mrf.mxu0
  %v1611 = vadd.f32 %v1322, %v1610
  %v1612 = vpop.f32.mrf.mxu0
  %v1613 = vpop.f32.mrf.mxu0
  %v1614 = vadd.f32 %v1325, %v1613
  %v1615 = vpop.f32.mrf.mxu0
  %1616 = vdwg.mxu0
  %1617 = vst [vmem:[%s2] sm:$0xff] %v1363
  %1618 = vst [vmem:[%s2 + $0x8] sm:$0xff] %v1366
  %1619 = vst [vmem:[%s2 + $0x10] sm:$0xff] %v1371
  %1620 = vst [vmem:[%s2 + $0x18] sm:$0xff] %v1374
  %1621 = vst [vmem:[%s2 + $0x20] sm:$0xff] %v1379
  %1622 = vst [vmem:[%s2 + $0x28] sm:$0xff] %v1382
  %1623 = vst [vmem:[%s2 + $0x30] sm:$0xff] %v1387
  %1624 = vst [vmem:[%s2 + $0x38] sm:$0xff] %v1390
  %1625 = vst [vmem:[%s2 + $0x40] sm:$0xff] %v1395
  %1626 = vst [vmem:[%s2 + $0x48] sm:$0xff] %v1398
  %1627 = vst [vmem:[%s2 + $0x50] sm:$0xff] %v1403
  %1628 = vst [vmem:[%s2 + $0x58] sm:$0xff] %v1406
  %1629 = vst [vmem:[%s2 + $0x60] sm:$0xff] %v1411
  %1630 = vst [vmem:[%s2 + $0x68] sm:$0xff] %v1414
  %1631 = vst [vmem:[%s2 + $0x70] sm:$0xff] %v1419
  %1632 = vst [vmem:[%s2 + $0x78] sm:$0xff] %v1422
  %1633 = vst [vmem:[%s2 + $0x80] sm:$0xff] %v1427
  %1634 = vst [vmem:[%s2 + $0x88] sm:$0xff] %v1430
  %1635 = vst [vmem:[%s2 + $0x90] sm:$0xff] %v1435
  %1636 = vst [vmem:[%s2 + $0x98] sm:$0xff] %v1438
  %1637 = vst [vmem:[%s2 + $0xa0] sm:$0xff] %v1443
  %1638 = vst [vmem:[%s2 + $0xa8] sm:$0xff] %v1446
  %1639 = vst [vmem:[%s2 + $0xb0] sm:$0xff] %v1451
  %1640 = vst [vmem:[%s2 + $0xb8] sm:$0xff] %v1454
  %1641 = vst [vmem:[%s2 + $0xc0] sm:$0xff] %v1459
  %1642 = vst [vmem:[%s2 + $0xc8] sm:$0xff] %v1462
  %1643 = vst [vmem:[%s2 + $0xd0] sm:$0xff] %v1467
  %1644 = vst [vmem:[%s2 + $0xd8] sm:$0xff] %v1470
  %1645 = vst [vmem:[%s2 + $0xe0] sm:$0xff] %v1475
  %1646 = vst [vmem:[%s2 + $0xe8] sm:$0xff] %v1478
  %1647 = vst [vmem:[%s2 + $0xf0] sm:$0xff] %v1483
  %1648 = vst [vmem:[%s2 + $0xf8] sm:$0xff] %v1486
  %1649 = vst [vmem:[%s2 + $0x100] sm:$0xff] %v1491
  %1650 = vst [vmem:[%s2 + $0x108] sm:$0xff] %v1494
  %1651 = vst [vmem:[%s2 + $0x110] sm:$0xff] %v1499
  %1652 = vst [vmem:[%s2 + $0x118] sm:$0xff] %v1502
  %1653 = vst [vmem:[%s2 + $0x120] sm:$0xff] %v1507
  %1654 = vst [vmem:[%s2 + $0x128] sm:$0xff] %v1510
  %1655 = vst [vmem:[%s2 + $0x130] sm:$0xff] %v1515
  %1656 = vst [vmem:[%s2 + $0x138] sm:$0xff] %v1518
  %1657 = vst [vmem:[%s2 + $0x140] sm:$0xff] %v1523
  %1658 = vst [vmem:[%s2 + $0x148] sm:$0xff] %v1526
  %1659 = vst [vmem:[%s2 + $0x150] sm:$0xff] %v1531
  %1660 = vst [vmem:[%s2 + $0x158] sm:$0xff] %v1534
  %1661 = vst [vmem:[%s2 + $0x160] sm:$0xff] %v1539
  %1662 = vst [vmem:[%s2 + $0x168] sm:$0xff] %v1542
  %1663 = vst [vmem:[%s2 + $0x170] sm:$0xff] %v1547
  %1664 = vst [vmem:[%s2 + $0x178] sm:$0xff] %v1550
  %1665 = vst [vmem:[%s2 + $0x180] sm:$0xff] %v1555
  %1666 = vst [vmem:[%s2 + $0x188] sm:$0xff] %v1558
  %1667 = vst [vmem:[%s2 + $0x190] sm:$0xff] %v1563
  %1668 = vst [vmem:[%s2 + $0x198] sm:$0xff] %v1566
  %1669 = vst [vmem:[%s2 + $0x1a0] sm:$0xff] %v1571
  %1670 = vst [vmem:[%s2 + $0x1a8] sm:$0xff] %v1574
  %1671 = vst [vmem:[%s2 + $0x1b0] sm:$0xff] %v1579
  %1672 = vst [vmem:[%s2 + $0x1b8] sm:$0xff] %v1582
  %1673 = vst [vmem:[%s2 + $0x1c0] sm:$0xff] %v1587
  %1674 = vst [vmem:[%s2 + $0x1c8] sm:$0xff] %v1590
  %1675 = vst [vmem:[%s2 + $0x1d0] sm:$0xff] %v1595
  %1676 = vst [vmem:[%s2 + $0x1d8] sm:$0xff] %v1598
  %1677 = vst [vmem:[%s2 + $0x1e0] sm:$0xff] %v1603
  %1678 = vst [vmem:[%s2 + $0x1e8] sm:$0xff] %v1606
  %1679 = vst [vmem:[%s2 + $0x1f0] sm:$0xff] %v1611
  %1680 = vst [vmem:[%s2 + $0x1f8] sm:$0xff] %v1614
  %p1681 = scmp.eq.s32.totalorder 0, 0
  // Predicated region
  $region10: #{resnet_forward.33} parent=0 // pred_check
    %p1682 = pneg %p1681
  $region11: #{resnet_forward.33} parent=0 // pred_check_branch
    %1684 = sbr.rel (%p1682) target = $region13
  $region12: #{resnet_forward.33} parent=0 // pred_region
    %1685 = vst [vmem:[#allocation2] sm:$0x1] 0.0
    %1686 = vst [vmem:[#allocation3] sm:$0x1] 0.0
  $region13: #{resnet_forward.33} parent=0 // pred_fallthru
    _
  %v1687 = vld [vmem:[#allocation2] sm:$0x1]
  %v1688 = vadd.f32 %v1363, %v1366
  %v1689 = vadd.f32 %v1688, %v1371
  %v1690 = vadd.f32 %v1689, %v1374
  %v1691 = vadd.f32 %v1690, %v1379
  %v1692 = vadd.f32 %v1691, %v1382
  %v1693 = vadd.f32 %v1692, %v1387
  %v1694 = vadd.f32 %v1693, %v1390
  %v1695 = vadd.f32 %v1694, %v1395
  %v1696 = vadd.f32 %v1695, %v1398
  %v1697 = vadd.f32 %v1696, %v1403
  %v1698 = vadd.f32 %v1697, %v1406
  %v1699 = vadd.f32 %v1698, %v1411
  %v1700 = vadd.f32 %v1699, %v1414
  %v1701 = vadd.f32 %v1700, %v1419
  %v1702 = vadd.f32 %v1701, %v1422
  %v1703 = vadd.f32 %v1702, %v1427
  %v1704 = vadd.f32 %v1703, %v1430
  %v1705 = vadd.f32 %v1704, %v1435
  %v1706 = vadd.f32 %v1705, %v1438
  %v1707 = vadd.f32 %v1706, %v1443
  %v1708 = vadd.f32 %v1707, %v1446
  %v1709 = vadd.f32 %v1708, %v1451
  %v1710 = vadd.f32 %v1709, %v1454
  %v1711 = vadd.f32 %v1710, %v1459
  %v1712 = vadd.f32 %v1711, %v1462
  %v1713 = vadd.f32 %v1712, %v1467
  %v1714 = vadd.f32 %v1713, %v1470
  %v1715 = vadd.f32 %v1714, %v1475
  %v1716 = vadd.f32 %v1715, %v1478
  %v1717 = vadd.f32 %v1716, %v1483
  %v1718 = vadd.f32 %v1717, %v1486
  %v1719 = vadd.f32 %v1718, %v1491
  %v1720 = vadd.f32 %v1719, %v1494
  %v1721 = vadd.f32 %v1720, %v1499
  %v1722 = vadd.f32 %v1721, %v1502
  %v1723 = vadd.f32 %v1722, %v1507
  %v1724 = vadd.f32 %v1723, %v1510
  %v1725 = vadd.f32 %v1724, %v1515
  %v1726 = vadd.f32 %v1725, %v1518
  %v1727 = vadd.f32 %v1726, %v1523
  %v1728 = vadd.f32 %v1727, %v1526
  %v1729 = vadd.f32 %v1728, %v1531
  %v1730 = vadd.f32 %v1729, %v1534
  %v1731 = vadd.f32 %v1730, %v1539
  %v1732 = vadd.f32 %v1731, %v1542
  %v1733 = vadd.f32 %v1732, %v1547
  %v1734 = vadd.f32 %v1733, %v1550
  %v1735 = vadd.f32 %v1734, %v1555
  %v1736 = vadd.f32 %v1735, %v1558
  %v1737 = vadd.f32 %v1736, %v1563
  %v1738 = vadd.f32 %v1737, %v1566
  %v1739 = vadd.f32 %v1738, %v1571
  %v1740 = vadd.f32 %v1739, %v1574
  %v1741 = vadd.f32 %v1740, %v1579
  %v1742 = vadd.f32 %v1741, %v1582
  %v1743 = vadd.f32 %v1742, %v1587
  %v1744 = vadd.f32 %v1743, %v1590
  %v1745 = vadd.f32 %v1744, %v1595
  %v1746 = vadd.f32 %v1745, %v1598
  %v1747 = vadd.f32 %v1746, %v1603
  %v1748 = vadd.f32 %v1747, %v1606
  %v1749 = vadd.f32 %v1748, %v1611
  %v1750 = vadd.f32 %v1749, %v1614
  %v1751 = vrot.slane %v1750, 4
  %v1752 = vadd.f32 %v1750, %v1751
  %v1753 = vrot.slane %v1752, 2
  %v1754 = vadd.f32 %v1752, %v1753
  %v1755 = vrot.slane %v1754, 1
  %v1756 = vadd.f32 %v1754, %v1755
  %v1757 = vadd.f32 %v1687, %v1756
  %1758 = vst [vmem:[#allocation2] sm:$0x1] %v1757
  %v1759 = vld [vmem:[#allocation3] sm:$0x1]
  %v1760 = vmul.f32 %v1363, %v1363
  %v1761 = vmul.f32 %v1366, %v1366
  %v1762 = vmul.f32 %v1371, %v1371
  %v1763 = vmul.f32 %v1374, %v1374
  %v1764 = vmul.f32 %v1379, %v1379
  %v1765 = vmul.f32 %v1382, %v1382
  %v1766 = vmul.f32 %v1387, %v1387
  %v1767 = vmul.f32 %v1390, %v1390
  %v1768 = vmul.f32 %v1395, %v1395
  %v1769 = vmul.f32 %v1398, %v1398
  %v1770 = vmul.f32 %v1403, %v1403
  %v1771 = vmul.f32 %v1406, %v1406
  %v1772 = vmul.f32 %v1411, %v1411
  %v1773 = vmul.f32 %v1414, %v1414
  %v1774 = vmul.f32 %v1419, %v1419
  %v1775 = vmul.f32 %v1422, %v1422
  %v1776 = vmul.f32 %v1427, %v1427
  %v1777 = vmul.f32 %v1430, %v1430
  %v1778 = vmul.f32 %v1435, %v1435
  %v1779 = vmul.f32 %v1438, %v1438
  %v1780 = vmul.f32 %v1443, %v1443
  %v1781 = vmul.f32 %v1446, %v1446
  %v1782 = vmul.f32 %v1451, %v1451
  %v1783 = vmul.f32 %v1454, %v1454
  %v1784 = vmul.f32 %v1459, %v1459
  %v1785 = vmul.f32 %v1462, %v1462
  %v1786 = vmul.f32 %v1467, %v1467
  %v1787 = vmul.f32 %v1470, %v1470
  %v1788 = vmul.f32 %v1475, %v1475
  %v1789 = vmul.f32 %v1478, %v1478
  %v1790 = vmul.f32 %v1483, %v1483
  %v1791 = vmul.f32 %v1486, %v1486
  %v1792 = vmul.f32 %v1491, %v1491
  %v1793 = vmul.f32 %v1494, %v1494
  %v1794 = vmul.f32 %v1499, %v1499
  %v1795 = vmul.f32 %v1502, %v1502
  %v1796 = vmul.f32 %v1507, %v1507
  %v1797 = vmul.f32 %v1510, %v1510
  %v1798 = vmul.f32 %v1515, %v1515
  %v1799 = vmul.f32 %v1518, %v1518
  %v1800 = vmul.f32 %v1523, %v1523
  %v1801 = vmul.f32 %v1526, %v1526
  %v1802 = vmul.f32 %v1531, %v1531
  %v1803 = vmul.f32 %v1534, %v1534
  %v1804 = vmul.f32 %v1539, %v1539
  %v1805 = vmul.f32 %v1542, %v1542
  %v1806 = vmul.f32 %v1547, %v1547
  %v1807 = vmul.f32 %v1550, %v1550
  %v1808 = vmul.f32 %v1555, %v1555
  %v1809 = vmul.f32 %v1558, %v1558
  %v1810 = vmul.f32 %v1563, %v1563
  %v1811 = vmul.f32 %v1566, %v1566
  %v1812 = vmul.f32 %v1571, %v1571
  %v1813 = vmul.f32 %v1574, %v1574
  %v1814 = vmul.f32 %v1579, %v1579
  %v1815 = vmul.f32 %v1582, %v1582
  %v1816 = vmul.f32 %v1587, %v1587
  %v1817 = vmul.f32 %v1590, %v1590
  %v1818 = vmul.f32 %v1595, %v1595
  %v1819 = vmul.f32 %v1598, %v1598
  %v1820 = vmul.f32 %v1603, %v1603
  %v1821 = vmul.f32 %v1606, %v1606
  %v1822 = vmul.f32 %v1611, %v1611
  %v1823 = vmul.f32 %v1614, %v1614
  %v1824 = vadd.f32 %v1760, %v1761
  %v1825 = vadd.f32 %v1824, %v1762
  %v1826 = vadd.f32 %v1825, %v1763
  %v1827 = vadd.f32 %v1826, %v1764
  %v1828 = vadd.f32 %v1827, %v1765
  %v1829 = vadd.f32 %v1828, %v1766
  %v1830 = vadd.f32 %v1829, %v1767
  %v1831 = vadd.f32 %v1830, %v1768
  %v1832 = vadd.f32 %v1831, %v1769
  %v1833 = vadd.f32 %v1832, %v1770
  %v1834 = vadd.f32 %v1833, %v1771
  %v1835 = vadd.f32 %v1834, %v1772
  %v1836 = vadd.f32 %v1835, %v1773
  %v1837 = vadd.f32 %v1836, %v1774
  %v1838 = vadd.f32 %v1837, %v1775
  %v1839 = vadd.f32 %v1838, %v1776
  %v1840 = vadd.f32 %v1839, %v1777
  %v1841 = vadd.f32 %v1840, %v1778
  %v1842 = vadd.f32 %v1841, %v1779
  %v1843 = vadd.f32 %v1842, %v1780
  %v1844 = vadd.f32 %v1843, %v1781
  %v1845 = vadd.f32 %v1844, %v1782
  %v1846 = vadd.f32 %v1845, %v1783
  %v1847 = vadd.f32 %v1846, %v1784
  %v1848 = vadd.f32 %v1847, %v1785
  %v1849 = vadd.f32 %v1848, %v1786
  %v1850 = vadd.f32 %v1849, %v1787
  %v1851 = vadd.f32 %v1850, %v1788
  %v1852 = vadd.f32 %v1851, %v1789
  %v1853 = vadd.f32 %v1852, %v1790
  %v1854 = vadd.f32 %v1853, %v1791
  %v1855 = vadd.f32 %v1854, %v1792
  %v1856 = vadd.f32 %v1855, %v1793
  %v1857 = vadd.f32 %v1856, %v1794
  %v1858 = vadd.f32 %v1857, %v1795
  %v1859 = vadd.f32 %v1858, %v1796
  %v1860 = vadd.f32 %v1859, %v1797
  %v1861 = vadd.f32 %v1860, %v1798
  %v1862 = vadd.f32 %v1861, %v1799
  %v1863 = vadd.f32 %v1862, %v1800
  %v1864 = vadd.f32 %v1863, %v1801
  %v1865 = vadd.f32 %v1864, %v1802
  %v1866 = vadd.f32 %v1865, %v1803
  %v1867 = vadd.f32 %v1866, %v1804
  %v1868 = vadd.f32 %v1867, %v1805
  %v1869 = vadd.f32 %v1868, %v1806
  %v1870 = vadd.f32 %v1869, %v1807
  %v1871 = vadd.f32 %v1870, %v1808
  %v1872 = vadd.f32 %v1871, %v1809
  %v1873 = vadd.f32 %v1872, %v1810
  %v1874 = vadd.f32 %v1873, %v1811
  %v1875 = vadd.f32 %v1874, %v1812
  %v1876 = vadd.f32 %v1875, %v1813
  %v1877 = vadd.f32 %v1876, %v1814
  %v1878 = vadd.f32 %v1877, %v1815
  %v1879 = vadd.f32 %v1878, %v1816
  %v1880 = vadd.f32 %v1879, %v1817
  %v1881 = vadd.f32 %v1880, %v1818
  %v1882 = vadd.f32 %v1881, %v1819
  %v1883 = vadd.f32 %v1882, %v1820
  %v1884 = vadd.f32 %v1883, %v1821
  %v1885 = vadd.f32 %v1884, %v1822
  %v1886 = vadd.f32 %v1885, %v1823
  %v1887 = vrot.slane %v1886, 4
  %v1888 = vadd.f32 %v1886, %v1887
  %v1889 = vrot.slane %v1888, 2
  %v1890 = vadd.f32 %v1888, %v1889
  %v1891 = vrot.slane %v1890, 1
  %v1892 = vadd.f32 %v1890, %v1891
  %v1893 = vadd.f32 %v1759, %v1892
  %1894 = vst [vmem:[#allocation3] sm:$0x1] %v1893
  // Predicated region
  $region14: #{resnet_forward.33} parent=0 // pred_check
    %p1895 = pneg %p1681
  $region15: #{resnet_forward.33} parent=0 // pred_check_branch
    %1897 = sbr.rel (%p1895) target = $region17
  $region16: #{resnet_forward.33} parent=0 // pred_region
    %v1898 = vld [vmem:[#allocation2] sm:$0x1]
    %v1899 = vmul.f32 %v1898, 0.001953125
    %1900 = vst [vmem:[%s3] sm:$0x1] %v1899
    %v1901 = vld [vmem:[#allocation3] sm:$0x1]
    %v1902 = vmul.f32 %v1901, 0.001953125
    %v1903 = vmul.f32 %v1899, %v1899
    %v1904 = vsub.f32 %v1902, %v1903
    %v1905 = vmax.f32 %v1904, 0.0
    %1906 = vst [vmem:[%s4] sm:$0x1] %v1905
  $region17: #{resnet_forward.33} parent=0 // pred_fallthru
    _
  // Predicated region
  $region18: #{resnet_forward.33} parent=0 // pred_check
    _
  $region19: #{resnet_forward.33} parent=0 // pred_check_branch
    %1908 = sbr.rel (0) target = $region21
  $region20: #{resnet_forward.33} parent=0 // pred_region
    _
  $region21: #{resnet_forward.33} parent=0 // pred_fallthru
    _
  // Predicated region
  $region22: #{resnet_forward.33} parent=0 // pred_check
    _
  $region23: #{resnet_forward.33} parent=0 // pred_check_branch
    %1910 = sbr.rel (0) target = $region25
  $region24: #{resnet_forward.33} parent=0 // pred_region
    _
  $region25: #{resnet_forward.33} parent=0 // pred_fallthru
    _
  // Predicated region
  $region26: #{resnet_forward.33} parent=0 // pred_check
    _
  $region27: #{resnet_forward.33} parent=0 // pred_check_branch
    %1912 = sbr.rel (0) target = $region29
  $region28: #{resnet_forward.33} parent=0 // pred_region
    _
  $region29: #{resnet_forward.33} parent=0 // pred_fallthru
    _
  // Predicated region
  $region30: #{resnet_forward.33} parent=0 // pred_check
    _
  $region31: #{resnet_forward.33} parent=0 // pred_check_branch
    %1914 = sbr.rel (0) target = $region33
  $region32: #{resnet_forward.33} parent=0 // pred_region
    _
  $region33: #{resnet_forward.33} parent=0 // pred_fallthru
    _
  // Predicated region
  $region34: #{resnet_forward.33} parent=0 // pred_check
    _
  $region35: #{resnet_forward.33} parent=0 // pred_check_branch
    %1916 = sbr.rel (0) target = $region37
  $region36: #{resnet_forward.33} parent=0 // pred_region
    _
  $region37: #{resnet_forward.33} parent=0 // pred_fallthru
    _
  // Predicated region
  $region38: #{resnet_forward.33} parent=0 // pred_check
    _
  $region39: #{resnet_forward.33} parent=0 // pred_check_branch
    %1918 = sbr.rel (0) target = $region41
  $region40: #{resnet_forward.33} parent=0 // pred_region
    _
  $region41: #{resnet_forward.33} parent=0 // pred_fallthru
    _

// kernel: resnet_forward.37
$region0: #{resnet_forward.37}
  #allocation0 [shape = 'u32[]', space=smem, size = 0x4, offset = 0x4, fixed_abs, tag = 'smem constant byte address 0x4 - core index']
  #allocation1 [shape = 'u32[144,128]{1,0:T(1,128)}', space=vmem, size = 0x12000, scoped, tag = 'internal scratch']
  %s0 = inlined_call_operand.vmem [shape: bf16[2048,512], index: 0, kind: input, shape index: {}]
  %s1 = inlined_call_operand.vmem [shape: bf16[512,128], index: 1, kind: input, shape index: {}]
  %s2 = inlined_call_operand.vmem [shape: f32[2048,128], index: 2, kind: output, shape index: {}]
  %s3 = sld [smem:[#allocation0]]
  $region41: #{resnet_forward.37} parent=0
    _
  %s5 = ssub.s32 1, %s3
  %s6 = scalar_select 0, %s5, %s3
  loop: start=0, step=1, limit=4
  $region2: #{resnet_forward.37} parent=0 // loop_pre_header
    _
  $region3: #{resnet_forward.37} parent=0 // loop_header
    %s8 = sphi 0, %s12
    %p9 = scmp.ge.s32.totalorder %s8, 4
    %s18 = sphi 0, %s20
    %s21 = sphi 0, %s18
    %s22 = sphi 0, %s21
    %s38 = sphi 0, %s22
    %s42 = sphi 0, %s42
    %s44 = sphi 0, %s42
    %s45 = sphi 0, %s44
    %s59 = sphi 0, %s45
    %s65 = sphi 0, %s67
    %s68 = sphi 0, %s65
    %s69 = sphi 0, %s68
    %s85 = sphi 0, %s69
  $region4: #{resnet_forward.37} parent=0 // loop_header_branch
    %11 = sbr.rel (%p9) target = $region8
  $region5: #{resnet_forward.37} parent=0 // loop_body
    %s13 = ssub.s32 %s8, 1
    %s14 = ssub.s32 %s8, 2
    %s15 = sadd.s32 %s8, 1
    %s16 = ssub.s32 %s8, %s15
    %p17 = scmp.eq.s32.totalorder %s16, 0
    %s19 = sadd.s32 %s18, 1
    %s20 = scalar_select %p17, %s18, %s19
    %p23 = pneg %p17
    %p24 = scmp.eq.s32.totalorder %s8, 1
    %p25 = por %p23, %p24
    %p26 = scmp.ne.s32.totalorder %s18, %s21
    %p27 = scmp.eq.s32.totalorder %s8, 0
    %p28 = por %p26, %p27
    %p29 = scmp.ne.s32.totalorder %s18, %s21
    %p30 = scmp.eq.s32.totalorder %s13, 1
    %p31 = por %p29, %p30
    %p32 = scmp.ne.s32.totalorder %s21, %s22
    %p33 = scmp.eq.s32.totalorder %s13, 0
    %p34 = por %p32, %p33
    %p35 = scmp.ne.s32.totalorder %s21, %s22
    %p36 = scmp.eq.s32.totalorder %s14, 1
    %p37 = por %p35, %p36
    %p39 = scmp.ne.s32.totalorder %s22, %s38
    %p40 = scmp.eq.s32.totalorder %s14, 0
    %p41 = por %p39, %p40
    %s43 = sadd.s32 %s42, 1
    %p46 = scmp.eq.s32.totalorder %s8, 1
    %p47 = scmp.ne.s32.totalorder %s42, %s44
    %p48 = scmp.eq.s32.totalorder %s8, 0
    %p49 = por %p47, %p48
    %p50 = scmp.ne.s32.totalorder %s42, %s44
    %p51 = scmp.eq.s32.totalorder %s13, 1
    %p52 = por %p50, %p51
    %p53 = scmp.ne.s32.totalorder %s44, %s45
    %p54 = scmp.eq.s32.totalorder %s13, 0
    %p55 = por %p53, %p54
    %p56 = scmp.ne.s32.totalorder %s44, %s45
    %p57 = scmp.eq.s32.totalorder %s14, 1
    %p58 = por %p56, %p57
    %p60 = scmp.ne.s32.totalorder %s45, %s59
    %p61 = scmp.eq.s32.totalorder %s14, 0
    %p62 = por %p60, %p61
    %s63 = ssub.s32 %s8, %s15
    %p64 = scmp.eq.s32.totalorder %s63, 0
    %s66 = sadd.s32 %s65, 1
    %s67 = scalar_select %p64, %s65, %s66
    %p70 = pneg %p64
    %p71 = scmp.eq.s32.totalorder %s8, 1
    %p72 = por %p70, %p71
    %p73 = scmp.ne.s32.totalorder %s65, %s68
    %p74 = scmp.eq.s32.totalorder %s8, 0
    %p75 = por %p73, %p74
    %p76 = scmp.ne.s32.totalorder %s65, %s68
    %p77 = scmp.eq.s32.totalorder %s13, 1
    %p78 = por %p76, %p77
    %p79 = scmp.ne.s32.totalorder %s68, %s69
    %p80 = scmp.eq.s32.totalorder %s13, 0
    %p81 = por %p79, %p80
    %p82 = scmp.ne.s32.totalorder %s68, %s69
    %p83 = scmp.eq.s32.totalorder %s14, 1
    %p84 = por %p82, %p83
    %p86 = scmp.ne.s32.totalorder %s69, %s85
    %p87 = scmp.eq.s32.totalorder %s14, 0
    %p88 = por %p86, %p87
    %p89 = scmp.le.s32.totalorder 1, %s8
    %p90 = scmp.lt.s32.totalorder %s8, 3
    %p91 = pnand %p89, %p90
    %p92 = pneg %p91
    // Predicated region
    $region9: #{resnet_forward.37} parent=5 // pred_check
      _
    $region10: #{resnet_forward.37} parent=5 // pred_check_branch
      %94 = sbr.rel (%p91) target = $region12
    $region11: #{resnet_forward.37} parent=5 // pred_region
      %s95 = ssub.s32 %s8, 1
      // Predicated region
      $region13: #{resnet_forward.37} parent=11 // pred_check
        %p96 = pneg %p55
      $region14: #{resnet_forward.37} parent=11 // pred_check_branch
        %98 = sbr.rel (%p96) target = $region16
      $region15: #{resnet_forward.37} parent=11 // pred_region
        _
      $region16: #{resnet_forward.37} parent=11 // pred_fallthru
        _
    $region12: #{resnet_forward.37} parent=5 // pred_fallthru
      _
    %p99 = scmp.lt.s32.totalorder %s8, 2
    // Predicated region
    $region17: #{resnet_forward.37} parent=5 // pred_check
      %p100 = pneg %p99
    $region18: #{resnet_forward.37} parent=5 // pred_check_branch
      %102 = sbr.rel (%p100) target = $region20
    $region19: #{resnet_forward.37} parent=5 // pred_region
      // Predicated region
      $region21: #{resnet_forward.37} parent=19 // pred_check
        %p103 = pneg %p28
      $region22: #{resnet_forward.37} parent=19 // pred_check_branch
        %105 = sbr.rel (%p103) target = $region24
      $region23: #{resnet_forward.37} parent=19 // pred_region
        %s106 = smul.u32 128, %s8
        %p107 = scmp.lt.s32.totalorder %s106, 255
        %s108 = scalar_select %p107, %s106, 255
        %s109 = smul.addr %s108, 4
        %s110 = smul.addr %s109, 4
        %s111 = scalar_lea.vmem %s0, %s110
        %s112 = smul.u32 128, %s8
      $region24: #{resnet_forward.37} parent=19 // pred_fallthru
        _
    $region20: #{resnet_forward.37} parent=5 // pred_fallthru
      _
    %p113 = scmp.le.s32.totalorder 1, %s8
    %p114 = scmp.lt.s32.totalorder %s8, 3
    %p115 = pnand %p113, %p114
    %p116 = pneg %p115
    // Predicated region
    $region25: #{resnet_forward.37} parent=5 // pred_check
      _
    $region26: #{resnet_forward.37} parent=5 // pred_check_branch
      %118 = sbr.rel (%p115) target = $region28
    $region27: #{resnet_forward.37} parent=5 // pred_region
      %s119 = ssub.s32 %s8, 1
      %s120 = smul.u32 128, %s13
      %p121 = scmp.lt.s32.totalorder %s120, 255
      %s122 = scalar_select %p121, %s120, 255
      %s123 = smul.addr %s122, 4
      %s124 = smul.addr %s123, 4
      %s125 = scalar_lea.vmem %s0, %s124
      %p126 = pneg %p34
      %p127 = pneg %p31
      %p128 = pneg %p55
      %p129 = pneg %p52
      %p130 = pneg %p81
      %p131 = pneg %p78
      %s132 = smul.u32 128, %s13
      %p133 = scmp.lt.s32.totalorder %s132, 255
      %s134 = scalar_select %p133, %s132, 255
      %s135 = smul.addr %s134, 8
      %s136 = scalar_lea.vmem %s2, %s135
      %s137 = smul.u32 128, %s13
      %p138 = scmp.lt.s32.totalorder %s137, 255
      %s139 = scalar_select %p138, %s137, 255
      %s140 = smul.addr %s139, 4
      %s141 = smul.addr %s140, 4
      %s142 = scalar_lea.vmem %s0, %s141
      %s143 = smul.u32 128, %s13
      %s144 = smul.u32 128, %s13
      %p145 = scmp.lt.s32.totalorder %s144, 255
      %s146 = scalar_select %p145, %s144, 255
      %s147 = smul.addr %s146, 8
      %s148 = scalar_lea.vmem %s2, %s147
      %s149 = smul.u32 128, %s13
      %v151 = vld [vmem:[%s142] sm:$0xff]
      %v152 = vld [vmem:[%s142 + $0x8] sm:$0xff]
      %v153 = vld [vmem:[%s142 + $0x10] sm:$0xff]
      %v154 = vld [vmem:[%s142 + $0x18] sm:$0xff]
      %v155 = vld [vmem:[%s142 + $0x20] sm:$0xff]
      %v156 = vld [vmem:[%s142 + $0x28] sm:$0xff]
      %v157 = vld [vmem:[%s142 + $0x30] sm:$0xff]
      %v158 = vld [vmem:[%s142 + $0x38] sm:$0xff]
      %v159 = vld [vmem:[%s142 + $0x40] sm:$0xff]
      %v160 = vld [vmem:[%s142 + $0x48] sm:$0xff]
      %v161 = vld [vmem:[%s142 + $0x50] sm:$0xff]
      %v162 = vld [vmem:[%s142 + $0x58] sm:$0xff]
      %v163 = vld [vmem:[%s142 + $0x60] sm:$0xff]
      %v164 = vld [vmem:[%s142 + $0x68] sm:$0xff]
      %v165 = vld [vmem:[%s142 + $0x70] sm:$0xff]
      %v166 = vld [vmem:[%s142 + $0x78] sm:$0xff]
      %v167 = vld [vmem:[%s142 + $0x80] sm:$0xff]
      %v168 = vld [vmem:[%s142 + $0x88] sm:$0xff]
      %v169 = vld [vmem:[%s142 + $0x90] sm:$0xff]
      %v170 = vld [vmem:[%s142 + $0x98] sm:$0xff]
      %v171 = vld [vmem:[%s142 + $0xa0] sm:$0xff]
      %v172 = vld [vmem:[%s142 + $0xa8] sm:$0xff]
      %v173 = vld [vmem:[%s142 + $0xb0] sm:$0xff]
      %v174 = vld [vmem:[%s142 + $0xb8] sm:$0xff]
      %v175 = vld [vmem:[%s142 + $0xc0] sm:$0xff]
      %v176 = vld [vmem:[%s142 + $0xc8] sm:$0xff]
      %v177 = vld [vmem:[%s142 + $0xd0] sm:$0xff]
      %v178 = vld [vmem:[%s142 + $0xd8] sm:$0xff]
      %v179 = vld [vmem:[%s142 + $0xe0] sm:$0xff]
      %v180 = vld [vmem:[%s142 + $0xe8] sm:$0xff]
      %v181 = vld [vmem:[%s142 + $0xf0] sm:$0xff]
      %v182 = vld [vmem:[%s142 + $0xf8] sm:$0xff]
      %v183 = vld [vmem:[%s142 + $0x100] sm:$0xff]
      %v184 = vld [vmem:[%s142 + $0x108] sm:$0xff]
      %v185 = vld [vmem:[%s142 + $0x110] sm:$0xff]
      %v186 = vld [vmem:[%s142 + $0x118] sm:$0xff]
      %v187 = vld [vmem:[%s142 + $0x120] sm:$0xff]
      %v188 = vld [vmem:[%s142 + $0x128] sm:$0xff]
      %v189 = vld [vmem:[%s142 + $0x130] sm:$0xff]
      %v190 = vld [vmem:[%s142 + $0x138] sm:$0xff]
      %v191 = vld [vmem:[%s142 + $0x140] sm:$0xff]
      %v192 = vld [vmem:[%s142 + $0x148] sm:$0xff]
      %v193 = vld [vmem:[%s142 + $0x150] sm:$0xff]
      %v194 = vld [vmem:[%s142 + $0x158] sm:$0xff]
      %v195 = vld [vmem:[%s142 + $0x160] sm:$0xff]
      %v196 = vld [vmem:[%s142 + $0x168] sm:$0xff]
      %v197 = vld [vmem:[%s142 + $0x170] sm:$0xff]
      %v198 = vld [vmem:[%s142 + $0x178] sm:$0xff]
      %v199 = vld [vmem:[%s142 + $0x180] sm:$0xff]
      %v200 = vld [vmem:[%s142 + $0x188] sm:$0xff]
      %v201 = vld [vmem:[%s142 + $0x190] sm:$0xff]
      %v202 = vld [vmem:[%s142 + $0x198] sm:$0xff]
      %v203 = vld [vmem:[%s142 + $0x1a0] sm:$0xff]
      %v204 = vld [vmem:[%s142 + $0x1a8] sm:$0xff]
      %v205 = vld [vmem:[%s142 + $0x1b0] sm:$0xff]
      %v206 = vld [vmem:[%s142 + $0x1b8] sm:$0xff]
      %v207 = vld [vmem:[%s142 + $0x1c0] sm:$0xff]
      %v208 = vld [vmem:[%s142 + $0x1c8] sm:$0xff]
      %v209 = vld [vmem:[%s142 + $0x1d0] sm:$0xff]
      %v210 = vld [vmem:[%s142 + $0x1d8] sm:$0xff]
      %v211 = vld [vmem:[%s142 + $0x1e0] sm:$0xff]
      %v212 = vld [vmem:[%s142 + $0x1e8] sm:$0xff]
      %v213 = vld [vmem:[%s142 + $0x1f0] sm:$0xff]
      %v214 = vld [vmem:[%s142 + $0x1f8] sm:$0xff]
      %v215 = vld [vmem:[%s142 + $0x200] sm:$0xff]
      %v216 = vld [vmem:[%s142 + $0x208] sm:$0xff]
      %v217 = vld [vmem:[%s142 + $0x210] sm:$0xff]
      %v218 = vld [vmem:[%s142 + $0x218] sm:$0xff]
      %v219 = vld [vmem:[%s142 + $0x220] sm:$0xff]
      %v220 = vld [vmem:[%s142 + $0x228] sm:$0xff]
      %v221 = vld [vmem:[%s142 + $0x230] sm:$0xff]
      %v222 = vld [vmem:[%s142 + $0x238] sm:$0xff]
      %v223 = vld [vmem:[%s142 + $0x240] sm:$0xff]
      %v224 = vld [vmem:[%s142 + $0x248] sm:$0xff]
      %v225 = vld [vmem:[%s142 + $0x250] sm:$0xff]
      %v226 = vld [vmem:[%s142 + $0x258] sm:$0xff]
      %v227 = vld [vmem:[%s142 + $0x260] sm:$0xff]
      %v228 = vld [vmem:[%s142 + $0x268] sm:$0xff]
      %v229 = vld [vmem:[%s142 + $0x270] sm:$0xff]
      %v230 = vld [vmem:[%s142 + $0x278] sm:$0xff]
      %v231 = vld [vmem:[%s142 + $0x280] sm:$0xff]
      %v232 = vld [vmem:[%s142 + $0x288] sm:$0xff]
      %v233 = vld [vmem:[%s142 + $0x290] sm:$0xff]
      %v234 = vld [vmem:[%s142 + $0x298] sm:$0xff]
      %v235 = vld [vmem:[%s142 + $0x2a0] sm:$0xff]
      %v236 = vld [vmem:[%s142 + $0x2a8] sm:$0xff]
      %v237 = vld [vmem:[%s142 + $0x2b0] sm:$0xff]
      %v238 = vld [vmem:[%s142 + $0x2b8] sm:$0xff]
      %v239 = vld [vmem:[%s142 + $0x2c0] sm:$0xff]
      %v240 = vld [vmem:[%s142 + $0x2c8] sm:$0xff]
      %v241 = vld [vmem:[%s142 + $0x2d0] sm:$0xff]
      %v242 = vld [vmem:[%s142 + $0x2d8] sm:$0xff]
      %v243 = vld [vmem:[%s142 + $0x2e0] sm:$0xff]
      %v244 = vld [vmem:[%s142 + $0x2e8] sm:$0xff]
      %v245 = vld [vmem:[%s142 + $0x2f0] sm:$0xff]
      %v246 = vld [vmem:[%s142 + $0x2f8] sm:$0xff]
      %v247 = vld [vmem:[%s142 + $0x300] sm:$0xff]
      %v248 = vld [vmem:[%s142 + $0x308] sm:$0xff]
      %v249 = vld [vmem:[%s142 + $0x310] sm:$0xff]
      %v250 = vld [vmem:[%s142 + $0x318] sm:$0xff]
      %v251 = vld [vmem:[%s142 + $0x320] sm:$0xff]
      %v252 = vld [vmem:[%s142 + $0x328] sm:$0xff]
      %v253 = vld [vmem:[%s142 + $0x330] sm:$0xff]
      %v254 = vld [vmem:[%s142 + $0x338] sm:$0xff]
      %v255 = vld [vmem:[%s142 + $0x340] sm:$0xff]
      %v256 = vld [vmem:[%s142 + $0x348] sm:$0xff]
      %v257 = vld [vmem:[%s142 + $0x350] sm:$0xff]
      %v258 = vld [vmem:[%s142 + $0x358] sm:$0xff]
      %v259 = vld [vmem:[%s142 + $0x360] sm:$0xff]
      %v260 = vld [vmem:[%s142 + $0x368] sm:$0xff]
      %v261 = vld [vmem:[%s142 + $0x370] sm:$0xff]
      %v262 = vld [vmem:[%s142 + $0x378] sm:$0xff]
      %v263 = vld [vmem:[%s142 + $0x380] sm:$0xff]
      %v264 = vld [vmem:[%s142 + $0x388] sm:$0xff]
      %v265 = vld [vmem:[%s142 + $0x390] sm:$0xff]
      %v266 = vld [vmem:[%s142 + $0x398] sm:$0xff]
      %v267 = vld [vmem:[%s142 + $0x3a0] sm:$0xff]
      %v268 = vld [vmem:[%s142 + $0x3a8] sm:$0xff]
      %v269 = vld [vmem:[%s142 + $0x3b0] sm:$0xff]
      %v270 = vld [vmem:[%s142 + $0x3b8] sm:$0xff]
      %v271 = vld [vmem:[%s142 + $0x3c0] sm:$0xff]
      %v272 = vld [vmem:[%s142 + $0x3c8] sm:$0xff]
      %v273 = vld [vmem:[%s142 + $0x3d0] sm:$0xff]
      %v274 = vld [vmem:[%s142 + $0x3d8] sm:$0xff]
      %v275 = vld [vmem:[%s142 + $0x3e0] sm:$0xff]
      %v276 = vld [vmem:[%s142 + $0x3e8] sm:$0xff]
      %v277 = vld [vmem:[%s142 + $0x3f0] sm:$0xff]
      %v278 = vld [vmem:[%s142 + $0x3f8] sm:$0xff]
      %v279 = vld [vmem:[%s142 + $0x400] sm:$0xff]
      %v280 = vld [vmem:[%s142 + $0x408] sm:$0xff]
      %v281 = vld [vmem:[%s142 + $0x410] sm:$0xff]
      %v282 = vld [vmem:[%s142 + $0x418] sm:$0xff]
      %v283 = vld [vmem:[%s142 + $0x420] sm:$0xff]
      %v284 = vld [vmem:[%s142 + $0x428] sm:$0xff]
      %v285 = vld [vmem:[%s142 + $0x430] sm:$0xff]
      %v286 = vld [vmem:[%s142 + $0x438] sm:$0xff]
      %v287 = vld [vmem:[%s142 + $0x440] sm:$0xff]
      %v288 = vld [vmem:[%s142 + $0x448] sm:$0xff]
      %v289 = vld [vmem:[%s142 + $0x450] sm:$0xff]
      %v290 = vld [vmem:[%s142 + $0x458] sm:$0xff]
      %v291 = vld [vmem:[%s142 + $0x460] sm:$0xff]
      %v292 = vld [vmem:[%s142 + $0x468] sm:$0xff]
      %v293 = vld [vmem:[%s142 + $0x470] sm:$0xff]
      %v294 = vld [vmem:[%s142 + $0x478] sm:$0xff]
      %v295 = vld [vmem:[%s142 + $0x480] sm:$0xff]
      %v296 = vld [vmem:[%s142 + $0x488] sm:$0xff]
      %v297 = vld [vmem:[%s142 + $0x490] sm:$0xff]
      %v298 = vld [vmem:[%s142 + $0x498] sm:$0xff]
      %v299 = vld [vmem:[%s142 + $0x4a0] sm:$0xff]
      %v300 = vld [vmem:[%s142 + $0x4a8] sm:$0xff]
      %v301 = vld [vmem:[%s142 + $0x4b0] sm:$0xff]
      %v302 = vld [vmem:[%s142 + $0x4b8] sm:$0xff]
      %v303 = vld [vmem:[%s142 + $0x4c0] sm:$0xff]
      %v304 = vld [vmem:[%s142 + $0x4c8] sm:$0xff]
      %v305 = vld [vmem:[%s142 + $0x4d0] sm:$0xff]
      %v306 = vld [vmem:[%s142 + $0x4d8] sm:$0xff]
      %v307 = vld [vmem:[%s142 + $0x4e0] sm:$0xff]
      %v308 = vld [vmem:[%s142 + $0x4e8] sm:$0xff]
      %v309 = vld [vmem:[%s142 + $0x4f0] sm:$0xff]
      %v310 = vld [vmem:[%s142 + $0x4f8] sm:$0xff]
      %v311 = vld [vmem:[%s142 + $0x500] sm:$0xff]
      %v312 = vld [vmem:[%s142 + $0x508] sm:$0xff]
      %v313 = vld [vmem:[%s142 + $0x510] sm:$0xff]
      %v314 = vld [vmem:[%s142 + $0x518] sm:$0xff]
      %v315 = vld [vmem:[%s142 + $0x520] sm:$0xff]
      %v316 = vld [vmem:[%s142 + $0x528] sm:$0xff]
      %v317 = vld [vmem:[%s142 + $0x530] sm:$0xff]
      %v318 = vld [vmem:[%s142 + $0x538] sm:$0xff]
      %v319 = vld [vmem:[%s142 + $0x540] sm:$0xff]
      %v320 = vld [vmem:[%s142 + $0x548] sm:$0xff]
      %v321 = vld [vmem:[%s142 + $0x550] sm:$0xff]
      %v322 = vld [vmem:[%s142 + $0x558] sm:$0xff]
      %v323 = vld [vmem:[%s142 + $0x560] sm:$0xff]
      %v324 = vld [vmem:[%s142 + $0x568] sm:$0xff]
      %v325 = vld [vmem:[%s142 + $0x570] sm:$0xff]
      %v326 = vld [vmem:[%s142 + $0x578] sm:$0xff]
      %v327 = vld [vmem:[%s142 + $0x580] sm:$0xff]
      %v328 = vld [vmem:[%s142 + $0x588] sm:$0xff]
      %v329 = vld [vmem:[%s142 + $0x590] sm:$0xff]
      %v330 = vld [vmem:[%s142 + $0x598] sm:$0xff]
      %v331 = vld [vmem:[%s142 + $0x5a0] sm:$0xff]
      %v332 = vld [vmem:[%s142 + $0x5a8] sm:$0xff]
      %v333 = vld [vmem:[%s142 + $0x5b0] sm:$0xff]
      %v334 = vld [vmem:[%s142 + $0x5b8] sm:$0xff]
      %v335 = vld [vmem:[%s142 + $0x5c0] sm:$0xff]
      %v336 = vld [vmem:[%s142 + $0x5c8] sm:$0xff]
      %v337 = vld [vmem:[%s142 + $0x5d0] sm:$0xff]
      %v338 = vld [vmem:[%s142 + $0x5d8] sm:$0xff]
      %v339 = vld [vmem:[%s142 + $0x5e0] sm:$0xff]
      %v340 = vld [vmem:[%s142 + $0x5e8] sm:$0xff]
      %v341 = vld [vmem:[%s142 + $0x5f0] sm:$0xff]
      %v342 = vld [vmem:[%s142 + $0x5f8] sm:$0xff]
      %v343 = vld [vmem:[%s142 + $0x600] sm:$0xff]
      %v344 = vld [vmem:[%s142 + $0x608] sm:$0xff]
      %v345 = vld [vmem:[%s142 + $0x610] sm:$0xff]
      %v346 = vld [vmem:[%s142 + $0x618] sm:$0xff]
      %v347 = vld [vmem:[%s142 + $0x620] sm:$0xff]
      %v348 = vld [vmem:[%s142 + $0x628] sm:$0xff]
      %v349 = vld [vmem:[%s142 + $0x630] sm:$0xff]
      %v350 = vld [vmem:[%s142 + $0x638] sm:$0xff]
      %v351 = vld [vmem:[%s142 + $0x640] sm:$0xff]
      %v352 = vld [vmem:[%s142 + $0x648] sm:$0xff]
      %v353 = vld [vmem:[%s142 + $0x650] sm:$0xff]
      %v354 = vld [vmem:[%s142 + $0x658] sm:$0xff]
      %v355 = vld [vmem:[%s142 + $0x660] sm:$0xff]
      %v356 = vld [vmem:[%s142 + $0x668] sm:$0xff]
      %v357 = vld [vmem:[%s142 + $0x670] sm:$0xff]
      %v358 = vld [vmem:[%s142 + $0x678] sm:$0xff]
      %v359 = vld [vmem:[%s142 + $0x680] sm:$0xff]
      %v360 = vld [vmem:[%s142 + $0x688] sm:$0xff]
      %v361 = vld [vmem:[%s142 + $0x690] sm:$0xff]
      %v362 = vld [vmem:[%s142 + $0x698] sm:$0xff]
      %v363 = vld [vmem:[%s142 + $0x6a0] sm:$0xff]
      %v364 = vld [vmem:[%s142 + $0x6a8] sm:$0xff]
      %v365 = vld [vmem:[%s142 + $0x6b0] sm:$0xff]
      %v366 = vld [vmem:[%s142 + $0x6b8] sm:$0xff]
      %v367 = vld [vmem:[%s142 + $0x6c0] sm:$0xff]
      %v368 = vld [vmem:[%s142 + $0x6c8] sm:$0xff]
      %v369 = vld [vmem:[%s142 + $0x6d0] sm:$0xff]
      %v370 = vld [vmem:[%s142 + $0x6d8] sm:$0xff]
      %v371 = vld [vmem:[%s142 + $0x6e0] sm:$0xff]
      %v372 = vld [vmem:[%s142 + $0x6e8] sm:$0xff]
      %v373 = vld [vmem:[%s142 + $0x6f0] sm:$0xff]
      %v374 = vld [vmem:[%s142 + $0x6f8] sm:$0xff]
      %v375 = vld [vmem:[%s142 + $0x700] sm:$0xff]
      %v376 = vld [vmem:[%s142 + $0x708] sm:$0xff]
      %v377 = vld [vmem:[%s142 + $0x710] sm:$0xff]
      %v378 = vld [vmem:[%s142 + $0x718] sm:$0xff]
      %v379 = vld [vmem:[%s142 + $0x720] sm:$0xff]
      %v380 = vld [vmem:[%s142 + $0x728] sm:$0xff]
      %v381 = vld [vmem:[%s142 + $0x730] sm:$0xff]
      %v382 = vld [vmem:[%s142 + $0x738] sm:$0xff]
      %v383 = vld [vmem:[%s142 + $0x740] sm:$0xff]
      %v384 = vld [vmem:[%s142 + $0x748] sm:$0xff]
      %v385 = vld [vmem:[%s142 + $0x750] sm:$0xff]
      %v386 = vld [vmem:[%s142 + $0x758] sm:$0xff]
      %v387 = vld [vmem:[%s142 + $0x760] sm:$0xff]
      %v388 = vld [vmem:[%s142 + $0x768] sm:$0xff]
      %v389 = vld [vmem:[%s142 + $0x770] sm:$0xff]
      %v390 = vld [vmem:[%s142 + $0x778] sm:$0xff]
      %v391 = vld [vmem:[%s142 + $0x780] sm:$0xff]
      %v392 = vld [vmem:[%s142 + $0x788] sm:$0xff]
      %v393 = vld [vmem:[%s142 + $0x790] sm:$0xff]
      %v394 = vld [vmem:[%s142 + $0x798] sm:$0xff]
      %v395 = vld [vmem:[%s142 + $0x7a0] sm:$0xff]
      %v396 = vld [vmem:[%s142 + $0x7a8] sm:$0xff]
      %v397 = vld [vmem:[%s142 + $0x7b0] sm:$0xff]
      %v398 = vld [vmem:[%s142 + $0x7b8] sm:$0xff]
      %v399 = vld [vmem:[%s142 + $0x7c0] sm:$0xff]
      %v400 = vld [vmem:[%s142 + $0x7c8] sm:$0xff]
      %v401 = vld [vmem:[%s142 + $0x7d0] sm:$0xff]
      %v402 = vld [vmem:[%s142 + $0x7d8] sm:$0xff]
      %v403 = vld [vmem:[%s142 + $0x7e0] sm:$0xff]
      %v404 = vld [vmem:[%s142 + $0x7e8] sm:$0xff]
      %v405 = vld [vmem:[%s142 + $0x7f0] sm:$0xff]
      %v406 = vld [vmem:[%s142 + $0x7f8] sm:$0xff]
      %v407 = vld [vmem:[%s1] sm:$0xf]
      %v408 = vld [vmem:[%s1 + $0x4] sm:$0xf]
      %v409 = vld [vmem:[%s1 + $0x8] sm:$0xf]
      %v410 = vld [vmem:[%s1 + $0xc] sm:$0xf]
      %v411 = vld [vmem:[%s1 + $0x10] sm:$0xf]
      %v412 = vld [vmem:[%s1 + $0x14] sm:$0xf]
      %v413 = vld [vmem:[%s1 + $0x18] sm:$0xf]
      %v414 = vld [vmem:[%s1 + $0x1c] sm:$0xf]
      %v415 = vld [vmem:[%s1 + $0x20] sm:$0xf]
      %v416 = vld [vmem:[%s1 + $0x24] sm:$0xf]
      %v417 = vld [vmem:[%s1 + $0x28] sm:$0xf]
      %v418 = vld [vmem:[%s1 + $0x2c] sm:$0xf]
      %v419 = vld [vmem:[%s1 + $0x30] sm:$0xf]
      %v420 = vld [vmem:[%s1 + $0x34] sm:$0xf]
      %v421 = vld [vmem:[%s1 + $0x38] sm:$0xf]
      %v422 = vld [vmem:[%s1 + $0x3c] sm:$0xf]
      %v423 = vld [vmem:[%s1 + $0x40] sm:$0xf]
      %v424 = vld [vmem:[%s1 + $0x44] sm:$0xf]
      %v425 = vld [vmem:[%s1 + $0x48] sm:$0xf]
      %v426 = vld [vmem:[%s1 + $0x4c] sm:$0xf]
      %v427 = vld [vmem:[%s1 + $0x50] sm:$0xf]
      %v428 = vld [vmem:[%s1 + $0x54] sm:$0xf]
      %v429 = vld [vmem:[%s1 + $0x58] sm:$0xf]
      %v430 = vld [vmem:[%s1 + $0x5c] sm:$0xf]
      %v431 = vld [vmem:[%s1 + $0x60] sm:$0xf]
      %v432 = vld [vmem:[%s1 + $0x64] sm:$0xf]
      %v433 = vld [vmem:[%s1 + $0x68] sm:$0xf]
      %v434 = vld [vmem:[%s1 + $0x6c] sm:$0xf]
      %v435 = vld [vmem:[%s1 + $0x70] sm:$0xf]
      %v436 = vld [vmem:[%s1 + $0x74] sm:$0xf]
      %v437 = vld [vmem:[%s1 + $0x78] sm:$0xf]
      %v438 = vld [vmem:[%s1 + $0x7c] sm:$0xf]
      %v439 = vld [vmem:[%s1 + $0x80] sm:$0xf]
      %v440 = vld [vmem:[%s1 + $0x84] sm:$0xf]
      %v441 = vld [vmem:[%s1 + $0x88] sm:$0xf]
      %v442 = vld [vmem:[%s1 + $0x8c] sm:$0xf]
      %v443 = vld [vmem:[%s1 + $0x90] sm:$0xf]
      %v444 = vld [vmem:[%s1 + $0x94] sm:$0xf]
      %v445 = vld [vmem:[%s1 + $0x98] sm:$0xf]
      %v446 = vld [vmem:[%s1 + $0x9c] sm:$0xf]
      %v447 = vld [vmem:[%s1 + $0xa0] sm:$0xf]
      %v448 = vld [vmem:[%s1 + $0xa4] sm:$0xf]
      %v449 = vld [vmem:[%s1 + $0xa8] sm:$0xf]
      %v450 = vld [vmem:[%s1 + $0xac] sm:$0xf]
      %v451 = vld [vmem:[%s1 + $0xb0] sm:$0xf]
      %v452 = vld [vmem:[%s1 + $0xb4] sm:$0xf]
      %v453 = vld [vmem:[%s1 + $0xb8] sm:$0xf]
      %v454 = vld [vmem:[%s1 + $0xbc] sm:$0xf]
      %v455 = vld [vmem:[%s1 + $0xc0] sm:$0xf]
      %v456 = vld [vmem:[%s1 + $0xc4] sm:$0xf]
      %v457 = vld [vmem:[%s1 + $0xc8] sm:$0xf]
      %v458 = vld [vmem:[%s1 + $0xcc] sm:$0xf]
      %v459 = vld [vmem:[%s1 + $0xd0] sm:$0xf]
      %v460 = vld [vmem:[%s1 + $0xd4] sm:$0xf]
      %v461 = vld [vmem:[%s1 + $0xd8] sm:$0xf]
      %v462 = vld [vmem:[%s1 + $0xdc] sm:$0xf]
      %v463 = vld [vmem:[%s1 + $0xe0] sm:$0xf]
      %v464 = vld [vmem:[%s1 + $0xe4] sm:$0xf]
      %v465 = vld [vmem:[%s1 + $0xe8] sm:$0xf]
      %v466 = vld [vmem:[%s1 + $0xec] sm:$0xf]
      %v467 = vld [vmem:[%s1 + $0xf0] sm:$0xf]
      %v468 = vld [vmem:[%s1 + $0xf4] sm:$0xf]
      %v469 = vld [vmem:[%s1 + $0xf8] sm:$0xf]
      %v470 = vld [vmem:[%s1 + $0xfc] sm:$0xf]
      %v727 = vunpack.c.l.b16 %v151
      %v728 = vunpack.c.h.b16 %v151
      %v729 = vunpack.c.l.b16 %v152
      %v730 = vunpack.c.h.b16 %v152
      %v731 = vunpack.c.l.b16 %v153
      %v732 = vunpack.c.h.b16 %v153
      %v733 = vunpack.c.l.b16 %v154
      %v734 = vunpack.c.h.b16 %v154
      %v735 = vunpack.c.l.b16 %v155
      %v736 = vunpack.c.h.b16 %v155
      %v737 = vunpack.c.l.b16 %v156
      %v738 = vunpack.c.h.b16 %v156
      %v739 = vunpack.c.l.b16 %v157
      %v740 = vunpack.c.h.b16 %v157
      %v741 = vunpack.c.l.b16 %v158
      %v742 = vunpack.c.h.b16 %v158
      %v743 = vunpack.c.l.b16 %v159
      %v744 = vunpack.c.h.b16 %v159
      %v745 = vunpack.c.l.b16 %v160
      %v746 = vunpack.c.h.b16 %v160
      %v747 = vunpack.c.l.b16 %v161
      %v748 = vunpack.c.h.b16 %v161
      %v749 = vunpack.c.l.b16 %v162
      %v750 = vunpack.c.h.b16 %v162
      %v751 = vunpack.c.l.b16 %v163
      %v752 = vunpack.c.h.b16 %v163
      %v753 = vunpack.c.l.b16 %v164
      %v754 = vunpack.c.h.b16 %v164
      %v755 = vunpack.c.l.b16 %v165
      %v756 = vunpack.c.h.b16 %v165
      %v757 = vunpack.c.l.b16 %v166
      %v758 = vunpack.c.h.b16 %v166
      %v759 = vunpack.c.l.b16 %v167
      %v760 = vunpack.c.h.b16 %v167
      %v761 = vunpack.c.l.b16 %v168
      %v762 = vunpack.c.h.b16 %v168
      %v763 = vunpack.c.l.b16 %v169
      %v764 = vunpack.c.h.b16 %v169
      %v765 = vunpack.c.l.b16 %v170
      %v766 = vunpack.c.h.b16 %v170
      %v767 = vunpack.c.l.b16 %v171
      %v768 = vunpack.c.h.b16 %v171
      %v769 = vunpack.c.l.b16 %v172
      %v770 = vunpack.c.h.b16 %v172
      %v771 = vunpack.c.l.b16 %v173
      %v772 = vunpack.c.h.b16 %v173
      %v773 = vunpack.c.l.b16 %v174
      %v774 = vunpack.c.h.b16 %v174
      %v775 = vunpack.c.l.b16 %v175
      %v776 = vunpack.c.h.b16 %v175
      %v777 = vunpack.c.l.b16 %v176
      %v778 = vunpack.c.h.b16 %v176
      %v779 = vunpack.c.l.b16 %v177
      %v780 = vunpack.c.h.b16 %v177
      %v781 = vunpack.c.l.b16 %v178
      %v782 = vunpack.c.h.b16 %v178
      %v783 = vunpack.c.l.b16 %v179
      %v784 = vunpack.c.h.b16 %v179
      %v785 = vunpack.c.l.b16 %v180
      %v786 = vunpack.c.h.b16 %v180
      %v787 = vunpack.c.l.b16 %v181
      %v788 = vunpack.c.h.b16 %v181
      %v789 = vunpack.c.l.b16 %v182
      %v790 = vunpack.c.h.b16 %v182
      %v791 = vunpack.c.l.b16 %v183
      %v792 = vunpack.c.h.b16 %v183
      %v793 = vunpack.c.l.b16 %v184
      %v794 = vunpack.c.h.b16 %v184
      %v795 = vunpack.c.l.b16 %v185
      %v796 = vunpack.c.h.b16 %v185
      %v797 = vunpack.c.l.b16 %v186
      %v798 = vunpack.c.h.b16 %v186
      %v799 = vunpack.c.l.b16 %v187
      %v800 = vunpack.c.h.b16 %v187
      %v801 = vunpack.c.l.b16 %v188
      %v802 = vunpack.c.h.b16 %v188
      %v803 = vunpack.c.l.b16 %v189
      %v804 = vunpack.c.h.b16 %v189
      %v805 = vunpack.c.l.b16 %v190
      %v806 = vunpack.c.h.b16 %v190
      %v807 = vunpack.c.l.b16 %v191
      %v808 = vunpack.c.h.b16 %v191
      %v809 = vunpack.c.l.b16 %v192
      %v810 = vunpack.c.h.b16 %v192
      %v811 = vunpack.c.l.b16 %v193
      %v812 = vunpack.c.h.b16 %v193
      %v813 = vunpack.c.l.b16 %v194
      %v814 = vunpack.c.h.b16 %v194
      %v815 = vunpack.c.l.b16 %v195
      %v816 = vunpack.c.h.b16 %v195
      %v817 = vunpack.c.l.b16 %v196
      %v818 = vunpack.c.h.b16 %v196
      %v819 = vunpack.c.l.b16 %v197
      %v820 = vunpack.c.h.b16 %v197
      %v821 = vunpack.c.l.b16 %v198
      %v822 = vunpack.c.h.b16 %v198
      %v823 = vunpack.c.l.b16 %v199
      %v824 = vunpack.c.h.b16 %v199
      %v825 = vunpack.c.l.b16 %v200
      %v826 = vunpack.c.h.b16 %v200
      %v827 = vunpack.c.l.b16 %v201
      %v828 = vunpack.c.h.b16 %v201
      %v829 = vunpack.c.l.b16 %v202
      %v830 = vunpack.c.h.b16 %v202
      %v831 = vunpack.c.l.b16 %v203
      %v832 = vunpack.c.h.b16 %v203
      %v833 = vunpack.c.l.b16 %v204
      %v834 = vunpack.c.h.b16 %v204
      %v835 = vunpack.c.l.b16 %v205
      %v836 = vunpack.c.h.b16 %v205
      %v837 = vunpack.c.l.b16 %v206
      %v838 = vunpack.c.h.b16 %v206
      %v839 = vunpack.c.l.b16 %v207
      %v840 = vunpack.c.h.b16 %v207
      %v841 = vunpack.c.l.b16 %v208
      %v842 = vunpack.c.h.b16 %v208
      %v843 = vunpack.c.l.b16 %v209
      %v844 = vunpack.c.h.b16 %v209
      %v845 = vunpack.c.l.b16 %v210
      %v846 = vunpack.c.h.b16 %v210
      %v847 = vunpack.c.l.b16 %v211
      %v848 = vunpack.c.h.b16 %v211
      %v849 = vunpack.c.l.b16 %v212
      %v850 = vunpack.c.h.b16 %v212
      %v851 = vunpack.c.l.b16 %v213
      %v852 = vunpack.c.h.b16 %v213
      %v853 = vunpack.c.l.b16 %v214
      %v854 = vunpack.c.h.b16 %v214
      %v855 = vunpack.c.l.b16 %v215
      %v856 = vunpack.c.h.b16 %v215
      %v857 = vunpack.c.l.b16 %v216
      %v858 = vunpack.c.h.b16 %v216
      %v859 = vunpack.c.l.b16 %v217
      %v860 = vunpack.c.h.b16 %v217
      %v861 = vunpack.c.l.b16 %v218
      %v862 = vunpack.c.h.b16 %v218
      %v863 = vunpack.c.l.b16 %v219
      %v864 = vunpack.c.h.b16 %v219
      %v865 = vunpack.c.l.b16 %v220
      %v866 = vunpack.c.h.b16 %v220
      %v867 = vunpack.c.l.b16 %v221
      %v868 = vunpack.c.h.b16 %v221
      %v869 = vunpack.c.l.b16 %v222
      %v870 = vunpack.c.h.b16 %v222
      %v871 = vunpack.c.l.b16 %v223
      %v872 = vunpack.c.h.b16 %v223
      %v873 = vunpack.c.l.b16 %v224
      %v874 = vunpack.c.h.b16 %v224
      %v875 = vunpack.c.l.b16 %v225
      %v876 = vunpack.c.h.b16 %v225
      %v877 = vunpack.c.l.b16 %v226
      %v878 = vunpack.c.h.b16 %v226
      %v879 = vunpack.c.l.b16 %v227
      %v880 = vunpack.c.h.b16 %v227
      %v881 = vunpack.c.l.b16 %v228
      %v882 = vunpack.c.h.b16 %v228
      %v883 = vunpack.c.l.b16 %v229
      %v884 = vunpack.c.h.b16 %v229
      %v885 = vunpack.c.l.b16 %v230
      %v886 = vunpack.c.h.b16 %v230
      %v887 = vunpack.c.l.b16 %v231
      %v888 = vunpack.c.h.b16 %v231
      %v889 = vunpack.c.l.b16 %v232
      %v890 = vunpack.c.h.b16 %v232
      %v891 = vunpack.c.l.b16 %v233
      %v892 = vunpack.c.h.b16 %v233
      %v893 = vunpack.c.l.b16 %v234
      %v894 = vunpack.c.h.b16 %v234
      %v895 = vunpack.c.l.b16 %v235
      %v896 = vunpack.c.h.b16 %v235
      %v897 = vunpack.c.l.b16 %v236
      %v898 = vunpack.c.h.b16 %v236
      %v899 = vunpack.c.l.b16 %v237
      %v900 = vunpack.c.h.b16 %v237
      %v901 = vunpack.c.l.b16 %v238
      %v902 = vunpack.c.h.b16 %v238
      %v903 = vunpack.c.l.b16 %v239
      %v904 = vunpack.c.h.b16 %v239
      %v905 = vunpack.c.l.b16 %v240
      %v906 = vunpack.c.h.b16 %v240
      %v907 = vunpack.c.l.b16 %v241
      %v908 = vunpack.c.h.b16 %v241
      %v909 = vunpack.c.l.b16 %v242
      %v910 = vunpack.c.h.b16 %v242
      %v911 = vunpack.c.l.b16 %v243
      %v912 = vunpack.c.h.b16 %v243
      %v913 = vunpack.c.l.b16 %v244
      %v914 = vunpack.c.h.b16 %v244
      %v915 = vunpack.c.l.b16 %v245
      %v916 = vunpack.c.h.b16 %v245
      %v917 = vunpack.c.l.b16 %v246
      %v918 = vunpack.c.h.b16 %v246
      %v919 = vunpack.c.l.b16 %v247
      %v920 = vunpack.c.h.b16 %v247
      %v921 = vunpack.c.l.b16 %v248
      %v922 = vunpack.c.h.b16 %v248
      %v923 = vunpack.c.l.b16 %v249
      %v924 = vunpack.c.h.b16 %v249
      %v925 = vunpack.c.l.b16 %v250
      %v926 = vunpack.c.h.b16 %v250
      %v927 = vunpack.c.l.b16 %v251
      %v928 = vunpack.c.h.b16 %v251
      %v929 = vunpack.c.l.b16 %v252
      %v930 = vunpack.c.h.b16 %v252
      %v931 = vunpack.c.l.b16 %v253
      %v932 = vunpack.c.h.b16 %v253
      %v933 = vunpack.c.l.b16 %v254
      %v934 = vunpack.c.h.b16 %v254
      %v935 = vunpack.c.l.b16 %v255
      %v936 = vunpack.c.h.b16 %v255
      %v937 = vunpack.c.l.b16 %v256
      %v938 = vunpack.c.h.b16 %v256
      %v939 = vunpack.c.l.b16 %v257
      %v940 = vunpack.c.h.b16 %v257
      %v941 = vunpack.c.l.b16 %v258
      %v942 = vunpack.c.h.b16 %v258
      %v943 = vunpack.c.l.b16 %v259
      %v944 = vunpack.c.h.b16 %v259
      %v945 = vunpack.c.l.b16 %v260
      %v946 = vunpack.c.h.b16 %v260
      %v947 = vunpack.c.l.b16 %v261
      %v948 = vunpack.c.h.b16 %v261
      %v949 = vunpack.c.l.b16 %v262
      %v950 = vunpack.c.h.b16 %v262
      %v951 = vunpack.c.l.b16 %v263
      %v952 = vunpack.c.h.b16 %v263
      %v953 = vunpack.c.l.b16 %v264
      %v954 = vunpack.c.h.b16 %v264
      %v955 = vunpack.c.l.b16 %v265
      %v956 = vunpack.c.h.b16 %v265
      %v957 = vunpack.c.l.b16 %v266
      %v958 = vunpack.c.h.b16 %v266
      %v959 = vunpack.c.l.b16 %v267
      %v960 = vunpack.c.h.b16 %v267
      %v961 = vunpack.c.l.b16 %v268
      %v962 = vunpack.c.h.b16 %v268
      %v963 = vunpack.c.l.b16 %v269
      %v964 = vunpack.c.h.b16 %v269
      %v965 = vunpack.c.l.b16 %v270
      %v966 = vunpack.c.h.b16 %v270
      %v967 = vunpack.c.l.b16 %v271
      %v968 = vunpack.c.h.b16 %v271
      %v969 = vunpack.c.l.b16 %v272
      %v970 = vunpack.c.h.b16 %v272
      %v971 = vunpack.c.l.b16 %v273
      %v972 = vunpack.c.h.b16 %v273
      %v973 = vunpack.c.l.b16 %v274
      %v974 = vunpack.c.h.b16 %v274
      %v975 = vunpack.c.l.b16 %v275
      %v976 = vunpack.c.h.b16 %v275
      %v977 = vunpack.c.l.b16 %v276
      %v978 = vunpack.c.h.b16 %v276
      %v979 = vunpack.c.l.b16 %v277
      %v980 = vunpack.c.h.b16 %v277
      %v981 = vunpack.c.l.b16 %v278
      %v982 = vunpack.c.h.b16 %v278
      %v983 = vunpack.c.l.b16 %v279
      %v984 = vunpack.c.h.b16 %v279
      %v985 = vunpack.c.l.b16 %v280
      %v986 = vunpack.c.h.b16 %v280
      %v987 = vunpack.c.l.b16 %v281
      %v988 = vunpack.c.h.b16 %v281
      %v989 = vunpack.c.l.b16 %v282
      %v990 = vunpack.c.h.b16 %v282
      %v991 = vunpack.c.l.b16 %v283
      %v992 = vunpack.c.h.b16 %v283
      %v993 = vunpack.c.l.b16 %v284
      %v994 = vunpack.c.h.b16 %v284
      %v995 = vunpack.c.l.b16 %v285
      %v996 = vunpack.c.h.b16 %v285
      %v997 = vunpack.c.l.b16 %v286
      %v998 = vunpack.c.h.b16 %v286
      %v999 = vunpack.c.l.b16 %v287
      %v1000 = vunpack.c.h.b16 %v287
      %v1001 = vunpack.c.l.b16 %v288
      %v1002 = vunpack.c.h.b16 %v288
      %v1003 = vunpack.c.l.b16 %v289
      %v1004 = vunpack.c.h.b16 %v289
      %v1005 = vunpack.c.l.b16 %v290
      %v1006 = vunpack.c.h.b16 %v290
      %v1007 = vunpack.c.l.b16 %v291
      %v1008 = vunpack.c.h.b16 %v291
      %v1009 = vunpack.c.l.b16 %v292
      %v1010 = vunpack.c.h.b16 %v292
      %v1011 = vunpack.c.l.b16 %v293
      %v1012 = vunpack.c.h.b16 %v293
      %v1013 = vunpack.c.l.b16 %v294
      %v1014 = vunpack.c.h.b16 %v294
      %v1015 = vunpack.c.l.b16 %v295
      %v1016 = vunpack.c.h.b16 %v295
      %v1017 = vunpack.c.l.b16 %v296
      %v1018 = vunpack.c.h.b16 %v296
      %v1019 = vunpack.c.l.b16 %v297
      %v1020 = vunpack.c.h.b16 %v297
      %v1021 = vunpack.c.l.b16 %v298
      %v1022 = vunpack.c.h.b16 %v298
      %v1023 = vunpack.c.l.b16 %v299
      %v1024 = vunpack.c.h.b16 %v299
      %v1025 = vunpack.c.l.b16 %v300
      %v1026 = vunpack.c.h.b16 %v300
      %v1027 = vunpack.c.l.b16 %v301
      %v1028 = vunpack.c.h.b16 %v301
      %v1029 = vunpack.c.l.b16 %v302
      %v1030 = vunpack.c.h.b16 %v302
      %v1031 = vunpack.c.l.b16 %v303
      %v1032 = vunpack.c.h.b16 %v303
      %v1033 = vunpack.c.l.b16 %v304
      %v1034 = vunpack.c.h.b16 %v304
      %v1035 = vunpack.c.l.b16 %v305
      %v1036 = vunpack.c.h.b16 %v305
      %v1037 = vunpack.c.l.b16 %v306
      %v1038 = vunpack.c.h.b16 %v306
      %v1039 = vunpack.c.l.b16 %v307
      %v1040 = vunpack.c.h.b16 %v307
      %v1041 = vunpack.c.l.b16 %v308
      %v1042 = vunpack.c.h.b16 %v308
      %v1043 = vunpack.c.l.b16 %v309
      %v1044 = vunpack.c.h.b16 %v309
      %v1045 = vunpack.c.l.b16 %v310
      %v1046 = vunpack.c.h.b16 %v310
      %v1047 = vunpack.c.l.b16 %v311
      %v1048 = vunpack.c.h.b16 %v311
      %v1049 = vunpack.c.l.b16 %v312
      %v1050 = vunpack.c.h.b16 %v312
      %v1051 = vunpack.c.l.b16 %v313
      %v1052 = vunpack.c.h.b16 %v313
      %v1053 = vunpack.c.l.b16 %v314
      %v1054 = vunpack.c.h.b16 %v314
      %v1055 = vunpack.c.l.b16 %v315
      %v1056 = vunpack.c.h.b16 %v315
      %v1057 = vunpack.c.l.b16 %v316
      %v1058 = vunpack.c.h.b16 %v316
      %v1059 = vunpack.c.l.b16 %v317
      %v1060 = vunpack.c.h.b16 %v317
      %v1061 = vunpack.c.l.b16 %v318
      %v1062 = vunpack.c.h.b16 %v318
      %v1063 = vunpack.c.l.b16 %v319
      %v1064 = vunpack.c.h.b16 %v319
      %v1065 = vunpack.c.l.b16 %v320
      %v1066 = vunpack.c.h.b16 %v320
      %v1067 = vunpack.c.l.b16 %v321
      %v1068 = vunpack.c.h.b16 %v321
      %v1069 = vunpack.c.l.b16 %v322
      %v1070 = vunpack.c.h.b16 %v322
      %v1071 = vunpack.c.l.b16 %v323
      %v1072 = vunpack.c.h.b16 %v323
      %v1073 = vunpack.c.l.b16 %v324
      %v1074 = vunpack.c.h.b16 %v324
      %v1075 = vunpack.c.l.b16 %v325
      %v1076 = vunpack.c.h.b16 %v325
      %v1077 = vunpack.c.l.b16 %v326
      %v1078 = vunpack.c.h.b16 %v326
      %v1079 = vunpack.c.l.b16 %v327
      %v1080 = vunpack.c.h.b16 %v327
      %v1081 = vunpack.c.l.b16 %v328
      %v1082 = vunpack.c.h.b16 %v328
      %v1083 = vunpack.c.l.b16 %v329
      %v1084 = vunpack.c.h.b16 %v329
      %v1085 = vunpack.c.l.b16 %v330
      %v1086 = vunpack.c.h.b16 %v330
      %v1087 = vunpack.c.l.b16 %v331
      %v1088 = vunpack.c.h.b16 %v331
      %v1089 = vunpack.c.l.b16 %v332
      %v1090 = vunpack.c.h.b16 %v332
      %v1091 = vunpack.c.l.b16 %v333
      %v1092 = vunpack.c.h.b16 %v333
      %v1093 = vunpack.c.l.b16 %v334
      %v1094 = vunpack.c.h.b16 %v334
      %v1095 = vunpack.c.l.b16 %v335
      %v1096 = vunpack.c.h.b16 %v335
      %v1097 = vunpack.c.l.b16 %v336
      %v1098 = vunpack.c.h.b16 %v336
      %v1099 = vunpack.c.l.b16 %v337
      %v1100 = vunpack.c.h.b16 %v337
      %v1101 = vunpack.c.l.b16 %v338
      %v1102 = vunpack.c.h.b16 %v338
      %v1103 = vunpack.c.l.b16 %v339
      %v1104 = vunpack.c.h.b16 %v339
      %v1105 = vunpack.c.l.b16 %v340
      %v1106 = vunpack.c.h.b16 %v340
      %v1107 = vunpack.c.l.b16 %v341
      %v1108 = vunpack.c.h.b16 %v341
      %v1109 = vunpack.c.l.b16 %v342
      %v1110 = vunpack.c.h.b16 %v342
      %v1111 = vunpack.c.l.b16 %v343
      %v1112 = vunpack.c.h.b16 %v343
      %v1113 = vunpack.c.l.b16 %v344
      %v1114 = vunpack.c.h.b16 %v344
      %v1115 = vunpack.c.l.b16 %v345
      %v1116 = vunpack.c.h.b16 %v345
      %v1117 = vunpack.c.l.b16 %v346
      %v1118 = vunpack.c.h.b16 %v346
      %v1119 = vunpack.c.l.b16 %v347
      %v1120 = vunpack.c.h.b16 %v347
      %v1121 = vunpack.c.l.b16 %v348
      %v1122 = vunpack.c.h.b16 %v348
      %v1123 = vunpack.c.l.b16 %v349
      %v1124 = vunpack.c.h.b16 %v349
      %v1125 = vunpack.c.l.b16 %v350
      %v1126 = vunpack.c.h.b16 %v350
      %v1127 = vunpack.c.l.b16 %v351
      %v1128 = vunpack.c.h.b16 %v351
      %v1129 = vunpack.c.l.b16 %v352
      %v1130 = vunpack.c.h.b16 %v352
      %v1131 = vunpack.c.l.b16 %v353
      %v1132 = vunpack.c.h.b16 %v353
      %v1133 = vunpack.c.l.b16 %v354
      %v1134 = vunpack.c.h.b16 %v354
      %v1135 = vunpack.c.l.b16 %v355
      %v1136 = vunpack.c.h.b16 %v355
      %v1137 = vunpack.c.l.b16 %v356
      %v1138 = vunpack.c.h.b16 %v356
      %v1139 = vunpack.c.l.b16 %v357
      %v1140 = vunpack.c.h.b16 %v357
      %v1141 = vunpack.c.l.b16 %v358
      %v1142 = vunpack.c.h.b16 %v358
      %v1143 = vunpack.c.l.b16 %v359
      %v1144 = vunpack.c.h.b16 %v359
      %v1145 = vunpack.c.l.b16 %v360
      %v1146 = vunpack.c.h.b16 %v360
      %v1147 = vunpack.c.l.b16 %v361
      %v1148 = vunpack.c.h.b16 %v361
      %v1149 = vunpack.c.l.b16 %v362
      %v1150 = vunpack.c.h.b16 %v362
      %v1151 = vunpack.c.l.b16 %v363
      %v1152 = vunpack.c.h.b16 %v363
      %v1153 = vunpack.c.l.b16 %v364
      %v1154 = vunpack.c.h.b16 %v364
      %v1155 = vunpack.c.l.b16 %v365
      %v1156 = vunpack.c.h.b16 %v365
      %v1157 = vunpack.c.l.b16 %v366
      %v1158 = vunpack.c.h.b16 %v366
      %v1159 = vunpack.c.l.b16 %v367
      %v1160 = vunpack.c.h.b16 %v367
      %v1161 = vunpack.c.l.b16 %v368
      %v1162 = vunpack.c.h.b16 %v368
      %v1163 = vunpack.c.l.b16 %v369
      %v1164 = vunpack.c.h.b16 %v369
      %v1165 = vunpack.c.l.b16 %v370
      %v1166 = vunpack.c.h.b16 %v370
      %v1167 = vunpack.c.l.b16 %v371
      %v1168 = vunpack.c.h.b16 %v371
      %v1169 = vunpack.c.l.b16 %v372
      %v1170 = vunpack.c.h.b16 %v372
      %v1171 = vunpack.c.l.b16 %v373
      %v1172 = vunpack.c.h.b16 %v373
      %v1173 = vunpack.c.l.b16 %v374
      %v1174 = vunpack.c.h.b16 %v374
      %v1175 = vunpack.c.l.b16 %v375
      %v1176 = vunpack.c.h.b16 %v375
      %v1177 = vunpack.c.l.b16 %v376
      %v1178 = vunpack.c.h.b16 %v376
      %v1179 = vunpack.c.l.b16 %v377
      %v1180 = vunpack.c.h.b16 %v377
      %v1181 = vunpack.c.l.b16 %v378
      %v1182 = vunpack.c.h.b16 %v378
      %v1183 = vunpack.c.l.b16 %v379
      %v1184 = vunpack.c.h.b16 %v379
      %v1185 = vunpack.c.l.b16 %v380
      %v1186 = vunpack.c.h.b16 %v380
      %v1187 = vunpack.c.l.b16 %v381
      %v1188 = vunpack.c.h.b16 %v381
      %v1189 = vunpack.c.l.b16 %v382
      %v1190 = vunpack.c.h.b16 %v382
      %v1191 = vunpack.c.l.b16 %v383
      %v1192 = vunpack.c.h.b16 %v383
      %v1193 = vunpack.c.l.b16 %v384
      %v1194 = vunpack.c.h.b16 %v384
      %v1195 = vunpack.c.l.b16 %v385
      %v1196 = vunpack.c.h.b16 %v385
      %v1197 = vunpack.c.l.b16 %v386
      %v1198 = vunpack.c.h.b16 %v386
      %v1199 = vunpack.c.l.b16 %v387
      %v1200 = vunpack.c.h.b16 %v387
      %v1201 = vunpack.c.l.b16 %v388
      %v1202 = vunpack.c.h.b16 %v388
      %v1203 = vunpack.c.l.b16 %v389
      %v1204 = vunpack.c.h.b16 %v389
      %v1205 = vunpack.c.l.b16 %v390
      %v1206 = vunpack.c.h.b16 %v390
      %v1207 = vunpack.c.l.b16 %v391
      %v1208 = vunpack.c.h.b16 %v391
      %v1209 = vunpack.c.l.b16 %v392
      %v1210 = vunpack.c.h.b16 %v392
      %v1211 = vunpack.c.l.b16 %v393
      %v1212 = vunpack.c.h.b16 %v393
      %v1213 = vunpack.c.l.b16 %v394
      %v1214 = vunpack.c.h.b16 %v394
      %v1215 = vunpack.c.l.b16 %v395
      %v1216 = vunpack.c.h.b16 %v395
      %v1217 = vunpack.c.l.b16 %v396
      %v1218 = vunpack.c.h.b16 %v396
      %v1219 = vunpack.c.l.b16 %v397
      %v1220 = vunpack.c.h.b16 %v397
      %v1221 = vunpack.c.l.b16 %v398
      %v1222 = vunpack.c.h.b16 %v398
      %v1223 = vunpack.c.l.b16 %v399
      %v1224 = vunpack.c.h.b16 %v399
      %v1225 = vunpack.c.l.b16 %v400
      %v1226 = vunpack.c.h.b16 %v400
      %v1227 = vunpack.c.l.b16 %v401
      %v1228 = vunpack.c.h.b16 %v401
      %v1229 = vunpack.c.l.b16 %v402
      %v1230 = vunpack.c.h.b16 %v402
      %v1231 = vunpack.c.l.b16 %v403
      %v1232 = vunpack.c.h.b16 %v403
      %v1233 = vunpack.c.l.b16 %v404
      %v1234 = vunpack.c.h.b16 %v404
      %v1235 = vunpack.c.l.b16 %v405
      %v1236 = vunpack.c.h.b16 %v405
      %v1237 = vunpack.c.l.b16 %v406
      %v1238 = vunpack.c.h.b16 %v406
      %v1239 = vpack.c.b16 %v731, %v727
      %v1240 = vpack.c.b16 %v732, %v728
      %v1241 = vpack.c.b16 %v733, %v729
      %v1242 = vpack.c.b16 %v734, %v730
      %v1243 = vpack.c.b16 %v739, %v735
      %v1244 = vpack.c.b16 %v740, %v736
      %v1245 = vpack.c.b16 %v741, %v737
      %v1246 = vpack.c.b16 %v742, %v738
      %v1247 = vpack.c.b16 %v747, %v743
      %v1248 = vpack.c.b16 %v748, %v744
      %v1249 = vpack.c.b16 %v749, %v745
      %v1250 = vpack.c.b16 %v750, %v746
      %v1251 = vpack.c.b16 %v755, %v751
      %v1252 = vpack.c.b16 %v756, %v752
      %v1253 = vpack.c.b16 %v757, %v753
      %v1254 = vpack.c.b16 %v758, %v754
      %v1255 = vpack.c.b16 %v763, %v759
      %v1256 = vpack.c.b16 %v764, %v760
      %v1257 = vpack.c.b16 %v765, %v761
      %v1258 = vpack.c.b16 %v766, %v762
      %v1259 = vpack.c.b16 %v771, %v767
      %v1260 = vpack.c.b16 %v772, %v768
      %v1261 = vpack.c.b16 %v773, %v769
      %v1262 = vpack.c.b16 %v774, %v770
      %v1263 = vpack.c.b16 %v779, %v775
      %v1264 = vpack.c.b16 %v780, %v776
      %v1265 = vpack.c.b16 %v781, %v777
      %v1266 = vpack.c.b16 %v782, %v778
      %v1267 = vpack.c.b16 %v787, %v783
      %v1268 = vpack.c.b16 %v788, %v784
      %v1269 = vpack.c.b16 %v789, %v785
      %v1270 = vpack.c.b16 %v790, %v786
      %v1271 = vpack.c.b16 %v795, %v791
      %v1272 = vpack.c.b16 %v796, %v792
      %v1273 = vpack.c.b16 %v797, %v793
      %v1274 = vpack.c.b16 %v798, %v794
      %v1275 = vpack.c.b16 %v803, %v799
      %v1276 = vpack.c.b16 %v804, %v800
      %v1277 = vpack.c.b16 %v805, %v801
      %v1278 = vpack.c.b16 %v806, %v802
      %v1279 = vpack.c.b16 %v811, %v807
      %v1280 = vpack.c.b16 %v812, %v808
      %v1281 = vpack.c.b16 %v813, %v809
      %v1282 = vpack.c.b16 %v814, %v810
      %v1283 = vpack.c.b16 %v819, %v815
      %v1284 = vpack.c.b16 %v820, %v816
      %v1285 = vpack.c.b16 %v821, %v817
      %v1286 = vpack.c.b16 %v822, %v818
      %v1287 = vpack.c.b16 %v827, %v823
      %v1288 = vpack.c.b16 %v828, %v824
      %v1289 = vpack.c.b16 %v829, %v825
      %v1290 = vpack.c.b16 %v830, %v826
      %v1291 = vpack.c.b16 %v835, %v831
      %v1292 = vpack.c.b16 %v836, %v832
      %v1293 = vpack.c.b16 %v837, %v833
      %v1294 = vpack.c.b16 %v838, %v834
      %v1295 = vpack.c.b16 %v843, %v839
      %v1296 = vpack.c.b16 %v844, %v840
      %v1297 = vpack.c.b16 %v845, %v841
      %v1298 = vpack.c.b16 %v846, %v842
      %v1299 = vpack.c.b16 %v851, %v847
      %v1300 = vpack.c.b16 %v852, %v848
      %v1301 = vpack.c.b16 %v853, %v849
      %v1302 = vpack.c.b16 %v854, %v850
      %v1303 = vpack.c.b16 %v859, %v855
      %v1304 = vpack.c.b16 %v860, %v856
      %v1305 = vpack.c.b16 %v861, %v857
      %v1306 = vpack.c.b16 %v862, %v858
      %v1307 = vpack.c.b16 %v867, %v863
      %v1308 = vpack.c.b16 %v868, %v864
      %v1309 = vpack.c.b16 %v869, %v865
      %v1310 = vpack.c.b16 %v870, %v866
      %v1311 = vpack.c.b16 %v875, %v871
      %v1312 = vpack.c.b16 %v876, %v872
      %v1313 = vpack.c.b16 %v877, %v873
      %v1314 = vpack.c.b16 %v878, %v874
      %v1315 = vpack.c.b16 %v883, %v879
      %v1316 = vpack.c.b16 %v884, %v880
      %v1317 = vpack.c.b16 %v885, %v881
      %v1318 = vpack.c.b16 %v886, %v882
      %v1319 = vpack.c.b16 %v891, %v887
      %v1320 = vpack.c.b16 %v892, %v888
      %v1321 = vpack.c.b16 %v893, %v889
      %v1322 = vpack.c.b16 %v894, %v890
      %v1323 = vpack.c.b16 %v899, %v895
      %v1324 = vpack.c.b16 %v900, %v896
      %v1325 = vpack.c.b16 %v901, %v897
      %v1326 = vpack.c.b16 %v902, %v898
      %v1327 = vpack.c.b16 %v907, %v903
      %v1328 = vpack.c.b16 %v908, %v904
      %v1329 = vpack.c.b16 %v909, %v905
      %v1330 = vpack.c.b16 %v910, %v906
      %v1331 = vpack.c.b16 %v915, %v911
      %v1332 = vpack.c.b16 %v916, %v912
      %v1333 = vpack.c.b16 %v917, %v913
      %v1334 = vpack.c.b16 %v918, %v914
      %v1335 = vpack.c.b16 %v923, %v919
      %v1336 = vpack.c.b16 %v924, %v920
      %v1337 = vpack.c.b16 %v925, %v921
      %v1338 = vpack.c.b16 %v926, %v922
      %v1339 = vpack.c.b16 %v931, %v927
      %v1340 = vpack.c.b16 %v932, %v928
      %v1341 = vpack.c.b16 %v933, %v929
      %v1342 = vpack.c.b16 %v934, %v930
      %v1343 = vpack.c.b16 %v939, %v935
      %v1344 = vpack.c.b16 %v940, %v936
      %v1345 = vpack.c.b16 %v941, %v937
      %v1346 = vpack.c.b16 %v942, %v938
      %v1347 = vpack.c.b16 %v947, %v943
      %v1348 = vpack.c.b16 %v948, %v944
      %v1349 = vpack.c.b16 %v949, %v945
      %v1350 = vpack.c.b16 %v950, %v946
      %v1351 = vpack.c.b16 %v955, %v951
      %v1352 = vpack.c.b16 %v956, %v952
      %v1353 = vpack.c.b16 %v957, %v953
      %v1354 = vpack.c.b16 %v958, %v954
      %v1355 = vpack.c.b16 %v963, %v959
      %v1356 = vpack.c.b16 %v964, %v960
      %v1357 = vpack.c.b16 %v965, %v961
      %v1358 = vpack.c.b16 %v966, %v962
      %v1359 = vpack.c.b16 %v971, %v967
      %v1360 = vpack.c.b16 %v972, %v968
      %v1361 = vpack.c.b16 %v973, %v969
      %v1362 = vpack.c.b16 %v974, %v970
      %v1363 = vpack.c.b16 %v979, %v975
      %v1364 = vpack.c.b16 %v980, %v976
      %v1365 = vpack.c.b16 %v981, %v977
      %v1366 = vpack.c.b16 %v982, %v978
      %v1367 = vpack.c.b16 %v987, %v983
      %v1368 = vpack.c.b16 %v988, %v984
      %v1369 = vpack.c.b16 %v989, %v985
      %v1370 = vpack.c.b16 %v990, %v986
      %v1371 = vpack.c.b16 %v995, %v991
      %v1372 = vpack.c.b16 %v996, %v992
      %v1373 = vpack.c.b16 %v997, %v993
      %v1374 = vpack.c.b16 %v998, %v994
      %v1375 = vpack.c.b16 %v1003, %v999
      %v1376 = vpack.c.b16 %v1004, %v1000
      %v1377 = vpack.c.b16 %v1005, %v1001
      %v1378 = vpack.c.b16 %v1006, %v1002
      %v1379 = vpack.c.b16 %v1011, %v1007
      %v1380 = vpack.c.b16 %v1012, %v1008
      %v1381 = vpack.c.b16 %v1013, %v1009
      %v1382 = vpack.c.b16 %v1014, %v1010
      %v1383 = vpack.c.b16 %v1019, %v1015
      %v1384 = vpack.c.b16 %v1020, %v1016
      %v1385 = vpack.c.b16 %v1021, %v1017
      %v1386 = vpack.c.b16 %v1022, %v1018
      %v1387 = vpack.c.b16 %v1027, %v1023
      %v1388 = vpack.c.b16 %v1028, %v1024
      %v1389 = vpack.c.b16 %v1029, %v1025
      %v1390 = vpack.c.b16 %v1030, %v1026
      %v1391 = vpack.c.b16 %v1035, %v1031
      %v1392 = vpack.c.b16 %v1036, %v1032
      %v1393 = vpack.c.b16 %v1037, %v1033
      %v1394 = vpack.c.b16 %v1038, %v1034
      %v1395 = vpack.c.b16 %v1043, %v1039
      %v1396 = vpack.c.b16 %v1044, %v1040
      %v1397 = vpack.c.b16 %v1045, %v1041
      %v1398 = vpack.c.b16 %v1046, %v1042
      %v1399 = vpack.c.b16 %v1051, %v1047
      %v1400 = vpack.c.b16 %v1052, %v1048
      %v1401 = vpack.c.b16 %v1053, %v1049
      %v1402 = vpack.c.b16 %v1054, %v1050
      %v1403 = vpack.c.b16 %v1059, %v1055
      %v1404 = vpack.c.b16 %v1060, %v1056
      %v1405 = vpack.c.b16 %v1061, %v1057
      %v1406 = vpack.c.b16 %v1062, %v1058
      %v1407 = vpack.c.b16 %v1067, %v1063
      %v1408 = vpack.c.b16 %v1068, %v1064
      %v1409 = vpack.c.b16 %v1069, %v1065
      %v1410 = vpack.c.b16 %v1070, %v1066
      %v1411 = vpack.c.b16 %v1075, %v1071
      %v1412 = vpack.c.b16 %v1076, %v1072
      %v1413 = vpack.c.b16 %v1077, %v1073
      %v1414 = vpack.c.b16 %v1078, %v1074
      %v1415 = vpack.c.b16 %v1083, %v1079
      %v1416 = vpack.c.b16 %v1084, %v1080
      %v1417 = vpack.c.b16 %v1085, %v1081
      %v1418 = vpack.c.b16 %v1086, %v1082
      %v1419 = vpack.c.b16 %v1091, %v1087
      %v1420 = vpack.c.b16 %v1092, %v1088
      %v1421 = vpack.c.b16 %v1093, %v1089
      %v1422 = vpack.c.b16 %v1094, %v1090
      %v1423 = vpack.c.b16 %v1099, %v1095
      %v1424 = vpack.c.b16 %v1100, %v1096
      %v1425 = vpack.c.b16 %v1101, %v1097
      %v1426 = vpack.c.b16 %v1102, %v1098
      %v1427 = vpack.c.b16 %v1107, %v1103
      %v1428 = vpack.c.b16 %v1108, %v1104
      %v1429 = vpack.c.b16 %v1109, %v1105
      %v1430 = vpack.c.b16 %v1110, %v1106
      %v1431 = vpack.c.b16 %v1115, %v1111
      %v1432 = vpack.c.b16 %v1116, %v1112
      %v1433 = vpack.c.b16 %v1117, %v1113
      %v1434 = vpack.c.b16 %v1118, %v1114
      %v1435 = vpack.c.b16 %v1123, %v1119
      %v1436 = vpack.c.b16 %v1124, %v1120
      %v1437 = vpack.c.b16 %v1125, %v1121
      %v1438 = vpack.c.b16 %v1126, %v1122
      %v1439 = vpack.c.b16 %v1131, %v1127
      %v1440 = vpack.c.b16 %v1132, %v1128
      %v1441 = vpack.c.b16 %v1133, %v1129
      %v1442 = vpack.c.b16 %v1134, %v1130
      %v1443 = vpack.c.b16 %v1139, %v1135
      %v1444 = vpack.c.b16 %v1140, %v1136
      %v1445 = vpack.c.b16 %v1141, %v1137
      %v1446 = vpack.c.b16 %v1142, %v1138
      %v1447 = vpack.c.b16 %v1147, %v1143
      %v1448 = vpack.c.b16 %v1148, %v1144
      %v1449 = vpack.c.b16 %v1149, %v1145
      %v1450 = vpack.c.b16 %v1150, %v1146
      %v1451 = vpack.c.b16 %v1155, %v1151
      %v1452 = vpack.c.b16 %v1156, %v1152
      %v1453 = vpack.c.b16 %v1157, %v1153
      %v1454 = vpack.c.b16 %v1158, %v1154
      %v1455 = vpack.c.b16 %v1163, %v1159
      %v1456 = vpack.c.b16 %v1164, %v1160
      %v1457 = vpack.c.b16 %v1165, %v1161
      %v1458 = vpack.c.b16 %v1166, %v1162
      %v1459 = vpack.c.b16 %v1171, %v1167
      %v1460 = vpack.c.b16 %v1172, %v1168
      %v1461 = vpack.c.b16 %v1173, %v1169
      %v1462 = vpack.c.b16 %v1174, %v1170
      %v1463 = vpack.c.b16 %v1179, %v1175
      %v1464 = vpack.c.b16 %v1180, %v1176
      %v1465 = vpack.c.b16 %v1181, %v1177
      %v1466 = vpack.c.b16 %v1182, %v1178
      %v1467 = vpack.c.b16 %v1187, %v1183
      %v1468 = vpack.c.b16 %v1188, %v1184
      %v1469 = vpack.c.b16 %v1189, %v1185
      %v1470 = vpack.c.b16 %v1190, %v1186
      %v1471 = vpack.c.b16 %v1195, %v1191
      %v1472 = vpack.c.b16 %v1196, %v1192
      %v1473 = vpack.c.b16 %v1197, %v1193
      %v1474 = vpack.c.b16 %v1198, %v1194
      %v1475 = vpack.c.b16 %v1203, %v1199
      %v1476 = vpack.c.b16 %v1204, %v1200
      %v1477 = vpack.c.b16 %v1205, %v1201
      %v1478 = vpack.c.b16 %v1206, %v1202
      %v1479 = vpack.c.b16 %v1211, %v1207
      %v1480 = vpack.c.b16 %v1212, %v1208
      %v1481 = vpack.c.b16 %v1213, %v1209
      %v1482 = vpack.c.b16 %v1214, %v1210
      %v1483 = vpack.c.b16 %v1219, %v1215
      %v1484 = vpack.c.b16 %v1220, %v1216
      %v1485 = vpack.c.b16 %v1221, %v1217
      %v1486 = vpack.c.b16 %v1222, %v1218
      %v1487 = vpack.c.b16 %v1227, %v1223
      %v1488 = vpack.c.b16 %v1228, %v1224
      %v1489 = vpack.c.b16 %v1229, %v1225
      %v1490 = vpack.c.b16 %v1230, %v1226
      %v1491 = vpack.c.b16 %v1235, %v1231
      %v1492 = vpack.c.b16 %v1236, %v1232
      %v1493 = vpack.c.b16 %v1237, %v1233
      %v1494 = vpack.c.b16 %v1238, %v1234
      %v1815 = vunpack.c.l.b16 %v407
      %v1816 = vunpack.c.l.b16 %v408
      %v1817 = vunpack.c.l.b16 %v409
      %v1818 = vunpack.c.l.b16 %v410
      %v1819 = vunpack.c.l.b16 %v411
      %v1820 = vunpack.c.l.b16 %v412
      %v1821 = vunpack.c.l.b16 %v413
      %v1822 = vunpack.c.l.b16 %v414
      %v1823 = vunpack.c.l.b16 %v415
      %v1824 = vunpack.c.l.b16 %v416
      %v1825 = vunpack.c.l.b16 %v417
      %v1826 = vunpack.c.l.b16 %v418
      %v1827 = vunpack.c.l.b16 %v419
      %v1828 = vunpack.c.l.b16 %v420
      %v1829 = vunpack.c.l.b16 %v421
      %v1830 = vunpack.c.l.b16 %v422
      %v1831 = vunpack.c.l.b16 %v423
      %v1832 = vunpack.c.l.b16 %v424
      %v1833 = vunpack.c.l.b16 %v425
      %v1834 = vunpack.c.l.b16 %v426
      %v1835 = vunpack.c.l.b16 %v427
      %v1836 = vunpack.c.l.b16 %v428
      %v1837 = vunpack.c.l.b16 %v429
      %v1838 = vunpack.c.l.b16 %v430
      %v1839 = vunpack.c.l.b16 %v431
      %v1840 = vunpack.c.l.b16 %v432
      %v1841 = vunpack.c.l.b16 %v433
      %v1842 = vunpack.c.l.b16 %v434
      %v1843 = vunpack.c.l.b16 %v435
      %v1844 = vunpack.c.l.b16 %v436
      %v1845 = vunpack.c.l.b16 %v437
      %v1846 = vunpack.c.l.b16 %v438
      %v1847 = vunpack.c.l.b16 %v439
      %v1848 = vunpack.c.l.b16 %v440
      %v1849 = vunpack.c.l.b16 %v441
      %v1850 = vunpack.c.l.b16 %v442
      %v1851 = vunpack.c.l.b16 %v443
      %v1852 = vunpack.c.l.b16 %v444
      %v1853 = vunpack.c.l.b16 %v445
      %v1854 = vunpack.c.l.b16 %v446
      %v1855 = vunpack.c.l.b16 %v447
      %v1856 = vunpack.c.l.b16 %v448
      %v1857 = vunpack.c.l.b16 %v449
      %v1858 = vunpack.c.l.b16 %v450
      %v1859 = vunpack.c.l.b16 %v451
      %v1860 = vunpack.c.l.b16 %v452
      %v1861 = vunpack.c.l.b16 %v453
      %v1862 = vunpack.c.l.b16 %v454
      %v1863 = vunpack.c.l.b16 %v455
      %v1864 = vunpack.c.l.b16 %v456
      %v1865 = vunpack.c.l.b16 %v457
      %v1866 = vunpack.c.l.b16 %v458
      %v1867 = vunpack.c.l.b16 %v459
      %v1868 = vunpack.c.l.b16 %v460
      %v1869 = vunpack.c.l.b16 %v461
      %v1870 = vunpack.c.l.b16 %v462
      %v1871 = vunpack.c.l.b16 %v463
      %v1872 = vunpack.c.l.b16 %v464
      %v1873 = vunpack.c.l.b16 %v465
      %v1874 = vunpack.c.l.b16 %v466
      %v1875 = vunpack.c.l.b16 %v467
      %v1876 = vunpack.c.l.b16 %v468
      %v1877 = vunpack.c.l.b16 %v469
      %v1878 = vunpack.c.l.b16 %v470
      %v1879 = vpack.c.b16 %v1816, %v1815
      %v1880 = vpack.c.b16 %v1818, %v1817
      %v1881 = vpack.c.b16 %v1820, %v1819
      %v1882 = vpack.c.b16 %v1822, %v1821
      %v1883 = vpack.c.b16 %v1824, %v1823
      %v1884 = vpack.c.b16 %v1826, %v1825
      %v1885 = vpack.c.b16 %v1828, %v1827
      %v1886 = vpack.c.b16 %v1830, %v1829
      %v1887 = vpack.c.b16 %v1832, %v1831
      %v1888 = vpack.c.b16 %v1834, %v1833
      %v1889 = vpack.c.b16 %v1836, %v1835
      %v1890 = vpack.c.b16 %v1838, %v1837
      %v1891 = vpack.c.b16 %v1840, %v1839
      %v1892 = vpack.c.b16 %v1842, %v1841
      %v1893 = vpack.c.b16 %v1844, %v1843
      %v1894 = vpack.c.b16 %v1846, %v1845
      %v1895 = vpack.c.b16 %v1848, %v1847
      %v1896 = vpack.c.b16 %v1850, %v1849
      %v1897 = vpack.c.b16 %v1852, %v1851
      %v1898 = vpack.c.b16 %v1854, %v1853
      %v1899 = vpack.c.b16 %v1856, %v1855
      %v1900 = vpack.c.b16 %v1858, %v1857
      %v1901 = vpack.c.b16 %v1860, %v1859
      %v1902 = vpack.c.b16 %v1862, %v1861
      %v1903 = vpack.c.b16 %v1864, %v1863
      %v1904 = vpack.c.b16 %v1866, %v1865
      %v1905 = vpack.c.b16 %v1868, %v1867
      %v1906 = vpack.c.b16 %v1870, %v1869
      %v1907 = vpack.c.b16 %v1872, %v1871
      %v1908 = vpack.c.b16 %v1874, %v1873
      %v1909 = vpack.c.b16 %v1876, %v1875
      %v1910 = vpack.c.b16 %v1878, %v1877
      %1943 = vmatprep.subr.bf16.mxu0 0
      %1944 = vmatpush1.bf16.msra.mxu0 %v1886
      %1945 = vmatprep.subr.bf16.mxu0 0
      %1946 = vmatpush1.bf16.msra.mxu0 %v1885
      %1947 = vmatprep.subr.bf16.mxu0 0
      %1948 = vmatpush1.bf16.msra.mxu0 %v1884
      %1949 = vmatprep.subr.bf16.mxu0 0
      %1950 = vmatpush1.bf16.msra.mxu0 %v1883
      %1951 = vmatprep.subr.bf16.mxu0 0
      %1952 = vmatpush1.bf16.msra.mxu0 %v1882
      %1953 = vmatprep.subr.bf16.mxu0 0
      %1954 = vmatpush1.bf16.msra.mxu0 %v1881
      %1955 = vmatprep.subr.bf16.mxu0 0
      %1956 = vmatpush1.bf16.msra.mxu0 %v1880
      %1957 = vmatprep.subr.bf16.mxu0 0
      %1958 = vmatpush1.bf16.msra.mxu0 %v1879
      %1959 = vmatprep.subr.bf16.mxu0 0
      %1960 = vmatpush2.bf16.msra.mxu0 %v1894
      %1961 = vmatprep.subr.bf16.mxu0 0
      %1962 = vmatpush2.bf16.msra.mxu0 %v1893
      %1963 = vmatprep.subr.bf16.mxu0 0
      %1964 = vmatpush2.bf16.msra.mxu0 %v1892
      %1965 = vmatprep.subr.bf16.mxu0 0
      %1966 = vmatpush2.bf16.msra.mxu0 %v1891
      %1967 = vmatprep.subr.bf16.mxu0 0
      %1968 = vmatpush2.bf16.msra.mxu0 %v1890
      %1969 = vmatprep.subr.bf16.mxu0 0
      %1970 = vmatpush2.bf16.msra.mxu0 %v1889
      %1971 = vmatprep.subr.bf16.mxu0 0
      %1972 = vmatpush2.bf16.msra.mxu0 %v1888
      %1973 = vmatprep.subr.bf16.mxu0 0
      %1974 = vmatpush2.bf16.msra.mxu0 %v1887
      %1975 = vmatprep.mubr.bf16.mxu0 %v1240
      %1976 = vmatmul.mubr.bf16.gmra.mxu0 %v1239
      %v1977 = vpop.f32.mrf.mxu0
      %v1978 = vadd.f32 0.0, %v1977
      %v1979 = vpop.f32.mrf.mxu0
      %v1980 = vpop.f32.mrf.mxu0
      %v1981 = vadd.f32 0.0, %v1980
      %v1982 = vpop.f32.mrf.mxu0
      %1983 = vmatprep.mubr.bf16.mxu0 %v1244
      %1984 = vmatmul.mubr.bf16.gmra.mxu0 %v1243
      %v1985 = vpop.f32.mrf.mxu0
      %v1986 = vadd.f32 0.0, %v1985
      %v1987 = vpop.f32.mrf.mxu0
      %v1988 = vpop.f32.mrf.mxu0
      %v1989 = vadd.f32 0.0, %v1988
      %v1990 = vpop.f32.mrf.mxu0
      %1991 = vmatprep.mubr.bf16.mxu0 %v1248
      %1992 = vmatmul.mubr.bf16.gmra.mxu0 %v1247
      %v1993 = vpop.f32.mrf.mxu0
      %v1994 = vadd.f32 0.0, %v1993
      %v1995 = vpop.f32.mrf.mxu0
      %v1996 = vpop.f32.mrf.mxu0
      %v1997 = vadd.f32 0.0, %v1996
      %v1998 = vpop.f32.mrf.mxu0
      %1999 = vmatprep.mubr.bf16.mxu0 %v1252
      %2000 = vmatmul.mubr.bf16.gmra.mxu0 %v1251
      %v2001 = vpop.f32.mrf.mxu0
      %v2002 = vadd.f32 0.0, %v2001
      %v2003 = vpop.f32.mrf.mxu0
      %v2004 = vpop.f32.mrf.mxu0
      %v2005 = vadd.f32 0.0, %v2004
      %v2006 = vpop.f32.mrf.mxu0
      %2007 = vmatprep.mubr.bf16.mxu0 %v1256
      %2008 = vmatmul.mubr.bf16.gmra.mxu0 %v1255
      %v2009 = vpop.f32.mrf.mxu0
      %v2010 = vadd.f32 0.0, %v2009
      %v2011 = vpop.f32.mrf.mxu0
      %v2012 = vpop.f32.mrf.mxu0
      %v2013 = vadd.f32 0.0, %v2012
      %v2014 = vpop.f32.mrf.mxu0
      %2015 = vmatprep.mubr.bf16.mxu0 %v1260
      %2016 = vmatmul.mubr.bf16.gmra.mxu0 %v1259
      %v2017 = vpop.f32.mrf.mxu0
      %v2018 = vadd.f32 0.0, %v2017
      %v2019 = vpop.f32.mrf.mxu0
      %v2020 = vpop.f32.mrf.mxu0
      %v2021 = vadd.f32 0.0, %v2020
      %v2022 = vpop.f32.mrf.mxu0
      %2023 = vmatprep.mubr.bf16.mxu0 %v1264
      %2024 = vmatmul.mubr.bf16.gmra.mxu0 %v1263
      %v2025 = vpop.f32.mrf.mxu0
      %v2026 = vadd.f32 0.0, %v2025
      %v2027 = vpop.f32.mrf.mxu0
      %v2028 = vpop.f32.mrf.mxu0
      %v2029 = vadd.f32 0.0, %v2028
      %v2030 = vpop.f32.mrf.mxu0
      %2031 = vmatprep.mubr.bf16.mxu0 %v1268
      %2032 = vmatmul.mubr.bf16.gmra.mxu0 %v1267
      %v2033 = vpop.f32.mrf.mxu0
      %v2034 = vadd.f32 0.0, %v2033
      %v2035 = vpop.f32.mrf.mxu0
      %v2036 = vpop.f32.mrf.mxu0
      %v2037 = vadd.f32 0.0, %v2036
      %v2038 = vpop.f32.mrf.mxu0
      %2039 = vmatprep.mubr.bf16.mxu0 %v1272
      %2040 = vmatmul.mubr.bf16.gmra.mxu0 %v1271
      %v2041 = vpop.f32.mrf.mxu0
      %v2042 = vadd.f32 0.0, %v2041
      %v2043 = vpop.f32.mrf.mxu0
      %v2044 = vpop.f32.mrf.mxu0
      %v2045 = vadd.f32 0.0, %v2044
      %v2046 = vpop.f32.mrf.mxu0
      %2047 = vmatprep.mubr.bf16.mxu0 %v1276
      %2048 = vmatmul.mubr.bf16.gmra.mxu0 %v1275
      %v2049 = vpop.f32.mrf.mxu0
      %v2050 = vadd.f32 0.0, %v2049
      %v2051 = vpop.f32.mrf.mxu0
      %v2052 = vpop.f32.mrf.mxu0
      %v2053 = vadd.f32 0.0, %v2052
      %v2054 = vpop.f32.mrf.mxu0
      %2055 = vmatprep.mubr.bf16.mxu0 %v1280
      %2056 = vmatmul.mubr.bf16.gmra.mxu0 %v1279
      %v2057 = vpop.f32.mrf.mxu0
      %v2058 = vadd.f32 0.0, %v2057
      %v2059 = vpop.f32.mrf.mxu0
      %v2060 = vpop.f32.mrf.mxu0
      %v2061 = vadd.f32 0.0, %v2060
      %v2062 = vpop.f32.mrf.mxu0
      %2063 = vmatprep.mubr.bf16.mxu0 %v1284
      %2064 = vmatmul.mubr.bf16.gmra.mxu0 %v1283
      %v2065 = vpop.f32.mrf.mxu0
      %v2066 = vadd.f32 0.0, %v2065
      %v2067 = vpop.f32.mrf.mxu0
      %v2068 = vpop.f32.mrf.mxu0
      %v2069 = vadd.f32 0.0, %v2068
      %v2070 = vpop.f32.mrf.mxu0
      %2071 = vmatprep.mubr.bf16.mxu0 %v1288
      %2072 = vmatmul.mubr.bf16.gmra.mxu0 %v1287
      %v2073 = vpop.f32.mrf.mxu0
      %v2074 = vadd.f32 0.0, %v2073
      %v2075 = vpop.f32.mrf.mxu0
      %v2076 = vpop.f32.mrf.mxu0
      %v2077 = vadd.f32 0.0, %v2076
      %v2078 = vpop.f32.mrf.mxu0
      %2079 = vmatprep.mubr.bf16.mxu0 %v1292
      %2080 = vmatmul.mubr.bf16.gmra.mxu0 %v1291
      %v2081 = vpop.f32.mrf.mxu0
      %v2082 = vadd.f32 0.0, %v2081
      %v2083 = vpop.f32.mrf.mxu0
      %v2084 = vpop.f32.mrf.mxu0
      %v2085 = vadd.f32 0.0, %v2084
      %v2086 = vpop.f32.mrf.mxu0
      %2087 = vmatprep.mubr.bf16.mxu0 %v1296
      %2088 = vmatmul.mubr.bf16.gmra.mxu0 %v1295
      %v2089 = vpop.f32.mrf.mxu0
      %v2090 = vadd.f32 0.0, %v2089
      %v2091 = vpop.f32.mrf.mxu0
      %v2092 = vpop.f32.mrf.mxu0
      %v2093 = vadd.f32 0.0, %v2092
      %v2094 = vpop.f32.mrf.mxu0
      %2095 = vmatprep.mubr.bf16.mxu0 %v1300
      %2096 = vmatmul.mubr.bf16.gmra.mxu0 %v1299
      %v2097 = vpop.f32.mrf.mxu0
      %v2098 = vadd.f32 0.0, %v2097
      %v2099 = vpop.f32.mrf.mxu0
      %v2100 = vpop.f32.mrf.mxu0
      %v2101 = vadd.f32 0.0, %v2100
      %v2102 = vpop.f32.mrf.mxu0
      %2103 = vmatprep.mubr.bf16.mxu0 %v1304
      %2104 = vmatmul.mubr.bf16.gmra.mxu0 %v1303
      %v2105 = vpop.f32.mrf.mxu0
      %v2106 = vadd.f32 0.0, %v2105
      %v2107 = vpop.f32.mrf.mxu0
      %v2108 = vpop.f32.mrf.mxu0
      %v2109 = vadd.f32 0.0, %v2108
      %v2110 = vpop.f32.mrf.mxu0
      %2111 = vmatprep.mubr.bf16.mxu0 %v1308
      %2112 = vmatmul.mubr.bf16.gmra.mxu0 %v1307
      %v2113 = vpop.f32.mrf.mxu0
      %v2114 = vadd.f32 0.0, %v2113
      %v2115 = vpop.f32.mrf.mxu0
      %v2116 = vpop.f32.mrf.mxu0
      %v2117 = vadd.f32 0.0, %v2116
      %v2118 = vpop.f32.mrf.mxu0
      %2119 = vmatprep.mubr.bf16.mxu0 %v1312
      %2120 = vmatmul.mubr.bf16.gmra.mxu0 %v1311
      %v2121 = vpop.f32.mrf.mxu0
      %v2122 = vadd.f32 0.0, %v2121
      %v2123 = vpop.f32.mrf.mxu0
      %v2124 = vpop.f32.mrf.mxu0
      %v2125 = vadd.f32 0.0, %v2124
      %v2126 = vpop.f32.mrf.mxu0
      %2127 = vmatprep.mubr.bf16.mxu0 %v1316
      %2128 = vmatmul.mubr.bf16.gmra.mxu0 %v1315
      %v2129 = vpop.f32.mrf.mxu0
      %v2130 = vadd.f32 0.0, %v2129
      %v2131 = vpop.f32.mrf.mxu0
      %v2132 = vpop.f32.mrf.mxu0
      %v2133 = vadd.f32 0.0, %v2132
      %v2134 = vpop.f32.mrf.mxu0
      %2135 = vmatprep.mubr.bf16.mxu0 %v1320
      %2136 = vmatmul.mubr.bf16.gmra.mxu0 %v1319
      %v2137 = vpop.f32.mrf.mxu0
      %v2138 = vadd.f32 0.0, %v2137
      %v2139 = vpop.f32.mrf.mxu0
      %v2140 = vpop.f32.mrf.mxu0
      %v2141 = vadd.f32 0.0, %v2140
      %v2142 = vpop.f32.mrf.mxu0
      %2143 = vmatprep.mubr.bf16.mxu0 %v1324
      %2144 = vmatmul.mubr.bf16.gmra.mxu0 %v1323
      %v2145 = vpop.f32.mrf.mxu0
      %v2146 = vadd.f32 0.0, %v2145
      %v2147 = vpop.f32.mrf.mxu0
      %v2148 = vpop.f32.mrf.mxu0
      %v2149 = vadd.f32 0.0, %v2148
      %v2150 = vpop.f32.mrf.mxu0
      %2151 = vmatprep.mubr.bf16.mxu0 %v1328
      %2152 = vmatmul.mubr.bf16.gmra.mxu0 %v1327
      %v2153 = vpop.f32.mrf.mxu0
      %v2154 = vadd.f32 0.0, %v2153
      %v2155 = vpop.f32.mrf.mxu0
      %v2156 = vpop.f32.mrf.mxu0
      %v2157 = vadd.f32 0.0, %v2156
      %v2158 = vpop.f32.mrf.mxu0
      %2159 = vmatprep.mubr.bf16.mxu0 %v1332
      %2160 = vmatmul.mubr.bf16.gmra.mxu0 %v1331
      %v2161 = vpop.f32.mrf.mxu0
      %v2162 = vadd.f32 0.0, %v2161
      %v2163 = vpop.f32.mrf.mxu0
      %v2164 = vpop.f32.mrf.mxu0
      %v2165 = vadd.f32 0.0, %v2164
      %v2166 = vpop.f32.mrf.mxu0
      %2167 = vmatprep.mubr.bf16.mxu0 %v1336
      %2168 = vmatmul.mubr.bf16.gmra.mxu0 %v1335
      %v2169 = vpop.f32.mrf.mxu0
      %v2170 = vadd.f32 0.0, %v2169
      %v2171 = vpop.f32.mrf.mxu0
      %v2172 = vpop.f32.mrf.mxu0
      %v2173 = vadd.f32 0.0, %v2172
      %v2174 = vpop.f32.mrf.mxu0
      %2175 = vmatprep.mubr.bf16.mxu0 %v1340
      %2176 = vmatmul.mubr.bf16.gmra.mxu0 %v1339
      %v2177 = vpop.f32.mrf.mxu0
      %v2178 = vadd.f32 0.0, %v2177
      %v2179 = vpop.f32.mrf.mxu0
      %v2180 = vpop.f32.mrf.mxu0
      %v2181 = vadd.f32 0.0, %v2180
      %v2182 = vpop.f32.mrf.mxu0
      %2183 = vmatprep.mubr.bf16.mxu0 %v1344
      %2184 = vmatmul.mubr.bf16.gmra.mxu0 %v1343
      %v2185 = vpop.f32.mrf.mxu0
      %v2186 = vadd.f32 0.0, %v2185
      %v2187 = vpop.f32.mrf.mxu0
      %v2188 = vpop.f32.mrf.mxu0
      %v2189 = vadd.f32 0.0, %v2188
      %v2190 = vpop.f32.mrf.mxu0
      %2191 = vmatprep.mubr.bf16.mxu0 %v1348
      %2192 = vmatmul.mubr.bf16.gmra.mxu0 %v1347
      %v2193 = vpop.f32.mrf.mxu0
      %v2194 = vadd.f32 0.0, %v2193
      %v2195 = vpop.f32.mrf.mxu0
      %v2196 = vpop.f32.mrf.mxu0
      %v2197 = vadd.f32 0.0, %v2196
      %v2198 = vpop.f32.mrf.mxu0
      %2199 = vmatprep.mubr.bf16.mxu0 %v1352
      %2200 = vmatmul.mubr.bf16.gmra.mxu0 %v1351
      %v2201 = vpop.f32.mrf.mxu0
      %v2202 = vadd.f32 0.0, %v2201
      %v2203 = vpop.f32.mrf.mxu0
      %v2204 = vpop.f32.mrf.mxu0
      %v2205 = vadd.f32 0.0, %v2204
      %v2206 = vpop.f32.mrf.mxu0
      %2207 = vmatprep.mubr.bf16.mxu0 %v1356
      %2208 = vmatmul.mubr.bf16.gmra.mxu0 %v1355
      %v2209 = vpop.f32.mrf.mxu0
      %v2210 = vadd.f32 0.0, %v2209
      %v2211 = vpop.f32.mrf.mxu0
      %v2212 = vpop.f32.mrf.mxu0
      %v2213 = vadd.f32 0.0, %v2212
      %v2214 = vpop.f32.mrf.mxu0
      %2215 = vmatprep.mubr.bf16.mxu0 %v1360
      %2216 = vmatmul.mubr.bf16.gmra.mxu0 %v1359
      %v2217 = vpop.f32.mrf.mxu0
      %v2218 = vadd.f32 0.0, %v2217
      %v2219 = vpop.f32.mrf.mxu0
      %v2220 = vpop.f32.mrf.mxu0
      %v2221 = vadd.f32 0.0, %v2220
      %v2222 = vpop.f32.mrf.mxu0
      %2223 = vmatprep.mubr.bf16.mxu0 %v1364
      %2224 = vmatmul.mubr.bf16.gmra.mxu0 %v1363
      %v2225 = vpop.f32.mrf.mxu0
      %v2226 = vadd.f32 0.0, %v2225
      %v2227 = vpop.f32.mrf.mxu0
      %v2228 = vpop.f32.mrf.mxu0
      %v2229 = vadd.f32 0.0, %v2228
      %v2230 = vpop.f32.mrf.mxu0
      %2231 = vmatprep.mubr.bf16.mxu0 %v1368
      %2232 = vmatmul.mubr.bf16.gmra.mxu0 %v1367
      %v2233 = vpop.f32.mrf.mxu0
      %v2234 = vadd.f32 0.0, %v2233
      %v2235 = vpop.f32.mrf.mxu0
      %v2236 = vpop.f32.mrf.mxu0
      %v2237 = vadd.f32 0.0, %v2236
      %v2238 = vpop.f32.mrf.mxu0
      %2239 = vmatprep.mubr.bf16.mxu0 %v1372
      %2240 = vmatmul.mubr.bf16.gmra.mxu0 %v1371
      %v2241 = vpop.f32.mrf.mxu0
      %v2242 = vadd.f32 0.0, %v2241
      %v2243 = vpop.f32.mrf.mxu0
      %v2244 = vpop.f32.mrf.mxu0
      %v2245 = vadd.f32 0.0, %v2244
      %v2246 = vpop.f32.mrf.mxu0
      %2247 = vmatprep.mubr.bf16.mxu0 %v1376
      %2248 = vmatmul.mubr.bf16.gmra.mxu0 %v1375
      %v2249 = vpop.f32.mrf.mxu0
      %v2250 = vadd.f32 0.0, %v2249
      %v2251 = vpop.f32.mrf.mxu0
      %v2252 = vpop.f32.mrf.mxu0
      %v2253 = vadd.f32 0.0, %v2252
      %v2254 = vpop.f32.mrf.mxu0
      %2255 = vmatprep.mubr.bf16.mxu0 %v1380
      %2256 = vmatmul.mubr.bf16.gmra.mxu0 %v1379
      %v2257 = vpop.f32.mrf.mxu0
      %v2258 = vadd.f32 0.0, %v2257
      %v2259 = vpop.f32.mrf.mxu0
      %v2260 = vpop.f32.mrf.mxu0
      %v2261 = vadd.f32 0.0, %v2260
      %v2262 = vpop.f32.mrf.mxu0
      %2263 = vmatprep.mubr.bf16.mxu0 %v1384
      %2264 = vmatmul.mubr.bf16.gmra.mxu0 %v1383
      %v2265 = vpop.f32.mrf.mxu0
      %v2266 = vadd.f32 0.0, %v2265
      %v2267 = vpop.f32.mrf.mxu0
      %v2268 = vpop.f32.mrf.mxu0
      %v2269 = vadd.f32 0.0, %v2268
      %v2270 = vpop.f32.mrf.mxu0
      %2271 = vmatprep.mubr.bf16.mxu0 %v1388
      %2272 = vmatmul.mubr.bf16.gmra.mxu0 %v1387
      %v2273 = vpop.f32.mrf.mxu0
      %v2274 = vadd.f32 0.0, %v2273
      %v2275 = vpop.f32.mrf.mxu0
      %v2276 = vpop.f32.mrf.mxu0
      %v2277 = vadd.f32 0.0, %v2276
      %v2278 = vpop.f32.mrf.mxu0
      %2279 = vmatprep.mubr.bf16.mxu0 %v1392
      %2280 = vmatmul.mubr.bf16.gmra.mxu0 %v1391
      %v2281 = vpop.f32.mrf.mxu0
      %v2282 = vadd.f32 0.0, %v2281
      %v2283 = vpop.f32.mrf.mxu0
      %v2284 = vpop.f32.mrf.mxu0
      %v2285 = vadd.f32 0.0, %v2284
      %v2286 = vpop.f32.mrf.mxu0
      %2287 = vmatprep.mubr.bf16.mxu0 %v1396
      %2288 = vmatmul.mubr.bf16.gmra.mxu0 %v1395
      %v2289 = vpop.f32.mrf.mxu0
      %v2290 = vadd.f32 0.0, %v2289
      %v2291 = vpop.f32.mrf.mxu0
      %v2292 = vpop.f32.mrf.mxu0
      %v2293 = vadd.f32 0.0, %v2292
      %v2294 = vpop.f32.mrf.mxu0
      %2295 = vmatprep.mubr.bf16.mxu0 %v1400
      %2296 = vmatmul.mubr.bf16.gmra.mxu0 %v1399
      %v2297 = vpop.f32.mrf.mxu0
      %v2298 = vadd.f32 0.0, %v2297
      %v2299 = vpop.f32.mrf.mxu0
      %v2300 = vpop.f32.mrf.mxu0
      %v2301 = vadd.f32 0.0, %v2300
      %v2302 = vpop.f32.mrf.mxu0
      %2303 = vmatprep.mubr.bf16.mxu0 %v1404
      %2304 = vmatmul.mubr.bf16.gmra.mxu0 %v1403
      %v2305 = vpop.f32.mrf.mxu0
      %v2306 = vadd.f32 0.0, %v2305
      %v2307 = vpop.f32.mrf.mxu0
      %v2308 = vpop.f32.mrf.mxu0
      %v2309 = vadd.f32 0.0, %v2308
      %v2310 = vpop.f32.mrf.mxu0
      %2311 = vmatprep.mubr.bf16.mxu0 %v1408
      %2312 = vmatmul.mubr.bf16.gmra.mxu0 %v1407
      %v2313 = vpop.f32.mrf.mxu0
      %v2314 = vadd.f32 0.0, %v2313
      %v2315 = vpop.f32.mrf.mxu0
      %v2316 = vpop.f32.mrf.mxu0
      %v2317 = vadd.f32 0.0, %v2316
      %v2318 = vpop.f32.mrf.mxu0
      %2319 = vmatprep.mubr.bf16.mxu0 %v1412
      %2320 = vmatmul.mubr.bf16.gmra.mxu0 %v1411
      %v2321 = vpop.f32.mrf.mxu0
      %v2322 = vadd.f32 0.0, %v2321
      %v2323 = vpop.f32.mrf.mxu0
      %v2324 = vpop.f32.mrf.mxu0
      %v2325 = vadd.f32 0.0, %v2324
      %v2326 = vpop.f32.mrf.mxu0
      %2327 = vmatprep.mubr.bf16.mxu0 %v1416
      %2328 = vmatmul.mubr.bf16.gmra.mxu0 %v1415
      %v2329 = vpop.f32.mrf.mxu0
      %v2330 = vadd.f32 0.0, %v2329
      %v2331 = vpop.f32.mrf.mxu0
      %v2332 = vpop.f32.mrf.mxu0
      %v2333 = vadd.f32 0.0, %v2332
      %v2334 = vpop.f32.mrf.mxu0
      %2335 = vmatprep.mubr.bf16.mxu0 %v1420
      %2336 = vmatmul.mubr.bf16.gmra.mxu0 %v1419
      %v2337 = vpop.f32.mrf.mxu0
      %v2338 = vadd.f32 0.0, %v2337
      %v2339 = vpop.f32.mrf.mxu0
      %v2340 = vpop.f32.mrf.mxu0
      %v2341 = vadd.f32 0.0, %v2340
      %v2342 = vpop.f32.mrf.mxu0
      %2343 = vmatprep.mubr.bf16.mxu0 %v1424
      %2344 = vmatmul.mubr.bf16.gmra.mxu0 %v1423
      %v2345 = vpop.f32.mrf.mxu0
      %v2346 = vadd.f32 0.0, %v2345
      %v2347 = vpop.f32.mrf.mxu0
      %v2348 = vpop.f32.mrf.mxu0
      %v2349 = vadd.f32 0.0, %v2348
      %v2350 = vpop.f32.mrf.mxu0
      %2351 = vmatprep.mubr.bf16.mxu0 %v1428
      %2352 = vmatmul.mubr.bf16.gmra.mxu0 %v1427
      %v2353 = vpop.f32.mrf.mxu0
      %v2354 = vadd.f32 0.0, %v2353
      %v2355 = vpop.f32.mrf.mxu0
      %v2356 = vpop.f32.mrf.mxu0
      %v2357 = vadd.f32 0.0, %v2356
      %v2358 = vpop.f32.mrf.mxu0
      %2359 = vmatprep.mubr.bf16.mxu0 %v1432
      %2360 = vmatmul.mubr.bf16.gmra.mxu0 %v1431
      %v2361 = vpop.f32.mrf.mxu0
      %v2362 = vadd.f32 0.0, %v2361
      %v2363 = vpop.f32.mrf.mxu0
      %v2364 = vpop.f32.mrf.mxu0
      %v2365 = vadd.f32 0.0, %v2364
      %v2366 = vpop.f32.mrf.mxu0
      %2367 = vmatprep.mubr.bf16.mxu0 %v1436
      %2368 = vmatmul.mubr.bf16.gmra.mxu0 %v1435
      %v2369 = vpop.f32.mrf.mxu0
      %v2370 = vadd.f32 0.0, %v2369
      %v2371 = vpop.f32.mrf.mxu0
      %v2372 = vpop.f32.mrf.mxu0
      %v2373 = vadd.f32 0.0, %v2372
      %v2374 = vpop.f32.mrf.mxu0
      %2375 = vmatprep.mubr.bf16.mxu0 %v1440
      %2376 = vmatmul.mubr.bf16.gmra.mxu0 %v1439
      %v2377 = vpop.f32.mrf.mxu0
      %v2378 = vadd.f32 0.0, %v2377
      %v2379 = vpop.f32.mrf.mxu0
      %v2380 = vpop.f32.mrf.mxu0
      %v2381 = vadd.f32 0.0, %v2380
      %v2382 = vpop.f32.mrf.mxu0
      %2383 = vmatprep.mubr.bf16.mxu0 %v1444
      %2384 = vmatmul.mubr.bf16.gmra.mxu0 %v1443
      %v2385 = vpop.f32.mrf.mxu0
      %v2386 = vadd.f32 0.0, %v2385
      %v2387 = vpop.f32.mrf.mxu0
      %v2388 = vpop.f32.mrf.mxu0
      %v2389 = vadd.f32 0.0, %v2388
      %v2390 = vpop.f32.mrf.mxu0
      %2391 = vmatprep.mubr.bf16.mxu0 %v1448
      %2392 = vmatmul.mubr.bf16.gmra.mxu0 %v1447
      %v2393 = vpop.f32.mrf.mxu0
      %v2394 = vadd.f32 0.0, %v2393
      %v2395 = vpop.f32.mrf.mxu0
      %v2396 = vpop.f32.mrf.mxu0
      %v2397 = vadd.f32 0.0, %v2396
      %v2398 = vpop.f32.mrf.mxu0
      %2399 = vmatprep.mubr.bf16.mxu0 %v1452
      %2400 = vmatmul.mubr.bf16.gmra.mxu0 %v1451
      %v2401 = vpop.f32.mrf.mxu0
      %v2402 = vadd.f32 0.0, %v2401
      %v2403 = vpop.f32.mrf.mxu0
      %v2404 = vpop.f32.mrf.mxu0
      %v2405 = vadd.f32 0.0, %v2404
      %v2406 = vpop.f32.mrf.mxu0
      %2407 = vmatprep.mubr.bf16.mxu0 %v1456
      %2408 = vmatmul.mubr.bf16.gmra.mxu0 %v1455
      %v2409 = vpop.f32.mrf.mxu0
      %v2410 = vadd.f32 0.0, %v2409
      %v2411 = vpop.f32.mrf.mxu0
      %v2412 = vpop.f32.mrf.mxu0
      %v2413 = vadd.f32 0.0, %v2412
      %v2414 = vpop.f32.mrf.mxu0
      %2415 = vmatprep.mubr.bf16.mxu0 %v1460
      %2416 = vmatmul.mubr.bf16.gmra.mxu0 %v1459
      %v2417 = vpop.f32.mrf.mxu0
      %v2418 = vadd.f32 0.0, %v2417
      %v2419 = vpop.f32.mrf.mxu0
      %v2420 = vpop.f32.mrf.mxu0
      %v2421 = vadd.f32 0.0, %v2420
      %v2422 = vpop.f32.mrf.mxu0
      %2423 = vmatprep.mubr.bf16.mxu0 %v1464
      %2424 = vmatmul.mubr.bf16.gmra.mxu0 %v1463
      %v2425 = vpop.f32.mrf.mxu0
      %v2426 = vadd.f32 0.0, %v2425
      %v2427 = vpop.f32.mrf.mxu0
      %v2428 = vpop.f32.mrf.mxu0
      %v2429 = vadd.f32 0.0, %v2428
      %v2430 = vpop.f32.mrf.mxu0
      %2431 = vmatprep.mubr.bf16.mxu0 %v1468
      %2432 = vmatmul.mubr.bf16.gmra.mxu0 %v1467
      %v2433 = vpop.f32.mrf.mxu0
      %v2434 = vadd.f32 0.0, %v2433
      %v2435 = vpop.f32.mrf.mxu0
      %v2436 = vpop.f32.mrf.mxu0
      %v2437 = vadd.f32 0.0, %v2436
      %v2438 = vpop.f32.mrf.mxu0
      %2439 = vmatprep.mubr.bf16.mxu0 %v1472
      %2440 = vmatmul.mubr.bf16.gmra.mxu0 %v1471
      %v2441 = vpop.f32.mrf.mxu0
      %v2442 = vadd.f32 0.0, %v2441
      %v2443 = vpop.f32.mrf.mxu0
      %v2444 = vpop.f32.mrf.mxu0
      %v2445 = vadd.f32 0.0, %v2444
      %v2446 = vpop.f32.mrf.mxu0
      %2447 = vmatprep.mubr.bf16.mxu0 %v1476
      %2448 = vmatmul.mubr.bf16.gmra.mxu0 %v1475
      %v2449 = vpop.f32.mrf.mxu0
      %v2450 = vadd.f32 0.0, %v2449
      %v2451 = vpop.f32.mrf.mxu0
      %v2452 = vpop.f32.mrf.mxu0
      %v2453 = vadd.f32 0.0, %v2452
      %v2454 = vpop.f32.mrf.mxu0
      %2455 = vmatprep.mubr.bf16.mxu0 %v1480
      %2456 = vmatmul.mubr.bf16.gmra.mxu0 %v1479
      %v2457 = vpop.f32.mrf.mxu0
      %v2458 = vadd.f32 0.0, %v2457
      %v2459 = vpop.f32.mrf.mxu0
      %v2460 = vpop.f32.mrf.mxu0
      %v2461 = vadd.f32 0.0, %v2460
      %v2462 = vpop.f32.mrf.mxu0
      %2463 = vmatprep.mubr.bf16.mxu0 %v1484
      %2464 = vmatmul.mubr.bf16.gmra.mxu0 %v1483
      %v2465 = vpop.f32.mrf.mxu0
      %v2466 = vadd.f32 0.0, %v2465
      %v2467 = vpop.f32.mrf.mxu0
      %v2468 = vpop.f32.mrf.mxu0
      %v2469 = vadd.f32 0.0, %v2468
      %v2470 = vpop.f32.mrf.mxu0
      %2471 = vmatprep.mubr.bf16.mxu0 %v1488
      %2472 = vmatmul.mubr.bf16.gmra.mxu0 %v1487
      %v2473 = vpop.f32.mrf.mxu0
      %v2474 = vadd.f32 0.0, %v2473
      %v2475 = vpop.f32.mrf.mxu0
      %v2476 = vpop.f32.mrf.mxu0
      %v2477 = vadd.f32 0.0, %v2476
      %v2478 = vpop.f32.mrf.mxu0
      %2479 = vmatprep.mubr.bf16.mxu0 %v1492
      %2480 = vmatmul.mubr.bf16.gmra.mxu0 %v1491
      %v2481 = vpop.f32.mrf.mxu0
      %v2482 = vadd.f32 0.0, %v2481
      %v2483 = vpop.f32.mrf.mxu0
      %v2484 = vpop.f32.mrf.mxu0
      %v2485 = vadd.f32 0.0, %v2484
      %v2486 = vpop.f32.mrf.mxu0
      %2487 = vdwg.mxu0
      %2488 = vmatprep.subr.bf16.mxu0 0
      %2489 = vmatpush1.bf16.msra.mxu0 %v1902
      %2490 = vmatprep.subr.bf16.mxu0 0
      %2491 = vmatpush1.bf16.msra.mxu0 %v1901
      %2492 = vmatprep.subr.bf16.mxu0 0
      %2493 = vmatpush1.bf16.msra.mxu0 %v1900
      %2494 = vmatprep.subr.bf16.mxu0 0
      %2495 = vmatpush1.bf16.msra.mxu0 %v1899
      %2496 = vmatprep.subr.bf16.mxu0 0
      %2497 = vmatpush1.bf16.msra.mxu0 %v1898
      %2498 = vmatprep.subr.bf16.mxu0 0
      %2499 = vmatpush1.bf16.msra.mxu0 %v1897
      %2500 = vmatprep.subr.bf16.mxu0 0
      %2501 = vmatpush1.bf16.msra.mxu0 %v1896
      %2502 = vmatprep.subr.bf16.mxu0 0
      %2503 = vmatpush1.bf16.msra.mxu0 %v1895
      %2504 = vmatprep.subr.bf16.mxu0 0
      %2505 = vmatpush2.bf16.msra.mxu0 %v1910
      %2506 = vmatprep.subr.bf16.mxu0 0
      %2507 = vmatpush2.bf16.msra.mxu0 %v1909
      %2508 = vmatprep.subr.bf16.mxu0 0
      %2509 = vmatpush2.bf16.msra.mxu0 %v1908
      %2510 = vmatprep.subr.bf16.mxu0 0
      %2511 = vmatpush2.bf16.msra.mxu0 %v1907
      %2512 = vmatprep.subr.bf16.mxu0 0
      %2513 = vmatpush2.bf16.msra.mxu0 %v1906
      %2514 = vmatprep.subr.bf16.mxu0 0
      %2515 = vmatpush2.bf16.msra.mxu0 %v1905
      %2516 = vmatprep.subr.bf16.mxu0 0
      %2517 = vmatpush2.bf16.msra.mxu0 %v1904
      %2518 = vmatprep.subr.bf16.mxu0 0
      %2519 = vmatpush2.bf16.msra.mxu0 %v1903
      %2520 = vmatprep.mubr.bf16.mxu0 %v1242
      %2521 = vmatmul.mubr.bf16.gmra.mxu0 %v1241
      %v2522 = vpop.f32.mrf.mxu0
      %v2523 = vadd.f32 %v1978, %v2522
      %v2524 = vpop.f32.mrf.mxu0
      %v2525 = vpop.f32.mrf.mxu0
      %v2526 = vadd.f32 %v1981, %v2525
      %v2527 = vpop.f32.mrf.mxu0
      %2528 = vmatprep.mubr.bf16.mxu0 %v1246
      %2529 = vmatmul.mubr.bf16.gmra.mxu0 %v1245
      %v2530 = vpop.f32.mrf.mxu0
      %v2531 = vadd.f32 %v1986, %v2530
      %v2532 = vpop.f32.mrf.mxu0
      %v2533 = vpop.f32.mrf.mxu0
      %v2534 = vadd.f32 %v1989, %v2533
      %v2535 = vpop.f32.mrf.mxu0
      %2536 = vmatprep.mubr.bf16.mxu0 %v1250
      %2537 = vmatmul.mubr.bf16.gmra.mxu0 %v1249
      %v2538 = vpop.f32.mrf.mxu0
      %v2539 = vadd.f32 %v1994, %v2538
      %v2540 = vpop.f32.mrf.mxu0
      %v2541 = vpop.f32.mrf.mxu0
      %v2542 = vadd.f32 %v1997, %v2541
      %v2543 = vpop.f32.mrf.mxu0
      %2544 = vmatprep.mubr.bf16.mxu0 %v1254
      %2545 = vmatmul.mubr.bf16.gmra.mxu0 %v1253
      %v2546 = vpop.f32.mrf.mxu0
      %v2547 = vadd.f32 %v2002, %v2546
      %v2548 = vpop.f32.mrf.mxu0
      %v2549 = vpop.f32.mrf.mxu0
      %v2550 = vadd.f32 %v2005, %v2549
      %v2551 = vpop.f32.mrf.mxu0
      %2552 = vmatprep.mubr.bf16.mxu0 %v1258
      %2553 = vmatmul.mubr.bf16.gmra.mxu0 %v1257
      %v2554 = vpop.f32.mrf.mxu0
      %v2555 = vadd.f32 %v2010, %v2554
      %v2556 = vpop.f32.mrf.mxu0
      %v2557 = vpop.f32.mrf.mxu0
      %v2558 = vadd.f32 %v2013, %v2557
      %v2559 = vpop.f32.mrf.mxu0
      %2560 = vmatprep.mubr.bf16.mxu0 %v1262
      %2561 = vmatmul.mubr.bf16.gmra.mxu0 %v1261
      %v2562 = vpop.f32.mrf.mxu0
      %v2563 = vadd.f32 %v2018, %v2562
      %v2564 = vpop.f32.mrf.mxu0
      %v2565 = vpop.f32.mrf.mxu0
      %v2566 = vadd.f32 %v2021, %v2565
      %v2567 = vpop.f32.mrf.mxu0
      %2568 = vmatprep.mubr.bf16.mxu0 %v1266
      %2569 = vmatmul.mubr.bf16.gmra.mxu0 %v1265
      %v2570 = vpop.f32.mrf.mxu0
      %v2571 = vadd.f32 %v2026, %v2570
      %v2572 = vpop.f32.mrf.mxu0
      %v2573 = vpop.f32.mrf.mxu0
      %v2574 = vadd.f32 %v2029, %v2573
      %v2575 = vpop.f32.mrf.mxu0
      %2576 = vmatprep.mubr.bf16.mxu0 %v1270
      %2577 = vmatmul.mubr.bf16.gmra.mxu0 %v1269
      %v2578 = vpop.f32.mrf.mxu0
      %v2579 = vadd.f32 %v2034, %v2578
      %v2580 = vpop.f32.mrf.mxu0
      %v2581 = vpop.f32.mrf.mxu0
      %v2582 = vadd.f32 %v2037, %v2581
      %v2583 = vpop.f32.mrf.mxu0
      %2584 = vmatprep.mubr.bf16.mxu0 %v1274
      %2585 = vmatmul.mubr.bf16.gmra.mxu0 %v1273
      %v2586 = vpop.f32.mrf.mxu0
      %v2587 = vadd.f32 %v2042, %v2586
      %v2588 = vpop.f32.mrf.mxu0
      %v2589 = vpop.f32.mrf.mxu0
      %v2590 = vadd.f32 %v2045, %v2589
      %v2591 = vpop.f32.mrf.mxu0
      %2592 = vmatprep.mubr.bf16.mxu0 %v1278
      %2593 = vmatmul.mubr.bf16.gmra.mxu0 %v1277
      %v2594 = vpop.f32.mrf.mxu0
      %v2595 = vadd.f32 %v2050, %v2594
      %v2596 = vpop.f32.mrf.mxu0
      %v2597 = vpop.f32.mrf.mxu0
      %v2598 = vadd.f32 %v2053, %v2597
      %v2599 = vpop.f32.mrf.mxu0
      %2600 = vmatprep.mubr.bf16.mxu0 %v1282
      %2601 = vmatmul.mubr.bf16.gmra.mxu0 %v1281
      %v2602 = vpop.f32.mrf.mxu0
      %v2603 = vadd.f32 %v2058, %v2602
      %v2604 = vpop.f32.mrf.mxu0
      %v2605 = vpop.f32.mrf.mxu0
      %v2606 = vadd.f32 %v2061, %v2605
      %v2607 = vpop.f32.mrf.mxu0
      %2608 = vmatprep.mubr.bf16.mxu0 %v1286
      %2609 = vmatmul.mubr.bf16.gmra.mxu0 %v1285
      %v2610 = vpop.f32.mrf.mxu0
      %v2611 = vadd.f32 %v2066, %v2610
      %v2612 = vpop.f32.mrf.mxu0
      %v2613 = vpop.f32.mrf.mxu0
      %v2614 = vadd.f32 %v2069, %v2613
      %v2615 = vpop.f32.mrf.mxu0
      %2616 = vmatprep.mubr.bf16.mxu0 %v1290
      %2617 = vmatmul.mubr.bf16.gmra.mxu0 %v1289
      %v2618 = vpop.f32.mrf.mxu0
      %v2619 = vadd.f32 %v2074, %v2618
      %v2620 = vpop.f32.mrf.mxu0
      %v2621 = vpop.f32.mrf.mxu0
      %v2622 = vadd.f32 %v2077, %v2621
      %v2623 = vpop.f32.mrf.mxu0
      %2624 = vmatprep.mubr.bf16.mxu0 %v1294
      %2625 = vmatmul.mubr.bf16.gmra.mxu0 %v1293
      %v2626 = vpop.f32.mrf.mxu0
      %v2627 = vadd.f32 %v2082, %v2626
      %v2628 = vpop.f32.mrf.mxu0
      %v2629 = vpop.f32.mrf.mxu0
      %v2630 = vadd.f32 %v2085, %v2629
      %v2631 = vpop.f32.mrf.mxu0
      %2632 = vmatprep.mubr.bf16.mxu0 %v1298
      %2633 = vmatmul.mubr.bf16.gmra.mxu0 %v1297
      %v2634 = vpop.f32.mrf.mxu0
      %v2635 = vadd.f32 %v2090, %v2634
      %v2636 = vpop.f32.mrf.mxu0
      %v2637 = vpop.f32.mrf.mxu0
      %v2638 = vadd.f32 %v2093, %v2637
      %v2639 = vpop.f32.mrf.mxu0
      %2640 = vmatprep.mubr.bf16.mxu0 %v1302
      %2641 = vmatmul.mubr.bf16.gmra.mxu0 %v1301
      %v2642 = vpop.f32.mrf.mxu0
      %v2643 = vadd.f32 %v2098, %v2642
      %v2644 = vpop.f32.mrf.mxu0
      %v2645 = vpop.f32.mrf.mxu0
      %v2646 = vadd.f32 %v2101, %v2645
      %v2647 = vpop.f32.mrf.mxu0
      %2648 = vmatprep.mubr.bf16.mxu0 %v1306
      %2649 = vmatmul.mubr.bf16.gmra.mxu0 %v1305
      %v2650 = vpop.f32.mrf.mxu0
      %v2651 = vadd.f32 %v2106, %v2650
      %v2652 = vpop.f32.mrf.mxu0
      %v2653 = vpop.f32.mrf.mxu0
      %v2654 = vadd.f32 %v2109, %v2653
      %v2655 = vpop.f32.mrf.mxu0
      %2656 = vmatprep.mubr.bf16.mxu0 %v1310
      %2657 = vmatmul.mubr.bf16.gmra.mxu0 %v1309
      %v2658 = vpop.f32.mrf.mxu0
      %v2659 = vadd.f32 %v2114, %v2658
      %v2660 = vpop.f32.mrf.mxu0
      %v2661 = vpop.f32.mrf.mxu0
      %v2662 = vadd.f32 %v2117, %v2661
      %v2663 = vpop.f32.mrf.mxu0
      %2664 = vmatprep.mubr.bf16.mxu0 %v1314
      %2665 = vmatmul.mubr.bf16.gmra.mxu0 %v1313
      %v2666 = vpop.f32.mrf.mxu0
      %v2667 = vadd.f32 %v2122, %v2666
      %v2668 = vpop.f32.mrf.mxu0
      %v2669 = vpop.f32.mrf.mxu0
      %v2670 = vadd.f32 %v2125, %v2669
      %v2671 = vpop.f32.mrf.mxu0
      %2672 = vmatprep.mubr.bf16.mxu0 %v1318
      %2673 = vmatmul.mubr.bf16.gmra.mxu0 %v1317
      %v2674 = vpop.f32.mrf.mxu0
      %v2675 = vadd.f32 %v2130, %v2674
      %v2676 = vpop.f32.mrf.mxu0
      %v2677 = vpop.f32.mrf.mxu0
      %v2678 = vadd.f32 %v2133, %v2677
      %v2679 = vpop.f32.mrf.mxu0
      %2680 = vmatprep.mubr.bf16.mxu0 %v1322
      %2681 = vmatmul.mubr.bf16.gmra.mxu0 %v1321
      %v2682 = vpop.f32.mrf.mxu0
      %v2683 = vadd.f32 %v2138, %v2682
      %v2684 = vpop.f32.mrf.mxu0
      %v2685 = vpop.f32.mrf.mxu0
      %v2686 = vadd.f32 %v2141, %v2685
      %v2687 = vpop.f32.mrf.mxu0
      %2688 = vmatprep.mubr.bf16.mxu0 %v1326
      %2689 = vmatmul.mubr.bf16.gmra.mxu0 %v1325
      %v2690 = vpop.f32.mrf.mxu0
      %v2691 = vadd.f32 %v2146, %v2690
      %v2692 = vpop.f32.mrf.mxu0
      %v2693 = vpop.f32.mrf.mxu0
      %v2694 = vadd.f32 %v2149, %v2693
      %v2695 = vpop.f32.mrf.mxu0
      %2696 = vmatprep.mubr.bf16.mxu0 %v1330
      %2697 = vmatmul.mubr.bf16.gmra.mxu0 %v1329
      %v2698 = vpop.f32.mrf.mxu0
      %v2699 = vadd.f32 %v2154, %v2698
      %v2700 = vpop.f32.mrf.mxu0
      %v2701 = vpop.f32.mrf.mxu0
      %v2702 = vadd.f32 %v2157, %v2701
      %v2703 = vpop.f32.mrf.mxu0
      %2704 = vmatprep.mubr.bf16.mxu0 %v1334
      %2705 = vmatmul.mubr.bf16.gmra.mxu0 %v1333
      %v2706 = vpop.f32.mrf.mxu0
      %v2707 = vadd.f32 %v2162, %v2706
      %v2708 = vpop.f32.mrf.mxu0
      %v2709 = vpop.f32.mrf.mxu0
      %v2710 = vadd.f32 %v2165, %v2709
      %v2711 = vpop.f32.mrf.mxu0
      %2712 = vmatprep.mubr.bf16.mxu0 %v1338
      %2713 = vmatmul.mubr.bf16.gmra.mxu0 %v1337
      %v2714 = vpop.f32.mrf.mxu0
      %v2715 = vadd.f32 %v2170, %v2714
      %v2716 = vpop.f32.mrf.mxu0
      %v2717 = vpop.f32.mrf.mxu0
      %v2718 = vadd.f32 %v2173, %v2717
      %v2719 = vpop.f32.mrf.mxu0
      %2720 = vmatprep.mubr.bf16.mxu0 %v1342
      %2721 = vmatmul.mubr.bf16.gmra.mxu0 %v1341
      %v2722 = vpop.f32.mrf.mxu0
      %v2723 = vadd.f32 %v2178, %v2722
      %v2724 = vpop.f32.mrf.mxu0
      %v2725 = vpop.f32.mrf.mxu0
      %v2726 = vadd.f32 %v2181, %v2725
      %v2727 = vpop.f32.mrf.mxu0
      %2728 = vmatprep.mubr.bf16.mxu0 %v1346
      %2729 = vmatmul.mubr.bf16.gmra.mxu0 %v1345
      %v2730 = vpop.f32.mrf.mxu0
      %v2731 = vadd.f32 %v2186, %v2730
      %v2732 = vpop.f32.mrf.mxu0
      %v2733 = vpop.f32.mrf.mxu0
      %v2734 = vadd.f32 %v2189, %v2733
      %v2735 = vpop.f32.mrf.mxu0
      %2736 = vmatprep.mubr.bf16.mxu0 %v1350
      %2737 = vmatmul.mubr.bf16.gmra.mxu0 %v1349
      %v2738 = vpop.f32.mrf.mxu0
      %v2739 = vadd.f32 %v2194, %v2738
      %v2740 = vpop.f32.mrf.mxu0
      %v2741 = vpop.f32.mrf.mxu0
      %v2742 = vadd.f32 %v2197, %v2741
      %v2743 = vpop.f32.mrf.mxu0
      %2744 = vmatprep.mubr.bf16.mxu0 %v1354
      %2745 = vmatmul.mubr.bf16.gmra.mxu0 %v1353
      %v2746 = vpop.f32.mrf.mxu0
      %v2747 = vadd.f32 %v2202, %v2746
      %v2748 = vpop.f32.mrf.mxu0
      %v2749 = vpop.f32.mrf.mxu0
      %v2750 = vadd.f32 %v2205, %v2749
      %v2751 = vpop.f32.mrf.mxu0
      %2752 = vmatprep.mubr.bf16.mxu0 %v1358
      %2753 = vmatmul.mubr.bf16.gmra.mxu0 %v1357
      %v2754 = vpop.f32.mrf.mxu0
      %v2755 = vadd.f32 %v2210, %v2754
      %v2756 = vpop.f32.mrf.mxu0
      %v2757 = vpop.f32.mrf.mxu0
      %v2758 = vadd.f32 %v2213, %v2757
      %v2759 = vpop.f32.mrf.mxu0
      %2760 = vmatprep.mubr.bf16.mxu0 %v1362
      %2761 = vmatmul.mubr.bf16.gmra.mxu0 %v1361
      %v2762 = vpop.f32.mrf.mxu0
      %v2763 = vadd.f32 %v2218, %v2762
      %v2764 = vpop.f32.mrf.mxu0
      %v2765 = vpop.f32.mrf.mxu0
      %v2766 = vadd.f32 %v2221, %v2765
      %v2767 = vpop.f32.mrf.mxu0
      %2768 = vmatprep.mubr.bf16.mxu0 %v1366
      %2769 = vmatmul.mubr.bf16.gmra.mxu0 %v1365
      %v2770 = vpop.f32.mrf.mxu0
      %v2771 = vadd.f32 %v2226, %v2770
      %v2772 = vpop.f32.mrf.mxu0
      %v2773 = vpop.f32.mrf.mxu0
      %v2774 = vadd.f32 %v2229, %v2773
      %v2775 = vpop.f32.mrf.mxu0
      %2776 = vmatprep.mubr.bf16.mxu0 %v1370
      %2777 = vmatmul.mubr.bf16.gmra.mxu0 %v1369
      %v2778 = vpop.f32.mrf.mxu0
      %v2779 = vadd.f32 %v2234, %v2778
      %v2780 = vpop.f32.mrf.mxu0
      %v2781 = vpop.f32.mrf.mxu0
      %v2782 = vadd.f32 %v2237, %v2781
      %v2783 = vpop.f32.mrf.mxu0
      %2784 = vmatprep.mubr.bf16.mxu0 %v1374
      %2785 = vmatmul.mubr.bf16.gmra.mxu0 %v1373
      %v2786 = vpop.f32.mrf.mxu0
      %v2787 = vadd.f32 %v2242, %v2786
      %v2788 = vpop.f32.mrf.mxu0
      %v2789 = vpop.f32.mrf.mxu0
      %v2790 = vadd.f32 %v2245, %v2789
      %v2791 = vpop.f32.mrf.mxu0
      %2792 = vmatprep.mubr.bf16.mxu0 %v1378
      %2793 = vmatmul.mubr.bf16.gmra.mxu0 %v1377
      %v2794 = vpop.f32.mrf.mxu0
      %v2795 = vadd.f32 %v2250, %v2794
      %v2796 = vpop.f32.mrf.mxu0
      %v2797 = vpop.f32.mrf.mxu0
      %v2798 = vadd.f32 %v2253, %v2797
      %v2799 = vpop.f32.mrf.mxu0
      %2800 = vmatprep.mubr.bf16.mxu0 %v1382
      %2801 = vmatmul.mubr.bf16.gmra.mxu0 %v1381
      %v2802 = vpop.f32.mrf.mxu0
      %v2803 = vadd.f32 %v2258, %v2802
      %v2804 = vpop.f32.mrf.mxu0
      %v2805 = vpop.f32.mrf.mxu0
      %v2806 = vadd.f32 %v2261, %v2805
      %v2807 = vpop.f32.mrf.mxu0
      %2808 = vmatprep.mubr.bf16.mxu0 %v1386
      %2809 = vmatmul.mubr.bf16.gmra.mxu0 %v1385
      %v2810 = vpop.f32.mrf.mxu0
      %v2811 = vadd.f32 %v2266, %v2810
      %v2812 = vpop.f32.mrf.mxu0
      %v2813 = vpop.f32.mrf.mxu0
      %v2814 = vadd.f32 %v2269, %v2813
      %v2815 = vpop.f32.mrf.mxu0
      %2816 = vmatprep.mubr.bf16.mxu0 %v1390
      %2817 = vmatmul.mubr.bf16.gmra.mxu0 %v1389
      %v2818 = vpop.f32.mrf.mxu0
      %v2819 = vadd.f32 %v2274, %v2818
      %v2820 = vpop.f32.mrf.mxu0
      %v2821 = vpop.f32.mrf.mxu0
      %v2822 = vadd.f32 %v2277, %v2821
      %v2823 = vpop.f32.mrf.mxu0
      %2824 = vmatprep.mubr.bf16.mxu0 %v1394
      %2825 = vmatmul.mubr.bf16.gmra.mxu0 %v1393
      %v2826 = vpop.f32.mrf.mxu0
      %v2827 = vadd.f32 %v2282, %v2826
      %v2828 = vpop.f32.mrf.mxu0
      %v2829 = vpop.f32.mrf.mxu0
      %v2830 = vadd.f32 %v2285, %v2829
      %v2831 = vpop.f32.mrf.mxu0
      %2832 = vmatprep.mubr.bf16.mxu0 %v1398
      %2833 = vmatmul.mubr.bf16.gmra.mxu0 %v1397
      %v2834 = vpop.f32.mrf.mxu0
      %v2835 = vadd.f32 %v2290, %v2834
      %v2836 = vpop.f32.mrf.mxu0
      %v2837 = vpop.f32.mrf.mxu0
      %v2838 = vadd.f32 %v2293, %v2837
      %v2839 = vpop.f32.mrf.mxu0
      %2840 = vmatprep.mubr.bf16.mxu0 %v1402
      %2841 = vmatmul.mubr.bf16.gmra.mxu0 %v1401
      %v2842 = vpop.f32.mrf.mxu0
      %v2843 = vadd.f32 %v2298, %v2842
      %v2844 = vpop.f32.mrf.mxu0
      %v2845 = vpop.f32.mrf.mxu0
      %v2846 = vadd.f32 %v2301, %v2845
      %v2847 = vpop.f32.mrf.mxu0
      %2848 = vmatprep.mubr.bf16.mxu0 %v1406
      %2849 = vmatmul.mubr.bf16.gmra.mxu0 %v1405
      %v2850 = vpop.f32.mrf.mxu0
      %v2851 = vadd.f32 %v2306, %v2850
      %v2852 = vpop.f32.mrf.mxu0
      %v2853 = vpop.f32.mrf.mxu0
      %v2854 = vadd.f32 %v2309, %v2853
      %v2855 = vpop.f32.mrf.mxu0
      %2856 = vmatprep.mubr.bf16.mxu0 %v1410
      %2857 = vmatmul.mubr.bf16.gmra.mxu0 %v1409
      %v2858 = vpop.f32.mrf.mxu0
      %v2859 = vadd.f32 %v2314, %v2858
      %v2860 = vpop.f32.mrf.mxu0
      %v2861 = vpop.f32.mrf.mxu0
      %v2862 = vadd.f32 %v2317, %v2861
      %v2863 = vpop.f32.mrf.mxu0
      %2864 = vmatprep.mubr.bf16.mxu0 %v1414
      %2865 = vmatmul.mubr.bf16.gmra.mxu0 %v1413
      %v2866 = vpop.f32.mrf.mxu0
      %v2867 = vadd.f32 %v2322, %v2866
      %v2868 = vpop.f32.mrf.mxu0
      %v2869 = vpop.f32.mrf.mxu0
      %v2870 = vadd.f32 %v2325, %v2869
      %v2871 = vpop.f32.mrf.mxu0
      %2872 = vmatprep.mubr.bf16.mxu0 %v1418
      %2873 = vmatmul.mubr.bf16.gmra.mxu0 %v1417
      %v2874 = vpop.f32.mrf.mxu0
      %v2875 = vadd.f32 %v2330, %v2874
      %v2876 = vpop.f32.mrf.mxu0
      %v2877 = vpop.f32.mrf.mxu0
      %v2878 = vadd.f32 %v2333, %v2877
      %v2879 = vpop.f32.mrf.mxu0
      %2880 = vmatprep.mubr.bf16.mxu0 %v1422
      %2881 = vmatmul.mubr.bf16.gmra.mxu0 %v1421
      %v2882 = vpop.f32.mrf.mxu0
      %v2883 = vadd.f32 %v2338, %v2882
      %v2884 = vpop.f32.mrf.mxu0
      %v2885 = vpop.f32.mrf.mxu0
      %v2886 = vadd.f32 %v2341, %v2885
      %v2887 = vpop.f32.mrf.mxu0
      %2888 = vmatprep.mubr.bf16.mxu0 %v1426
      %2889 = vmatmul.mubr.bf16.gmra.mxu0 %v1425
      %v2890 = vpop.f32.mrf.mxu0
      %v2891 = vadd.f32 %v2346, %v2890
      %v2892 = vpop.f32.mrf.mxu0
      %v2893 = vpop.f32.mrf.mxu0
      %v2894 = vadd.f32 %v2349, %v2893
      %v2895 = vpop.f32.mrf.mxu0
      %2896 = vmatprep.mubr.bf16.mxu0 %v1430
      %2897 = vmatmul.mubr.bf16.gmra.mxu0 %v1429
      %v2898 = vpop.f32.mrf.mxu0
      %v2899 = vadd.f32 %v2354, %v2898
      %v2900 = vpop.f32.mrf.mxu0
      %v2901 = vpop.f32.mrf.mxu0
      %v2902 = vadd.f32 %v2357, %v2901
      %v2903 = vpop.f32.mrf.mxu0
      %2904 = vmatprep.mubr.bf16.mxu0 %v1434
      %2905 = vmatmul.mubr.bf16.gmra.mxu0 %v1433
      %v2906 = vpop.f32.mrf.mxu0
      %v2907 = vadd.f32 %v2362, %v2906
      %v2908 = vpop.f32.mrf.mxu0
      %v2909 = vpop.f32.mrf.mxu0
      %v2910 = vadd.f32 %v2365, %v2909
      %v2911 = vpop.f32.mrf.mxu0
      %2912 = vmatprep.mubr.bf16.mxu0 %v1438
      %2913 = vmatmul.mubr.bf16.gmra.mxu0 %v1437
      %v2914 = vpop.f32.mrf.mxu0
      %v2915 = vadd.f32 %v2370, %v2914
      %v2916 = vpop.f32.mrf.mxu0
      %v2917 = vpop.f32.mrf.mxu0
      %v2918 = vadd.f32 %v2373, %v2917
      %v2919 = vpop.f32.mrf.mxu0
      %2920 = vmatprep.mubr.bf16.mxu0 %v1442
      %2921 = vmatmul.mubr.bf16.gmra.mxu0 %v1441
      %v2922 = vpop.f32.mrf.mxu0
      %v2923 = vadd.f32 %v2378, %v2922
      %v2924 = vpop.f32.mrf.mxu0
      %v2925 = vpop.f32.mrf.mxu0
      %v2926 = vadd.f32 %v2381, %v2925
      %v2927 = vpop.f32.mrf.mxu0
      %2928 = vmatprep.mubr.bf16.mxu0 %v1446
      %2929 = vmatmul.mubr.bf16.gmra.mxu0 %v1445
      %v2930 = vpop.f32.mrf.mxu0
      %v2931 = vadd.f32 %v2386, %v2930
      %v2932 = vpop.f32.mrf.mxu0
      %v2933 = vpop.f32.mrf.mxu0
      %v2934 = vadd.f32 %v2389, %v2933
      %v2935 = vpop.f32.mrf.mxu0
      %2936 = vmatprep.mubr.bf16.mxu0 %v1450
      %2937 = vmatmul.mubr.bf16.gmra.mxu0 %v1449
      %v2938 = vpop.f32.mrf.mxu0
      %v2939 = vadd.f32 %v2394, %v2938
      %v2940 = vpop.f32.mrf.mxu0
      %v2941 = vpop.f32.mrf.mxu0
      %v2942 = vadd.f32 %v2397, %v2941
      %v2943 = vpop.f32.mrf.mxu0
      %2944 = vmatprep.mubr.bf16.mxu0 %v1454
      %2945 = vmatmul.mubr.bf16.gmra.mxu0 %v1453
      %v2946 = vpop.f32.mrf.mxu0
      %v2947 = vadd.f32 %v2402, %v2946
      %v2948 = vpop.f32.mrf.mxu0
      %v2949 = vpop.f32.mrf.mxu0
      %v2950 = vadd.f32 %v2405, %v2949
      %v2951 = vpop.f32.mrf.mxu0
      %2952 = vmatprep.mubr.bf16.mxu0 %v1458
      %2953 = vmatmul.mubr.bf16.gmra.mxu0 %v1457
      %v2954 = vpop.f32.mrf.mxu0
      %v2955 = vadd.f32 %v2410, %v2954
      %v2956 = vpop.f32.mrf.mxu0
      %v2957 = vpop.f32.mrf.mxu0
      %v2958 = vadd.f32 %v2413, %v2957
      %v2959 = vpop.f32.mrf.mxu0
      %2960 = vmatprep.mubr.bf16.mxu0 %v1462
      %2961 = vmatmul.mubr.bf16.gmra.mxu0 %v1461
      %v2962 = vpop.f32.mrf.mxu0
      %v2963 = vadd.f32 %v2418, %v2962
      %v2964 = vpop.f32.mrf.mxu0
      %v2965 = vpop.f32.mrf.mxu0
      %v2966 = vadd.f32 %v2421, %v2965
      %v2967 = vpop.f32.mrf.mxu0
      %2968 = vmatprep.mubr.bf16.mxu0 %v1466
      %2969 = vmatmul.mubr.bf16.gmra.mxu0 %v1465
      %v2970 = vpop.f32.mrf.mxu0
      %v2971 = vadd.f32 %v2426, %v2970
      %v2972 = vpop.f32.mrf.mxu0
      %v2973 = vpop.f32.mrf.mxu0
      %v2974 = vadd.f32 %v2429, %v2973
      %v2975 = vpop.f32.mrf.mxu0
      %2976 = vmatprep.mubr.bf16.mxu0 %v1470
      %2977 = vmatmul.mubr.bf16.gmra.mxu0 %v1469
      %v2978 = vpop.f32.mrf.mxu0
      %v2979 = vadd.f32 %v2434, %v2978
      %v2980 = vpop.f32.mrf.mxu0
      %v2981 = vpop.f32.mrf.mxu0
      %v2982 = vadd.f32 %v2437, %v2981
      %v2983 = vpop.f32.mrf.mxu0
      %2984 = vmatprep.mubr.bf16.mxu0 %v1474
      %2985 = vmatmul.mubr.bf16.gmra.mxu0 %v1473
      %v2986 = vpop.f32.mrf.mxu0
      %v2987 = vadd.f32 %v2442, %v2986
      %v2988 = vpop.f32.mrf.mxu0
      %v2989 = vpop.f32.mrf.mxu0
      %v2990 = vadd.f32 %v2445, %v2989
      %v2991 = vpop.f32.mrf.mxu0
      %2992 = vmatprep.mubr.bf16.mxu0 %v1478
      %2993 = vmatmul.mubr.bf16.gmra.mxu0 %v1477
      %v2994 = vpop.f32.mrf.mxu0
      %v2995 = vadd.f32 %v2450, %v2994
      %v2996 = vpop.f32.mrf.mxu0
      %v2997 = vpop.f32.mrf.mxu0
      %v2998 = vadd.f32 %v2453, %v2997
      %v2999 = vpop.f32.mrf.mxu0
      %3000 = vmatprep.mubr.bf16.mxu0 %v1482
      %3001 = vmatmul.mubr.bf16.gmra.mxu0 %v1481
      %v3002 = vpop.f32.mrf.mxu0
      %v3003 = vadd.f32 %v2458, %v3002
      %v3004 = vpop.f32.mrf.mxu0
      %v3005 = vpop.f32.mrf.mxu0
      %v3006 = vadd.f32 %v2461, %v3005
      %v3007 = vpop.f32.mrf.mxu0
      %3008 = vmatprep.mubr.bf16.mxu0 %v1486
      %3009 = vmatmul.mubr.bf16.gmra.mxu0 %v1485
      %v3010 = vpop.f32.mrf.mxu0
      %v3011 = vadd.f32 %v2466, %v3010
      %v3012 = vpop.f32.mrf.mxu0
      %v3013 = vpop.f32.mrf.mxu0
      %v3014 = vadd.f32 %v2469, %v3013
      %v3015 = vpop.f32.mrf.mxu0
      %3016 = vmatprep.mubr.bf16.mxu0 %v1490
      %3017 = vmatmul.mubr.bf16.gmra.mxu0 %v1489
      %v3018 = vpop.f32.mrf.mxu0
      %v3019 = vadd.f32 %v2474, %v3018
      %v3020 = vpop.f32.mrf.mxu0
      %v3021 = vpop.f32.mrf.mxu0
      %v3022 = vadd.f32 %v2477, %v3021
      %v3023 = vpop.f32.mrf.mxu0
      %3024 = vmatprep.mubr.bf16.mxu0 %v1494
      %3025 = vmatmul.mubr.bf16.gmra.mxu0 %v1493
      %v3026 = vpop.f32.mrf.mxu0
      %v3027 = vadd.f32 %v2482, %v3026
      %v3028 = vpop.f32.mrf.mxu0
      %v3029 = vpop.f32.mrf.mxu0
      %v3030 = vadd.f32 %v2485, %v3029
      %v3031 = vpop.f32.mrf.mxu0
      %3032 = vdwg.mxu0
      %v3033 = vtanh.pop %v2523
      %v3034 = vtanh.pop %v2526
      %v3035 = vtanh.pop %v2531
      %v3036 = vtanh.pop %v2534
      %v3037 = vtanh.pop %v2539
      %v3038 = vtanh.pop %v2542
      %v3039 = vtanh.pop %v2547
      %v3040 = vtanh.pop %v2550
      %v3041 = vtanh.pop %v2555
      %v3042 = vtanh.pop %v2558
      %v3043 = vtanh.pop %v2563
      %v3044 = vtanh.pop %v2566
      %v3045 = vtanh.pop %v2571
      %v3046 = vtanh.pop %v2574
      %v3047 = vtanh.pop %v2579
      %v3048 = vtanh.pop %v2582
      %v3049 = vtanh.pop %v2587
      %v3050 = vtanh.pop %v2590
      %v3051 = vtanh.pop %v2595
      %v3052 = vtanh.pop %v2598
      %v3053 = vtanh.pop %v2603
      %v3054 = vtanh.pop %v2606
      %v3055 = vtanh.pop %v2611
      %v3056 = vtanh.pop %v2614
      %v3057 = vtanh.pop %v2619
      %v3058 = vtanh.pop %v2622
      %v3059 = vtanh.pop %v2627
      %v3060 = vtanh.pop %v2630
      %v3061 = vtanh.pop %v2635
      %v3062 = vtanh.pop %v2638
      %v3063 = vtanh.pop %v2643
      %v3064 = vtanh.pop %v2646
      %v3065 = vtanh.pop %v2651
      %v3066 = vtanh.pop %v2654
      %v3067 = vtanh.pop %v2659
      %v3068 = vtanh.pop %v2662
      %v3069 = vtanh.pop %v2667
      %v3070 = vtanh.pop %v2670
      %v3071 = vtanh.pop %v2675
      %v3072 = vtanh.pop %v2678
      %v3073 = vtanh.pop %v2683
      %v3074 = vtanh.pop %v2686
      %v3075 = vtanh.pop %v2691
      %v3076 = vtanh.pop %v2694
      %v3077 = vtanh.pop %v2699
      %v3078 = vtanh.pop %v2702
      %v3079 = vtanh.pop %v2707
      %v3080 = vtanh.pop %v2710
      %v3081 = vtanh.pop %v2715
      %v3082 = vtanh.pop %v2718
      %v3083 = vtanh.pop %v2723
      %v3084 = vtanh.pop %v2726
      %v3085 = vtanh.pop %v2731
      %v3086 = vtanh.pop %v2734
      %v3087 = vtanh.pop %v2739
      %v3088 = vtanh.pop %v2742
      %v3089 = vtanh.pop %v2747
      %v3090 = vtanh.pop %v2750
      %v3091 = vtanh.pop %v2755
      %v3092 = vtanh.pop %v2758
      %v3093 = vtanh.pop %v2763
      %v3094 = vtanh.pop %v2766
      %v3095 = vtanh.pop %v2771
      %v3096 = vtanh.pop %v2774
      %v3097 = vtanh.pop %v2779
      %v3098 = vtanh.pop %v2782
      %v3099 = vtanh.pop %v2787
      %v3100 = vtanh.pop %v2790
      %v3101 = vtanh.pop %v2795
      %v3102 = vtanh.pop %v2798
      %v3103 = vtanh.pop %v2803
      %v3104 = vtanh.pop %v2806
      %v3105 = vtanh.pop %v2811
      %v3106 = vtanh.pop %v2814
      %v3107 = vtanh.pop %v2819
      %v3108 = vtanh.pop %v2822
      %v3109 = vtanh.pop %v2827
      %v3110 = vtanh.pop %v2830
      %v3111 = vtanh.pop %v2835
      %v3112 = vtanh.pop %v2838
      %v3113 = vtanh.pop %v2843
      %v3114 = vtanh.pop %v2846
      %v3115 = vtanh.pop %v2851
      %v3116 = vtanh.pop %v2854
      %v3117 = vtanh.pop %v2859
      %v3118 = vtanh.pop %v2862
      %v3119 = vtanh.pop %v2867
      %v3120 = vtanh.pop %v2870
      %v3121 = vtanh.pop %v2875
      %v3122 = vtanh.pop %v2878
      %v3123 = vtanh.pop %v2883
      %v3124 = vtanh.pop %v2886
      %v3125 = vtanh.pop %v2891
      %v3126 = vtanh.pop %v2894
      %v3127 = vtanh.pop %v2899
      %v3128 = vtanh.pop %v2902
      %v3129 = vtanh.pop %v2907
      %v3130 = vtanh.pop %v2910
      %v3131 = vtanh.pop %v2915
      %v3132 = vtanh.pop %v2918
      %v3133 = vtanh.pop %v2923
      %v3134 = vtanh.pop %v2926
      %v3135 = vtanh.pop %v2931
      %v3136 = vtanh.pop %v2934
      %v3137 = vtanh.pop %v2939
      %v3138 = vtanh.pop %v2942
      %v3139 = vtanh.pop %v2947
      %v3140 = vtanh.pop %v2950
      %v3141 = vtanh.pop %v2955
      %v3142 = vtanh.pop %v2958
      %v3143 = vtanh.pop %v2963
      %v3144 = vtanh.pop %v2966
      %v3145 = vtanh.pop %v2971
      %v3146 = vtanh.pop %v2974
      %v3147 = vtanh.pop %v2979
      %v3148 = vtanh.pop %v2982
      %v3149 = vtanh.pop %v2987
      %v3150 = vtanh.pop %v2990
      %v3151 = vtanh.pop %v2995
      %v3152 = vtanh.pop %v2998
      %v3153 = vtanh.pop %v3003
      %v3154 = vtanh.pop %v3006
      %v3155 = vtanh.pop %v3011
      %v3156 = vtanh.pop %v3014
      %v3157 = vtanh.pop %v3019
      %v3158 = vtanh.pop %v3022
      %v3159 = vtanh.pop %v3027
      %v3160 = vtanh.pop %v3030
      %3161 = vst [vmem:[%s148] sm:$0xff] %v3033
      %3162 = vst [vmem:[%s148 + $0x8] sm:$0xff] %v3034
      %3163 = vst [vmem:[%s148 + $0x10] sm:$0xff] %v3035
      %3164 = vst [vmem:[%s148 + $0x18] sm:$0xff] %v3036
      %3165 = vst [vmem:[%s148 + $0x20] sm:$0xff] %v3037
      %3166 = vst [vmem:[%s148 + $0x28] sm:$0xff] %v3038
      %3167 = vst [vmem:[%s148 + $0x30] sm:$0xff] %v3039
      %3168 = vst [vmem:[%s148 + $0x38] sm:$0xff] %v3040
      %3169 = vst [vmem:[%s148 + $0x40] sm:$0xff] %v3041
      %3170 = vst [vmem:[%s148 + $0x48] sm:$0xff] %v3042
      %3171 = vst [vmem:[%s148 + $0x50] sm:$0xff] %v3043
      %3172 = vst [vmem:[%s148 + $0x58] sm:$0xff] %v3044
      %3173 = vst [vmem:[%s148 + $0x60] sm:$0xff] %v3045
      %3174 = vst [vmem:[%s148 + $0x68] sm:$0xff] %v3046
      %3175 = vst [vmem:[%s148 + $0x70] sm:$0xff] %v3047
      %3176 = vst [vmem:[%s148 + $0x78] sm:$0xff] %v3048
      %3177 = vst [vmem:[%s148 + $0x80] sm:$0xff] %v3049
      %3178 = vst [vmem:[%s148 + $0x88] sm:$0xff] %v3050
      %3179 = vst [vmem:[%s148 + $0x90] sm:$0xff] %v3051
      %3180 = vst [vmem:[%s148 + $0x98] sm:$0xff] %v3052
      %3181 = vst [vmem:[%s148 + $0xa0] sm:$0xff] %v3053
      %3182 = vst [vmem:[%s148 + $0xa8] sm:$0xff] %v3054
      %3183 = vst [vmem:[%s148 + $0xb0] sm:$0xff] %v3055
      %3184 = vst [vmem:[%s148 + $0xb8] sm:$0xff] %v3056
      %3185 = vst [vmem:[%s148 + $0xc0] sm:$0xff] %v3057
      %3186 = vst [vmem:[%s148 + $0xc8] sm:$0xff] %v3058
      %3187 = vst [vmem:[%s148 + $0xd0] sm:$0xff] %v3059
      %3188 = vst [vmem:[%s148 + $0xd8] sm:$0xff] %v3060
      %3189 = vst [vmem:[%s148 + $0xe0] sm:$0xff] %v3061
      %3190 = vst [vmem:[%s148 + $0xe8] sm:$0xff] %v3062
      %3191 = vst [vmem:[%s148 + $0xf0] sm:$0xff] %v3063
      %3192 = vst [vmem:[%s148 + $0xf8] sm:$0xff] %v3064
      %3193 = vst [vmem:[%s148 + $0x100] sm:$0xff] %v3065
      %3194 = vst [vmem:[%s148 + $0x108] sm:$0xff] %v3066
      %3195 = vst [vmem:[%s148 + $0x110] sm:$0xff] %v3067
      %3196 = vst [vmem:[%s148 + $0x118] sm:$0xff] %v3068
      %3197 = vst [vmem:[%s148 + $0x120] sm:$0xff] %v3069
      %3198 = vst [vmem:[%s148 + $0x128] sm:$0xff] %v3070
      %3199 = vst [vmem:[%s148 + $0x130] sm:$0xff] %v3071
      %3200 = vst [vmem:[%s148 + $0x138] sm:$0xff] %v3072
      %3201 = vst [vmem:[%s148 + $0x140] sm:$0xff] %v3073
      %3202 = vst [vmem:[%s148 + $0x148] sm:$0xff] %v3074
      %3203 = vst [vmem:[%s148 + $0x150] sm:$0xff] %v3075
      %3204 = vst [vmem:[%s148 + $0x158] sm:$0xff] %v3076
      %3205 = vst [vmem:[%s148 + $0x160] sm:$0xff] %v3077
      %3206 = vst [vmem:[%s148 + $0x168] sm:$0xff] %v3078
      %3207 = vst [vmem:[%s148 + $0x170] sm:$0xff] %v3079
      %3208 = vst [vmem:[%s148 + $0x178] sm:$0xff] %v3080
      %3209 = vst [vmem:[%s148 + $0x180] sm:$0xff] %v3081
      %3210 = vst [vmem:[%s148 + $0x188] sm:$0xff] %v3082
      %3211 = vst [vmem:[%s148 + $0x190] sm:$0xff] %v3083
      %3212 = vst [vmem:[%s148 + $0x198] sm:$0xff] %v3084
      %3213 = vst [vmem:[%s148 + $0x1a0] sm:$0xff] %v3085
      %3214 = vst [vmem:[%s148 + $0x1a8] sm:$0xff] %v3086
      %3215 = vst [vmem:[%s148 + $0x1b0] sm:$0xff] %v3087
      %3216 = vst [vmem:[%s148 + $0x1b8] sm:$0xff] %v3088
      %3217 = vst [vmem:[%s148 + $0x1c0] sm:$0xff] %v3089
      %3218 = vst [vmem:[%s148 + $0x1c8] sm:$0xff] %v3090
      %3219 = vst [vmem:[%s148 + $0x1d0] sm:$0xff] %v3091
      %3220 = vst [vmem:[%s148 + $0x1d8] sm:$0xff] %v3092
      %3221 = vst [vmem:[%s148 + $0x1e0] sm:$0xff] %v3093
      %3222 = vst [vmem:[%s148 + $0x1e8] sm:$0xff] %v3094
      %3223 = vst [vmem:[%s148 + $0x1f0] sm:$0xff] %v3095
      %3224 = vst [vmem:[%s148 + $0x1f8] sm:$0xff] %v3096
      %3225 = vst [vmem:[%s148 + $0x200] sm:$0xff] %v3097
      %3226 = vst [vmem:[%s148 + $0x208] sm:$0xff] %v3098
      %3227 = vst [vmem:[%s148 + $0x210] sm:$0xff] %v3099
      %3228 = vst [vmem:[%s148 + $0x218] sm:$0xff] %v3100
      %3229 = vst [vmem:[%s148 + $0x220] sm:$0xff] %v3101
      %3230 = vst [vmem:[%s148 + $0x228] sm:$0xff] %v3102
      %3231 = vst [vmem:[%s148 + $0x230] sm:$0xff] %v3103
      %3232 = vst [vmem:[%s148 + $0x238] sm:$0xff] %v3104
      %3233 = vst [vmem:[%s148 + $0x240] sm:$0xff] %v3105
      %3234 = vst [vmem:[%s148 + $0x248] sm:$0xff] %v3106
      %3235 = vst [vmem:[%s148 + $0x250] sm:$0xff] %v3107
      %3236 = vst [vmem:[%s148 + $0x258] sm:$0xff] %v3108
      %3237 = vst [vmem:[%s148 + $0x260] sm:$0xff] %v3109
      %3238 = vst [vmem:[%s148 + $0x268] sm:$0xff] %v3110
      %3239 = vst [vmem:[%s148 + $0x270] sm:$0xff] %v3111
      %3240 = vst [vmem:[%s148 + $0x278] sm:$0xff] %v3112
      %3241 = vst [vmem:[%s148 + $0x280] sm:$0xff] %v3113
      %3242 = vst [vmem:[%s148 + $0x288] sm:$0xff] %v3114
      %3243 = vst [vmem:[%s148 + $0x290] sm:$0xff] %v3115
      %3244 = vst [vmem:[%s148 + $0x298] sm:$0xff] %v3116
      %3245 = vst [vmem:[%s148 + $0x2a0] sm:$0xff] %v3117
      %3246 = vst [vmem:[%s148 + $0x2a8] sm:$0xff] %v3118
      %3247 = vst [vmem:[%s148 + $0x2b0] sm:$0xff] %v3119
      %3248 = vst [vmem:[%s148 + $0x2b8] sm:$0xff] %v3120
      %3249 = vst [vmem:[%s148 + $0x2c0] sm:$0xff] %v3121
      %3250 = vst [vmem:[%s148 + $0x2c8] sm:$0xff] %v3122
      %3251 = vst [vmem:[%s148 + $0x2d0] sm:$0xff] %v3123
      %3252 = vst [vmem:[%s148 + $0x2d8] sm:$0xff] %v3124
      %3253 = vst [vmem:[%s148 + $0x2e0] sm:$0xff] %v3125
      %3254 = vst [vmem:[%s148 + $0x2e8] sm:$0xff] %v3126
      %3255 = vst [vmem:[%s148 + $0x2f0] sm:$0xff] %v3127
      %3256 = vst [vmem:[%s148 + $0x2f8] sm:$0xff] %v3128
      %3257 = vst [vmem:[%s148 + $0x300] sm:$0xff] %v3129
      %3258 = vst [vmem:[%s148 + $0x308] sm:$0xff] %v3130
      %3259 = vst [vmem:[%s148 + $0x310] sm:$0xff] %v3131
      %3260 = vst [vmem:[%s148 + $0x318] sm:$0xff] %v3132
      %3261 = vst [vmem:[%s148 + $0x320] sm:$0xff] %v3133
      %3262 = vst [vmem:[%s148 + $0x328] sm:$0xff] %v3134
      %3263 = vst [vmem:[%s148 + $0x330] sm:$0xff] %v3135
      %3264 = vst [vmem:[%s148 + $0x338] sm:$0xff] %v3136
      %3265 = vst [vmem:[%s148 + $0x340] sm:$0xff] %v3137
      %3266 = vst [vmem:[%s148 + $0x348] sm:$0xff] %v3138
      %3267 = vst [vmem:[%s148 + $0x350] sm:$0xff] %v3139
      %3268 = vst [vmem:[%s148 + $0x358] sm:$0xff] %v3140
      %3269 = vst [vmem:[%s148 + $0x360] sm:$0xff] %v3141
      %3270 = vst [vmem:[%s148 + $0x368] sm:$0xff] %v3142
      %3271 = vst [vmem:[%s148 + $0x370] sm:$0xff] %v3143
      %3272 = vst [vmem:[%s148 + $0x378] sm:$0xff] %v3144
      %3273 = vst [vmem:[%s148 + $0x380] sm:$0xff] %v3145
      %3274 = vst [vmem:[%s148 + $0x388] sm:$0xff] %v3146
      %3275 = vst [vmem:[%s148 + $0x390] sm:$0xff] %v3147
      %3276 = vst [vmem:[%s148 + $0x398] sm:$0xff] %v3148
      %3277 = vst [vmem:[%s148 + $0x3a0] sm:$0xff] %v3149
      %3278 = vst [vmem:[%s148 + $0x3a8] sm:$0xff] %v3150
      %3279 = vst [vmem:[%s148 + $0x3b0] sm:$0xff] %v3151
      %3280 = vst [vmem:[%s148 + $0x3b8] sm:$0xff] %v3152
      %3281 = vst [vmem:[%s148 + $0x3c0] sm:$0xff] %v3153
      %3282 = vst [vmem:[%s148 + $0x3c8] sm:$0xff] %v3154
      %3283 = vst [vmem:[%s148 + $0x3d0] sm:$0xff] %v3155
      %3284 = vst [vmem:[%s148 + $0x3d8] sm:$0xff] %v3156
      %3285 = vst [vmem:[%s148 + $0x3e0] sm:$0xff] %v3157
      %3286 = vst [vmem:[%s148 + $0x3e8] sm:$0xff] %v3158
      %3287 = vst [vmem:[%s148 + $0x3f0] sm:$0xff] %v3159
      %3288 = vst [vmem:[%s148 + $0x3f8] sm:$0xff] %v3160
      %s3289 = smul.u32 128, %s13
      %p3290 = scmp.lt.s32.totalorder %s3289, 255
      %s3291 = scalar_select %p3290, %s3289, 255
      %s3292 = smul.addr %s3291, 8
      %s3293 = scalar_lea.vmem %s2, %s3292
      // Predicated region
      $region29: #{resnet_forward.37} parent=27 // pred_check
        %p3294 = pneg %p78
      $region30: #{resnet_forward.37} parent=27 // pred_check_branch
        %3296 = sbr.rel (%p3294) target = $region32
      $region31: #{resnet_forward.37} parent=27 // pred_region
        %s3297 = smul.u32 128, %s13
      $region32: #{resnet_forward.37} parent=27 // pred_fallthru
        _
    $region28: #{resnet_forward.37} parent=5 // pred_fallthru
      _
    %p3298 = scmp.le.s32.totalorder 2, %s8
    // Predicated region
    $region33: #{resnet_forward.37} parent=5 // pred_check
      %p3299 = pneg %p3298
    $region34: #{resnet_forward.37} parent=5 // pred_check_branch
      %3301 = sbr.rel (%p3299) target = $region36
    $region35: #{resnet_forward.37} parent=5 // pred_region
      %s3302 = ssub.s32 %s8, 2
      // Predicated region
      $region37: #{resnet_forward.37} parent=35 // pred_check
        %p3303 = pneg %p84
      $region38: #{resnet_forward.37} parent=35 // pred_check_branch
        %3305 = sbr.rel (%p3303) target = $region40
      $region39: #{resnet_forward.37} parent=35 // pred_region
        %s3306 = smul.u32 128, %s14
        %p3307 = scmp.lt.s32.totalorder %s3306, 255
        %s3308 = scalar_select %p3307, %s3306, 255
        %s3309 = smul.addr %s3308, 8
        %s3310 = scalar_lea.vmem %s2, %s3309
      $region40: #{resnet_forward.37} parent=35 // pred_fallthru
        _
    $region36: #{resnet_forward.37} parent=5 // pred_fallthru
      _
  $region6: #{resnet_forward.37} parent=0 // loop_footer
    %s12 = sadd.s32 1, %s8
  $region7: #{resnet_forward.37} parent=0 // loop_footer_branch
    %7 = sbr.rel target = $region3
  $region8: #{resnet_forward.37} parent=0 // loop_exit
    _

</llo_original>
